<compile_context>
chip_gen: v7x
topology: tpu7x:2x2x1
jax: 0.10.0
libtpu: 0.0.40
codegen_flags: <defaults>
</compile_context>

<pallas_src>
import functools

import jax
import jax.numpy as jnp
import numpy as np
from jax.experimental import pallas as pl
from jax.experimental.pallas import tpu as pltpu


# ----------------------------------------------------------------------------- utils


def _layernorm(x, gamma, beta, eps=1e-5):
    mu = jnp.mean(x, axis=-1, keepdims=True)
    var = jnp.mean((x - mu) ** 2, axis=-1, keepdims=True)
    return (x - mu) * jax.lax.rsqrt(var + eps) * gamma + beta


# batched dot_general patterns (leading batch dim), same shapes as the proven
# flash-attention einsums 'bqd,bkd->bqk' / 'bqk,bkd->bqd':
_DN_PROJ = (((2,), (1,)), ((0,), (0,)))   # (H,M,K) x (H,K,N) -> (H,M,N)
_DN_QK = (((2,), (2,)), ((0,), (0,)))     # (H,M,K) x (H,N,K) -> (H,M,N)


# ----------------------------------------------------------------------------- fused kernel


def _fused_layers_kernel(
    x0_ref,
    g1_ref, be1_ref,
    wq_ref, wk_ref, wv_ref, wp_ref, bp_ref,
    g2_ref, be2_ref,
    w1_ref, b1_ref, w2_ref, b2_ref,
    o_ref,
    *, num_heads, batch, seq,
):
    H, B, N = num_heads, batch, seq
    bf16 = jnp.bfloat16

    # layer 0: load the initial activation into the VMEM-resident accumulator.
    @pl.when(pl.program_id(0) == 0)
    def _():
        o_ref[...] = x0_ref[...]

    x = o_ref[...]                                # (B*N, D) f32, stays in VMEM across layers
    D = x.shape[-1]
    hd = D // H
    scale = float(hd) ** -0.5

    wq = wq_ref[0]                                # (H, D, hd) bf16
    wk = wk_ref[0]
    wv = wv_ref[0]
    wp = wp_ref[0]                                # (H, hd, D) bf16

    # ---------------- attention block: x = x + Proj(MHA(LN1(x))) ----------------
    h = _layernorm(x, g1_ref[0], be1_ref[0]).astype(bf16)        # (B*N, D)
    hb = jnp.broadcast_to(h[None], (H, B * N, D))                # (H, B*N, D)

    q = jax.lax.dot_general(hb, wq, _DN_PROJ,
                            preferred_element_type=jnp.float32).astype(bf16)
    k = jax.lax.dot_general(hb, wk, _DN_PROJ,
                            preferred_element_type=jnp.float32).astype(bf16)
    v = jax.lax.dot_general(hb, wv, _DN_PROJ,
                            preferred_element_type=jnp.float32).astype(bf16)
    # q/k/v: (H, B*N, hd)

    attn_rows = []
    for b in range(B):                            # B is tiny -> unrolled; only scores need per-batch handling
        r0 = b * N
        qb = q[:, r0:r0 + N, :]                   # (H, N, hd)
        kb = k[:, r0:r0 + N, :]
        vb = v[:, r0:r0 + N, :]
        s = jax.lax.dot_general(qb, kb, _DN_QK,
                                preferred_element_type=jnp.float32) * scale   # (H, N, N)
        s = s - jnp.max(s, axis=-1, keepdims=True)
        p = jnp.exp(s)
        p = p * pl.reciprocal(jnp.sum(p, axis=-1, keepdims=True), approx=True)
        ob = jax.lax.dot_general(p.astype(bf16), vb, _DN_PROJ,
                                 preferred_element_type=jnp.float32)          # (H, N, hd)
        pr = jax.lax.dot_general(ob.astype(bf16), wp, _DN_PROJ,
                                 preferred_element_type=jnp.float32)          # (H, N, D)
        attn_rows.append(jnp.sum(pr, axis=0))     # sum over heads == concat-heads @ Wp
    attn = jnp.concatenate(attn_rows, axis=0) + bp_ref[0]                     # (B*N, D)
    x = x + attn

    # ---------------- MLP block: x = x + fc2(relu(fc1(LN2(x)))) ----------------
    h2 = _layernorm(x, g2_ref[0], be2_ref[0]).astype(bf16)
    m = jnp.dot(h2, w1_ref[0], preferred_element_type=jnp.float32) + b1_ref[0]
    m = jnp.maximum(m, 0.0).astype(bf16)
    m = jnp.dot(m, w2_ref[0], preferred_element_type=jnp.float32) + b2_ref[0]

    o_ref[...] = x + m


# ----------------------------------------------------------------------------- wrappers


def _stack_layer_params(layers, num_heads):
    """Stack per-layer params on a leading L axis; pre-split heads; cast matmul weights to bf16."""
    D = layers[0]["wq"].shape[0]
    hd = D // num_heads
    bf16 = jnp.bfloat16

    def stack(fn):
        return jnp.stack([fn(lp) for lp in layers], axis=0)

    def per_head_in(w):   # (D, H*hd) -> (H, D, hd)
        return w.reshape(D, num_heads, hd).transpose(1, 0, 2)

    return dict(
        g1=stack(lambda lp: lp["g1"]),                                     # (L, 1, D) f32
        be1=stack(lambda lp: lp["be1"]),
        wq=stack(lambda lp: per_head_in(lp["wq"])).astype(bf16),           # (L, H, D, hd)
        wk=stack(lambda lp: per_head_in(lp["wkv"][:, :D])).astype(bf16),
        wv=stack(lambda lp: per_head_in(lp["wkv"][:, D:])).astype(bf16),
        wp=stack(lambda lp: lp["wp"].reshape(num_heads, hd, D)).astype(bf16),  # (L, H, hd, D)
        bp=stack(lambda lp: lp["bp"]),                                     # (L, 1, D)
        g2=stack(lambda lp: lp["g2"]),
        be2=stack(lambda lp: lp["be2"]),
        w1=stack(lambda lp: lp["w1"]).astype(bf16),                        # (L, D, Hm)
        b1=stack(lambda lp: lp["bm1"]),                                    # (L, 1, Hm)
        w2=stack(lambda lp: lp["w2"]).astype(bf16),                        # (L, Hm, D)
        b2=stack(lambda lp: lp["bm2"]),                                    # (L, 1, D)
    )


def fused_transformer(x0, sp, *, batch, seq, num_heads):
    BN, D = x0.shape
    assert BN == batch * seq
    L = sp["wq"].shape[0]

    def per_layer(arr):
        shape = arr.shape
        nd = len(shape)
        return pl.BlockSpec((1,) + shape[1:],
                            lambda l, nd=nd: (l,) + (0,) * (nd - 1))

    order = ["g1", "be1", "wq", "wk", "wv", "wp", "bp",
             "g2", "be2", "w1", "b1", "w2", "b2"]

    kern = functools.partial(_fused_layers_kernel,
                             num_heads=num_heads, batch=batch, seq=seq)
    return pl.pallas_call(
        kern,
        out_shape=jax.ShapeDtypeStruct((BN, D), jnp.float32),
        grid=(L,),
        in_specs=[pl.BlockSpec((BN, D), lambda l: (0, 0))]
                 + [per_layer(sp[k]) for k in order],
        out_specs=pl.BlockSpec((BN, D), lambda l: (0, 0)),
        compiler_params=pltpu.CompilerParams(dimension_semantics=("arbitrary",)),
    )(x0, *[sp[k] for k in order])


def transformer_mapper_forward(x, params, clip_length, prefix_length, num_heads):
    B = x.shape[0]
    D = params["prefix"].shape[-1]
    N = clip_length + prefix_length

    # Tiny clip-feature GEMM + prefix concat left to XLA (kernel-launch dominated);
    # the whole transformer stack runs as one fused Pallas kernel below.
    h = (x @ params["w_lin"] + params["b_lin"][0]).reshape(B, clip_length, D)
    prefix = jnp.broadcast_to(params["prefix"][None], (B, prefix_length, D))
    x0 = jnp.concatenate([h, prefix], axis=1).reshape(B * N, D)

    sp = _stack_layer_params(params["layers"], num_heads)
    out = fused_transformer(x0, sp, batch=B, seq=N, num_heads=num_heads)
    out = out.reshape(B, N, D)
    return out[:, clip_length:]                                   # (B, prefix_len, D)


# ----------------------------------------------------------------------------- pure-JAX reference (mirrors the PyTorch module)


def _ref_layer(x, lp, num_heads):
    b, n, c = x.shape
    hd = c // num_heads
    scale = float(hd) ** -0.5
    f32 = jnp.float32
    h = _layernorm(x, lp["g1"], lp["be1"])
    q = h @ lp["wq"].astype(f32)
    kv = (h @ lp["wkv"].astype(f32)).reshape(b, n, 2, num_heads, hd)
    k, v = kv[:, :, 0], kv[:, :, 1]
    qh = q.reshape(b, n, num_heads, hd)
    att = jnp.einsum("bnhd,bmhd->bnmh", qh, k) * scale
    att = jax.nn.softmax(att, axis=2)
    out = jnp.einsum("bnmh,bmhd->bnhd", att, v).reshape(b, n, c)
    out = out @ lp["wp"].astype(f32) + lp["bp"][0]
    x = x + out
    h2 = _layernorm(x, lp["g2"], lp["be2"])
    m = jnp.maximum(h2 @ lp["w1"].astype(f32) + lp["bm1"][0], 0.0)
    m = m @ lp["w2"].astype(f32) + lp["bm2"][0]
    return x + m


def reference_forward(x, params, clip_length, prefix_length, num_heads):
    B = x.shape[0]
    D = params["prefix"].shape[-1]
    h = (x @ params["w_lin"] + params["b_lin"][0]).reshape(B, clip_length, D)
    prefix = jnp.broadcast_to(params["prefix"][None], (B, prefix_length, D))
    h = jnp.concatenate([h, prefix], axis=1)
    for lp in params["layers"]:
        h = _ref_layer(h, lp, num_heads)
    return h[:, clip_length:]


# ----------------------------------------------------------------------------- param init
# Matmul weights are stored in bf16 (the precision the MXU consumes); LN params,
# biases and the clip linear stay f32.  Weights are pre-transposed to (in, out).


def init_params(key, dim_clip, dim_emb, clip_length, prefix_length, num_layers,
                mlp_ratio=2.0):
    hidden = int(dim_emb * mlp_ratio)
    keys = iter(jax.random.split(key, 3 + num_layers * 8))
    bf16 = jnp.bfloat16

    def nrm(shape, s=0.05, dtype=jnp.float32):
        return (s * jax.random.normal(next(keys), shape)).astype(dtype)

    params = {
        "w_lin": nrm((dim_clip, clip_length * dim_emb)),
        "b_lin": nrm((1, clip_length * dim_emb)),
        "prefix": jax.random.normal(next(keys), (prefix_length, dim_emb)).astype(jnp.float32),
        "layers": [],
    }
    for _ in range(num_layers):
        lp = {
            "g1": jnp.ones((1, dim_emb), jnp.float32),
            "be1": jnp.zeros((1, dim_emb), jnp.float32),
            "wq": nrm((dim_emb, dim_emb), dtype=bf16),
            "wkv": nrm((dim_emb, 2 * dim_emb), dtype=bf16),
            "wp": nrm((dim_emb, dim_emb), dtype=bf16),
            "bp": nrm((1, dim_emb)),
            "g2": jnp.ones((1, dim_emb), jnp.float32),
            "be2": jnp.zeros((1, dim_emb), jnp.float32),
            "w1": nrm((dim_emb, hidden), dtype=bf16),
            "bm1": nrm((1, hidden)),
            "w2": nrm((hidden, dim_emb), dtype=bf16),
            "bm2": nrm((1, dim_emb)),
        }
        params["layers"].append(lp)
    return params


# ----------------------------------------------------------------------------- main


if __name__ == "__main__":
    B = 2
    DIM_CLIP = 16
    DIM_EMB = 64          # num_heads=8 hardcoded in TransformerMapper -> head_dim=8
    NUM_HEADS = 8
    CLIP_LEN = 10
    PREFIX_LEN = 10
    NUM_LAYERS = 4        # small for the demo (module default is 8)

    key = jax.random.PRNGKey(0)
    k_x, k_p = jax.random.split(key)
    x = jax.random.normal(k_x, (B, DIM_CLIP), dtype=jnp.float32)
    params = init_params(k_p, DIM_CLIP, DIM_EMB, CLIP_LEN, PREFIX_LEN, NUM_LAYERS)

    out = transformer_mapper_forward(x, params, CLIP_LEN, PREFIX_LEN, NUM_HEADS)
    out = jax.block_until_ready(out)

    ref = reference_forward(x, params, CLIP_LEN, PREFIX_LEN, NUM_HEADS)
    ref = jax.block_until_ready(ref)

    assert out.shape == (B, PREFIX_LEN, DIM_EMB), out.shape
    np.testing.assert_allclose(np.asarray(out), np.asarray(ref), rtol=2e-2, atol=2e-2)

    print("KERNEL_OK")
</pallas_src>

<mosaic_0001>
module attributes {stable_mosaic.version = 11 : i64} {
  func.func @_fused_layers_kernel(%arg0: i32, %arg1: memref<40x64xf32, #tpu.memory_space<vmem>>, %arg2: memref<1x1x64xf32, #tpu.memory_space<vmem>>, %arg3: memref<1x1x64xf32, #tpu.memory_space<vmem>>, %arg4: memref<1x8x64x8xbf16, #tpu.memory_space<vmem>>, %arg5: memref<1x8x64x8xbf16, #tpu.memory_space<vmem>>, %arg6: memref<1x8x64x8xbf16, #tpu.memory_space<vmem>>, %arg7: memref<1x8x8x64xbf16, #tpu.memory_space<vmem>>, %arg8: memref<1x1x64xf32, #tpu.memory_space<vmem>>, %arg9: memref<1x1x64xf32, #tpu.memory_space<vmem>>, %arg10: memref<1x1x64xf32, #tpu.memory_space<vmem>>, %arg11: memref<1x64x128xbf16, #tpu.memory_space<vmem>>, %arg12: memref<1x1x128xf32, #tpu.memory_space<vmem>>, %arg13: memref<1x128x64xbf16, #tpu.memory_space<vmem>>, %arg14: memref<1x1x64xf32, #tpu.memory_space<vmem>>, %arg15: memref<40x64xf32, #tpu.memory_space<vmem>>) attributes {dimension_semantics = [#tpu.dimension_semantics<arbitrary>], iteration_bounds = array<i64: 4>, scalar_prefetch = 0 : i64, scratch_operands = 0 : i64, tpu.core_type = #tpu.core_type<tc>, window_params = [{pipeline_mode = #tpu.pipeline_mode<synchronous>, transform_indices = @transform_0, window_bounds = array<i64: 40, 64>}, {transform_indices = @transform_1, window_bounds = array<i64: 1, 1, 64>}, {transform_indices = @transform_2, window_bounds = array<i64: 1, 1, 64>}, {transform_indices = @transform_3, window_bounds = array<i64: 1, 8, 64, 8>}, {transform_indices = @transform_4, window_bounds = array<i64: 1, 8, 64, 8>}, {transform_indices = @transform_5, window_bounds = array<i64: 1, 8, 64, 8>}, {transform_indices = @transform_6, window_bounds = array<i64: 1, 8, 8, 64>}, {transform_indices = @transform_7, window_bounds = array<i64: 1, 1, 64>}, {transform_indices = @transform_8, window_bounds = array<i64: 1, 1, 64>}, {transform_indices = @transform_9, window_bounds = array<i64: 1, 1, 64>}, {transform_indices = @transform_10, window_bounds = array<i64: 1, 64, 128>}, {transform_indices = @transform_11, window_bounds = array<i64: 1, 1, 128>}, {transform_indices = @transform_12, window_bounds = array<i64: 1, 128, 64>}, {transform_indices = @transform_13, window_bounds = array<i64: 1, 1, 64>}, {pipeline_mode = #tpu.pipeline_mode<synchronous>, transform_indices = @transform_14, window_bounds = array<i64: 40, 64>}]} {
    %c0_i32 = arith.constant 0 : i32
    %0 = arith.cmpi eq, %arg0, %c0_i32 : i32
    %1 = arith.extui %0 : i1 to i32
    %c0_i32_0 = arith.constant 0 : i32
    %2 = arith.cmpi ne, %1, %c0_i32_0 : i32
    scf.if %2 {
      %c0_76 = arith.constant 0 : index
      %c0_77 = arith.constant 0 : index
      %142 = vector.load %arg1[%c0_76, %c0_77] : memref<40x64xf32, #tpu.memory_space<vmem>>, vector<40x64xf32>
      %c0_78 = arith.constant 0 : index
      %c0_79 = arith.constant 0 : index
      %143 = vector.load %arg15[%c0_78, %c0_79] : memref<40x64xf32, #tpu.memory_space<vmem>>, vector<40x64xf32>
      tpu.vector_store %arg15[%c0_78, %c0_79], %142 {strides = array<i32>} : memref<40x64xf32, #tpu.memory_space<vmem>>, vector<40x64xf32>,
    } else {
    }
    %c0 = arith.constant 0 : index
    %c0_1 = arith.constant 0 : index
    %3 = vector.load %arg15[%c0, %c0_1] : memref<40x64xf32, #tpu.memory_space<vmem>>, vector<40x64xf32>
    %c0_2 = arith.constant 0 : index
    %c0_3 = arith.constant 0 : index
    %c0_4 = arith.constant 0 : index
    %c0_5 = arith.constant 0 : index
    %4 = vector.load %arg4[%c0_2, %c0_3, %c0_4, %c0_5] : memref<1x8x64x8xbf16, #tpu.memory_space<vmem>>, vector<1x8x64x8xbf16>
    %5 = vector.shape_cast %4 : vector<1x8x64x8xbf16> to vector<8x64x8xbf16>
    %c0_6 = arith.constant 0 : index
    %c0_7 = arith.constant 0 : index
    %c0_8 = arith.constant 0 : index
    %c0_9 = arith.constant 0 : index
    %6 = vector.load %arg5[%c0_6, %c0_7, %c0_8, %c0_9] : memref<1x8x64x8xbf16, #tpu.memory_space<vmem>>, vector<1x8x64x8xbf16>
    %7 = vector.shape_cast %6 : vector<1x8x64x8xbf16> to vector<8x64x8xbf16>
    %c0_10 = arith.constant 0 : index
    %c0_11 = arith.constant 0 : index
    %c0_12 = arith.constant 0 : index
    %c0_13 = arith.constant 0 : index
    %8 = vector.load %arg6[%c0_10, %c0_11, %c0_12, %c0_13] : memref<1x8x64x8xbf16, #tpu.memory_space<vmem>>, vector<1x8x64x8xbf16>
    %9 = vector.shape_cast %8 : vector<1x8x64x8xbf16> to vector<8x64x8xbf16>
    %c0_14 = arith.constant 0 : index
    %c0_15 = arith.constant 0 : index
    %c0_16 = arith.constant 0 : index
    %c0_17 = arith.constant 0 : index
    %10 = vector.load %arg7[%c0_14, %c0_15, %c0_16, %c0_17] : memref<1x8x8x64xbf16, #tpu.memory_space<vmem>>, vector<1x8x8x64xbf16>
    %11 = vector.shape_cast %10 : vector<1x8x8x64xbf16> to vector<8x8x64xbf16>
    %c0_18 = arith.constant 0 : index
    %c0_19 = arith.constant 0 : index
    %c0_20 = arith.constant 0 : index
    %12 = vector.load %arg2[%c0_18, %c0_19, %c0_20] : memref<1x1x64xf32, #tpu.memory_space<vmem>>, vector<1x1x64xf32>
    %13 = vector.shape_cast %12 : vector<1x1x64xf32> to vector<1x64xf32>
    %c0_21 = arith.constant 0 : index
    %c0_22 = arith.constant 0 : index
    %c0_23 = arith.constant 0 : index
    %14 = vector.load %arg3[%c0_21, %c0_22, %c0_23] : memref<1x1x64xf32, #tpu.memory_space<vmem>>, vector<1x1x64xf32>
    %15 = vector.shape_cast %14 : vector<1x1x64xf32> to vector<1x64xf32>
    %cst = arith.constant dense<0.000000e+00> : vector<40xf32>
    %16 = vector.multi_reduction <add>, %3, %cst [1] : vector<40x64xf32> to vector<40xf32>
    %17 = vector.shape_cast %16 : vector<40xf32> to vector<40x1xf32>
    %cst_24 = arith.constant 6.400000e+01 : f32
    %18 = vector.broadcast %cst_24 : f32 to vector<40x1xf32>
    %19 = arith.divf %17, %18 : vector<40x1xf32>
    %20 = vector.broadcast %19 : vector<40x1xf32> to vector<40x64xf32>
    %21 = arith.subf %3, %20 : vector<40x64xf32>
    %22 = arith.mulf %21, %21 : vector<40x64xf32>
    %cst_25 = arith.constant dense<0.000000e+00> : vector<40xf32>
    %23 = vector.multi_reduction <add>, %22, %cst_25 [1] : vector<40x64xf32> to vector<40xf32>
    %24 = vector.shape_cast %23 : vector<40xf32> to vector<40x1xf32>
    %cst_26 = arith.constant 6.400000e+01 : f32
    %25 = vector.broadcast %cst_26 : f32 to vector<40x1xf32>
    %26 = arith.divf %24, %25 : vector<40x1xf32>
    %27 = vector.broadcast %19 : vector<40x1xf32> to vector<40x64xf32>
    %28 = arith.subf %3, %27 : vector<40x64xf32>
    %cst_27 = arith.constant 9.99999974E-6 : f32
    %29 = vector.broadcast %cst_27 : f32 to vector<40x1xf32>
    %30 = arith.addf %26, %29 : vector<40x1xf32>
    %31 = math.rsqrt %30 : vector<40x1xf32>
    %32 = vector.broadcast %31 : vector<40x1xf32> to vector<40x64xf32>
    %33 = arith.mulf %28, %32 : vector<40x64xf32>
    %34 = vector.broadcast %13 : vector<1x64xf32> to vector<40x64xf32>
    %35 = arith.mulf %33, %34 : vector<40x64xf32>
    %36 = vector.broadcast %15 : vector<1x64xf32> to vector<40x64xf32>
    %37 = arith.addf %35, %36 : vector<40x64xf32>
    %38 = arith.truncf %37 : vector<40x64xf32> to vector<40x64xbf16>
    %39 = vector.shape_cast %38 : vector<40x64xbf16> to vector<1x40x64xbf16>
    %40 = vector.shape_cast %39 : vector<1x40x64xbf16> to vector<1x40x64xbf16>
    %41 = vector.broadcast %40 : vector<1x40x64xbf16> to vector<8x40x64xbf16>
    %cst_28 = arith.constant dense<0.000000e+00> : vector<8x40x8xf32>
    %42 = tpu.matmul %41, %5, %cst_28 {dimension_numbers = #tpu.dot_dimension_numbers<[2], [1], [1], [2], [0, 0, 0, 1, 1, 2], [0], [0]>} : vector<8x40x64xbf16>, vector<8x64x8xbf16>, vector<8x40x8xf32> -> vector<8x40x8xf32>
    %43 = arith.truncf %42 : vector<8x40x8xf32> to vector<8x40x8xbf16>
    %cst_29 = arith.constant dense<0.000000e+00> : vector<8x40x8xf32>
    %44 = tpu.matmul %41, %7, %cst_29 {dimension_numbers = #tpu.dot_dimension_numbers<[2], [1], [1], [2], [0, 0, 0, 1, 1, 2], [0], [0]>} : vector<8x40x64xbf16>, vector<8x64x8xbf16>, vector<8x40x8xf32> -> vector<8x40x8xf32>
    %45 = arith.truncf %44 : vector<8x40x8xf32> to vector<8x40x8xbf16>
    %cst_30 = arith.constant dense<0.000000e+00> : vector<8x40x8xf32>
    %46 = tpu.matmul %41, %9, %cst_30 {dimension_numbers = #tpu.dot_dimension_numbers<[2], [1], [1], [2], [0, 0, 0, 1, 1, 2], [0], [0]>} : vector<8x40x64xbf16>, vector<8x64x8xbf16>, vector<8x40x8xf32> -> vector<8x40x8xf32>
    %47 = arith.truncf %46 : vector<8x40x8xf32> to vector<8x40x8xbf16>
    %48 = vector.extract_strided_slice %43 {offsets = [0, 0, 0], sizes = [8, 20, 8], strides = [1, 1, 1]} : vector<8x40x8xbf16> to vector<8x20x8xbf16>
    %49 = vector.extract_strided_slice %45 {offsets = [0, 0, 0], sizes = [8, 20, 8], strides = [1, 1, 1]} : vector<8x40x8xbf16> to vector<8x20x8xbf16>
    %50 = vector.extract_strided_slice %47 {offsets = [0, 0, 0], sizes = [8, 20, 8], strides = [1, 1, 1]} : vector<8x40x8xbf16> to vector<8x20x8xbf16>
    %cst_31 = arith.constant dense<0.000000e+00> : vector<8x20x20xf32>
    %51 = tpu.matmul %48, %49, %cst_31 {dimension_numbers = #tpu.dot_dimension_numbers<[2], [2], [1], [1], [0, 0, 0, 1, 1, 1], [0], [0]>} : vector<8x20x8xbf16>, vector<8x20x8xbf16>, vector<8x20x20xf32> -> vector<8x20x20xf32>
    %cst_32 = arith.constant 0.353553385 : f32
    %52 = vector.broadcast %cst_32 : f32 to vector<8x20x20xf32>
    %53 = arith.mulf %51, %52 : vector<8x20x20xf32>
    %cst_33 = arith.constant dense<0xFF800000> : vector<8x20xf32>
    %54 = vector.multi_reduction <maximumf>, %53, %cst_33 [2] : vector<8x20x20xf32> to vector<8x20xf32>
    %55 = vector.shape_cast %54 : vector<8x20xf32> to vector<8x20x1xf32>
    %56 = vector.broadcast %55 : vector<8x20x1xf32> to vector<8x20x20xf32>
    %57 = arith.subf %53, %56 : vector<8x20x20xf32>
    %58 = math.exp %57 : vector<8x20x20xf32>
    %cst_34 = arith.constant dense<0.000000e+00> : vector<8x20xf32>
    %59 = vector.multi_reduction <add>, %58, %cst_34 [2] : vector<8x20x20xf32> to vector<8x20xf32>
    %60 = vector.shape_cast %59 : vector<8x20xf32> to vector<8x20x1xf32>
    %61 = tpu.reciprocal %60 {approx = true} : vector<8x20x1xf32> -> vector<8x20x1xf32>
    %62 = vector.broadcast %61 : vector<8x20x1xf32> to vector<8x20x20xf32>
    %63 = arith.mulf %58, %62 : vector<8x20x20xf32>
    %64 = arith.truncf %63 : vector<8x20x20xf32> to vector<8x20x20xbf16>
    %cst_35 = arith.constant dense<0.000000e+00> : vector<8x20x8xf32>
    %65 = tpu.matmul %64, %50, %cst_35 {dimension_numbers = #tpu.dot_dimension_numbers<[2], [1], [1], [2], [0, 0, 0, 1, 1, 2], [0], [0]>} : vector<8x20x20xbf16>, vector<8x20x8xbf16>, vector<8x20x8xf32> -> vector<8x20x8xf32>
    %66 = arith.truncf %65 : vector<8x20x8xf32> to vector<8x20x8xbf16>
    %cst_36 = arith.constant dense<0.000000e+00> : vector<8x20x64xf32>
    %67 = tpu.matmul %66, %11, %cst_36 {dimension_numbers = #tpu.dot_dimension_numbers<[2], [1], [1], [2], [0, 0, 0, 1, 1, 2], [0], [0]>} : vector<8x20x8xbf16>, vector<8x8x64xbf16>, vector<8x20x64xf32> -> vector<8x20x64xf32>
    %cst_37 = arith.constant dense<0.000000e+00> : vector<20x64xf32>
    %68 = vector.multi_reduction <add>, %67, %cst_37 [0] : vector<8x20x64xf32> to vector<20x64xf32>
    %69 = vector.extract_strided_slice %43 {offsets = [0, 20, 0], sizes = [8, 20, 8], strides = [1, 1, 1]} : vector<8x40x8xbf16> to vector<8x20x8xbf16>
    %70 = vector.extract_strided_slice %45 {offsets = [0, 20, 0], sizes = [8, 20, 8], strides = [1, 1, 1]} : vector<8x40x8xbf16> to vector<8x20x8xbf16>
    %71 = vector.extract_strided_slice %47 {offsets = [0, 20, 0], sizes = [8, 20, 8], strides = [1, 1, 1]} : vector<8x40x8xbf16> to vector<8x20x8xbf16>
    %cst_38 = arith.constant dense<0.000000e+00> : vector<8x20x20xf32>
    %72 = tpu.matmul %69, %70, %cst_38 {dimension_numbers = #tpu.dot_dimension_numbers<[2], [2], [1], [1], [0, 0, 0, 1, 1, 1], [0], [0]>} : vector<8x20x8xbf16>, vector<8x20x8xbf16>, vector<8x20x20xf32> -> vector<8x20x20xf32>
    %cst_39 = arith.constant 0.353553385 : f32
    %73 = vector.broadcast %cst_39 : f32 to vector<8x20x20xf32>
    %74 = arith.mulf %72, %73 : vector<8x20x20xf32>
    %cst_40 = arith.constant dense<0xFF800000> : vector<8x20xf32>
    %75 = vector.multi_reduction <maximumf>, %74, %cst_40 [2] : vector<8x20x20xf32> to vector<8x20xf32>
    %76 = vector.shape_cast %75 : vector<8x20xf32> to vector<8x20x1xf32>
    %77 = vector.broadcast %76 : vector<8x20x1xf32> to vector<8x20x20xf32>
    %78 = arith.subf %74, %77 : vector<8x20x20xf32>
    %79 = math.exp %78 : vector<8x20x20xf32>
    %cst_41 = arith.constant dense<0.000000e+00> : vector<8x20xf32>
    %80 = vector.multi_reduction <add>, %79, %cst_41 [2] : vector<8x20x20xf32> to vector<8x20xf32>
    %81 = vector.shape_cast %80 : vector<8x20xf32> to vector<8x20x1xf32>
    %82 = tpu.reciprocal %81 {approx = true} : vector<8x20x1xf32> -> vector<8x20x1xf32>
    %83 = vector.broadcast %82 : vector<8x20x1xf32> to vector<8x20x20xf32>
    %84 = arith.mulf %79, %83 : vector<8x20x20xf32>
    %85 = arith.truncf %84 : vector<8x20x20xf32> to vector<8x20x20xbf16>
    %cst_42 = arith.constant dense<0.000000e+00> : vector<8x20x8xf32>
    %86 = tpu.matmul %85, %71, %cst_42 {dimension_numbers = #tpu.dot_dimension_numbers<[2], [1], [1], [2], [0, 0, 0, 1, 1, 2], [0], [0]>} : vector<8x20x20xbf16>, vector<8x20x8xbf16>, vector<8x20x8xf32> -> vector<8x20x8xf32>
    %87 = arith.truncf %86 : vector<8x20x8xf32> to vector<8x20x8xbf16>
    %cst_43 = arith.constant dense<0.000000e+00> : vector<8x20x64xf32>
    %88 = tpu.matmul %87, %11, %cst_43 {dimension_numbers = #tpu.dot_dimension_numbers<[2], [1], [1], [2], [0, 0, 0, 1, 1, 2], [0], [0]>} : vector<8x20x8xbf16>, vector<8x8x64xbf16>, vector<8x20x64xf32> -> vector<8x20x64xf32>
    %cst_44 = arith.constant dense<0.000000e+00> : vector<20x64xf32>
    %89 = vector.multi_reduction <add>, %88, %cst_44 [0] : vector<8x20x64xf32> to vector<20x64xf32>
    %90 = tpu.concatenate %68, %89 in 0 : vector<20x64xf32>, vector<20x64xf32> -> vector<40x64xf32>
    %c0_45 = arith.constant 0 : index
    %c0_46 = arith.constant 0 : index
    %c0_47 = arith.constant 0 : index
    %91 = vector.load %arg8[%c0_45, %c0_46, %c0_47] : memref<1x1x64xf32, #tpu.memory_space<vmem>>, vector<1x1x64xf32>
    %92 = vector.shape_cast %91 : vector<1x1x64xf32> to vector<1x64xf32>
    %93 = vector.broadcast %92 : vector<1x64xf32> to vector<40x64xf32>
    %94 = arith.addf %90, %93 : vector<40x64xf32>
    %95 = arith.addf %3, %94 : vector<40x64xf32>
    %c0_48 = arith.constant 0 : index
    %c0_49 = arith.constant 0 : index
    %c0_50 = arith.constant 0 : index
    %96 = vector.load %arg9[%c0_48, %c0_49, %c0_50] : memref<1x1x64xf32, #tpu.memory_space<vmem>>, vector<1x1x64xf32>
    %97 = vector.shape_cast %96 : vector<1x1x64xf32> to vector<1x64xf32>
    %c0_51 = arith.constant 0 : index
    %c0_52 = arith.constant 0 : index
    %c0_53 = arith.constant 0 : index
    %98 = vector.load %arg10[%c0_51, %c0_52, %c0_53] : memref<1x1x64xf32, #tpu.memory_space<vmem>>, vector<1x1x64xf32>
    %99 = vector.shape_cast %98 : vector<1x1x64xf32> to vector<1x64xf32>
    %cst_54 = arith.constant dense<0.000000e+00> : vector<40xf32>
    %100 = vector.multi_reduction <add>, %95, %cst_54 [1] : vector<40x64xf32> to vector<40xf32>
    %101 = vector.shape_cast %100 : vector<40xf32> to vector<40x1xf32>
    %cst_55 = arith.constant 6.400000e+01 : f32
    %102 = vector.broadcast %cst_55 : f32 to vector<40x1xf32>
    %103 = arith.divf %101, %102 : vector<40x1xf32>
    %104 = vector.broadcast %103 : vector<40x1xf32> to vector<40x64xf32>
    %105 = arith.subf %95, %104 : vector<40x64xf32>
    %106 = arith.mulf %105, %105 : vector<40x64xf32>
    %cst_56 = arith.constant dense<0.000000e+00> : vector<40xf32>
    %107 = vector.multi_reduction <add>, %106, %cst_56 [1] : vector<40x64xf32> to vector<40xf32>
    %108 = vector.shape_cast %107 : vector<40xf32> to vector<40x1xf32>
    %cst_57 = arith.constant 6.400000e+01 : f32
    %109 = vector.broadcast %cst_57 : f32 to vector<40x1xf32>
    %110 = arith.divf %108, %109 : vector<40x1xf32>
    %111 = vector.broadcast %103 : vector<40x1xf32> to vector<40x64xf32>
    %112 = arith.subf %95, %111 : vector<40x64xf32>
    %cst_58 = arith.constant 9.99999974E-6 : f32
    %113 = vector.broadcast %cst_58 : f32 to vector<40x1xf32>
    %114 = arith.addf %110, %113 : vector<40x1xf32>
    %115 = math.rsqrt %114 : vector<40x1xf32>
    %116 = vector.broadcast %115 : vector<40x1xf32> to vector<40x64xf32>
    %117 = arith.mulf %112, %116 : vector<40x64xf32>
    %118 = vector.broadcast %97 : vector<1x64xf32> to vector<40x64xf32>
    %119 = arith.mulf %117, %118 : vector<40x64xf32>
    %120 = vector.broadcast %99 : vector<1x64xf32> to vector<40x64xf32>
    %121 = arith.addf %119, %120 : vector<40x64xf32>
    %122 = arith.truncf %121 : vector<40x64xf32> to vector<40x64xbf16>
    %c0_59 = arith.constant 0 : index
    %c0_60 = arith.constant 0 : index
    %c0_61 = arith.constant 0 : index
    %123 = vector.load %arg11[%c0_59, %c0_60, %c0_61] : memref<1x64x128xbf16, #tpu.memory_space<vmem>>, vector<1x64x128xbf16>
    %124 = vector.shape_cast %123 : vector<1x64x128xbf16> to vector<64x128xbf16>
    %cst_62 = arith.constant dense<0.000000e+00> : vector<40x128xf32>
    %125 = tpu.matmul %122, %124, %cst_62 {dimension_numbers = #tpu.dot_dimension_numbers<[1], [0], [0], [1], [0, 0, 1, 1], [], []>} : vector<40x64xbf16>, vector<64x128xbf16>, vector<40x128xf32> -> vector<40x128xf32>
    %c0_63 = arith.constant 0 : index
    %c0_64 = arith.constant 0 : index
    %c0_65 = arith.constant 0 : index
    %126 = vector.load %arg12[%c0_63, %c0_64, %c0_65] : memref<1x1x128xf32, #tpu.memory_space<vmem>>, vector<1x1x128xf32>
    %127 = vector.shape_cast %126 : vector<1x1x128xf32> to vector<1x128xf32>
    %128 = vector.broadcast %127 : vector<1x128xf32> to vector<40x128xf32>
    %129 = arith.addf %125, %128 : vector<40x128xf32>
    %cst_66 = arith.constant 0.000000e+00 : f32
    %130 = vector.broadcast %cst_66 : f32 to vector<40x128xf32>
    %131 = arith.maximumf %129, %130 : vector<40x128xf32>
    %132 = arith.truncf %131 : vector<40x128xf32> to vector<40x128xbf16>
    %c0_67 = arith.constant 0 : index
    %c0_68 = arith.constant 0 : index
    %c0_69 = arith.constant 0 : index
    %133 = vector.load %arg13[%c0_67, %c0_68, %c0_69] : memref<1x128x64xbf16, #tpu.memory_space<vmem>>, vector<1x128x64xbf16>
    %134 = vector.shape_cast %133 : vector<1x128x64xbf16> to vector<128x64xbf16>
    %cst_70 = arith.constant dense<0.000000e+00> : vector<40x64xf32>
    %135 = tpu.matmul %132, %134, %cst_70 {dimension_numbers = #tpu.dot_dimension_numbers<[1], [0], [0], [1], [0, 0, 1, 1], [], []>} : vector<40x128xbf16>, vector<128x64xbf16>, vector<40x64xf32> -> vector<40x64xf32>
    %c0_71 = arith.constant 0 : index
    %c0_72 = arith.constant 0 : index
    %c0_73 = arith.constant 0 : index
    %136 = vector.load %arg14[%c0_71, %c0_72, %c0_73] : memref<1x1x64xf32, #tpu.memory_space<vmem>>, vector<1x1x64xf32>
    %137 = vector.shape_cast %136 : vector<1x1x64xf32> to vector<1x64xf32>
    %138 = vector.broadcast %137 : vector<1x64xf32> to vector<40x64xf32>
    %139 = arith.addf %135, %138 : vector<40x64xf32>
    %140 = arith.addf %95, %139 : vector<40x64xf32>
    %c0_74 = arith.constant 0 : index
    %c0_75 = arith.constant 0 : index
    %141 = vector.load %arg15[%c0_74, %c0_75] : memref<40x64xf32, #tpu.memory_space<vmem>>, vector<40x64xf32>
    tpu.vector_store %arg15[%c0_74, %c0_75], %140 {strides = array<i32>} : memref<40x64xf32, #tpu.memory_space<vmem>>, vector<40x64xf32>,
    return
  }
  func.func @transform_0(%arg0: i32) -> (i32, i32) {
    %c0_i32 = arith.constant 0 : i32
    %c0_i32_0 = arith.constant 0 : i32
    %c0_i32_1 = arith.constant 0 : i32
    return %c0_i32, %c0_i32_0 : i32, i32
  }
  func.func @transform_1(%arg0: i32) -> (i32, i32, i32) {
    %c0_i32 = arith.constant 0 : i32
    %c0_i32_0 = arith.constant 0 : i32
    %c0_i32_1 = arith.constant 0 : i32
    return %arg0, %c0_i32, %c0_i32_0 : i32, i32, i32
  }
  func.func @transform_2(%arg0: i32) -> (i32, i32, i32) {
    %c0_i32 = arith.constant 0 : i32
    %c0_i32_0 = arith.constant 0 : i32
    %c0_i32_1 = arith.constant 0 : i32
    return %arg0, %c0_i32, %c0_i32_0 : i32, i32, i32
  }
  func.func @transform_3(%arg0: i32) -> (i32, i32, i32, i32) {
    %c0_i32 = arith.constant 0 : i32
    %c0_i32_0 = arith.constant 0 : i32
    %c0_i32_1 = arith.constant 0 : i32
    %c0_i32_2 = arith.constant 0 : i32
    return %arg0, %c0_i32, %c0_i32_0, %c0_i32_1 : i32, i32, i32, i32
  }
  func.func @transform_4(%arg0: i32) -> (i32, i32, i32, i32) {
    %c0_i32 = arith.constant 0 : i32
    %c0_i32_0 = arith.constant 0 : i32
    %c0_i32_1 = arith.constant 0 : i32
    %c0_i32_2 = arith.constant 0 : i32
    return %arg0, %c0_i32, %c0_i32_0, %c0_i32_1 : i32, i32, i32, i32
  }
  func.func @transform_5(%arg0: i32) -> (i32, i32, i32, i32) {
    %c0_i32 = arith.constant 0 : i32
    %c0_i32_0 = arith.constant 0 : i32
    %c0_i32_1 = arith.constant 0 : i32
    %c0_i32_2 = arith.constant 0 : i32
    return %arg0, %c0_i32, %c0_i32_0, %c0_i32_1 : i32, i32, i32, i32
  }
  func.func @transform_6(%arg0: i32) -> (i32, i32, i32, i32) {
    %c0_i32 = arith.constant 0 : i32
    %c0_i32_0 = arith.constant 0 : i32
    %c0_i32_1 = arith.constant 0 : i32
    %c0_i32_2 = arith.constant 0 : i32
    return %arg0, %c0_i32, %c0_i32_0, %c0_i32_1 : i32, i32, i32, i32
  }
  func.func @transform_7(%arg0: i32) -> (i32, i32, i32) {
    %c0_i32 = arith.constant 0 : i32
    %c0_i32_0 = arith.constant 0 : i32
    %c0_i32_1 = arith.constant 0 : i32
    return %arg0, %c0_i32, %c0_i32_0 : i32, i32, i32
  }
  func.func @transform_8(%arg0: i32) -> (i32, i32, i32) {
    %c0_i32 = arith.constant 0 : i32
    %c0_i32_0 = arith.constant 0 : i32
    %c0_i32_1 = arith.constant 0 : i32
    return %arg0, %c0_i32, %c0_i32_0 : i32, i32, i32
  }
  func.func @transform_9(%arg0: i32) -> (i32, i32, i32) {
    %c0_i32 = arith.constant 0 : i32
    %c0_i32_0 = arith.constant 0 : i32
    %c0_i32_1 = arith.constant 0 : i32
    return %arg0, %c0_i32, %c0_i32_0 : i32, i32, i32
  }
  func.func @transform_10(%arg0: i32) -> (i32, i32, i32) {
    %c0_i32 = arith.constant 0 : i32
    %c0_i32_0 = arith.constant 0 : i32
    %c0_i32_1 = arith.constant 0 : i32
    return %arg0, %c0_i32, %c0_i32_0 : i32, i32, i32
  }
  func.func @transform_11(%arg0: i32) -> (i32, i32, i32) {
    %c0_i32 = arith.constant 0 : i32
    %c0_i32_0 = arith.constant 0 : i32
    %c0_i32_1 = arith.constant 0 : i32
    return %arg0, %c0_i32, %c0_i32_0 : i32, i32, i32
  }
  func.func @transform_12(%arg0: i32) -> (i32, i32, i32) {
    %c0_i32 = arith.constant 0 : i32
    %c0_i32_0 = arith.constant 0 : i32
    %c0_i32_1 = arith.constant 0 : i32
    return %arg0, %c0_i32, %c0_i32_0 : i32, i32, i32
  }
  func.func @transform_13(%arg0: i32) -> (i32, i32, i32) {
    %c0_i32 = arith.constant 0 : i32
    %c0_i32_0 = arith.constant 0 : i32
    %c0_i32_1 = arith.constant 0 : i32
    return %arg0, %c0_i32, %c0_i32_0 : i32, i32, i32
  }
  func.func @transform_14(%arg0: i32) -> (i32, i32) {
    %c0_i32 = arith.constant 0 : i32
    %c0_i32_0 = arith.constant 0 : i32
    %c0_i32_1 = arith.constant 0 : i32
    return %c0_i32, %c0_i32_0 : i32, i32
  }
}

</mosaic_0001>

<llo_original>
// kernel: tpu_custom_call.1
$region0: #{tpu_custom_call.1}
  #allocation0 [shape = 'u32[]', space=smem, size = 0x4, offset = 0x4, fixed_abs, tag = 'smem constant byte address 0x4 - core index']
  #allocation1 [shape = 'u32[144,128]{1,0:T(1,128)}', space=vmem, size = 0x12000, scoped, tag = 'internal scratch']
  %s0 = inlined_call_operand.vmem [shape: f32[40,64], index: 0, kind: input, shape index: {}]
  %s1 = inlined_call_operand.vmem [shape: f32[4,1,64], index: 1, kind: input, shape index: {}]
  %s2 = inlined_call_operand.vmem [shape: f32[4,1,64], index: 2, kind: input, shape index: {}]
  %s3 = inlined_call_operand.vmem [shape: bf16[4,8,64,8], index: 3, kind: input, shape index: {}]
  %s4 = inlined_call_operand.vmem [shape: bf16[4,8,64,8], index: 4, kind: input, shape index: {}]
  %s5 = inlined_call_operand.vmem [shape: bf16[4,8,64,8], index: 5, kind: input, shape index: {}]
  %s6 = inlined_call_operand.vmem [shape: bf16[4,8,8,64], index: 6, kind: input, shape index: {}]
  %s7 = inlined_call_operand.vmem [shape: f32[4,1,64], index: 7, kind: input, shape index: {}]
  %s8 = inlined_call_operand.vmem [shape: f32[4,1,64], index: 8, kind: input, shape index: {}]
  %s9 = inlined_call_operand.vmem [shape: f32[4,1,64], index: 9, kind: input, shape index: {}]
  %s10 = inlined_call_operand.vmem [shape: bf16[4,64,128], index: 10, kind: input, shape index: {}]
  %s11 = inlined_call_operand.vmem [shape: f32[4,1,128], index: 11, kind: input, shape index: {}]
  %s12 = inlined_call_operand.vmem [shape: bf16[4,128,64], index: 12, kind: input, shape index: {}]
  %s13 = inlined_call_operand.vmem [shape: f32[4,1,64], index: 13, kind: input, shape index: {}]
  %s14 = inlined_call_operand.hbm [shape: f32[40,64], index: 14, kind: output, shape index: {}]
  %s15 = sld [smem:[#allocation0]]
  $region93: #{tpu_custom_call.1} parent=0
    _
  %s17 = ssub.s32 1, %s15
  %s18 = scalar_select 0, %s17, %s15
  $region1: #{tpu_custom_call.1} parent=0
    #allocation2 [shape = 'u8[20480]{0}', space=vmem, size = 0x5000, scoped, tag = 'output window, operand 0, single buffered']
    #allocation3 [shape = 's32[2]{0}', space=sflag, size = 0x8, scoped, tag = 'scoped memory for tpu_custom_call.1']
    %19 = vsyncpa [#allocation3], 0
    loop: start=0, step=1, limit=6
    $region2: #{tpu_custom_call.1} parent=1 // loop_pre_header
      _
    $region3: #{tpu_custom_call.1} parent=1 // loop_header
      %s21 = sphi 0, %s25
      %p22 = scmp.ge.s32.totalorder %s21, 6
      %s29 = sphi 0, %s29
      %s31 = sphi 0, %s29
      %s32 = sphi 0, %s31
      %s46 = sphi 0, %s32
      %s52 = sphi 0, %s54
      %s55 = sphi 0, %s52
      %s56 = sphi 0, %s55
      %s72 = sphi 0, %s56
      %s78 = sphi 0, %s80
      %s81 = sphi 0, %s78
      %s82 = sphi 0, %s81
      %s98 = sphi 0, %s82
      %s104 = sphi 0, %s106
      %s107 = sphi 0, %s104
      %s108 = sphi 0, %s107
      %s124 = sphi 0, %s108
      %s130 = sphi 0, %s132
      %s133 = sphi 0, %s130
      %s134 = sphi 0, %s133
      %s150 = sphi 0, %s134
      %s156 = sphi 0, %s158
      %s159 = sphi 0, %s156
      %s160 = sphi 0, %s159
      %s176 = sphi 0, %s160
      %s182 = sphi 0, %s184
      %s185 = sphi 0, %s182
      %s186 = sphi 0, %s185
      %s202 = sphi 0, %s186
      %s208 = sphi 0, %s210
      %s211 = sphi 0, %s208
      %s212 = sphi 0, %s211
      %s228 = sphi 0, %s212
      %s234 = sphi 0, %s236
      %s237 = sphi 0, %s234
      %s238 = sphi 0, %s237
      %s254 = sphi 0, %s238
      %s260 = sphi 0, %s262
      %s263 = sphi 0, %s260
      %s264 = sphi 0, %s263
      %s280 = sphi 0, %s264
      %s286 = sphi 0, %s288
      %s289 = sphi 0, %s286
      %s290 = sphi 0, %s289
      %s306 = sphi 0, %s290
      %s312 = sphi 0, %s314
      %s315 = sphi 0, %s312
      %s316 = sphi 0, %s315
      %s332 = sphi 0, %s316
      %s338 = sphi 0, %s340
      %s341 = sphi 0, %s338
      %s342 = sphi 0, %s341
      %s358 = sphi 0, %s342
      %s364 = sphi 0, %s366
      %s367 = sphi 0, %s364
      %s368 = sphi 0, %s367
      %s384 = sphi 0, %s368
      %s388 = sphi 0, %s388
      %s390 = sphi 0, %s388
      %s391 = sphi 0, %s390
      %s405 = sphi 0, %s391
    $region4: #{tpu_custom_call.1} parent=1 // loop_header_branch
      %24 = sbr.rel (%p22) target = $region8
    $region5: #{tpu_custom_call.1} parent=1 // loop_body
      %s26 = ssub.s32 %s21, 1
      %s27 = ssub.s32 %s21, 2
      %s28 = sadd.s32 %s21, 1
      %s30 = sadd.s32 %s29, 1
      %p33 = scmp.eq.s32.totalorder %s21, 3
      %p34 = scmp.ne.s32.totalorder %s29, %s31
      %p35 = scmp.eq.s32.totalorder %s21, 0
      %p36 = por %p34, %p35
      %p37 = scmp.ne.s32.totalorder %s29, %s31
      %p38 = scmp.eq.s32.totalorder %s26, 3
      %p39 = por %p37, %p38
      %p40 = scmp.ne.s32.totalorder %s31, %s32
      %p41 = scmp.eq.s32.totalorder %s26, 0
      %p42 = por %p40, %p41
      %p43 = scmp.ne.s32.totalorder %s31, %s32
      %p44 = scmp.eq.s32.totalorder %s27, 3
      %p45 = por %p43, %p44
      %p47 = scmp.ne.s32.totalorder %s32, %s46
      %p48 = scmp.eq.s32.totalorder %s27, 0
      %p49 = por %p47, %p48
      %s50 = ssub.s32 %s21, %s28
      %p51 = scmp.eq.s32.totalorder %s50, 0
      %s53 = sadd.s32 %s52, 1
      %s54 = scalar_select %p51, %s52, %s53
      %p57 = pneg %p51
      %p58 = scmp.eq.s32.totalorder %s21, 3
      %p59 = por %p57, %p58
      %p60 = scmp.ne.s32.totalorder %s52, %s55
      %p61 = scmp.eq.s32.totalorder %s21, 0
      %p62 = por %p60, %p61
      %p63 = scmp.ne.s32.totalorder %s52, %s55
      %p64 = scmp.eq.s32.totalorder %s26, 3
      %p65 = por %p63, %p64
      %p66 = scmp.ne.s32.totalorder %s55, %s56
      %p67 = scmp.eq.s32.totalorder %s26, 0
      %p68 = por %p66, %p67
      %p69 = scmp.ne.s32.totalorder %s55, %s56
      %p70 = scmp.eq.s32.totalorder %s27, 3
      %p71 = por %p69, %p70
      %p73 = scmp.ne.s32.totalorder %s56, %s72
      %p74 = scmp.eq.s32.totalorder %s27, 0
      %p75 = por %p73, %p74
      %s76 = ssub.s32 %s21, %s28
      %p77 = scmp.eq.s32.totalorder %s76, 0
      %s79 = sadd.s32 %s78, 1
      %s80 = scalar_select %p77, %s78, %s79
      %p83 = pneg %p77
      %p84 = scmp.eq.s32.totalorder %s21, 3
      %p85 = por %p83, %p84
      %p86 = scmp.ne.s32.totalorder %s78, %s81
      %p87 = scmp.eq.s32.totalorder %s21, 0
      %p88 = por %p86, %p87
      %p89 = scmp.ne.s32.totalorder %s78, %s81
      %p90 = scmp.eq.s32.totalorder %s26, 3
      %p91 = por %p89, %p90
      %p92 = scmp.ne.s32.totalorder %s81, %s82
      %p93 = scmp.eq.s32.totalorder %s26, 0
      %p94 = por %p92, %p93
      %p95 = scmp.ne.s32.totalorder %s81, %s82
      %p96 = scmp.eq.s32.totalorder %s27, 3
      %p97 = por %p95, %p96
      %p99 = scmp.ne.s32.totalorder %s82, %s98
      %p100 = scmp.eq.s32.totalorder %s27, 0
      %p101 = por %p99, %p100
      %s102 = ssub.s32 %s21, %s28
      %p103 = scmp.eq.s32.totalorder %s102, 0
      %s105 = sadd.s32 %s104, 1
      %s106 = scalar_select %p103, %s104, %s105
      %p109 = pneg %p103
      %p110 = scmp.eq.s32.totalorder %s21, 3
      %p111 = por %p109, %p110
      %p112 = scmp.ne.s32.totalorder %s104, %s107
      %p113 = scmp.eq.s32.totalorder %s21, 0
      %p114 = por %p112, %p113
      %p115 = scmp.ne.s32.totalorder %s104, %s107
      %p116 = scmp.eq.s32.totalorder %s26, 3
      %p117 = por %p115, %p116
      %p118 = scmp.ne.s32.totalorder %s107, %s108
      %p119 = scmp.eq.s32.totalorder %s26, 0
      %p120 = por %p118, %p119
      %p121 = scmp.ne.s32.totalorder %s107, %s108
      %p122 = scmp.eq.s32.totalorder %s27, 3
      %p123 = por %p121, %p122
      %p125 = scmp.ne.s32.totalorder %s108, %s124
      %p126 = scmp.eq.s32.totalorder %s27, 0
      %p127 = por %p125, %p126
      %s128 = ssub.s32 %s21, %s28
      %p129 = scmp.eq.s32.totalorder %s128, 0
      %s131 = sadd.s32 %s130, 1
      %s132 = scalar_select %p129, %s130, %s131
      %p135 = pneg %p129
      %p136 = scmp.eq.s32.totalorder %s21, 3
      %p137 = por %p135, %p136
      %p138 = scmp.ne.s32.totalorder %s130, %s133
      %p139 = scmp.eq.s32.totalorder %s21, 0
      %p140 = por %p138, %p139
      %p141 = scmp.ne.s32.totalorder %s130, %s133
      %p142 = scmp.eq.s32.totalorder %s26, 3
      %p143 = por %p141, %p142
      %p144 = scmp.ne.s32.totalorder %s133, %s134
      %p145 = scmp.eq.s32.totalorder %s26, 0
      %p146 = por %p144, %p145
      %p147 = scmp.ne.s32.totalorder %s133, %s134
      %p148 = scmp.eq.s32.totalorder %s27, 3
      %p149 = por %p147, %p148
      %p151 = scmp.ne.s32.totalorder %s134, %s150
      %p152 = scmp.eq.s32.totalorder %s27, 0
      %p153 = por %p151, %p152
      %s154 = ssub.s32 %s21, %s28
      %p155 = scmp.eq.s32.totalorder %s154, 0
      %s157 = sadd.s32 %s156, 1
      %s158 = scalar_select %p155, %s156, %s157
      %p161 = pneg %p155
      %p162 = scmp.eq.s32.totalorder %s21, 3
      %p163 = por %p161, %p162
      %p164 = scmp.ne.s32.totalorder %s156, %s159
      %p165 = scmp.eq.s32.totalorder %s21, 0
      %p166 = por %p164, %p165
      %p167 = scmp.ne.s32.totalorder %s156, %s159
      %p168 = scmp.eq.s32.totalorder %s26, 3
      %p169 = por %p167, %p168
      %p170 = scmp.ne.s32.totalorder %s159, %s160
      %p171 = scmp.eq.s32.totalorder %s26, 0
      %p172 = por %p170, %p171
      %p173 = scmp.ne.s32.totalorder %s159, %s160
      %p174 = scmp.eq.s32.totalorder %s27, 3
      %p175 = por %p173, %p174
      %p177 = scmp.ne.s32.totalorder %s160, %s176
      %p178 = scmp.eq.s32.totalorder %s27, 0
      %p179 = por %p177, %p178
      %s180 = ssub.s32 %s21, %s28
      %p181 = scmp.eq.s32.totalorder %s180, 0
      %s183 = sadd.s32 %s182, 1
      %s184 = scalar_select %p181, %s182, %s183
      %p187 = pneg %p181
      %p188 = scmp.eq.s32.totalorder %s21, 3
      %p189 = por %p187, %p188
      %p190 = scmp.ne.s32.totalorder %s182, %s185
      %p191 = scmp.eq.s32.totalorder %s21, 0
      %p192 = por %p190, %p191
      %p193 = scmp.ne.s32.totalorder %s182, %s185
      %p194 = scmp.eq.s32.totalorder %s26, 3
      %p195 = por %p193, %p194
      %p196 = scmp.ne.s32.totalorder %s185, %s186
      %p197 = scmp.eq.s32.totalorder %s26, 0
      %p198 = por %p196, %p197
      %p199 = scmp.ne.s32.totalorder %s185, %s186
      %p200 = scmp.eq.s32.totalorder %s27, 3
      %p201 = por %p199, %p200
      %p203 = scmp.ne.s32.totalorder %s186, %s202
      %p204 = scmp.eq.s32.totalorder %s27, 0
      %p205 = por %p203, %p204
      %s206 = ssub.s32 %s21, %s28
      %p207 = scmp.eq.s32.totalorder %s206, 0
      %s209 = sadd.s32 %s208, 1
      %s210 = scalar_select %p207, %s208, %s209
      %p213 = pneg %p207
      %p214 = scmp.eq.s32.totalorder %s21, 3
      %p215 = por %p213, %p214
      %p216 = scmp.ne.s32.totalorder %s208, %s211
      %p217 = scmp.eq.s32.totalorder %s21, 0
      %p218 = por %p216, %p217
      %p219 = scmp.ne.s32.totalorder %s208, %s211
      %p220 = scmp.eq.s32.totalorder %s26, 3
      %p221 = por %p219, %p220
      %p222 = scmp.ne.s32.totalorder %s211, %s212
      %p223 = scmp.eq.s32.totalorder %s26, 0
      %p224 = por %p222, %p223
      %p225 = scmp.ne.s32.totalorder %s211, %s212
      %p226 = scmp.eq.s32.totalorder %s27, 3
      %p227 = por %p225, %p226
      %p229 = scmp.ne.s32.totalorder %s212, %s228
      %p230 = scmp.eq.s32.totalorder %s27, 0
      %p231 = por %p229, %p230
      %s232 = ssub.s32 %s21, %s28
      %p233 = scmp.eq.s32.totalorder %s232, 0
      %s235 = sadd.s32 %s234, 1
      %s236 = scalar_select %p233, %s234, %s235
      %p239 = pneg %p233
      %p240 = scmp.eq.s32.totalorder %s21, 3
      %p241 = por %p239, %p240
      %p242 = scmp.ne.s32.totalorder %s234, %s237
      %p243 = scmp.eq.s32.totalorder %s21, 0
      %p244 = por %p242, %p243
      %p245 = scmp.ne.s32.totalorder %s234, %s237
      %p246 = scmp.eq.s32.totalorder %s26, 3
      %p247 = por %p245, %p246
      %p248 = scmp.ne.s32.totalorder %s237, %s238
      %p249 = scmp.eq.s32.totalorder %s26, 0
      %p250 = por %p248, %p249
      %p251 = scmp.ne.s32.totalorder %s237, %s238
      %p252 = scmp.eq.s32.totalorder %s27, 3
      %p253 = por %p251, %p252
      %p255 = scmp.ne.s32.totalorder %s238, %s254
      %p256 = scmp.eq.s32.totalorder %s27, 0
      %p257 = por %p255, %p256
      %s258 = ssub.s32 %s21, %s28
      %p259 = scmp.eq.s32.totalorder %s258, 0
      %s261 = sadd.s32 %s260, 1
      %s262 = scalar_select %p259, %s260, %s261
      %p265 = pneg %p259
      %p266 = scmp.eq.s32.totalorder %s21, 3
      %p267 = por %p265, %p266
      %p268 = scmp.ne.s32.totalorder %s260, %s263
      %p269 = scmp.eq.s32.totalorder %s21, 0
      %p270 = por %p268, %p269
      %p271 = scmp.ne.s32.totalorder %s260, %s263
      %p272 = scmp.eq.s32.totalorder %s26, 3
      %p273 = por %p271, %p272
      %p274 = scmp.ne.s32.totalorder %s263, %s264
      %p275 = scmp.eq.s32.totalorder %s26, 0
      %p276 = por %p274, %p275
      %p277 = scmp.ne.s32.totalorder %s263, %s264
      %p278 = scmp.eq.s32.totalorder %s27, 3
      %p279 = por %p277, %p278
      %p281 = scmp.ne.s32.totalorder %s264, %s280
      %p282 = scmp.eq.s32.totalorder %s27, 0
      %p283 = por %p281, %p282
      %s284 = ssub.s32 %s21, %s28
      %p285 = scmp.eq.s32.totalorder %s284, 0
      %s287 = sadd.s32 %s286, 1
      %s288 = scalar_select %p285, %s286, %s287
      %p291 = pneg %p285
      %p292 = scmp.eq.s32.totalorder %s21, 3
      %p293 = por %p291, %p292
      %p294 = scmp.ne.s32.totalorder %s286, %s289
      %p295 = scmp.eq.s32.totalorder %s21, 0
      %p296 = por %p294, %p295
      %p297 = scmp.ne.s32.totalorder %s286, %s289
      %p298 = scmp.eq.s32.totalorder %s26, 3
      %p299 = por %p297, %p298
      %p300 = scmp.ne.s32.totalorder %s289, %s290
      %p301 = scmp.eq.s32.totalorder %s26, 0
      %p302 = por %p300, %p301
      %p303 = scmp.ne.s32.totalorder %s289, %s290
      %p304 = scmp.eq.s32.totalorder %s27, 3
      %p305 = por %p303, %p304
      %p307 = scmp.ne.s32.totalorder %s290, %s306
      %p308 = scmp.eq.s32.totalorder %s27, 0
      %p309 = por %p307, %p308
      %s310 = ssub.s32 %s21, %s28
      %p311 = scmp.eq.s32.totalorder %s310, 0
      %s313 = sadd.s32 %s312, 1
      %s314 = scalar_select %p311, %s312, %s313
      %p317 = pneg %p311
      %p318 = scmp.eq.s32.totalorder %s21, 3
      %p319 = por %p317, %p318
      %p320 = scmp.ne.s32.totalorder %s312, %s315
      %p321 = scmp.eq.s32.totalorder %s21, 0
      %p322 = por %p320, %p321
      %p323 = scmp.ne.s32.totalorder %s312, %s315
      %p324 = scmp.eq.s32.totalorder %s26, 3
      %p325 = por %p323, %p324
      %p326 = scmp.ne.s32.totalorder %s315, %s316
      %p327 = scmp.eq.s32.totalorder %s26, 0
      %p328 = por %p326, %p327
      %p329 = scmp.ne.s32.totalorder %s315, %s316
      %p330 = scmp.eq.s32.totalorder %s27, 3
      %p331 = por %p329, %p330
      %p333 = scmp.ne.s32.totalorder %s316, %s332
      %p334 = scmp.eq.s32.totalorder %s27, 0
      %p335 = por %p333, %p334
      %s336 = ssub.s32 %s21, %s28
      %p337 = scmp.eq.s32.totalorder %s336, 0
      %s339 = sadd.s32 %s338, 1
      %s340 = scalar_select %p337, %s338, %s339
      %p343 = pneg %p337
      %p344 = scmp.eq.s32.totalorder %s21, 3
      %p345 = por %p343, %p344
      %p346 = scmp.ne.s32.totalorder %s338, %s341
      %p347 = scmp.eq.s32.totalorder %s21, 0
      %p348 = por %p346, %p347
      %p349 = scmp.ne.s32.totalorder %s338, %s341
      %p350 = scmp.eq.s32.totalorder %s26, 3
      %p351 = por %p349, %p350
      %p352 = scmp.ne.s32.totalorder %s341, %s342
      %p353 = scmp.eq.s32.totalorder %s26, 0
      %p354 = por %p352, %p353
      %p355 = scmp.ne.s32.totalorder %s341, %s342
      %p356 = scmp.eq.s32.totalorder %s27, 3
      %p357 = por %p355, %p356
      %p359 = scmp.ne.s32.totalorder %s342, %s358
      %p360 = scmp.eq.s32.totalorder %s27, 0
      %p361 = por %p359, %p360
      %s362 = ssub.s32 %s21, %s28
      %p363 = scmp.eq.s32.totalorder %s362, 0
      %s365 = sadd.s32 %s364, 1
      %s366 = scalar_select %p363, %s364, %s365
      %p369 = pneg %p363
      %p370 = scmp.eq.s32.totalorder %s21, 3
      %p371 = por %p369, %p370
      %p372 = scmp.ne.s32.totalorder %s364, %s367
      %p373 = scmp.eq.s32.totalorder %s21, 0
      %p374 = por %p372, %p373
      %p375 = scmp.ne.s32.totalorder %s364, %s367
      %p376 = scmp.eq.s32.totalorder %s26, 3
      %p377 = por %p375, %p376
      %p378 = scmp.ne.s32.totalorder %s367, %s368
      %p379 = scmp.eq.s32.totalorder %s26, 0
      %p380 = por %p378, %p379
      %p381 = scmp.ne.s32.totalorder %s367, %s368
      %p382 = scmp.eq.s32.totalorder %s27, 3
      %p383 = por %p381, %p382
      %p385 = scmp.ne.s32.totalorder %s368, %s384
      %p386 = scmp.eq.s32.totalorder %s27, 0
      %p387 = por %p385, %p386
      %s389 = sadd.s32 %s388, 1
      %p392 = scmp.eq.s32.totalorder %s21, 3
      %p393 = scmp.ne.s32.totalorder %s388, %s390
      %p394 = scmp.eq.s32.totalorder %s21, 0
      %p395 = por %p393, %p394
      %p396 = scmp.ne.s32.totalorder %s388, %s390
      %p397 = scmp.eq.s32.totalorder %s26, 3
      %p398 = por %p396, %p397
      %p399 = scmp.ne.s32.totalorder %s390, %s391
      %p400 = scmp.eq.s32.totalorder %s26, 0
      %p401 = por %p399, %p400
      %p402 = scmp.ne.s32.totalorder %s390, %s391
      %p403 = scmp.eq.s32.totalorder %s27, 3
      %p404 = por %p402, %p403
      %p406 = scmp.ne.s32.totalorder %s391, %s405
      %p407 = scmp.eq.s32.totalorder %s27, 0
      %p408 = por %p406, %p407
      %p409 = scmp.le.s32.totalorder 1, %s21
      %p410 = scmp.lt.s32.totalorder %s21, 5
      %p411 = pnand %p409, %p410
      %p412 = pneg %p411
      // Predicated region
      $region9: #{tpu_custom_call.1} parent=5 // pred_check
        _
      $region10: #{tpu_custom_call.1} parent=5 // pred_check_branch
        %414 = sbr.rel (%p411) target = $region12
      $region11: #{tpu_custom_call.1} parent=5 // pred_region
        %s415 = ssub.s32 %s21, 1
        // Predicated region
        $region13: #{tpu_custom_call.1} parent=11 // pred_check
          %p416 = pneg %p42
        $region14: #{tpu_custom_call.1} parent=11 // pred_check_branch
          %418 = sbr.rel (%p416) target = $region16
        $region15: #{tpu_custom_call.1} parent=11 // pred_region
          _
        $region16: #{tpu_custom_call.1} parent=11 // pred_fallthru
          _
      $region12: #{tpu_custom_call.1} parent=5 // pred_fallthru
        _
      %p419 = scmp.lt.s32.totalorder %s21, 4
      // Predicated region
      $region17: #{tpu_custom_call.1} parent=5 // pred_check
        %p420 = pneg %p419
      $region18: #{tpu_custom_call.1} parent=5 // pred_check_branch
        %422 = sbr.rel (%p420) target = $region20
      $region19: #{tpu_custom_call.1} parent=5 // pred_region
        // Predicated region
        $region21: #{tpu_custom_call.1} parent=19 // pred_check
          %p423 = pneg %p62
        $region22: #{tpu_custom_call.1} parent=19 // pred_check_branch
          %425 = sbr.rel (%p423) target = $region24
        $region23: #{tpu_custom_call.1} parent=19 // pred_region
          %p426 = scmp.lt.s32.totalorder %s21, 3
          %s427 = scalar_select %p426, %s21, 3
          %s428 = scalar_lea.vmem %s1, %s427
        $region24: #{tpu_custom_call.1} parent=19 // pred_fallthru
          _
        // Predicated region
        $region25: #{tpu_custom_call.1} parent=19 // pred_check
          %p429 = pneg %p88
        $region26: #{tpu_custom_call.1} parent=19 // pred_check_branch
          %431 = sbr.rel (%p429) target = $region28
        $region27: #{tpu_custom_call.1} parent=19 // pred_region
          %p432 = scmp.lt.s32.totalorder %s21, 3
          %s433 = scalar_select %p432, %s21, 3
          %s434 = scalar_lea.vmem %s2, %s433
        $region28: #{tpu_custom_call.1} parent=19 // pred_fallthru
          _
        // Predicated region
        $region29: #{tpu_custom_call.1} parent=19 // pred_check
          %p435 = pneg %p114
        $region30: #{tpu_custom_call.1} parent=19 // pred_check_branch
          %437 = sbr.rel (%p435) target = $region32
        $region31: #{tpu_custom_call.1} parent=19 // pred_region
          %p438 = scmp.lt.s32.totalorder %s21, 3
          %s439 = scalar_select %p438, %s21, 3
          %s440 = smul.addr %s439, 64
          %s441 = smul.addr %s440, 4
          %s442 = scalar_lea.vmem %s3, %s441
        $region32: #{tpu_custom_call.1} parent=19 // pred_fallthru
          _
        // Predicated region
        $region33: #{tpu_custom_call.1} parent=19 // pred_check
          %p443 = pneg %p140
        $region34: #{tpu_custom_call.1} parent=19 // pred_check_branch
          %445 = sbr.rel (%p443) target = $region36
        $region35: #{tpu_custom_call.1} parent=19 // pred_region
          %p446 = scmp.lt.s32.totalorder %s21, 3
          %s447 = scalar_select %p446, %s21, 3
          %s448 = smul.addr %s447, 64
          %s449 = smul.addr %s448, 4
          %s450 = scalar_lea.vmem %s4, %s449
        $region36: #{tpu_custom_call.1} parent=19 // pred_fallthru
          _
        // Predicated region
        $region37: #{tpu_custom_call.1} parent=19 // pred_check
          %p451 = pneg %p166
        $region38: #{tpu_custom_call.1} parent=19 // pred_check_branch
          %453 = sbr.rel (%p451) target = $region40
        $region39: #{tpu_custom_call.1} parent=19 // pred_region
          %p454 = scmp.lt.s32.totalorder %s21, 3
          %s455 = scalar_select %p454, %s21, 3
          %s456 = smul.addr %s455, 64
          %s457 = smul.addr %s456, 4
          %s458 = scalar_lea.vmem %s5, %s457
        $region40: #{tpu_custom_call.1} parent=19 // pred_fallthru
          _
        // Predicated region
        $region41: #{tpu_custom_call.1} parent=19 // pred_check
          %p459 = pneg %p192
        $region42: #{tpu_custom_call.1} parent=19 // pred_check_branch
          %461 = sbr.rel (%p459) target = $region44
        $region43: #{tpu_custom_call.1} parent=19 // pred_region
          %p462 = scmp.lt.s32.totalorder %s21, 3
          %s463 = scalar_select %p462, %s21, 3
          %s464 = smul.addr %s463, 8
          %s465 = smul.addr %s464, 4
          %s466 = scalar_lea.vmem %s6, %s465
        $region44: #{tpu_custom_call.1} parent=19 // pred_fallthru
          _
        // Predicated region
        $region45: #{tpu_custom_call.1} parent=19 // pred_check
          %p467 = pneg %p218
        $region46: #{tpu_custom_call.1} parent=19 // pred_check_branch
          %469 = sbr.rel (%p467) target = $region48
        $region47: #{tpu_custom_call.1} parent=19 // pred_region
          %p470 = scmp.lt.s32.totalorder %s21, 3
          %s471 = scalar_select %p470, %s21, 3
          %s472 = scalar_lea.vmem %s7, %s471
        $region48: #{tpu_custom_call.1} parent=19 // pred_fallthru
          _
        // Predicated region
        $region49: #{tpu_custom_call.1} parent=19 // pred_check
          %p473 = pneg %p244
        $region50: #{tpu_custom_call.1} parent=19 // pred_check_branch
          %475 = sbr.rel (%p473) target = $region52
        $region51: #{tpu_custom_call.1} parent=19 // pred_region
          %p476 = scmp.lt.s32.totalorder %s21, 3
          %s477 = scalar_select %p476, %s21, 3
          %s478 = scalar_lea.vmem %s8, %s477
        $region52: #{tpu_custom_call.1} parent=19 // pred_fallthru
          _
        // Predicated region
        $region53: #{tpu_custom_call.1} parent=19 // pred_check
          %p479 = pneg %p270
        $region54: #{tpu_custom_call.1} parent=19 // pred_check_branch
          %481 = sbr.rel (%p479) target = $region56
        $region55: #{tpu_custom_call.1} parent=19 // pred_region
          %p482 = scmp.lt.s32.totalorder %s21, 3
          %s483 = scalar_select %p482, %s21, 3
          %s484 = scalar_lea.vmem %s9, %s483
        $region56: #{tpu_custom_call.1} parent=19 // pred_fallthru
          _
        // Predicated region
        $region57: #{tpu_custom_call.1} parent=19 // pred_check
          %p485 = pneg %p296
        $region58: #{tpu_custom_call.1} parent=19 // pred_check_branch
          %487 = sbr.rel (%p485) target = $region60
        $region59: #{tpu_custom_call.1} parent=19 // pred_region
          %p488 = scmp.lt.s32.totalorder %s21, 3
          %s489 = scalar_select %p488, %s21, 3
          %s490 = smul.addr %s489, 8
          %s491 = smul.addr %s490, 4
          %s492 = scalar_lea.vmem %s10, %s491
        $region60: #{tpu_custom_call.1} parent=19 // pred_fallthru
          _
        // Predicated region
        $region61: #{tpu_custom_call.1} parent=19 // pred_check
          %p493 = pneg %p322
        $region62: #{tpu_custom_call.1} parent=19 // pred_check_branch
          %495 = sbr.rel (%p493) target = $region64
        $region63: #{tpu_custom_call.1} parent=19 // pred_region
          %p496 = scmp.lt.s32.totalorder %s21, 3
          %s497 = scalar_select %p496, %s21, 3
          %s498 = scalar_lea.vmem %s11, %s497
        $region64: #{tpu_custom_call.1} parent=19 // pred_fallthru
          _
        // Predicated region
        $region65: #{tpu_custom_call.1} parent=19 // pred_check
          %p499 = pneg %p348
        $region66: #{tpu_custom_call.1} parent=19 // pred_check_branch
          %501 = sbr.rel (%p499) target = $region68
        $region67: #{tpu_custom_call.1} parent=19 // pred_region
          %p502 = scmp.lt.s32.totalorder %s21, 3
          %s503 = scalar_select %p502, %s21, 3
          %s504 = smul.addr %s503, 16
          %s505 = smul.addr %s504, 4
          %s506 = scalar_lea.vmem %s12, %s505
        $region68: #{tpu_custom_call.1} parent=19 // pred_fallthru
          _
        // Predicated region
        $region69: #{tpu_custom_call.1} parent=19 // pred_check
          %p507 = pneg %p374
        $region70: #{tpu_custom_call.1} parent=19 // pred_check_branch
          %509 = sbr.rel (%p507) target = $region72
        $region71: #{tpu_custom_call.1} parent=19 // pred_region
          %p510 = scmp.lt.s32.totalorder %s21, 3
          %s511 = scalar_select %p510, %s21, 3
          %s512 = scalar_lea.vmem %s13, %s511
        $region72: #{tpu_custom_call.1} parent=19 // pred_fallthru
          _
      $region20: #{tpu_custom_call.1} parent=5 // pred_fallthru
        _
      %p513 = scmp.le.s32.totalorder 1, %s21
      %p514 = scmp.lt.s32.totalorder %s21, 5
      %p515 = pnand %p513, %p514
      %p516 = pneg %p515
      // Predicated region
      $region73: #{tpu_custom_call.1} parent=5 // pred_check
        _
      $region74: #{tpu_custom_call.1} parent=5 // pred_check_branch
        %518 = sbr.rel (%p515) target = $region76
      $region75: #{tpu_custom_call.1} parent=5 // pred_region
        %s519 = ssub.s32 %s21, 1
        %p520 = pneg %p42
        %p521 = pneg %p39
        %p522 = scmp.lt.s32.totalorder %s26, 3
        %s523 = scalar_select %p522, %s26, 3
        %s524 = scalar_lea.vmem %s1, %s523
        %p525 = pneg %p68
        %p526 = pneg %p65
        %p527 = scmp.lt.s32.totalorder %s26, 3
        %s528 = scalar_select %p527, %s26, 3
        %s529 = scalar_lea.vmem %s2, %s528
        %p530 = pneg %p94
        %p531 = pneg %p91
        %p532 = scmp.lt.s32.totalorder %s26, 3
        %s533 = scalar_select %p532, %s26, 3
        %s534 = smul.addr %s533, 64
        %s535 = smul.addr %s534, 4
        %s536 = scalar_lea.vmem %s3, %s535
        %p537 = pneg %p120
        %p538 = pneg %p117
        %p539 = scmp.lt.s32.totalorder %s26, 3
        %s540 = scalar_select %p539, %s26, 3
        %s541 = smul.addr %s540, 64
        %s542 = smul.addr %s541, 4
        %s543 = scalar_lea.vmem %s4, %s542
        %p544 = pneg %p146
        %p545 = pneg %p143
        %p546 = scmp.lt.s32.totalorder %s26, 3
        %s547 = scalar_select %p546, %s26, 3
        %s548 = smul.addr %s547, 64
        %s549 = smul.addr %s548, 4
        %s550 = scalar_lea.vmem %s5, %s549
        %p551 = pneg %p172
        %p552 = pneg %p169
        %p553 = scmp.lt.s32.totalorder %s26, 3
        %s554 = scalar_select %p553, %s26, 3
        %s555 = smul.addr %s554, 8
        %s556 = smul.addr %s555, 4
        %s557 = scalar_lea.vmem %s6, %s556
        %p558 = pneg %p198
        %p559 = pneg %p195
        %p560 = scmp.lt.s32.totalorder %s26, 3
        %s561 = scalar_select %p560, %s26, 3
        %s562 = scalar_lea.vmem %s7, %s561
        %p563 = pneg %p224
        %p564 = pneg %p221
        %p565 = scmp.lt.s32.totalorder %s26, 3
        %s566 = scalar_select %p565, %s26, 3
        %s567 = scalar_lea.vmem %s8, %s566
        %p568 = pneg %p250
        %p569 = pneg %p247
        %p570 = scmp.lt.s32.totalorder %s26, 3
        %s571 = scalar_select %p570, %s26, 3
        %s572 = scalar_lea.vmem %s9, %s571
        %p573 = pneg %p276
        %p574 = pneg %p273
        %p575 = scmp.lt.s32.totalorder %s26, 3
        %s576 = scalar_select %p575, %s26, 3
        %s577 = smul.addr %s576, 8
        %s578 = smul.addr %s577, 4
        %s579 = scalar_lea.vmem %s10, %s578
        %p580 = pneg %p302
        %p581 = pneg %p299
        %p582 = scmp.lt.s32.totalorder %s26, 3
        %s583 = scalar_select %p582, %s26, 3
        %s584 = scalar_lea.vmem %s11, %s583
        %p585 = pneg %p328
        %p586 = pneg %p325
        %p587 = scmp.lt.s32.totalorder %s26, 3
        %s588 = scalar_select %p587, %s26, 3
        %s589 = smul.addr %s588, 16
        %s590 = smul.addr %s589, 4
        %s591 = scalar_lea.vmem %s12, %s590
        %p592 = pneg %p354
        %p593 = pneg %p351
        %p594 = scmp.lt.s32.totalorder %s26, 3
        %s595 = scalar_select %p594, %s26, 3
        %s596 = scalar_lea.vmem %s13, %s595
        %p597 = pneg %p380
        %p598 = pneg %p377
        %p599 = pneg %p401
        %p600 = pneg %p398
        %p601 = scmp.lt.s32.totalorder %s26, 3
        %s602 = scalar_select %p601, %s26, 3
        %s603 = scalar_lea.vmem %s1, %s602
        %p604 = scmp.lt.s32.totalorder %s26, 3
        %s605 = scalar_select %p604, %s26, 3
        %s606 = scalar_lea.vmem %s2, %s605
        %p607 = scmp.lt.s32.totalorder %s26, 3
        %s608 = scalar_select %p607, %s26, 3
        %s609 = smul.addr %s608, 64
        %s610 = smul.addr %s609, 4
        %s611 = scalar_lea.vmem %s3, %s610
        %p612 = scmp.lt.s32.totalorder %s26, 3
        %s613 = scalar_select %p612, %s26, 3
        %s614 = smul.addr %s613, 64
        %s615 = smul.addr %s614, 4
        %s616 = scalar_lea.vmem %s4, %s615
        %p617 = scmp.lt.s32.totalorder %s26, 3
        %s618 = scalar_select %p617, %s26, 3
        %s619 = smul.addr %s618, 64
        %s620 = smul.addr %s619, 4
        %s621 = scalar_lea.vmem %s5, %s620
        %p622 = scmp.lt.s32.totalorder %s26, 3
        %s623 = scalar_select %p622, %s26, 3
        %s624 = smul.addr %s623, 8
        %s625 = smul.addr %s624, 4
        %s626 = scalar_lea.vmem %s6, %s625
        %p627 = scmp.lt.s32.totalorder %s26, 3
        %s628 = scalar_select %p627, %s26, 3
        %s629 = scalar_lea.vmem %s7, %s628
        %p630 = scmp.lt.s32.totalorder %s26, 3
        %s631 = scalar_select %p630, %s26, 3
        %s632 = scalar_lea.vmem %s8, %s631
        %p633 = scmp.lt.s32.totalorder %s26, 3
        %s634 = scalar_select %p633, %s26, 3
        %s635 = scalar_lea.vmem %s9, %s634
        %p636 = scmp.lt.s32.totalorder %s26, 3
        %s637 = scalar_select %p636, %s26, 3
        %s638 = smul.addr %s637, 8
        %s639 = smul.addr %s638, 4
        %s640 = scalar_lea.vmem %s10, %s639
        %p641 = scmp.lt.s32.totalorder %s26, 3
        %s642 = scalar_select %p641, %s26, 3
        %s643 = scalar_lea.vmem %s11, %s642
        %p644 = scmp.lt.s32.totalorder %s26, 3
        %s645 = scalar_select %p644, %s26, 3
        %s646 = smul.addr %s645, 16
        %s647 = smul.addr %s646, 4
        %s648 = scalar_lea.vmem %s12, %s647
        %p649 = scmp.lt.s32.totalorder %s26, 3
        %s650 = scalar_select %p649, %s26, 3
        %s651 = scalar_lea.vmem %s13, %s650
        %p653 = scmp.eq.s32.totalorder %s26, 0
        // Predicated region
        $region77: #{tpu_custom_call.1} parent=75 // pred_check
          %p654 = pneg %p653
        $region78: #{tpu_custom_call.1} parent=75 // pred_check_branch
          %656 = sbr.rel (%p654) target = $region80
        $region79: #{tpu_custom_call.1} parent=75 // pred_region
          %v657 = vld [vmem:[%s0] sm:$0xff]
          %v658 = vld [vmem:[%s0 + $0x8] sm:$0xff]
          %v659 = vld [vmem:[%s0 + $0x10] sm:$0xff]
          %v660 = vld [vmem:[%s0 + $0x18] sm:$0xff]
          %v661 = vld [vmem:[%s0 + $0x20] sm:$0xff]
          %vm662 = vcmask 523264
          %663 = vst.msk [vmem:[#allocation2] sm:$0xff] %vm662, %v657
          %664 = vst.msk [vmem:[#allocation2 + $0x8] sm:$0xff] %vm662, %v658
          %665 = vst.msk [vmem:[#allocation2 + $0x10] sm:$0xff] %vm662, %v659
          %666 = vst.msk [vmem:[#allocation2 + $0x18] sm:$0xff] %vm662, %v660
          %667 = vst.msk [vmem:[#allocation2 + $0x20] sm:$0xff] %vm662, %v661
        $region80: #{tpu_custom_call.1} parent=75 // pred_fallthru
          _
        %v668 = vld [vmem:[#allocation2] sm:$0xff]
        %v669 = vld [vmem:[#allocation2 + $0x8] sm:$0xff]
        %v670 = vld [vmem:[#allocation2 + $0x10] sm:$0xff]
        %v671 = vld [vmem:[#allocation2 + $0x18] sm:$0xff]
        %v672 = vld [vmem:[#allocation2 + $0x20] sm:$0xff]
        %v673 = vld [vmem:[%s611] sm:$0xf]
        %v674 = vld [vmem:[%s611 + $0x4] sm:$0xf]
        %v675 = vld [vmem:[%s611 + $0x8] sm:$0xf]
        %v676 = vld [vmem:[%s611 + $0xc] sm:$0xf]
        %v677 = vld [vmem:[%s611 + $0x10] sm:$0xf]
        %v678 = vld [vmem:[%s611 + $0x14] sm:$0xf]
        %v679 = vld [vmem:[%s611 + $0x18] sm:$0xf]
        %v680 = vld [vmem:[%s611 + $0x1c] sm:$0xf]
        %v681 = vld [vmem:[%s611 + $0x20] sm:$0xf]
        %v682 = vld [vmem:[%s611 + $0x24] sm:$0xf]
        %v683 = vld [vmem:[%s611 + $0x28] sm:$0xf]
        %v684 = vld [vmem:[%s611 + $0x2c] sm:$0xf]
        %v685 = vld [vmem:[%s611 + $0x30] sm:$0xf]
        %v686 = vld [vmem:[%s611 + $0x34] sm:$0xf]
        %v687 = vld [vmem:[%s611 + $0x38] sm:$0xf]
        %v688 = vld [vmem:[%s611 + $0x3c] sm:$0xf]
        %v689 = vld [vmem:[%s611 + $0x40] sm:$0xf]
        %v690 = vld [vmem:[%s611 + $0x44] sm:$0xf]
        %v691 = vld [vmem:[%s611 + $0x48] sm:$0xf]
        %v692 = vld [vmem:[%s611 + $0x4c] sm:$0xf]
        %v693 = vld [vmem:[%s611 + $0x50] sm:$0xf]
        %v694 = vld [vmem:[%s611 + $0x54] sm:$0xf]
        %v695 = vld [vmem:[%s611 + $0x58] sm:$0xf]
        %v696 = vld [vmem:[%s611 + $0x5c] sm:$0xf]
        %v697 = vld [vmem:[%s611 + $0x60] sm:$0xf]
        %v698 = vld [vmem:[%s611 + $0x64] sm:$0xf]
        %v699 = vld [vmem:[%s611 + $0x68] sm:$0xf]
        %v700 = vld [vmem:[%s611 + $0x6c] sm:$0xf]
        %v701 = vld [vmem:[%s611 + $0x70] sm:$0xf]
        %v702 = vld [vmem:[%s611 + $0x74] sm:$0xf]
        %v703 = vld [vmem:[%s611 + $0x78] sm:$0xf]
        %v704 = vld [vmem:[%s611 + $0x7c] sm:$0xf]
        %v705 = vld [vmem:[%s611 + $0x80] sm:$0xf]
        %v706 = vld [vmem:[%s611 + $0x84] sm:$0xf]
        %v707 = vld [vmem:[%s611 + $0x88] sm:$0xf]
        %v708 = vld [vmem:[%s611 + $0x8c] sm:$0xf]
        %v709 = vld [vmem:[%s611 + $0x90] sm:$0xf]
        %v710 = vld [vmem:[%s611 + $0x94] sm:$0xf]
        %v711 = vld [vmem:[%s611 + $0x98] sm:$0xf]
        %v712 = vld [vmem:[%s611 + $0x9c] sm:$0xf]
        %v713 = vld [vmem:[%s611 + $0xa0] sm:$0xf]
        %v714 = vld [vmem:[%s611 + $0xa4] sm:$0xf]
        %v715 = vld [vmem:[%s611 + $0xa8] sm:$0xf]
        %v716 = vld [vmem:[%s611 + $0xac] sm:$0xf]
        %v717 = vld [vmem:[%s611 + $0xb0] sm:$0xf]
        %v718 = vld [vmem:[%s611 + $0xb4] sm:$0xf]
        %v719 = vld [vmem:[%s611 + $0xb8] sm:$0xf]
        %v720 = vld [vmem:[%s611 + $0xbc] sm:$0xf]
        %v721 = vld [vmem:[%s611 + $0xc0] sm:$0xf]
        %v722 = vld [vmem:[%s611 + $0xc4] sm:$0xf]
        %v723 = vld [vmem:[%s611 + $0xc8] sm:$0xf]
        %v724 = vld [vmem:[%s611 + $0xcc] sm:$0xf]
        %v725 = vld [vmem:[%s611 + $0xd0] sm:$0xf]
        %v726 = vld [vmem:[%s611 + $0xd4] sm:$0xf]
        %v727 = vld [vmem:[%s611 + $0xd8] sm:$0xf]
        %v728 = vld [vmem:[%s611 + $0xdc] sm:$0xf]
        %v729 = vld [vmem:[%s611 + $0xe0] sm:$0xf]
        %v730 = vld [vmem:[%s611 + $0xe4] sm:$0xf]
        %v731 = vld [vmem:[%s611 + $0xe8] sm:$0xf]
        %v732 = vld [vmem:[%s611 + $0xec] sm:$0xf]
        %v733 = vld [vmem:[%s611 + $0xf0] sm:$0xf]
        %v734 = vld [vmem:[%s611 + $0xf4] sm:$0xf]
        %v735 = vld [vmem:[%s611 + $0xf8] sm:$0xf]
        %v736 = vld [vmem:[%s611 + $0xfc] sm:$0xf]
        %v737 = vld [vmem:[%s616] sm:$0xf]
        %v738 = vld [vmem:[%s616 + $0x4] sm:$0xf]
        %v739 = vld [vmem:[%s616 + $0x8] sm:$0xf]
        %v740 = vld [vmem:[%s616 + $0xc] sm:$0xf]
        %v741 = vld [vmem:[%s616 + $0x10] sm:$0xf]
        %v742 = vld [vmem:[%s616 + $0x14] sm:$0xf]
        %v743 = vld [vmem:[%s616 + $0x18] sm:$0xf]
        %v744 = vld [vmem:[%s616 + $0x1c] sm:$0xf]
        %v745 = vld [vmem:[%s616 + $0x20] sm:$0xf]
        %v746 = vld [vmem:[%s616 + $0x24] sm:$0xf]
        %v747 = vld [vmem:[%s616 + $0x28] sm:$0xf]
        %v748 = vld [vmem:[%s616 + $0x2c] sm:$0xf]
        %v749 = vld [vmem:[%s616 + $0x30] sm:$0xf]
        %v750 = vld [vmem:[%s616 + $0x34] sm:$0xf]
        %v751 = vld [vmem:[%s616 + $0x38] sm:$0xf]
        %v752 = vld [vmem:[%s616 + $0x3c] sm:$0xf]
        %v753 = vld [vmem:[%s616 + $0x40] sm:$0xf]
        %v754 = vld [vmem:[%s616 + $0x44] sm:$0xf]
        %v755 = vld [vmem:[%s616 + $0x48] sm:$0xf]
        %v756 = vld [vmem:[%s616 + $0x4c] sm:$0xf]
        %v757 = vld [vmem:[%s616 + $0x50] sm:$0xf]
        %v758 = vld [vmem:[%s616 + $0x54] sm:$0xf]
        %v759 = vld [vmem:[%s616 + $0x58] sm:$0xf]
        %v760 = vld [vmem:[%s616 + $0x5c] sm:$0xf]
        %v761 = vld [vmem:[%s616 + $0x60] sm:$0xf]
        %v762 = vld [vmem:[%s616 + $0x64] sm:$0xf]
        %v763 = vld [vmem:[%s616 + $0x68] sm:$0xf]
        %v764 = vld [vmem:[%s616 + $0x6c] sm:$0xf]
        %v765 = vld [vmem:[%s616 + $0x70] sm:$0xf]
        %v766 = vld [vmem:[%s616 + $0x74] sm:$0xf]
        %v767 = vld [vmem:[%s616 + $0x78] sm:$0xf]
        %v768 = vld [vmem:[%s616 + $0x7c] sm:$0xf]
        %v769 = vld [vmem:[%s616 + $0x80] sm:$0xf]
        %v770 = vld [vmem:[%s616 + $0x84] sm:$0xf]
        %v771 = vld [vmem:[%s616 + $0x88] sm:$0xf]
        %v772 = vld [vmem:[%s616 + $0x8c] sm:$0xf]
        %v773 = vld [vmem:[%s616 + $0x90] sm:$0xf]
        %v774 = vld [vmem:[%s616 + $0x94] sm:$0xf]
        %v775 = vld [vmem:[%s616 + $0x98] sm:$0xf]
        %v776 = vld [vmem:[%s616 + $0x9c] sm:$0xf]
        %v777 = vld [vmem:[%s616 + $0xa0] sm:$0xf]
        %v778 = vld [vmem:[%s616 + $0xa4] sm:$0xf]
        %v779 = vld [vmem:[%s616 + $0xa8] sm:$0xf]
        %v780 = vld [vmem:[%s616 + $0xac] sm:$0xf]
        %v781 = vld [vmem:[%s616 + $0xb0] sm:$0xf]
        %v782 = vld [vmem:[%s616 + $0xb4] sm:$0xf]
        %v783 = vld [vmem:[%s616 + $0xb8] sm:$0xf]
        %v784 = vld [vmem:[%s616 + $0xbc] sm:$0xf]
        %v785 = vld [vmem:[%s616 + $0xc0] sm:$0xf]
        %v786 = vld [vmem:[%s616 + $0xc4] sm:$0xf]
        %v787 = vld [vmem:[%s616 + $0xc8] sm:$0xf]
        %v788 = vld [vmem:[%s616 + $0xcc] sm:$0xf]
        %v789 = vld [vmem:[%s616 + $0xd0] sm:$0xf]
        %v790 = vld [vmem:[%s616 + $0xd4] sm:$0xf]
        %v791 = vld [vmem:[%s616 + $0xd8] sm:$0xf]
        %v792 = vld [vmem:[%s616 + $0xdc] sm:$0xf]
        %v793 = vld [vmem:[%s616 + $0xe0] sm:$0xf]
        %v794 = vld [vmem:[%s616 + $0xe4] sm:$0xf]
        %v795 = vld [vmem:[%s616 + $0xe8] sm:$0xf]
        %v796 = vld [vmem:[%s616 + $0xec] sm:$0xf]
        %v797 = vld [vmem:[%s616 + $0xf0] sm:$0xf]
        %v798 = vld [vmem:[%s616 + $0xf4] sm:$0xf]
        %v799 = vld [vmem:[%s616 + $0xf8] sm:$0xf]
        %v800 = vld [vmem:[%s616 + $0xfc] sm:$0xf]
        %v801 = vld [vmem:[%s621] sm:$0xf]
        %v802 = vld [vmem:[%s621 + $0x4] sm:$0xf]
        %v803 = vld [vmem:[%s621 + $0x8] sm:$0xf]
        %v804 = vld [vmem:[%s621 + $0xc] sm:$0xf]
        %v805 = vld [vmem:[%s621 + $0x10] sm:$0xf]
        %v806 = vld [vmem:[%s621 + $0x14] sm:$0xf]
        %v807 = vld [vmem:[%s621 + $0x18] sm:$0xf]
        %v808 = vld [vmem:[%s621 + $0x1c] sm:$0xf]
        %v809 = vld [vmem:[%s621 + $0x20] sm:$0xf]
        %v810 = vld [vmem:[%s621 + $0x24] sm:$0xf]
        %v811 = vld [vmem:[%s621 + $0x28] sm:$0xf]
        %v812 = vld [vmem:[%s621 + $0x2c] sm:$0xf]
        %v813 = vld [vmem:[%s621 + $0x30] sm:$0xf]
        %v814 = vld [vmem:[%s621 + $0x34] sm:$0xf]
        %v815 = vld [vmem:[%s621 + $0x38] sm:$0xf]
        %v816 = vld [vmem:[%s621 + $0x3c] sm:$0xf]
        %v817 = vld [vmem:[%s621 + $0x40] sm:$0xf]
        %v818 = vld [vmem:[%s621 + $0x44] sm:$0xf]
        %v819 = vld [vmem:[%s621 + $0x48] sm:$0xf]
        %v820 = vld [vmem:[%s621 + $0x4c] sm:$0xf]
        %v821 = vld [vmem:[%s621 + $0x50] sm:$0xf]
        %v822 = vld [vmem:[%s621 + $0x54] sm:$0xf]
        %v823 = vld [vmem:[%s621 + $0x58] sm:$0xf]
        %v824 = vld [vmem:[%s621 + $0x5c] sm:$0xf]
        %v825 = vld [vmem:[%s621 + $0x60] sm:$0xf]
        %v826 = vld [vmem:[%s621 + $0x64] sm:$0xf]
        %v827 = vld [vmem:[%s621 + $0x68] sm:$0xf]
        %v828 = vld [vmem:[%s621 + $0x6c] sm:$0xf]
        %v829 = vld [vmem:[%s621 + $0x70] sm:$0xf]
        %v830 = vld [vmem:[%s621 + $0x74] sm:$0xf]
        %v831 = vld [vmem:[%s621 + $0x78] sm:$0xf]
        %v832 = vld [vmem:[%s621 + $0x7c] sm:$0xf]
        %v833 = vld [vmem:[%s621 + $0x80] sm:$0xf]
        %v834 = vld [vmem:[%s621 + $0x84] sm:$0xf]
        %v835 = vld [vmem:[%s621 + $0x88] sm:$0xf]
        %v836 = vld [vmem:[%s621 + $0x8c] sm:$0xf]
        %v837 = vld [vmem:[%s621 + $0x90] sm:$0xf]
        %v838 = vld [vmem:[%s621 + $0x94] sm:$0xf]
        %v839 = vld [vmem:[%s621 + $0x98] sm:$0xf]
        %v840 = vld [vmem:[%s621 + $0x9c] sm:$0xf]
        %v841 = vld [vmem:[%s621 + $0xa0] sm:$0xf]
        %v842 = vld [vmem:[%s621 + $0xa4] sm:$0xf]
        %v843 = vld [vmem:[%s621 + $0xa8] sm:$0xf]
        %v844 = vld [vmem:[%s621 + $0xac] sm:$0xf]
        %v845 = vld [vmem:[%s621 + $0xb0] sm:$0xf]
        %v846 = vld [vmem:[%s621 + $0xb4] sm:$0xf]
        %v847 = vld [vmem:[%s621 + $0xb8] sm:$0xf]
        %v848 = vld [vmem:[%s621 + $0xbc] sm:$0xf]
        %v849 = vld [vmem:[%s621 + $0xc0] sm:$0xf]
        %v850 = vld [vmem:[%s621 + $0xc4] sm:$0xf]
        %v851 = vld [vmem:[%s621 + $0xc8] sm:$0xf]
        %v852 = vld [vmem:[%s621 + $0xcc] sm:$0xf]
        %v853 = vld [vmem:[%s621 + $0xd0] sm:$0xf]
        %v854 = vld [vmem:[%s621 + $0xd4] sm:$0xf]
        %v855 = vld [vmem:[%s621 + $0xd8] sm:$0xf]
        %v856 = vld [vmem:[%s621 + $0xdc] sm:$0xf]
        %v857 = vld [vmem:[%s621 + $0xe0] sm:$0xf]
        %v858 = vld [vmem:[%s621 + $0xe4] sm:$0xf]
        %v859 = vld [vmem:[%s621 + $0xe8] sm:$0xf]
        %v860 = vld [vmem:[%s621 + $0xec] sm:$0xf]
        %v861 = vld [vmem:[%s621 + $0xf0] sm:$0xf]
        %v862 = vld [vmem:[%s621 + $0xf4] sm:$0xf]
        %v863 = vld [vmem:[%s621 + $0xf8] sm:$0xf]
        %v864 = vld [vmem:[%s621 + $0xfc] sm:$0xf]
        %v865 = vld [vmem:[%s626] sm:$0xf]
        %v866 = vld [vmem:[%s626 + $0x4] sm:$0xf]
        %v867 = vld [vmem:[%s626 + $0x8] sm:$0xf]
        %v868 = vld [vmem:[%s626 + $0xc] sm:$0xf]
        %v869 = vld [vmem:[%s626 + $0x10] sm:$0xf]
        %v870 = vld [vmem:[%s626 + $0x14] sm:$0xf]
        %v871 = vld [vmem:[%s626 + $0x18] sm:$0xf]
        %v872 = vld [vmem:[%s626 + $0x1c] sm:$0xf]
        %v873 = vld [vmem:[%s603] sm:$0x1]
        %v874 = vld [vmem:[%s606] sm:$0x1]
        %vm875 = vcmask 523264
        %v876 = vsel %vm875, %v668, 0.0
        %877 = vadd.xlane.f32.xlu0 %v876
        %v878 = vpop.xlane.xlu0 %877
        %v879 = vsel %vm875, %v669, 0.0
        %880 = vadd.xlane.f32.xlu0 %v879
        %v881 = vpop.xlane.xlu0 %880
        %v882 = vsel %vm875, %v670, 0.0
        %883 = vadd.xlane.f32.xlu0 %v882
        %v884 = vpop.xlane.xlu0 %883
        %v885 = vsel %vm875, %v671, 0.0
        %886 = vadd.xlane.f32.xlu0 %v885
        %v887 = vpop.xlane.xlu0 %886
        %v888 = vsel %vm875, %v672, 0.0
        %889 = vadd.xlane.f32.xlu0 %v888
        %v890 = vpop.xlane.xlu0 %889
        %v891 = vrcp.pop 64.0
        %v892 = vmul.f32 %v878, %v891
        %v893 = vmul.f32 %v881, %v891
        %v894 = vmul.f32 %v884, %v891
        %v895 = vmul.f32 %v887, %v891
        %v896 = vmul.f32 %v890, %v891
        %v897 = vsub.f32 %v668, %v892
        %v898 = vsub.f32 %v669, %v893
        %v899 = vsub.f32 %v670, %v894
        %v900 = vsub.f32 %v671, %v895
        %v901 = vsub.f32 %v672, %v896
        %v902 = vmul.f32 %v897, %v897
        %v903 = vmul.f32 %v898, %v898
        %v904 = vmul.f32 %v899, %v899
        %v905 = vmul.f32 %v900, %v900
        %v906 = vmul.f32 %v901, %v901
        %v907 = vsel %vm875, %v902, 0.0
        %908 = vadd.xlane.f32.xlu0 %v907
        %v909 = vpop.xlane.xlu0 %908
        %v910 = vsel %vm875, %v903, 0.0
        %911 = vadd.xlane.f32.xlu0 %v910
        %v912 = vpop.xlane.xlu0 %911
        %v913 = vsel %vm875, %v904, 0.0
        %914 = vadd.xlane.f32.xlu0 %v913
        %v915 = vpop.xlane.xlu0 %914
        %v916 = vsel %vm875, %v905, 0.0
        %917 = vadd.xlane.f32.xlu0 %v916
        %v918 = vpop.xlane.xlu0 %917
        %v919 = vsel %vm875, %v906, 0.0
        %920 = vadd.xlane.f32.xlu0 %v919
        %v921 = vpop.xlane.xlu0 %920
        %v922 = vmul.f32 %v909, %v891
        %v923 = vmul.f32 %v912, %v891
        %v924 = vmul.f32 %v915, %v891
        %v925 = vmul.f32 %v918, %v891
        %v926 = vmul.f32 %v921, %v891
        %v927 = vadd.f32 %v922, 1e-05
        %v928 = vadd.f32 %v923, 1e-05
        %v929 = vadd.f32 %v924, 1e-05
        %v930 = vadd.f32 %v925, 1e-05
        %v931 = vadd.f32 %v926, 1e-05
        %v932 = vrsqrt.pop %v927
        %v933 = vrsqrt.pop %v928
        %v934 = vrsqrt.pop %v929
        %v935 = vrsqrt.pop %v930
        %v936 = vrsqrt.pop %v931
        %v937 = vmul.f32 %v897, %v932
        %v938 = vmul.f32 %v898, %v933
        %v939 = vmul.f32 %v899, %v934
        %v940 = vmul.f32 %v900, %v935
        %v941 = vmul.f32 %v901, %v936
        %v943 = vlaneseq
        %v944 = vshrl.u32 %v943, 7
        %v945 = vsub.s32 0, %v944
        %v946 = vrot.slane %v873, %v945
        %v948 = vmul.f32 %v937, %v946
        %v949 = vmul.f32 %v938, %v946
        %v950 = vmul.f32 %v939, %v946
        %v951 = vmul.f32 %v940, %v946
        %v952 = vmul.f32 %v941, %v946
        %v954 = vlaneseq
        %v955 = vshrl.u32 %v954, 7
        %v956 = vsub.s32 0, %v955
        %v957 = vrot.slane %v874, %v956
        %v959 = vadd.f32 %v948, %v957
        %v960 = vadd.f32 %v949, %v957
        %v961 = vadd.f32 %v950, %v957
        %v962 = vadd.f32 %v951, %v957
        %v963 = vadd.f32 %v952, %v957
        %v964 = vpack.c.bf16 %v960, %v959
        %v965 = vpack.c.bf16 %v962, %v961
        %v966 = vpack.c.bf16 %v963, %v963
        %v975 = vunpack.c.l.b16 %v673
        %v976 = vunpack.c.l.b16 %v674
        %v977 = vunpack.c.l.b16 %v675
        %v978 = vunpack.c.l.b16 %v676
        %v979 = vunpack.c.l.b16 %v677
        %v980 = vunpack.c.l.b16 %v678
        %v981 = vunpack.c.l.b16 %v679
        %v982 = vunpack.c.l.b16 %v680
        %v983 = vpack.c.b16 %v976, %v975
        %v984 = vpack.c.b16 %v978, %v977
        %v985 = vpack.c.b16 %v980, %v979
        %v986 = vpack.c.b16 %v982, %v981
        %v992 = vsel %vm875, %v964, 0
        %v995 = vsel %vm875, %v965, 0
        %v998 = vsel %vm875, %v966, 0
        %1000 = vmatprep.subr.bf16.mxu0 0
        %1001 = vmatpush1.bf16.msra.mxu0 %v983
        %1002 = vmatprep.subr.bf16.mxu0 0
        %1003 = vmatpush1.bf16.msra.mxu0 %v984
        %1004 = vmatprep.subr.bf16.mxu0 0
        %1005 = vmatpush1.bf16.msra.mxu0 %v985
        %1006 = vmatprep.subr.bf16.mxu0 0
        %1007 = vmatpush1.bf16.msra.mxu0 %v986
        %1008 = vmatprep.subr.bf16.mxu0 0
        %1009 = vmatpush1.bf16.msra.mxu0 0
        %1010 = vmatprep.subr.bf16.mxu0 0
        %1011 = vmatpush1.bf16.msra.mxu0 0
        %1012 = vmatprep.subr.bf16.mxu0 0
        %1013 = vmatpush1.bf16.msra.mxu0 0
        %1014 = vmatprep.subr.bf16.mxu0 0
        %1015 = vmatpush1.bf16.msra.mxu0 0
        %1016 = vmatprep.subr.bf16.mxu0 0
        %1017 = vmatpush1.bf16.msra.mxu0 0
        %1018 = vmatprep.subr.bf16.mxu0 0
        %1019 = vmatpush1.bf16.msra.mxu0 0
        %1020 = vmatprep.subr.bf16.mxu0 0
        %1021 = vmatpush1.bf16.msra.mxu0 0
        %1022 = vmatprep.subr.bf16.mxu0 0
        %1023 = vmatpush1.bf16.msra.mxu0 0
        %1024 = vmatprep.subr.bf16.mxu0 0
        %1025 = vmatpush1.bf16.msra.mxu0 0
        %1026 = vmatprep.subr.bf16.mxu0 0
        %1027 = vmatpush1.bf16.msra.mxu0 0
        %1028 = vmatprep.subr.bf16.mxu0 0
        %1029 = vmatpush1.bf16.msra.mxu0 0
        %1030 = vmatprep.subr.bf16.mxu0 0
        %1031 = vmatpush1.bf16.msra.mxu0 0
        %1032 = vmatprep.mubr.bf16.mxu0 0
        %1033 = vmatmul.mubr.bf16.gmra.mrb[0].mxu0 %v992
        %v1034 = vpop.f32.mrb[0].mxu0
        %v1035 = vadd.f32 0.0, %v1034
        %v1036 = vpop.f32.mrb[0].mxu0
        %v1037 = vpop.f32.mrb[0].mxu0
        %v1038 = vadd.f32 0.0, %v1037
        %v1039 = vpop.f32.mrb[0].mxu0
        %1040 = vmatprep.mubr.bf16.mxu0 0
        %1041 = vmatmul.mubr.bf16.gmra.mrb[0].mxu0 %v995
        %v1042 = vpop.f32.mrb[0].mxu0
        %v1043 = vadd.f32 0.0, %v1042
        %v1044 = vpop.f32.mrb[0].mxu0
        %v1045 = vpop.f32.mrb[0].mxu0
        %v1046 = vadd.f32 0.0, %v1045
        %v1047 = vpop.f32.mrb[0].mxu0
        %1048 = vmatprep.mubr.bf16.mxu0 0
        %1049 = vmatmul.mubr.bf16.gmra.mrb[0].mxu0 %v998
        %v1050 = vpop.f32.mrb[0].mxu0
        %v1051 = vadd.f32 0.0, %v1050
        %v1052 = vpop.f32.mrb[0].mxu0
        %v1053 = vpop.f32.mrb[0].mxu0
        %v1054 = vpop.f32.mrb[0].mxu0
        %1055 = vdwg.mxu0
        %v1064 = vunpack.c.l.b16 %v681
        %v1065 = vunpack.c.l.b16 %v682
        %v1066 = vunpack.c.l.b16 %v683
        %v1067 = vunpack.c.l.b16 %v684
        %v1068 = vunpack.c.l.b16 %v685
        %v1069 = vunpack.c.l.b16 %v686
        %v1070 = vunpack.c.l.b16 %v687
        %v1071 = vunpack.c.l.b16 %v688
        %v1072 = vpack.c.b16 %v1065, %v1064
        %v1073 = vpack.c.b16 %v1067, %v1066
        %v1074 = vpack.c.b16 %v1069, %v1068
        %v1075 = vpack.c.b16 %v1071, %v1070
        %1080 = vmatprep.subr.bf16.mxu0 0
        %1081 = vmatpush1.bf16.msra.mxu0 %v1072
        %1082 = vmatprep.subr.bf16.mxu0 0
        %1083 = vmatpush1.bf16.msra.mxu0 %v1073
        %1084 = vmatprep.subr.bf16.mxu0 0
        %1085 = vmatpush1.bf16.msra.mxu0 %v1074
        %1086 = vmatprep.subr.bf16.mxu0 0
        %1087 = vmatpush1.bf16.msra.mxu0 %v1075
        %1088 = vmatprep.subr.bf16.mxu0 0
        %1089 = vmatpush1.bf16.msra.mxu0 0
        %1090 = vmatprep.subr.bf16.mxu0 0
        %1091 = vmatpush1.bf16.msra.mxu0 0
        %1092 = vmatprep.subr.bf16.mxu0 0
        %1093 = vmatpush1.bf16.msra.mxu0 0
        %1094 = vmatprep.subr.bf16.mxu0 0
        %1095 = vmatpush1.bf16.msra.mxu0 0
        %1096 = vmatprep.subr.bf16.mxu0 0
        %1097 = vmatpush1.bf16.msra.mxu0 0
        %1098 = vmatprep.subr.bf16.mxu0 0
        %1099 = vmatpush1.bf16.msra.mxu0 0
        %1100 = vmatprep.subr.bf16.mxu0 0
        %1101 = vmatpush1.bf16.msra.mxu0 0
        %1102 = vmatprep.subr.bf16.mxu0 0
        %1103 = vmatpush1.bf16.msra.mxu0 0
        %1104 = vmatprep.subr.bf16.mxu0 0
        %1105 = vmatpush1.bf16.msra.mxu0 0
        %1106 = vmatprep.subr.bf16.mxu0 0
        %1107 = vmatpush1.bf16.msra.mxu0 0
        %1108 = vmatprep.subr.bf16.mxu0 0
        %1109 = vmatpush1.bf16.msra.mxu0 0
        %1110 = vmatprep.subr.bf16.mxu0 0
        %1111 = vmatpush1.bf16.msra.mxu0 0
        %1112 = vmatprep.mubr.bf16.mxu0 0
        %1113 = vmatmul.mubr.bf16.gmra.mrb[0].mxu0 %v992
        %v1114 = vpop.f32.mrb[0].mxu0
        %v1115 = vadd.f32 0.0, %v1114
        %v1116 = vpop.f32.mrb[0].mxu0
        %v1117 = vpop.f32.mrb[0].mxu0
        %v1118 = vadd.f32 0.0, %v1117
        %v1119 = vpop.f32.mrb[0].mxu0
        %1120 = vmatprep.mubr.bf16.mxu0 0
        %1121 = vmatmul.mubr.bf16.gmra.mrb[0].mxu0 %v995
        %v1122 = vpop.f32.mrb[0].mxu0
        %v1123 = vadd.f32 0.0, %v1122
        %v1124 = vpop.f32.mrb[0].mxu0
        %v1125 = vpop.f32.mrb[0].mxu0
        %v1126 = vadd.f32 0.0, %v1125
        %v1127 = vpop.f32.mrb[0].mxu0
        %1128 = vmatprep.mubr.bf16.mxu0 0
        %1129 = vmatmul.mubr.bf16.gmra.mrb[0].mxu0 %v998
        %v1130 = vpop.f32.mrb[0].mxu0
        %v1131 = vadd.f32 0.0, %v1130
        %v1132 = vpop.f32.mrb[0].mxu0
        %v1133 = vpop.f32.mrb[0].mxu0
        %v1134 = vpop.f32.mrb[0].mxu0
        %1135 = vdwg.mxu0
        %v1144 = vunpack.c.l.b16 %v689
        %v1145 = vunpack.c.l.b16 %v690
        %v1146 = vunpack.c.l.b16 %v691
        %v1147 = vunpack.c.l.b16 %v692
        %v1148 = vunpack.c.l.b16 %v693
        %v1149 = vunpack.c.l.b16 %v694
        %v1150 = vunpack.c.l.b16 %v695
        %v1151 = vunpack.c.l.b16 %v696
        %v1152 = vpack.c.b16 %v1145, %v1144
        %v1153 = vpack.c.b16 %v1147, %v1146
        %v1154 = vpack.c.b16 %v1149, %v1148
        %v1155 = vpack.c.b16 %v1151, %v1150
        %1160 = vmatprep.subr.bf16.mxu0 0
        %1161 = vmatpush1.bf16.msra.mxu0 %v1152
        %1162 = vmatprep.subr.bf16.mxu0 0
        %1163 = vmatpush1.bf16.msra.mxu0 %v1153
        %1164 = vmatprep.subr.bf16.mxu0 0
        %1165 = vmatpush1.bf16.msra.mxu0 %v1154
        %1166 = vmatprep.subr.bf16.mxu0 0
        %1167 = vmatpush1.bf16.msra.mxu0 %v1155
        %1168 = vmatprep.subr.bf16.mxu0 0
        %1169 = vmatpush1.bf16.msra.mxu0 0
        %1170 = vmatprep.subr.bf16.mxu0 0
        %1171 = vmatpush1.bf16.msra.mxu0 0
        %1172 = vmatprep.subr.bf16.mxu0 0
        %1173 = vmatpush1.bf16.msra.mxu0 0
        %1174 = vmatprep.subr.bf16.mxu0 0
        %1175 = vmatpush1.bf16.msra.mxu0 0
        %1176 = vmatprep.subr.bf16.mxu0 0
        %1177 = vmatpush1.bf16.msra.mxu0 0
        %1178 = vmatprep.subr.bf16.mxu0 0
        %1179 = vmatpush1.bf16.msra.mxu0 0
        %1180 = vmatprep.subr.bf16.mxu0 0
        %1181 = vmatpush1.bf16.msra.mxu0 0
        %1182 = vmatprep.subr.bf16.mxu0 0
        %1183 = vmatpush1.bf16.msra.mxu0 0
        %1184 = vmatprep.subr.bf16.mxu0 0
        %1185 = vmatpush1.bf16.msra.mxu0 0
        %1186 = vmatprep.subr.bf16.mxu0 0
        %1187 = vmatpush1.bf16.msra.mxu0 0
        %1188 = vmatprep.subr.bf16.mxu0 0
        %1189 = vmatpush1.bf16.msra.mxu0 0
        %1190 = vmatprep.subr.bf16.mxu0 0
        %1191 = vmatpush1.bf16.msra.mxu0 0
        %1192 = vmatprep.mubr.bf16.mxu0 0
        %1193 = vmatmul.mubr.bf16.gmra.mrb[0].mxu0 %v992
        %v1194 = vpop.f32.mrb[0].mxu0
        %v1195 = vadd.f32 0.0, %v1194
        %v1196 = vpop.f32.mrb[0].mxu0
        %v1197 = vpop.f32.mrb[0].mxu0
        %v1198 = vadd.f32 0.0, %v1197
        %v1199 = vpop.f32.mrb[0].mxu0
        %1200 = vmatprep.mubr.bf16.mxu0 0
        %1201 = vmatmul.mubr.bf16.gmra.mrb[0].mxu0 %v995
        %v1202 = vpop.f32.mrb[0].mxu0
        %v1203 = vadd.f32 0.0, %v1202
        %v1204 = vpop.f32.mrb[0].mxu0
        %v1205 = vpop.f32.mrb[0].mxu0
        %v1206 = vadd.f32 0.0, %v1205
        %v1207 = vpop.f32.mrb[0].mxu0
        %1208 = vmatprep.mubr.bf16.mxu0 0
        %1209 = vmatmul.mubr.bf16.gmra.mrb[0].mxu0 %v998
        %v1210 = vpop.f32.mrb[0].mxu0
        %v1211 = vadd.f32 0.0, %v1210
        %v1212 = vpop.f32.mrb[0].mxu0
        %v1213 = vpop.f32.mrb[0].mxu0
        %v1214 = vpop.f32.mrb[0].mxu0
        %1215 = vdwg.mxu0
        %v1224 = vunpack.c.l.b16 %v697
        %v1225 = vunpack.c.l.b16 %v698
        %v1226 = vunpack.c.l.b16 %v699
        %v1227 = vunpack.c.l.b16 %v700
        %v1228 = vunpack.c.l.b16 %v701
        %v1229 = vunpack.c.l.b16 %v702
        %v1230 = vunpack.c.l.b16 %v703
        %v1231 = vunpack.c.l.b16 %v704
        %v1232 = vpack.c.b16 %v1225, %v1224
        %v1233 = vpack.c.b16 %v1227, %v1226
        %v1234 = vpack.c.b16 %v1229, %v1228
        %v1235 = vpack.c.b16 %v1231, %v1230
        %1240 = vmatprep.subr.bf16.mxu0 0
        %1241 = vmatpush1.bf16.msra.mxu0 %v1232
        %1242 = vmatprep.subr.bf16.mxu0 0
        %1243 = vmatpush1.bf16.msra.mxu0 %v1233
        %1244 = vmatprep.subr.bf16.mxu0 0
        %1245 = vmatpush1.bf16.msra.mxu0 %v1234
        %1246 = vmatprep.subr.bf16.mxu0 0
        %1247 = vmatpush1.bf16.msra.mxu0 %v1235
        %1248 = vmatprep.subr.bf16.mxu0 0
        %1249 = vmatpush1.bf16.msra.mxu0 0
        %1250 = vmatprep.subr.bf16.mxu0 0
        %1251 = vmatpush1.bf16.msra.mxu0 0
        %1252 = vmatprep.subr.bf16.mxu0 0
        %1253 = vmatpush1.bf16.msra.mxu0 0
        %1254 = vmatprep.subr.bf16.mxu0 0
        %1255 = vmatpush1.bf16.msra.mxu0 0
        %1256 = vmatprep.subr.bf16.mxu0 0
        %1257 = vmatpush1.bf16.msra.mxu0 0
        %1258 = vmatprep.subr.bf16.mxu0 0
        %1259 = vmatpush1.bf16.msra.mxu0 0
        %1260 = vmatprep.subr.bf16.mxu0 0
        %1261 = vmatpush1.bf16.msra.mxu0 0
        %1262 = vmatprep.subr.bf16.mxu0 0
        %1263 = vmatpush1.bf16.msra.mxu0 0
        %1264 = vmatprep.subr.bf16.mxu0 0
        %1265 = vmatpush1.bf16.msra.mxu0 0
        %1266 = vmatprep.subr.bf16.mxu0 0
        %1267 = vmatpush1.bf16.msra.mxu0 0
        %1268 = vmatprep.subr.bf16.mxu0 0
        %1269 = vmatpush1.bf16.msra.mxu0 0
        %1270 = vmatprep.subr.bf16.mxu0 0
        %1271 = vmatpush1.bf16.msra.mxu0 0
        %1272 = vmatprep.mubr.bf16.mxu0 0
        %1273 = vmatmul.mubr.bf16.gmra.mrb[0].mxu0 %v992
        %v1274 = vpop.f32.mrb[0].mxu0
        %v1275 = vadd.f32 0.0, %v1274
        %v1276 = vpop.f32.mrb[0].mxu0
        %v1277 = vpop.f32.mrb[0].mxu0
        %v1278 = vadd.f32 0.0, %v1277
        %v1279 = vpop.f32.mrb[0].mxu0
        %1280 = vmatprep.mubr.bf16.mxu0 0
        %1281 = vmatmul.mubr.bf16.gmra.mrb[0].mxu0 %v995
        %v1282 = vpop.f32.mrb[0].mxu0
        %v1283 = vadd.f32 0.0, %v1282
        %v1284 = vpop.f32.mrb[0].mxu0
        %v1285 = vpop.f32.mrb[0].mxu0
        %v1286 = vadd.f32 0.0, %v1285
        %v1287 = vpop.f32.mrb[0].mxu0
        %1288 = vmatprep.mubr.bf16.mxu0 0
        %1289 = vmatmul.mubr.bf16.gmra.mrb[0].mxu0 %v998
        %v1290 = vpop.f32.mrb[0].mxu0
        %v1291 = vadd.f32 0.0, %v1290
        %v1292 = vpop.f32.mrb[0].mxu0
        %v1293 = vpop.f32.mrb[0].mxu0
        %v1294 = vpop.f32.mrb[0].mxu0
        %1295 = vdwg.mxu0
        %v1304 = vunpack.c.l.b16 %v705
        %v1305 = vunpack.c.l.b16 %v706
        %v1306 = vunpack.c.l.b16 %v707
        %v1307 = vunpack.c.l.b16 %v708
        %v1308 = vunpack.c.l.b16 %v709
        %v1309 = vunpack.c.l.b16 %v710
        %v1310 = vunpack.c.l.b16 %v711
        %v1311 = vunpack.c.l.b16 %v712
        %v1312 = vpack.c.b16 %v1305, %v1304
        %v1313 = vpack.c.b16 %v1307, %v1306
        %v1314 = vpack.c.b16 %v1309, %v1308
        %v1315 = vpack.c.b16 %v1311, %v1310
        %1320 = vmatprep.subr.bf16.mxu0 0
        %1321 = vmatpush1.bf16.msra.mxu0 %v1312
        %1322 = vmatprep.subr.bf16.mxu0 0
        %1323 = vmatpush1.bf16.msra.mxu0 %v1313
        %1324 = vmatprep.subr.bf16.mxu0 0
        %1325 = vmatpush1.bf16.msra.mxu0 %v1314
        %1326 = vmatprep.subr.bf16.mxu0 0
        %1327 = vmatpush1.bf16.msra.mxu0 %v1315
        %1328 = vmatprep.subr.bf16.mxu0 0
        %1329 = vmatpush1.bf16.msra.mxu0 0
        %1330 = vmatprep.subr.bf16.mxu0 0
        %1331 = vmatpush1.bf16.msra.mxu0 0
        %1332 = vmatprep.subr.bf16.mxu0 0
        %1333 = vmatpush1.bf16.msra.mxu0 0
        %1334 = vmatprep.subr.bf16.mxu0 0
        %1335 = vmatpush1.bf16.msra.mxu0 0
        %1336 = vmatprep.subr.bf16.mxu0 0
        %1337 = vmatpush1.bf16.msra.mxu0 0
        %1338 = vmatprep.subr.bf16.mxu0 0
        %1339 = vmatpush1.bf16.msra.mxu0 0
        %1340 = vmatprep.subr.bf16.mxu0 0
        %1341 = vmatpush1.bf16.msra.mxu0 0
        %1342 = vmatprep.subr.bf16.mxu0 0
        %1343 = vmatpush1.bf16.msra.mxu0 0
        %1344 = vmatprep.subr.bf16.mxu0 0
        %1345 = vmatpush1.bf16.msra.mxu0 0
        %1346 = vmatprep.subr.bf16.mxu0 0
        %1347 = vmatpush1.bf16.msra.mxu0 0
        %1348 = vmatprep.subr.bf16.mxu0 0
        %1349 = vmatpush1.bf16.msra.mxu0 0
        %1350 = vmatprep.subr.bf16.mxu0 0
        %1351 = vmatpush1.bf16.msra.mxu0 0
        %1352 = vmatprep.mubr.bf16.mxu0 0
        %1353 = vmatmul.mubr.bf16.gmra.mrb[0].mxu0 %v992
        %v1354 = vpop.f32.mrb[0].mxu0
        %v1355 = vadd.f32 0.0, %v1354
        %v1356 = vpop.f32.mrb[0].mxu0
        %v1357 = vpop.f32.mrb[0].mxu0
        %v1358 = vadd.f32 0.0, %v1357
        %v1359 = vpop.f32.mrb[0].mxu0
        %1360 = vmatprep.mubr.bf16.mxu0 0
        %1361 = vmatmul.mubr.bf16.gmra.mrb[0].mxu0 %v995
        %v1362 = vpop.f32.mrb[0].mxu0
        %v1363 = vadd.f32 0.0, %v1362
        %v1364 = vpop.f32.mrb[0].mxu0
        %v1365 = vpop.f32.mrb[0].mxu0
        %v1366 = vadd.f32 0.0, %v1365
        %v1367 = vpop.f32.mrb[0].mxu0
        %1368 = vmatprep.mubr.bf16.mxu0 0
        %1369 = vmatmul.mubr.bf16.gmra.mrb[0].mxu0 %v998
        %v1370 = vpop.f32.mrb[0].mxu0
        %v1371 = vadd.f32 0.0, %v1370
        %v1372 = vpop.f32.mrb[0].mxu0
        %v1373 = vpop.f32.mrb[0].mxu0
        %v1374 = vpop.f32.mrb[0].mxu0
        %1375 = vdwg.mxu0
        %v1384 = vunpack.c.l.b16 %v713
        %v1385 = vunpack.c.l.b16 %v714
        %v1386 = vunpack.c.l.b16 %v715
        %v1387 = vunpack.c.l.b16 %v716
        %v1388 = vunpack.c.l.b16 %v717
        %v1389 = vunpack.c.l.b16 %v718
        %v1390 = vunpack.c.l.b16 %v719
        %v1391 = vunpack.c.l.b16 %v720
        %v1392 = vpack.c.b16 %v1385, %v1384
        %v1393 = vpack.c.b16 %v1387, %v1386
        %v1394 = vpack.c.b16 %v1389, %v1388
        %v1395 = vpack.c.b16 %v1391, %v1390
        %1400 = vmatprep.subr.bf16.mxu0 0
        %1401 = vmatpush1.bf16.msra.mxu0 %v1392
        %1402 = vmatprep.subr.bf16.mxu0 0
        %1403 = vmatpush1.bf16.msra.mxu0 %v1393
        %1404 = vmatprep.subr.bf16.mxu0 0
        %1405 = vmatpush1.bf16.msra.mxu0 %v1394
        %1406 = vmatprep.subr.bf16.mxu0 0
        %1407 = vmatpush1.bf16.msra.mxu0 %v1395
        %1408 = vmatprep.subr.bf16.mxu0 0
        %1409 = vmatpush1.bf16.msra.mxu0 0
        %1410 = vmatprep.subr.bf16.mxu0 0
        %1411 = vmatpush1.bf16.msra.mxu0 0
        %1412 = vmatprep.subr.bf16.mxu0 0
        %1413 = vmatpush1.bf16.msra.mxu0 0
        %1414 = vmatprep.subr.bf16.mxu0 0
        %1415 = vmatpush1.bf16.msra.mxu0 0
        %1416 = vmatprep.subr.bf16.mxu0 0
        %1417 = vmatpush1.bf16.msra.mxu0 0
        %1418 = vmatprep.subr.bf16.mxu0 0
        %1419 = vmatpush1.bf16.msra.mxu0 0
        %1420 = vmatprep.subr.bf16.mxu0 0
        %1421 = vmatpush1.bf16.msra.mxu0 0
        %1422 = vmatprep.subr.bf16.mxu0 0
        %1423 = vmatpush1.bf16.msra.mxu0 0
        %1424 = vmatprep.subr.bf16.mxu0 0
        %1425 = vmatpush1.bf16.msra.mxu0 0
        %1426 = vmatprep.subr.bf16.mxu0 0
        %1427 = vmatpush1.bf16.msra.mxu0 0
        %1428 = vmatprep.subr.bf16.mxu0 0
        %1429 = vmatpush1.bf16.msra.mxu0 0
        %1430 = vmatprep.subr.bf16.mxu0 0
        %1431 = vmatpush1.bf16.msra.mxu0 0
        %1432 = vmatprep.mubr.bf16.mxu0 0
        %1433 = vmatmul.mubr.bf16.gmra.mrb[0].mxu0 %v992
        %v1434 = vpop.f32.mrb[0].mxu0
        %v1435 = vadd.f32 0.0, %v1434
        %v1436 = vpop.f32.mrb[0].mxu0
        %v1437 = vpop.f32.mrb[0].mxu0
        %v1438 = vadd.f32 0.0, %v1437
        %v1439 = vpop.f32.mrb[0].mxu0
        %1440 = vmatprep.mubr.bf16.mxu0 0
        %1441 = vmatmul.mubr.bf16.gmra.mrb[0].mxu0 %v995
        %v1442 = vpop.f32.mrb[0].mxu0
        %v1443 = vadd.f32 0.0, %v1442
        %v1444 = vpop.f32.mrb[0].mxu0
        %v1445 = vpop.f32.mrb[0].mxu0
        %v1446 = vadd.f32 0.0, %v1445
        %v1447 = vpop.f32.mrb[0].mxu0
        %1448 = vmatprep.mubr.bf16.mxu0 0
        %1449 = vmatmul.mubr.bf16.gmra.mrb[0].mxu0 %v998
        %v1450 = vpop.f32.mrb[0].mxu0
        %v1451 = vadd.f32 0.0, %v1450
        %v1452 = vpop.f32.mrb[0].mxu0
        %v1453 = vpop.f32.mrb[0].mxu0
        %v1454 = vpop.f32.mrb[0].mxu0
        %1455 = vdwg.mxu0
        %v1464 = vunpack.c.l.b16 %v721
        %v1465 = vunpack.c.l.b16 %v722
        %v1466 = vunpack.c.l.b16 %v723
        %v1467 = vunpack.c.l.b16 %v724
        %v1468 = vunpack.c.l.b16 %v725
        %v1469 = vunpack.c.l.b16 %v726
        %v1470 = vunpack.c.l.b16 %v727
        %v1471 = vunpack.c.l.b16 %v728
        %v1472 = vpack.c.b16 %v1465, %v1464
        %v1473 = vpack.c.b16 %v1467, %v1466
        %v1474 = vpack.c.b16 %v1469, %v1468
        %v1475 = vpack.c.b16 %v1471, %v1470
        %1480 = vmatprep.subr.bf16.mxu0 0
        %1481 = vmatpush1.bf16.msra.mxu0 %v1472
        %1482 = vmatprep.subr.bf16.mxu0 0
        %1483 = vmatpush1.bf16.msra.mxu0 %v1473
        %1484 = vmatprep.subr.bf16.mxu0 0
        %1485 = vmatpush1.bf16.msra.mxu0 %v1474
        %1486 = vmatprep.subr.bf16.mxu0 0
        %1487 = vmatpush1.bf16.msra.mxu0 %v1475
        %1488 = vmatprep.subr.bf16.mxu0 0
        %1489 = vmatpush1.bf16.msra.mxu0 0
        %1490 = vmatprep.subr.bf16.mxu0 0
        %1491 = vmatpush1.bf16.msra.mxu0 0
        %1492 = vmatprep.subr.bf16.mxu0 0
        %1493 = vmatpush1.bf16.msra.mxu0 0
        %1494 = vmatprep.subr.bf16.mxu0 0
        %1495 = vmatpush1.bf16.msra.mxu0 0
        %1496 = vmatprep.subr.bf16.mxu0 0
        %1497 = vmatpush1.bf16.msra.mxu0 0
        %1498 = vmatprep.subr.bf16.mxu0 0
        %1499 = vmatpush1.bf16.msra.mxu0 0
        %1500 = vmatprep.subr.bf16.mxu0 0
        %1501 = vmatpush1.bf16.msra.mxu0 0
        %1502 = vmatprep.subr.bf16.mxu0 0
        %1503 = vmatpush1.bf16.msra.mxu0 0
        %1504 = vmatprep.subr.bf16.mxu0 0
        %1505 = vmatpush1.bf16.msra.mxu0 0
        %1506 = vmatprep.subr.bf16.mxu0 0
        %1507 = vmatpush1.bf16.msra.mxu0 0
        %1508 = vmatprep.subr.bf16.mxu0 0
        %1509 = vmatpush1.bf16.msra.mxu0 0
        %1510 = vmatprep.subr.bf16.mxu0 0
        %1511 = vmatpush1.bf16.msra.mxu0 0
        %1512 = vmatprep.mubr.bf16.mxu0 0
        %1513 = vmatmul.mubr.bf16.gmra.mrb[0].mxu0 %v992
        %v1514 = vpop.f32.mrb[0].mxu0
        %v1515 = vadd.f32 0.0, %v1514
        %v1516 = vpop.f32.mrb[0].mxu0
        %v1517 = vpop.f32.mrb[0].mxu0
        %v1518 = vadd.f32 0.0, %v1517
        %v1519 = vpop.f32.mrb[0].mxu0
        %1520 = vmatprep.mubr.bf16.mxu0 0
        %1521 = vmatmul.mubr.bf16.gmra.mrb[0].mxu0 %v995
        %v1522 = vpop.f32.mrb[0].mxu0
        %v1523 = vadd.f32 0.0, %v1522
        %v1524 = vpop.f32.mrb[0].mxu0
        %v1525 = vpop.f32.mrb[0].mxu0
        %v1526 = vadd.f32 0.0, %v1525
        %v1527 = vpop.f32.mrb[0].mxu0
        %1528 = vmatprep.mubr.bf16.mxu0 0
        %1529 = vmatmul.mubr.bf16.gmra.mrb[0].mxu0 %v998
        %v1530 = vpop.f32.mrb[0].mxu0
        %v1531 = vadd.f32 0.0, %v1530
        %v1532 = vpop.f32.mrb[0].mxu0
        %v1533 = vpop.f32.mrb[0].mxu0
        %v1534 = vpop.f32.mrb[0].mxu0
        %1535 = vdwg.mxu0
        %v1544 = vunpack.c.l.b16 %v729
        %v1545 = vunpack.c.l.b16 %v730
        %v1546 = vunpack.c.l.b16 %v731
        %v1547 = vunpack.c.l.b16 %v732
        %v1548 = vunpack.c.l.b16 %v733
        %v1549 = vunpack.c.l.b16 %v734
        %v1550 = vunpack.c.l.b16 %v735
        %v1551 = vunpack.c.l.b16 %v736
        %v1552 = vpack.c.b16 %v1545, %v1544
        %v1553 = vpack.c.b16 %v1547, %v1546
        %v1554 = vpack.c.b16 %v1549, %v1548
        %v1555 = vpack.c.b16 %v1551, %v1550
        %1560 = vmatprep.subr.bf16.mxu0 0
        %1561 = vmatpush1.bf16.msra.mxu0 %v1552
        %1562 = vmatprep.subr.bf16.mxu0 0
        %1563 = vmatpush1.bf16.msra.mxu0 %v1553
        %1564 = vmatprep.subr.bf16.mxu0 0
        %1565 = vmatpush1.bf16.msra.mxu0 %v1554
        %1566 = vmatprep.subr.bf16.mxu0 0
        %1567 = vmatpush1.bf16.msra.mxu0 %v1555
        %1568 = vmatprep.subr.bf16.mxu0 0
        %1569 = vmatpush1.bf16.msra.mxu0 0
        %1570 = vmatprep.subr.bf16.mxu0 0
        %1571 = vmatpush1.bf16.msra.mxu0 0
        %1572 = vmatprep.subr.bf16.mxu0 0
        %1573 = vmatpush1.bf16.msra.mxu0 0
        %1574 = vmatprep.subr.bf16.mxu0 0
        %1575 = vmatpush1.bf16.msra.mxu0 0
        %1576 = vmatprep.subr.bf16.mxu0 0
        %1577 = vmatpush1.bf16.msra.mxu0 0
        %1578 = vmatprep.subr.bf16.mxu0 0
        %1579 = vmatpush1.bf16.msra.mxu0 0
        %1580 = vmatprep.subr.bf16.mxu0 0
        %1581 = vmatpush1.bf16.msra.mxu0 0
        %1582 = vmatprep.subr.bf16.mxu0 0
        %1583 = vmatpush1.bf16.msra.mxu0 0
        %1584 = vmatprep.subr.bf16.mxu0 0
        %1585 = vmatpush1.bf16.msra.mxu0 0
        %1586 = vmatprep.subr.bf16.mxu0 0
        %1587 = vmatpush1.bf16.msra.mxu0 0
        %1588 = vmatprep.subr.bf16.mxu0 0
        %1589 = vmatpush1.bf16.msra.mxu0 0
        %1590 = vmatprep.subr.bf16.mxu0 0
        %1591 = vmatpush1.bf16.msra.mxu0 0
        %1592 = vmatprep.mubr.bf16.mxu0 0
        %1593 = vmatmul.mubr.bf16.gmra.mrb[0].mxu0 %v992
        %v1594 = vpop.f32.mrb[0].mxu0
        %v1595 = vadd.f32 0.0, %v1594
        %v1596 = vpop.f32.mrb[0].mxu0
        %v1597 = vpop.f32.mrb[0].mxu0
        %v1598 = vadd.f32 0.0, %v1597
        %v1599 = vpop.f32.mrb[0].mxu0
        %1600 = vmatprep.mubr.bf16.mxu0 0
        %1601 = vmatmul.mubr.bf16.gmra.mrb[0].mxu0 %v995
        %v1602 = vpop.f32.mrb[0].mxu0
        %v1603 = vadd.f32 0.0, %v1602
        %v1604 = vpop.f32.mrb[0].mxu0
        %v1605 = vpop.f32.mrb[0].mxu0
        %v1606 = vadd.f32 0.0, %v1605
        %v1607 = vpop.f32.mrb[0].mxu0
        %1608 = vmatprep.mubr.bf16.mxu0 0
        %1609 = vmatmul.mubr.bf16.gmra.mrb[0].mxu0 %v998
        %v1610 = vpop.f32.mrb[0].mxu0
        %v1611 = vadd.f32 0.0, %v1610
        %v1612 = vpop.f32.mrb[0].mxu0
        %v1613 = vpop.f32.mrb[0].mxu0
        %v1614 = vpop.f32.mrb[0].mxu0
        %1615 = vdwg.mxu0
        %v1616 = vpack.c.bf16 %v1038, %v1035
        %v1617 = vpack.c.bf16 %v1046, %v1043
        %v1618 = vpack.c.bf16 %v1051, %v1051
        %v1619 = vpack.c.bf16 %v1118, %v1115
        %v1620 = vpack.c.bf16 %v1126, %v1123
        %v1621 = vpack.c.bf16 %v1131, %v1131
        %v1622 = vpack.c.bf16 %v1198, %v1195
        %v1623 = vpack.c.bf16 %v1206, %v1203
        %v1624 = vpack.c.bf16 %v1211, %v1211
        %v1625 = vpack.c.bf16 %v1278, %v1275
        %v1626 = vpack.c.bf16 %v1286, %v1283
        %v1627 = vpack.c.bf16 %v1291, %v1291
        %v1628 = vpack.c.bf16 %v1358, %v1355
        %v1629 = vpack.c.bf16 %v1366, %v1363
        %v1630 = vpack.c.bf16 %v1371, %v1371
        %v1631 = vpack.c.bf16 %v1438, %v1435
        %v1632 = vpack.c.bf16 %v1446, %v1443
        %v1633 = vpack.c.bf16 %v1451, %v1451
        %v1634 = vpack.c.bf16 %v1518, %v1515
        %v1635 = vpack.c.bf16 %v1526, %v1523
        %v1636 = vpack.c.bf16 %v1531, %v1531
        %v1637 = vpack.c.bf16 %v1598, %v1595
        %v1638 = vpack.c.bf16 %v1606, %v1603
        %v1639 = vpack.c.bf16 %v1611, %v1611
        %v1648 = vunpack.c.l.b16 %v737
        %v1649 = vunpack.c.l.b16 %v738
        %v1650 = vunpack.c.l.b16 %v739
        %v1651 = vunpack.c.l.b16 %v740
        %v1652 = vunpack.c.l.b16 %v741
        %v1653 = vunpack.c.l.b16 %v742
        %v1654 = vunpack.c.l.b16 %v743
        %v1655 = vunpack.c.l.b16 %v744
        %v1656 = vpack.c.b16 %v1649, %v1648
        %v1657 = vpack.c.b16 %v1651, %v1650
        %v1658 = vpack.c.b16 %v1653, %v1652
        %v1659 = vpack.c.b16 %v1655, %v1654
        %1664 = vmatprep.subr.bf16.mxu0 0
        %1665 = vmatpush1.bf16.msra.mxu0 %v1656
        %1666 = vmatprep.subr.bf16.mxu0 0
        %1667 = vmatpush1.bf16.msra.mxu0 %v1657
        %1668 = vmatprep.subr.bf16.mxu0 0
        %1669 = vmatpush1.bf16.msra.mxu0 %v1658
        %1670 = vmatprep.subr.bf16.mxu0 0
        %1671 = vmatpush1.bf16.msra.mxu0 %v1659
        %1672 = vmatprep.subr.bf16.mxu0 0
        %1673 = vmatpush1.bf16.msra.mxu0 0
        %1674 = vmatprep.subr.bf16.mxu0 0
        %1675 = vmatpush1.bf16.msra.mxu0 0
        %1676 = vmatprep.subr.bf16.mxu0 0
        %1677 = vmatpush1.bf16.msra.mxu0 0
        %1678 = vmatprep.subr.bf16.mxu0 0
        %1679 = vmatpush1.bf16.msra.mxu0 0
        %1680 = vmatprep.subr.bf16.mxu0 0
        %1681 = vmatpush1.bf16.msra.mxu0 0
        %1682 = vmatprep.subr.bf16.mxu0 0
        %1683 = vmatpush1.bf16.msra.mxu0 0
        %1684 = vmatprep.subr.bf16.mxu0 0
        %1685 = vmatpush1.bf16.msra.mxu0 0
        %1686 = vmatprep.subr.bf16.mxu0 0
        %1687 = vmatpush1.bf16.msra.mxu0 0
        %1688 = vmatprep.subr.bf16.mxu0 0
        %1689 = vmatpush1.bf16.msra.mxu0 0
        %1690 = vmatprep.subr.bf16.mxu0 0
        %1691 = vmatpush1.bf16.msra.mxu0 0
        %1692 = vmatprep.subr.bf16.mxu0 0
        %1693 = vmatpush1.bf16.msra.mxu0 0
        %1694 = vmatprep.subr.bf16.mxu0 0
        %1695 = vmatpush1.bf16.msra.mxu0 0
        %1696 = vmatprep.mubr.bf16.mxu0 0
        %1697 = vmatmul.mubr.bf16.gmra.mrb[0].mxu0 %v992
        %v1698 = vpop.f32.mrb[0].mxu0
        %v1699 = vadd.f32 0.0, %v1698
        %v1700 = vpop.f32.mrb[0].mxu0
        %v1701 = vpop.f32.mrb[0].mxu0
        %v1702 = vadd.f32 0.0, %v1701
        %v1703 = vpop.f32.mrb[0].mxu0
        %1704 = vmatprep.mubr.bf16.mxu0 0
        %1705 = vmatmul.mubr.bf16.gmra.mrb[0].mxu0 %v995
        %v1706 = vpop.f32.mrb[0].mxu0
        %v1707 = vadd.f32 0.0, %v1706
        %v1708 = vpop.f32.mrb[0].mxu0
        %v1709 = vpop.f32.mrb[0].mxu0
        %v1710 = vadd.f32 0.0, %v1709
        %v1711 = vpop.f32.mrb[0].mxu0
        %1712 = vmatprep.mubr.bf16.mxu0 0
        %1713 = vmatmul.mubr.bf16.gmra.mrb[0].mxu0 %v998
        %v1714 = vpop.f32.mrb[0].mxu0
        %v1715 = vadd.f32 0.0, %v1714
        %v1716 = vpop.f32.mrb[0].mxu0
        %v1717 = vpop.f32.mrb[0].mxu0
        %v1718 = vpop.f32.mrb[0].mxu0
        %1719 = vdwg.mxu0
        %v1728 = vunpack.c.l.b16 %v745
        %v1729 = vunpack.c.l.b16 %v746
        %v1730 = vunpack.c.l.b16 %v747
        %v1731 = vunpack.c.l.b16 %v748
        %v1732 = vunpack.c.l.b16 %v749
        %v1733 = vunpack.c.l.b16 %v750
        %v1734 = vunpack.c.l.b16 %v751
        %v1735 = vunpack.c.l.b16 %v752
        %v1736 = vpack.c.b16 %v1729, %v1728
        %v1737 = vpack.c.b16 %v1731, %v1730
        %v1738 = vpack.c.b16 %v1733, %v1732
        %v1739 = vpack.c.b16 %v1735, %v1734
        %1744 = vmatprep.subr.bf16.mxu0 0
        %1745 = vmatpush1.bf16.msra.mxu0 %v1736
        %1746 = vmatprep.subr.bf16.mxu0 0
        %1747 = vmatpush1.bf16.msra.mxu0 %v1737
        %1748 = vmatprep.subr.bf16.mxu0 0
        %1749 = vmatpush1.bf16.msra.mxu0 %v1738
        %1750 = vmatprep.subr.bf16.mxu0 0
        %1751 = vmatpush1.bf16.msra.mxu0 %v1739
        %1752 = vmatprep.subr.bf16.mxu0 0
        %1753 = vmatpush1.bf16.msra.mxu0 0
        %1754 = vmatprep.subr.bf16.mxu0 0
        %1755 = vmatpush1.bf16.msra.mxu0 0
        %1756 = vmatprep.subr.bf16.mxu0 0
        %1757 = vmatpush1.bf16.msra.mxu0 0
        %1758 = vmatprep.subr.bf16.mxu0 0
        %1759 = vmatpush1.bf16.msra.mxu0 0
        %1760 = vmatprep.subr.bf16.mxu0 0
        %1761 = vmatpush1.bf16.msra.mxu0 0
        %1762 = vmatprep.subr.bf16.mxu0 0
        %1763 = vmatpush1.bf16.msra.mxu0 0
        %1764 = vmatprep.subr.bf16.mxu0 0
        %1765 = vmatpush1.bf16.msra.mxu0 0
        %1766 = vmatprep.subr.bf16.mxu0 0
        %1767 = vmatpush1.bf16.msra.mxu0 0
        %1768 = vmatprep.subr.bf16.mxu0 0
        %1769 = vmatpush1.bf16.msra.mxu0 0
        %1770 = vmatprep.subr.bf16.mxu0 0
        %1771 = vmatpush1.bf16.msra.mxu0 0
        %1772 = vmatprep.subr.bf16.mxu0 0
        %1773 = vmatpush1.bf16.msra.mxu0 0
        %1774 = vmatprep.subr.bf16.mxu0 0
        %1775 = vmatpush1.bf16.msra.mxu0 0
        %1776 = vmatprep.mubr.bf16.mxu0 0
        %1777 = vmatmul.mubr.bf16.gmra.mrb[0].mxu0 %v992
        %v1778 = vpop.f32.mrb[0].mxu0
        %v1779 = vadd.f32 0.0, %v1778
        %v1780 = vpop.f32.mrb[0].mxu0
        %v1781 = vpop.f32.mrb[0].mxu0
        %v1782 = vadd.f32 0.0, %v1781
        %v1783 = vpop.f32.mrb[0].mxu0
        %1784 = vmatprep.mubr.bf16.mxu0 0
        %1785 = vmatmul.mubr.bf16.gmra.mrb[0].mxu0 %v995
        %v1786 = vpop.f32.mrb[0].mxu0
        %v1787 = vadd.f32 0.0, %v1786
        %v1788 = vpop.f32.mrb[0].mxu0
        %v1789 = vpop.f32.mrb[0].mxu0
        %v1790 = vadd.f32 0.0, %v1789
        %v1791 = vpop.f32.mrb[0].mxu0
        %1792 = vmatprep.mubr.bf16.mxu0 0
        %1793 = vmatmul.mubr.bf16.gmra.mrb[0].mxu0 %v998
        %v1794 = vpop.f32.mrb[0].mxu0
        %v1795 = vadd.f32 0.0, %v1794
        %v1796 = vpop.f32.mrb[0].mxu0
        %v1797 = vpop.f32.mrb[0].mxu0
        %v1798 = vpop.f32.mrb[0].mxu0
        %1799 = vdwg.mxu0
        %v1808 = vunpack.c.l.b16 %v753
        %v1809 = vunpack.c.l.b16 %v754
        %v1810 = vunpack.c.l.b16 %v755
        %v1811 = vunpack.c.l.b16 %v756
        %v1812 = vunpack.c.l.b16 %v757
        %v1813 = vunpack.c.l.b16 %v758
        %v1814 = vunpack.c.l.b16 %v759
        %v1815 = vunpack.c.l.b16 %v760
        %v1816 = vpack.c.b16 %v1809, %v1808
        %v1817 = vpack.c.b16 %v1811, %v1810
        %v1818 = vpack.c.b16 %v1813, %v1812
        %v1819 = vpack.c.b16 %v1815, %v1814
        %1824 = vmatprep.subr.bf16.mxu0 0
        %1825 = vmatpush1.bf16.msra.mxu0 %v1816
        %1826 = vmatprep.subr.bf16.mxu0 0
        %1827 = vmatpush1.bf16.msra.mxu0 %v1817
        %1828 = vmatprep.subr.bf16.mxu0 0
        %1829 = vmatpush1.bf16.msra.mxu0 %v1818
        %1830 = vmatprep.subr.bf16.mxu0 0
        %1831 = vmatpush1.bf16.msra.mxu0 %v1819
        %1832 = vmatprep.subr.bf16.mxu0 0
        %1833 = vmatpush1.bf16.msra.mxu0 0
        %1834 = vmatprep.subr.bf16.mxu0 0
        %1835 = vmatpush1.bf16.msra.mxu0 0
        %1836 = vmatprep.subr.bf16.mxu0 0
        %1837 = vmatpush1.bf16.msra.mxu0 0
        %1838 = vmatprep.subr.bf16.mxu0 0
        %1839 = vmatpush1.bf16.msra.mxu0 0
        %1840 = vmatprep.subr.bf16.mxu0 0
        %1841 = vmatpush1.bf16.msra.mxu0 0
        %1842 = vmatprep.subr.bf16.mxu0 0
        %1843 = vmatpush1.bf16.msra.mxu0 0
        %1844 = vmatprep.subr.bf16.mxu0 0
        %1845 = vmatpush1.bf16.msra.mxu0 0
        %1846 = vmatprep.subr.bf16.mxu0 0
        %1847 = vmatpush1.bf16.msra.mxu0 0
        %1848 = vmatprep.subr.bf16.mxu0 0
        %1849 = vmatpush1.bf16.msra.mxu0 0
        %1850 = vmatprep.subr.bf16.mxu0 0
        %1851 = vmatpush1.bf16.msra.mxu0 0
        %1852 = vmatprep.subr.bf16.mxu0 0
        %1853 = vmatpush1.bf16.msra.mxu0 0
        %1854 = vmatprep.subr.bf16.mxu0 0
        %1855 = vmatpush1.bf16.msra.mxu0 0
        %1856 = vmatprep.mubr.bf16.mxu0 0
        %1857 = vmatmul.mubr.bf16.gmra.mrb[0].mxu0 %v992
        %v1858 = vpop.f32.mrb[0].mxu0
        %v1859 = vadd.f32 0.0, %v1858
        %v1860 = vpop.f32.mrb[0].mxu0
        %v1861 = vpop.f32.mrb[0].mxu0
        %v1862 = vadd.f32 0.0, %v1861
        %v1863 = vpop.f32.mrb[0].mxu0
        %1864 = vmatprep.mubr.bf16.mxu0 0
        %1865 = vmatmul.mubr.bf16.gmra.mrb[0].mxu0 %v995
        %v1866 = vpop.f32.mrb[0].mxu0
        %v1867 = vadd.f32 0.0, %v1866
        %v1868 = vpop.f32.mrb[0].mxu0
        %v1869 = vpop.f32.mrb[0].mxu0
        %v1870 = vadd.f32 0.0, %v1869
        %v1871 = vpop.f32.mrb[0].mxu0
        %1872 = vmatprep.mubr.bf16.mxu0 0
        %1873 = vmatmul.mubr.bf16.gmra.mrb[0].mxu0 %v998
        %v1874 = vpop.f32.mrb[0].mxu0
        %v1875 = vadd.f32 0.0, %v1874
        %v1876 = vpop.f32.mrb[0].mxu0
        %v1877 = vpop.f32.mrb[0].mxu0
        %v1878 = vpop.f32.mrb[0].mxu0
        %1879 = vdwg.mxu0
        %v1888 = vunpack.c.l.b16 %v761
        %v1889 = vunpack.c.l.b16 %v762
        %v1890 = vunpack.c.l.b16 %v763
        %v1891 = vunpack.c.l.b16 %v764
        %v1892 = vunpack.c.l.b16 %v765
        %v1893 = vunpack.c.l.b16 %v766
        %v1894 = vunpack.c.l.b16 %v767
        %v1895 = vunpack.c.l.b16 %v768
        %v1896 = vpack.c.b16 %v1889, %v1888
        %v1897 = vpack.c.b16 %v1891, %v1890
        %v1898 = vpack.c.b16 %v1893, %v1892
        %v1899 = vpack.c.b16 %v1895, %v1894
        %1904 = vmatprep.subr.bf16.mxu0 0
        %1905 = vmatpush1.bf16.msra.mxu0 %v1896
        %1906 = vmatprep.subr.bf16.mxu0 0
        %1907 = vmatpush1.bf16.msra.mxu0 %v1897
        %1908 = vmatprep.subr.bf16.mxu0 0
        %1909 = vmatpush1.bf16.msra.mxu0 %v1898
        %1910 = vmatprep.subr.bf16.mxu0 0
        %1911 = vmatpush1.bf16.msra.mxu0 %v1899
        %1912 = vmatprep.subr.bf16.mxu0 0
        %1913 = vmatpush1.bf16.msra.mxu0 0
        %1914 = vmatprep.subr.bf16.mxu0 0
        %1915 = vmatpush1.bf16.msra.mxu0 0
        %1916 = vmatprep.subr.bf16.mxu0 0
        %1917 = vmatpush1.bf16.msra.mxu0 0
        %1918 = vmatprep.subr.bf16.mxu0 0
        %1919 = vmatpush1.bf16.msra.mxu0 0
        %1920 = vmatprep.subr.bf16.mxu0 0
        %1921 = vmatpush1.bf16.msra.mxu0 0
        %1922 = vmatprep.subr.bf16.mxu0 0
        %1923 = vmatpush1.bf16.msra.mxu0 0
        %1924 = vmatprep.subr.bf16.mxu0 0
        %1925 = vmatpush1.bf16.msra.mxu0 0
        %1926 = vmatprep.subr.bf16.mxu0 0
        %1927 = vmatpush1.bf16.msra.mxu0 0
        %1928 = vmatprep.subr.bf16.mxu0 0
        %1929 = vmatpush1.bf16.msra.mxu0 0
        %1930 = vmatprep.subr.bf16.mxu0 0
        %1931 = vmatpush1.bf16.msra.mxu0 0
        %1932 = vmatprep.subr.bf16.mxu0 0
        %1933 = vmatpush1.bf16.msra.mxu0 0
        %1934 = vmatprep.subr.bf16.mxu0 0
        %1935 = vmatpush1.bf16.msra.mxu0 0
        %1936 = vmatprep.mubr.bf16.mxu0 0
        %1937 = vmatmul.mubr.bf16.gmra.mrb[0].mxu0 %v992
        %v1938 = vpop.f32.mrb[0].mxu0
        %v1939 = vadd.f32 0.0, %v1938
        %v1940 = vpop.f32.mrb[0].mxu0
        %v1941 = vpop.f32.mrb[0].mxu0
        %v1942 = vadd.f32 0.0, %v1941
        %v1943 = vpop.f32.mrb[0].mxu0
        %1944 = vmatprep.mubr.bf16.mxu0 0
        %1945 = vmatmul.mubr.bf16.gmra.mrb[0].mxu0 %v995
        %v1946 = vpop.f32.mrb[0].mxu0
        %v1947 = vadd.f32 0.0, %v1946
        %v1948 = vpop.f32.mrb[0].mxu0
        %v1949 = vpop.f32.mrb[0].mxu0
        %v1950 = vadd.f32 0.0, %v1949
        %v1951 = vpop.f32.mrb[0].mxu0
        %1952 = vmatprep.mubr.bf16.mxu0 0
        %1953 = vmatmul.mubr.bf16.gmra.mrb[0].mxu0 %v998
        %v1954 = vpop.f32.mrb[0].mxu0
        %v1955 = vadd.f32 0.0, %v1954
        %v1956 = vpop.f32.mrb[0].mxu0
        %v1957 = vpop.f32.mrb[0].mxu0
        %v1958 = vpop.f32.mrb[0].mxu0
        %1959 = vdwg.mxu0
        %v1968 = vunpack.c.l.b16 %v769
        %v1969 = vunpack.c.l.b16 %v770
        %v1970 = vunpack.c.l.b16 %v771
        %v1971 = vunpack.c.l.b16 %v772
        %v1972 = vunpack.c.l.b16 %v773
        %v1973 = vunpack.c.l.b16 %v774
        %v1974 = vunpack.c.l.b16 %v775
        %v1975 = vunpack.c.l.b16 %v776
        %v1976 = vpack.c.b16 %v1969, %v1968
        %v1977 = vpack.c.b16 %v1971, %v1970
        %v1978 = vpack.c.b16 %v1973, %v1972
        %v1979 = vpack.c.b16 %v1975, %v1974
        %1984 = vmatprep.subr.bf16.mxu0 0
        %1985 = vmatpush1.bf16.msra.mxu0 %v1976
        %1986 = vmatprep.subr.bf16.mxu0 0
        %1987 = vmatpush1.bf16.msra.mxu0 %v1977
        %1988 = vmatprep.subr.bf16.mxu0 0
        %1989 = vmatpush1.bf16.msra.mxu0 %v1978
        %1990 = vmatprep.subr.bf16.mxu0 0
        %1991 = vmatpush1.bf16.msra.mxu0 %v1979
        %1992 = vmatprep.subr.bf16.mxu0 0
        %1993 = vmatpush1.bf16.msra.mxu0 0
        %1994 = vmatprep.subr.bf16.mxu0 0
        %1995 = vmatpush1.bf16.msra.mxu0 0
        %1996 = vmatprep.subr.bf16.mxu0 0
        %1997 = vmatpush1.bf16.msra.mxu0 0
        %1998 = vmatprep.subr.bf16.mxu0 0
        %1999 = vmatpush1.bf16.msra.mxu0 0
        %2000 = vmatprep.subr.bf16.mxu0 0
        %2001 = vmatpush1.bf16.msra.mxu0 0
        %2002 = vmatprep.subr.bf16.mxu0 0
        %2003 = vmatpush1.bf16.msra.mxu0 0
        %2004 = vmatprep.subr.bf16.mxu0 0
        %2005 = vmatpush1.bf16.msra.mxu0 0
        %2006 = vmatprep.subr.bf16.mxu0 0
        %2007 = vmatpush1.bf16.msra.mxu0 0
        %2008 = vmatprep.subr.bf16.mxu0 0
        %2009 = vmatpush1.bf16.msra.mxu0 0
        %2010 = vmatprep.subr.bf16.mxu0 0
        %2011 = vmatpush1.bf16.msra.mxu0 0
        %2012 = vmatprep.subr.bf16.mxu0 0
        %2013 = vmatpush1.bf16.msra.mxu0 0
        %2014 = vmatprep.subr.bf16.mxu0 0
        %2015 = vmatpush1.bf16.msra.mxu0 0
        %2016 = vmatprep.mubr.bf16.mxu0 0
        %2017 = vmatmul.mubr.bf16.gmra.mrb[0].mxu0 %v992
        %v2018 = vpop.f32.mrb[0].mxu0
        %v2019 = vadd.f32 0.0, %v2018
        %v2020 = vpop.f32.mrb[0].mxu0
        %v2021 = vpop.f32.mrb[0].mxu0
        %v2022 = vadd.f32 0.0, %v2021
        %v2023 = vpop.f32.mrb[0].mxu0
        %2024 = vmatprep.mubr.bf16.mxu0 0
        %2025 = vmatmul.mubr.bf16.gmra.mrb[0].mxu0 %v995
        %v2026 = vpop.f32.mrb[0].mxu0
        %v2027 = vadd.f32 0.0, %v2026
        %v2028 = vpop.f32.mrb[0].mxu0
        %v2029 = vpop.f32.mrb[0].mxu0
        %v2030 = vadd.f32 0.0, %v2029
        %v2031 = vpop.f32.mrb[0].mxu0
        %2032 = vmatprep.mubr.bf16.mxu0 0
        %2033 = vmatmul.mubr.bf16.gmra.mrb[0].mxu0 %v998
        %v2034 = vpop.f32.mrb[0].mxu0
        %v2035 = vadd.f32 0.0, %v2034
        %v2036 = vpop.f32.mrb[0].mxu0
        %v2037 = vpop.f32.mrb[0].mxu0
        %v2038 = vpop.f32.mrb[0].mxu0
        %2039 = vdwg.mxu0
        %v2048 = vunpack.c.l.b16 %v777
        %v2049 = vunpack.c.l.b16 %v778
        %v2050 = vunpack.c.l.b16 %v779
        %v2051 = vunpack.c.l.b16 %v780
        %v2052 = vunpack.c.l.b16 %v781
        %v2053 = vunpack.c.l.b16 %v782
        %v2054 = vunpack.c.l.b16 %v783
        %v2055 = vunpack.c.l.b16 %v784
        %v2056 = vpack.c.b16 %v2049, %v2048
        %v2057 = vpack.c.b16 %v2051, %v2050
        %v2058 = vpack.c.b16 %v2053, %v2052
        %v2059 = vpack.c.b16 %v2055, %v2054
        %2064 = vmatprep.subr.bf16.mxu0 0
        %2065 = vmatpush1.bf16.msra.mxu0 %v2056
        %2066 = vmatprep.subr.bf16.mxu0 0
        %2067 = vmatpush1.bf16.msra.mxu0 %v2057
        %2068 = vmatprep.subr.bf16.mxu0 0
        %2069 = vmatpush1.bf16.msra.mxu0 %v2058
        %2070 = vmatprep.subr.bf16.mxu0 0
        %2071 = vmatpush1.bf16.msra.mxu0 %v2059
        %2072 = vmatprep.subr.bf16.mxu0 0
        %2073 = vmatpush1.bf16.msra.mxu0 0
        %2074 = vmatprep.subr.bf16.mxu0 0
        %2075 = vmatpush1.bf16.msra.mxu0 0
        %2076 = vmatprep.subr.bf16.mxu0 0
        %2077 = vmatpush1.bf16.msra.mxu0 0
        %2078 = vmatprep.subr.bf16.mxu0 0
        %2079 = vmatpush1.bf16.msra.mxu0 0
        %2080 = vmatprep.subr.bf16.mxu0 0
        %2081 = vmatpush1.bf16.msra.mxu0 0
        %2082 = vmatprep.subr.bf16.mxu0 0
        %2083 = vmatpush1.bf16.msra.mxu0 0
        %2084 = vmatprep.subr.bf16.mxu0 0
        %2085 = vmatpush1.bf16.msra.mxu0 0
        %2086 = vmatprep.subr.bf16.mxu0 0
        %2087 = vmatpush1.bf16.msra.mxu0 0
        %2088 = vmatprep.subr.bf16.mxu0 0
        %2089 = vmatpush1.bf16.msra.mxu0 0
        %2090 = vmatprep.subr.bf16.mxu0 0
        %2091 = vmatpush1.bf16.msra.mxu0 0
        %2092 = vmatprep.subr.bf16.mxu0 0
        %2093 = vmatpush1.bf16.msra.mxu0 0
        %2094 = vmatprep.subr.bf16.mxu0 0
        %2095 = vmatpush1.bf16.msra.mxu0 0
        %2096 = vmatprep.mubr.bf16.mxu0 0
        %2097 = vmatmul.mubr.bf16.gmra.mrb[0].mxu0 %v992
        %v2098 = vpop.f32.mrb[0].mxu0
        %v2099 = vadd.f32 0.0, %v2098
        %v2100 = vpop.f32.mrb[0].mxu0
        %v2101 = vpop.f32.mrb[0].mxu0
        %v2102 = vadd.f32 0.0, %v2101
        %v2103 = vpop.f32.mrb[0].mxu0
        %2104 = vmatprep.mubr.bf16.mxu0 0
        %2105 = vmatmul.mubr.bf16.gmra.mrb[0].mxu0 %v995
        %v2106 = vpop.f32.mrb[0].mxu0
        %v2107 = vadd.f32 0.0, %v2106
        %v2108 = vpop.f32.mrb[0].mxu0
        %v2109 = vpop.f32.mrb[0].mxu0
        %v2110 = vadd.f32 0.0, %v2109
        %v2111 = vpop.f32.mrb[0].mxu0
        %2112 = vmatprep.mubr.bf16.mxu0 0
        %2113 = vmatmul.mubr.bf16.gmra.mrb[0].mxu0 %v998
        %v2114 = vpop.f32.mrb[0].mxu0
        %v2115 = vadd.f32 0.0, %v2114
        %v2116 = vpop.f32.mrb[0].mxu0
        %v2117 = vpop.f32.mrb[0].mxu0
        %v2118 = vpop.f32.mrb[0].mxu0
        %2119 = vdwg.mxu0
        %v2128 = vunpack.c.l.b16 %v785
        %v2129 = vunpack.c.l.b16 %v786
        %v2130 = vunpack.c.l.b16 %v787
        %v2131 = vunpack.c.l.b16 %v788
        %v2132 = vunpack.c.l.b16 %v789
        %v2133 = vunpack.c.l.b16 %v790
        %v2134 = vunpack.c.l.b16 %v791
        %v2135 = vunpack.c.l.b16 %v792
        %v2136 = vpack.c.b16 %v2129, %v2128
        %v2137 = vpack.c.b16 %v2131, %v2130
        %v2138 = vpack.c.b16 %v2133, %v2132
        %v2139 = vpack.c.b16 %v2135, %v2134
        %2144 = vmatprep.subr.bf16.mxu0 0
        %2145 = vmatpush1.bf16.msra.mxu0 %v2136
        %2146 = vmatprep.subr.bf16.mxu0 0
        %2147 = vmatpush1.bf16.msra.mxu0 %v2137
        %2148 = vmatprep.subr.bf16.mxu0 0
        %2149 = vmatpush1.bf16.msra.mxu0 %v2138
        %2150 = vmatprep.subr.bf16.mxu0 0
        %2151 = vmatpush1.bf16.msra.mxu0 %v2139
        %2152 = vmatprep.subr.bf16.mxu0 0
        %2153 = vmatpush1.bf16.msra.mxu0 0
        %2154 = vmatprep.subr.bf16.mxu0 0
        %2155 = vmatpush1.bf16.msra.mxu0 0
        %2156 = vmatprep.subr.bf16.mxu0 0
        %2157 = vmatpush1.bf16.msra.mxu0 0
        %2158 = vmatprep.subr.bf16.mxu0 0
        %2159 = vmatpush1.bf16.msra.mxu0 0
        %2160 = vmatprep.subr.bf16.mxu0 0
        %2161 = vmatpush1.bf16.msra.mxu0 0
        %2162 = vmatprep.subr.bf16.mxu0 0
        %2163 = vmatpush1.bf16.msra.mxu0 0
        %2164 = vmatprep.subr.bf16.mxu0 0
        %2165 = vmatpush1.bf16.msra.mxu0 0
        %2166 = vmatprep.subr.bf16.mxu0 0
        %2167 = vmatpush1.bf16.msra.mxu0 0
        %2168 = vmatprep.subr.bf16.mxu0 0
        %2169 = vmatpush1.bf16.msra.mxu0 0
        %2170 = vmatprep.subr.bf16.mxu0 0
        %2171 = vmatpush1.bf16.msra.mxu0 0
        %2172 = vmatprep.subr.bf16.mxu0 0
        %2173 = vmatpush1.bf16.msra.mxu0 0
        %2174 = vmatprep.subr.bf16.mxu0 0
        %2175 = vmatpush1.bf16.msra.mxu0 0
        %2176 = vmatprep.mubr.bf16.mxu0 0
        %2177 = vmatmul.mubr.bf16.gmra.mrb[0].mxu0 %v992
        %v2178 = vpop.f32.mrb[0].mxu0
        %v2179 = vadd.f32 0.0, %v2178
        %v2180 = vpop.f32.mrb[0].mxu0
        %v2181 = vpop.f32.mrb[0].mxu0
        %v2182 = vadd.f32 0.0, %v2181
        %v2183 = vpop.f32.mrb[0].mxu0
        %2184 = vmatprep.mubr.bf16.mxu0 0
        %2185 = vmatmul.mubr.bf16.gmra.mrb[0].mxu0 %v995
        %v2186 = vpop.f32.mrb[0].mxu0
        %v2187 = vadd.f32 0.0, %v2186
        %v2188 = vpop.f32.mrb[0].mxu0
        %v2189 = vpop.f32.mrb[0].mxu0
        %v2190 = vadd.f32 0.0, %v2189
        %v2191 = vpop.f32.mrb[0].mxu0
        %2192 = vmatprep.mubr.bf16.mxu0 0
        %2193 = vmatmul.mubr.bf16.gmra.mrb[0].mxu0 %v998
        %v2194 = vpop.f32.mrb[0].mxu0
        %v2195 = vadd.f32 0.0, %v2194
        %v2196 = vpop.f32.mrb[0].mxu0
        %v2197 = vpop.f32.mrb[0].mxu0
        %v2198 = vpop.f32.mrb[0].mxu0
        %2199 = vdwg.mxu0
        %v2208 = vunpack.c.l.b16 %v793
        %v2209 = vunpack.c.l.b16 %v794
        %v2210 = vunpack.c.l.b16 %v795
        %v2211 = vunpack.c.l.b16 %v796
        %v2212 = vunpack.c.l.b16 %v797
        %v2213 = vunpack.c.l.b16 %v798
        %v2214 = vunpack.c.l.b16 %v799
        %v2215 = vunpack.c.l.b16 %v800
        %v2216 = vpack.c.b16 %v2209, %v2208
        %v2217 = vpack.c.b16 %v2211, %v2210
        %v2218 = vpack.c.b16 %v2213, %v2212
        %v2219 = vpack.c.b16 %v2215, %v2214
        %2224 = vmatprep.subr.bf16.mxu0 0
        %2225 = vmatpush1.bf16.msra.mxu0 %v2216
        %2226 = vmatprep.subr.bf16.mxu0 0
        %2227 = vmatpush1.bf16.msra.mxu0 %v2217
        %2228 = vmatprep.subr.bf16.mxu0 0
        %2229 = vmatpush1.bf16.msra.mxu0 %v2218
        %2230 = vmatprep.subr.bf16.mxu0 0
        %2231 = vmatpush1.bf16.msra.mxu0 %v2219
        %2232 = vmatprep.subr.bf16.mxu0 0
        %2233 = vmatpush1.bf16.msra.mxu0 0
        %2234 = vmatprep.subr.bf16.mxu0 0
        %2235 = vmatpush1.bf16.msra.mxu0 0
        %2236 = vmatprep.subr.bf16.mxu0 0
        %2237 = vmatpush1.bf16.msra.mxu0 0
        %2238 = vmatprep.subr.bf16.mxu0 0
        %2239 = vmatpush1.bf16.msra.mxu0 0
        %2240 = vmatprep.subr.bf16.mxu0 0
        %2241 = vmatpush1.bf16.msra.mxu0 0
        %2242 = vmatprep.subr.bf16.mxu0 0
        %2243 = vmatpush1.bf16.msra.mxu0 0
        %2244 = vmatprep.subr.bf16.mxu0 0
        %2245 = vmatpush1.bf16.msra.mxu0 0
        %2246 = vmatprep.subr.bf16.mxu0 0
        %2247 = vmatpush1.bf16.msra.mxu0 0
        %2248 = vmatprep.subr.bf16.mxu0 0
        %2249 = vmatpush1.bf16.msra.mxu0 0
        %2250 = vmatprep.subr.bf16.mxu0 0
        %2251 = vmatpush1.bf16.msra.mxu0 0
        %2252 = vmatprep.subr.bf16.mxu0 0
        %2253 = vmatpush1.bf16.msra.mxu0 0
        %2254 = vmatprep.subr.bf16.mxu0 0
        %2255 = vmatpush1.bf16.msra.mxu0 0
        %2256 = vmatprep.mubr.bf16.mxu0 0
        %2257 = vmatmul.mubr.bf16.gmra.mrb[0].mxu0 %v992
        %v2258 = vpop.f32.mrb[0].mxu0
        %v2259 = vadd.f32 0.0, %v2258
        %v2260 = vpop.f32.mrb[0].mxu0
        %v2261 = vpop.f32.mrb[0].mxu0
        %v2262 = vadd.f32 0.0, %v2261
        %v2263 = vpop.f32.mrb[0].mxu0
        %2264 = vmatprep.mubr.bf16.mxu0 0
        %2265 = vmatmul.mubr.bf16.gmra.mrb[0].mxu0 %v995
        %v2266 = vpop.f32.mrb[0].mxu0
        %v2267 = vadd.f32 0.0, %v2266
        %v2268 = vpop.f32.mrb[0].mxu0
        %v2269 = vpop.f32.mrb[0].mxu0
        %v2270 = vadd.f32 0.0, %v2269
        %v2271 = vpop.f32.mrb[0].mxu0
        %2272 = vmatprep.mubr.bf16.mxu0 0
        %2273 = vmatmul.mubr.bf16.gmra.mrb[0].mxu0 %v998
        %v2274 = vpop.f32.mrb[0].mxu0
        %v2275 = vadd.f32 0.0, %v2274
        %v2276 = vpop.f32.mrb[0].mxu0
        %v2277 = vpop.f32.mrb[0].mxu0
        %v2278 = vpop.f32.mrb[0].mxu0
        %2279 = vdwg.mxu0
        %v2280 = vpack.c.bf16 %v1702, %v1699
        %v2281 = vpack.c.bf16 %v1710, %v1707
        %v2282 = vpack.c.bf16 %v1715, %v1715
        %v2283 = vpack.c.bf16 %v1782, %v1779
        %v2284 = vpack.c.bf16 %v1790, %v1787
        %v2285 = vpack.c.bf16 %v1795, %v1795
        %v2286 = vpack.c.bf16 %v1862, %v1859
        %v2287 = vpack.c.bf16 %v1870, %v1867
        %v2288 = vpack.c.bf16 %v1875, %v1875
        %v2289 = vpack.c.bf16 %v1942, %v1939
        %v2290 = vpack.c.bf16 %v1950, %v1947
        %v2291 = vpack.c.bf16 %v1955, %v1955
        %v2292 = vpack.c.bf16 %v2022, %v2019
        %v2293 = vpack.c.bf16 %v2030, %v2027
        %v2294 = vpack.c.bf16 %v2035, %v2035
        %v2295 = vpack.c.bf16 %v2102, %v2099
        %v2296 = vpack.c.bf16 %v2110, %v2107
        %v2297 = vpack.c.bf16 %v2115, %v2115
        %v2298 = vpack.c.bf16 %v2182, %v2179
        %v2299 = vpack.c.bf16 %v2190, %v2187
        %v2300 = vpack.c.bf16 %v2195, %v2195
        %v2301 = vpack.c.bf16 %v2262, %v2259
        %v2302 = vpack.c.bf16 %v2270, %v2267
        %v2303 = vpack.c.bf16 %v2275, %v2275
        %v2312 = vunpack.c.l.b16 %v801
        %v2313 = vunpack.c.l.b16 %v802
        %v2314 = vunpack.c.l.b16 %v803
        %v2315 = vunpack.c.l.b16 %v804
        %v2316 = vunpack.c.l.b16 %v805
        %v2317 = vunpack.c.l.b16 %v806
        %v2318 = vunpack.c.l.b16 %v807
        %v2319 = vunpack.c.l.b16 %v808
        %v2320 = vpack.c.b16 %v2313, %v2312
        %v2321 = vpack.c.b16 %v2315, %v2314
        %v2322 = vpack.c.b16 %v2317, %v2316
        %v2323 = vpack.c.b16 %v2319, %v2318
        %2328 = vmatprep.subr.bf16.mxu0 0
        %2329 = vmatpush1.bf16.msra.mxu0 %v2320
        %2330 = vmatprep.subr.bf16.mxu0 0
        %2331 = vmatpush1.bf16.msra.mxu0 %v2321
        %2332 = vmatprep.subr.bf16.mxu0 0
        %2333 = vmatpush1.bf16.msra.mxu0 %v2322
        %2334 = vmatprep.subr.bf16.mxu0 0
        %2335 = vmatpush1.bf16.msra.mxu0 %v2323
        %2336 = vmatprep.subr.bf16.mxu0 0
        %2337 = vmatpush1.bf16.msra.mxu0 0
        %2338 = vmatprep.subr.bf16.mxu0 0
        %2339 = vmatpush1.bf16.msra.mxu0 0
        %2340 = vmatprep.subr.bf16.mxu0 0
        %2341 = vmatpush1.bf16.msra.mxu0 0
        %2342 = vmatprep.subr.bf16.mxu0 0
        %2343 = vmatpush1.bf16.msra.mxu0 0
        %2344 = vmatprep.subr.bf16.mxu0 0
        %2345 = vmatpush1.bf16.msra.mxu0 0
        %2346 = vmatprep.subr.bf16.mxu0 0
        %2347 = vmatpush1.bf16.msra.mxu0 0
        %2348 = vmatprep.subr.bf16.mxu0 0
        %2349 = vmatpush1.bf16.msra.mxu0 0
        %2350 = vmatprep.subr.bf16.mxu0 0
        %2351 = vmatpush1.bf16.msra.mxu0 0
        %2352 = vmatprep.subr.bf16.mxu0 0
        %2353 = vmatpush1.bf16.msra.mxu0 0
        %2354 = vmatprep.subr.bf16.mxu0 0
        %2355 = vmatpush1.bf16.msra.mxu0 0
        %2356 = vmatprep.subr.bf16.mxu0 0
        %2357 = vmatpush1.bf16.msra.mxu0 0
        %2358 = vmatprep.subr.bf16.mxu0 0
        %2359 = vmatpush1.bf16.msra.mxu0 0
        %2360 = vmatprep.mubr.bf16.mxu0 0
        %2361 = vmatmul.mubr.bf16.gmra.mrb[0].mxu0 %v992
        %v2362 = vpop.f32.mrb[0].mxu0
        %v2363 = vadd.f32 0.0, %v2362
        %v2364 = vpop.f32.mrb[0].mxu0
        %v2365 = vpop.f32.mrb[0].mxu0
        %v2366 = vadd.f32 0.0, %v2365
        %v2367 = vpop.f32.mrb[0].mxu0
        %2368 = vmatprep.mubr.bf16.mxu0 0
        %2369 = vmatmul.mubr.bf16.gmra.mrb[0].mxu0 %v995
        %v2370 = vpop.f32.mrb[0].mxu0
        %v2371 = vadd.f32 0.0, %v2370
        %v2372 = vpop.f32.mrb[0].mxu0
        %v2373 = vpop.f32.mrb[0].mxu0
        %v2374 = vadd.f32 0.0, %v2373
        %v2375 = vpop.f32.mrb[0].mxu0
        %2376 = vmatprep.mubr.bf16.mxu0 0
        %2377 = vmatmul.mubr.bf16.gmra.mrb[0].mxu0 %v998
        %v2378 = vpop.f32.mrb[0].mxu0
        %v2379 = vadd.f32 0.0, %v2378
        %v2380 = vpop.f32.mrb[0].mxu0
        %v2381 = vpop.f32.mrb[0].mxu0
        %v2382 = vpop.f32.mrb[0].mxu0
        %2383 = vdwg.mxu0
        %v2392 = vunpack.c.l.b16 %v809
        %v2393 = vunpack.c.l.b16 %v810
        %v2394 = vunpack.c.l.b16 %v811
        %v2395 = vunpack.c.l.b16 %v812
        %v2396 = vunpack.c.l.b16 %v813
        %v2397 = vunpack.c.l.b16 %v814
        %v2398 = vunpack.c.l.b16 %v815
        %v2399 = vunpack.c.l.b16 %v816
        %v2400 = vpack.c.b16 %v2393, %v2392
        %v2401 = vpack.c.b16 %v2395, %v2394
        %v2402 = vpack.c.b16 %v2397, %v2396
        %v2403 = vpack.c.b16 %v2399, %v2398
        %2408 = vmatprep.subr.bf16.mxu0 0
        %2409 = vmatpush1.bf16.msra.mxu0 %v2400
        %2410 = vmatprep.subr.bf16.mxu0 0
        %2411 = vmatpush1.bf16.msra.mxu0 %v2401
        %2412 = vmatprep.subr.bf16.mxu0 0
        %2413 = vmatpush1.bf16.msra.mxu0 %v2402
        %2414 = vmatprep.subr.bf16.mxu0 0
        %2415 = vmatpush1.bf16.msra.mxu0 %v2403
        %2416 = vmatprep.subr.bf16.mxu0 0
        %2417 = vmatpush1.bf16.msra.mxu0 0
        %2418 = vmatprep.subr.bf16.mxu0 0
        %2419 = vmatpush1.bf16.msra.mxu0 0
        %2420 = vmatprep.subr.bf16.mxu0 0
        %2421 = vmatpush1.bf16.msra.mxu0 0
        %2422 = vmatprep.subr.bf16.mxu0 0
        %2423 = vmatpush1.bf16.msra.mxu0 0
        %2424 = vmatprep.subr.bf16.mxu0 0
        %2425 = vmatpush1.bf16.msra.mxu0 0
        %2426 = vmatprep.subr.bf16.mxu0 0
        %2427 = vmatpush1.bf16.msra.mxu0 0
        %2428 = vmatprep.subr.bf16.mxu0 0
        %2429 = vmatpush1.bf16.msra.mxu0 0
        %2430 = vmatprep.subr.bf16.mxu0 0
        %2431 = vmatpush1.bf16.msra.mxu0 0
        %2432 = vmatprep.subr.bf16.mxu0 0
        %2433 = vmatpush1.bf16.msra.mxu0 0
        %2434 = vmatprep.subr.bf16.mxu0 0
        %2435 = vmatpush1.bf16.msra.mxu0 0
        %2436 = vmatprep.subr.bf16.mxu0 0
        %2437 = vmatpush1.bf16.msra.mxu0 0
        %2438 = vmatprep.subr.bf16.mxu0 0
        %2439 = vmatpush1.bf16.msra.mxu0 0
        %2440 = vmatprep.mubr.bf16.mxu0 0
        %2441 = vmatmul.mubr.bf16.gmra.mrb[0].mxu0 %v992
        %v2442 = vpop.f32.mrb[0].mxu0
        %v2443 = vadd.f32 0.0, %v2442
        %v2444 = vpop.f32.mrb[0].mxu0
        %v2445 = vpop.f32.mrb[0].mxu0
        %v2446 = vadd.f32 0.0, %v2445
        %v2447 = vpop.f32.mrb[0].mxu0
        %2448 = vmatprep.mubr.bf16.mxu0 0
        %2449 = vmatmul.mubr.bf16.gmra.mrb[0].mxu0 %v995
        %v2450 = vpop.f32.mrb[0].mxu0
        %v2451 = vadd.f32 0.0, %v2450
        %v2452 = vpop.f32.mrb[0].mxu0
        %v2453 = vpop.f32.mrb[0].mxu0
        %v2454 = vadd.f32 0.0, %v2453
        %v2455 = vpop.f32.mrb[0].mxu0
        %2456 = vmatprep.mubr.bf16.mxu0 0
        %2457 = vmatmul.mubr.bf16.gmra.mrb[0].mxu0 %v998
        %v2458 = vpop.f32.mrb[0].mxu0
        %v2459 = vadd.f32 0.0, %v2458
        %v2460 = vpop.f32.mrb[0].mxu0
        %v2461 = vpop.f32.mrb[0].mxu0
        %v2462 = vpop.f32.mrb[0].mxu0
        %2463 = vdwg.mxu0
        %v2472 = vunpack.c.l.b16 %v817
        %v2473 = vunpack.c.l.b16 %v818
        %v2474 = vunpack.c.l.b16 %v819
        %v2475 = vunpack.c.l.b16 %v820
        %v2476 = vunpack.c.l.b16 %v821
        %v2477 = vunpack.c.l.b16 %v822
        %v2478 = vunpack.c.l.b16 %v823
        %v2479 = vunpack.c.l.b16 %v824
        %v2480 = vpack.c.b16 %v2473, %v2472
        %v2481 = vpack.c.b16 %v2475, %v2474
        %v2482 = vpack.c.b16 %v2477, %v2476
        %v2483 = vpack.c.b16 %v2479, %v2478
        %2488 = vmatprep.subr.bf16.mxu0 0
        %2489 = vmatpush1.bf16.msra.mxu0 %v2480
        %2490 = vmatprep.subr.bf16.mxu0 0
        %2491 = vmatpush1.bf16.msra.mxu0 %v2481
        %2492 = vmatprep.subr.bf16.mxu0 0
        %2493 = vmatpush1.bf16.msra.mxu0 %v2482
        %2494 = vmatprep.subr.bf16.mxu0 0
        %2495 = vmatpush1.bf16.msra.mxu0 %v2483
        %2496 = vmatprep.subr.bf16.mxu0 0
        %2497 = vmatpush1.bf16.msra.mxu0 0
        %2498 = vmatprep.subr.bf16.mxu0 0
        %2499 = vmatpush1.bf16.msra.mxu0 0
        %2500 = vmatprep.subr.bf16.mxu0 0
        %2501 = vmatpush1.bf16.msra.mxu0 0
        %2502 = vmatprep.subr.bf16.mxu0 0
        %2503 = vmatpush1.bf16.msra.mxu0 0
        %2504 = vmatprep.subr.bf16.mxu0 0
        %2505 = vmatpush1.bf16.msra.mxu0 0
        %2506 = vmatprep.subr.bf16.mxu0 0
        %2507 = vmatpush1.bf16.msra.mxu0 0
        %2508 = vmatprep.subr.bf16.mxu0 0
        %2509 = vmatpush1.bf16.msra.mxu0 0
        %2510 = vmatprep.subr.bf16.mxu0 0
        %2511 = vmatpush1.bf16.msra.mxu0 0
        %2512 = vmatprep.subr.bf16.mxu0 0
        %2513 = vmatpush1.bf16.msra.mxu0 0
        %2514 = vmatprep.subr.bf16.mxu0 0
        %2515 = vmatpush1.bf16.msra.mxu0 0
        %2516 = vmatprep.subr.bf16.mxu0 0
        %2517 = vmatpush1.bf16.msra.mxu0 0
        %2518 = vmatprep.subr.bf16.mxu0 0
        %2519 = vmatpush1.bf16.msra.mxu0 0
        %2520 = vmatprep.mubr.bf16.mxu0 0
        %2521 = vmatmul.mubr.bf16.gmra.mrb[0].mxu0 %v992
        %v2522 = vpop.f32.mrb[0].mxu0
        %v2523 = vadd.f32 0.0, %v2522
        %v2524 = vpop.f32.mrb[0].mxu0
        %v2525 = vpop.f32.mrb[0].mxu0
        %v2526 = vadd.f32 0.0, %v2525
        %v2527 = vpop.f32.mrb[0].mxu0
        %2528 = vmatprep.mubr.bf16.mxu0 0
        %2529 = vmatmul.mubr.bf16.gmra.mrb[0].mxu0 %v995
        %v2530 = vpop.f32.mrb[0].mxu0
        %v2531 = vadd.f32 0.0, %v2530
        %v2532 = vpop.f32.mrb[0].mxu0
        %v2533 = vpop.f32.mrb[0].mxu0
        %v2534 = vadd.f32 0.0, %v2533
        %v2535 = vpop.f32.mrb[0].mxu0
        %2536 = vmatprep.mubr.bf16.mxu0 0
        %2537 = vmatmul.mubr.bf16.gmra.mrb[0].mxu0 %v998
        %v2538 = vpop.f32.mrb[0].mxu0
        %v2539 = vadd.f32 0.0, %v2538
        %v2540 = vpop.f32.mrb[0].mxu0
        %v2541 = vpop.f32.mrb[0].mxu0
        %v2542 = vpop.f32.mrb[0].mxu0
        %2543 = vdwg.mxu0
        %v2552 = vunpack.c.l.b16 %v825
        %v2553 = vunpack.c.l.b16 %v826
        %v2554 = vunpack.c.l.b16 %v827
        %v2555 = vunpack.c.l.b16 %v828
        %v2556 = vunpack.c.l.b16 %v829
        %v2557 = vunpack.c.l.b16 %v830
        %v2558 = vunpack.c.l.b16 %v831
        %v2559 = vunpack.c.l.b16 %v832
        %v2560 = vpack.c.b16 %v2553, %v2552
        %v2561 = vpack.c.b16 %v2555, %v2554
        %v2562 = vpack.c.b16 %v2557, %v2556
        %v2563 = vpack.c.b16 %v2559, %v2558
        %2568 = vmatprep.subr.bf16.mxu0 0
        %2569 = vmatpush1.bf16.msra.mxu0 %v2560
        %2570 = vmatprep.subr.bf16.mxu0 0
        %2571 = vmatpush1.bf16.msra.mxu0 %v2561
        %2572 = vmatprep.subr.bf16.mxu0 0
        %2573 = vmatpush1.bf16.msra.mxu0 %v2562
        %2574 = vmatprep.subr.bf16.mxu0 0
        %2575 = vmatpush1.bf16.msra.mxu0 %v2563
        %2576 = vmatprep.subr.bf16.mxu0 0
        %2577 = vmatpush1.bf16.msra.mxu0 0
        %2578 = vmatprep.subr.bf16.mxu0 0
        %2579 = vmatpush1.bf16.msra.mxu0 0
        %2580 = vmatprep.subr.bf16.mxu0 0
        %2581 = vmatpush1.bf16.msra.mxu0 0
        %2582 = vmatprep.subr.bf16.mxu0 0
        %2583 = vmatpush1.bf16.msra.mxu0 0
        %2584 = vmatprep.subr.bf16.mxu0 0
        %2585 = vmatpush1.bf16.msra.mxu0 0
        %2586 = vmatprep.subr.bf16.mxu0 0
        %2587 = vmatpush1.bf16.msra.mxu0 0
        %2588 = vmatprep.subr.bf16.mxu0 0
        %2589 = vmatpush1.bf16.msra.mxu0 0
        %2590 = vmatprep.subr.bf16.mxu0 0
        %2591 = vmatpush1.bf16.msra.mxu0 0
        %2592 = vmatprep.subr.bf16.mxu0 0
        %2593 = vmatpush1.bf16.msra.mxu0 0
        %2594 = vmatprep.subr.bf16.mxu0 0
        %2595 = vmatpush1.bf16.msra.mxu0 0
        %2596 = vmatprep.subr.bf16.mxu0 0
        %2597 = vmatpush1.bf16.msra.mxu0 0
        %2598 = vmatprep.subr.bf16.mxu0 0
        %2599 = vmatpush1.bf16.msra.mxu0 0
        %2600 = vmatprep.mubr.bf16.mxu0 0
        %2601 = vmatmul.mubr.bf16.gmra.mrb[0].mxu0 %v992
        %v2602 = vpop.f32.mrb[0].mxu0
        %v2603 = vadd.f32 0.0, %v2602
        %v2604 = vpop.f32.mrb[0].mxu0
        %v2605 = vpop.f32.mrb[0].mxu0
        %v2606 = vadd.f32 0.0, %v2605
        %v2607 = vpop.f32.mrb[0].mxu0
        %2608 = vmatprep.mubr.bf16.mxu0 0
        %2609 = vmatmul.mubr.bf16.gmra.mrb[0].mxu0 %v995
        %v2610 = vpop.f32.mrb[0].mxu0
        %v2611 = vadd.f32 0.0, %v2610
        %v2612 = vpop.f32.mrb[0].mxu0
        %v2613 = vpop.f32.mrb[0].mxu0
        %v2614 = vadd.f32 0.0, %v2613
        %v2615 = vpop.f32.mrb[0].mxu0
        %2616 = vmatprep.mubr.bf16.mxu0 0
        %2617 = vmatmul.mubr.bf16.gmra.mrb[0].mxu0 %v998
        %v2618 = vpop.f32.mrb[0].mxu0
        %v2619 = vadd.f32 0.0, %v2618
        %v2620 = vpop.f32.mrb[0].mxu0
        %v2621 = vpop.f32.mrb[0].mxu0
        %v2622 = vpop.f32.mrb[0].mxu0
        %2623 = vdwg.mxu0
        %v2632 = vunpack.c.l.b16 %v833
        %v2633 = vunpack.c.l.b16 %v834
        %v2634 = vunpack.c.l.b16 %v835
        %v2635 = vunpack.c.l.b16 %v836
        %v2636 = vunpack.c.l.b16 %v837
        %v2637 = vunpack.c.l.b16 %v838
        %v2638 = vunpack.c.l.b16 %v839
        %v2639 = vunpack.c.l.b16 %v840
        %v2640 = vpack.c.b16 %v2633, %v2632
        %v2641 = vpack.c.b16 %v2635, %v2634
        %v2642 = vpack.c.b16 %v2637, %v2636
        %v2643 = vpack.c.b16 %v2639, %v2638
        %2648 = vmatprep.subr.bf16.mxu0 0
        %2649 = vmatpush1.bf16.msra.mxu0 %v2640
        %2650 = vmatprep.subr.bf16.mxu0 0
        %2651 = vmatpush1.bf16.msra.mxu0 %v2641
        %2652 = vmatprep.subr.bf16.mxu0 0
        %2653 = vmatpush1.bf16.msra.mxu0 %v2642
        %2654 = vmatprep.subr.bf16.mxu0 0
        %2655 = vmatpush1.bf16.msra.mxu0 %v2643
        %2656 = vmatprep.subr.bf16.mxu0 0
        %2657 = vmatpush1.bf16.msra.mxu0 0
        %2658 = vmatprep.subr.bf16.mxu0 0
        %2659 = vmatpush1.bf16.msra.mxu0 0
        %2660 = vmatprep.subr.bf16.mxu0 0
        %2661 = vmatpush1.bf16.msra.mxu0 0
        %2662 = vmatprep.subr.bf16.mxu0 0
        %2663 = vmatpush1.bf16.msra.mxu0 0
        %2664 = vmatprep.subr.bf16.mxu0 0
        %2665 = vmatpush1.bf16.msra.mxu0 0
        %2666 = vmatprep.subr.bf16.mxu0 0
        %2667 = vmatpush1.bf16.msra.mxu0 0
        %2668 = vmatprep.subr.bf16.mxu0 0
        %2669 = vmatpush1.bf16.msra.mxu0 0
        %2670 = vmatprep.subr.bf16.mxu0 0
        %2671 = vmatpush1.bf16.msra.mxu0 0
        %2672 = vmatprep.subr.bf16.mxu0 0
        %2673 = vmatpush1.bf16.msra.mxu0 0
        %2674 = vmatprep.subr.bf16.mxu0 0
        %2675 = vmatpush1.bf16.msra.mxu0 0
        %2676 = vmatprep.subr.bf16.mxu0 0
        %2677 = vmatpush1.bf16.msra.mxu0 0
        %2678 = vmatprep.subr.bf16.mxu0 0
        %2679 = vmatpush1.bf16.msra.mxu0 0
        %2680 = vmatprep.mubr.bf16.mxu0 0
        %2681 = vmatmul.mubr.bf16.gmra.mrb[0].mxu0 %v992
        %v2682 = vpop.f32.mrb[0].mxu0
        %v2683 = vadd.f32 0.0, %v2682
        %v2684 = vpop.f32.mrb[0].mxu0
        %v2685 = vpop.f32.mrb[0].mxu0
        %v2686 = vadd.f32 0.0, %v2685
        %v2687 = vpop.f32.mrb[0].mxu0
        %2688 = vmatprep.mubr.bf16.mxu0 0
        %2689 = vmatmul.mubr.bf16.gmra.mrb[0].mxu0 %v995
        %v2690 = vpop.f32.mrb[0].mxu0
        %v2691 = vadd.f32 0.0, %v2690
        %v2692 = vpop.f32.mrb[0].mxu0
        %v2693 = vpop.f32.mrb[0].mxu0
        %v2694 = vadd.f32 0.0, %v2693
        %v2695 = vpop.f32.mrb[0].mxu0
        %2696 = vmatprep.mubr.bf16.mxu0 0
        %2697 = vmatmul.mubr.bf16.gmra.mrb[0].mxu0 %v998
        %v2698 = vpop.f32.mrb[0].mxu0
        %v2699 = vadd.f32 0.0, %v2698
        %v2700 = vpop.f32.mrb[0].mxu0
        %v2701 = vpop.f32.mrb[0].mxu0
        %v2702 = vpop.f32.mrb[0].mxu0
        %2703 = vdwg.mxu0
        %v2712 = vunpack.c.l.b16 %v841
        %v2713 = vunpack.c.l.b16 %v842
        %v2714 = vunpack.c.l.b16 %v843
        %v2715 = vunpack.c.l.b16 %v844
        %v2716 = vunpack.c.l.b16 %v845
        %v2717 = vunpack.c.l.b16 %v846
        %v2718 = vunpack.c.l.b16 %v847
        %v2719 = vunpack.c.l.b16 %v848
        %v2720 = vpack.c.b16 %v2713, %v2712
        %v2721 = vpack.c.b16 %v2715, %v2714
        %v2722 = vpack.c.b16 %v2717, %v2716
        %v2723 = vpack.c.b16 %v2719, %v2718
        %2728 = vmatprep.subr.bf16.mxu0 0
        %2729 = vmatpush1.bf16.msra.mxu0 %v2720
        %2730 = vmatprep.subr.bf16.mxu0 0
        %2731 = vmatpush1.bf16.msra.mxu0 %v2721
        %2732 = vmatprep.subr.bf16.mxu0 0
        %2733 = vmatpush1.bf16.msra.mxu0 %v2722
        %2734 = vmatprep.subr.bf16.mxu0 0
        %2735 = vmatpush1.bf16.msra.mxu0 %v2723
        %2736 = vmatprep.subr.bf16.mxu0 0
        %2737 = vmatpush1.bf16.msra.mxu0 0
        %2738 = vmatprep.subr.bf16.mxu0 0
        %2739 = vmatpush1.bf16.msra.mxu0 0
        %2740 = vmatprep.subr.bf16.mxu0 0
        %2741 = vmatpush1.bf16.msra.mxu0 0
        %2742 = vmatprep.subr.bf16.mxu0 0
        %2743 = vmatpush1.bf16.msra.mxu0 0
        %2744 = vmatprep.subr.bf16.mxu0 0
        %2745 = vmatpush1.bf16.msra.mxu0 0
        %2746 = vmatprep.subr.bf16.mxu0 0
        %2747 = vmatpush1.bf16.msra.mxu0 0
        %2748 = vmatprep.subr.bf16.mxu0 0
        %2749 = vmatpush1.bf16.msra.mxu0 0
        %2750 = vmatprep.subr.bf16.mxu0 0
        %2751 = vmatpush1.bf16.msra.mxu0 0
        %2752 = vmatprep.subr.bf16.mxu0 0
        %2753 = vmatpush1.bf16.msra.mxu0 0
        %2754 = vmatprep.subr.bf16.mxu0 0
        %2755 = vmatpush1.bf16.msra.mxu0 0
        %2756 = vmatprep.subr.bf16.mxu0 0
        %2757 = vmatpush1.bf16.msra.mxu0 0
        %2758 = vmatprep.subr.bf16.mxu0 0
        %2759 = vmatpush1.bf16.msra.mxu0 0
        %2760 = vmatprep.mubr.bf16.mxu0 0
        %2761 = vmatmul.mubr.bf16.gmra.mrb[0].mxu0 %v992
        %v2762 = vpop.f32.mrb[0].mxu0
        %v2763 = vadd.f32 0.0, %v2762
        %v2764 = vpop.f32.mrb[0].mxu0
        %v2765 = vpop.f32.mrb[0].mxu0
        %v2766 = vadd.f32 0.0, %v2765
        %v2767 = vpop.f32.mrb[0].mxu0
        %2768 = vmatprep.mubr.bf16.mxu0 0
        %2769 = vmatmul.mubr.bf16.gmra.mrb[0].mxu0 %v995
        %v2770 = vpop.f32.mrb[0].mxu0
        %v2771 = vadd.f32 0.0, %v2770
        %v2772 = vpop.f32.mrb[0].mxu0
        %v2773 = vpop.f32.mrb[0].mxu0
        %v2774 = vadd.f32 0.0, %v2773
        %v2775 = vpop.f32.mrb[0].mxu0
        %2776 = vmatprep.mubr.bf16.mxu0 0
        %2777 = vmatmul.mubr.bf16.gmra.mrb[0].mxu0 %v998
        %v2778 = vpop.f32.mrb[0].mxu0
        %v2779 = vadd.f32 0.0, %v2778
        %v2780 = vpop.f32.mrb[0].mxu0
        %v2781 = vpop.f32.mrb[0].mxu0
        %v2782 = vpop.f32.mrb[0].mxu0
        %2783 = vdwg.mxu0
        %v2792 = vunpack.c.l.b16 %v849
        %v2793 = vunpack.c.l.b16 %v850
        %v2794 = vunpack.c.l.b16 %v851
        %v2795 = vunpack.c.l.b16 %v852
        %v2796 = vunpack.c.l.b16 %v853
        %v2797 = vunpack.c.l.b16 %v854
        %v2798 = vunpack.c.l.b16 %v855
        %v2799 = vunpack.c.l.b16 %v856
        %v2800 = vpack.c.b16 %v2793, %v2792
        %v2801 = vpack.c.b16 %v2795, %v2794
        %v2802 = vpack.c.b16 %v2797, %v2796
        %v2803 = vpack.c.b16 %v2799, %v2798
        %2808 = vmatprep.subr.bf16.mxu0 0
        %2809 = vmatpush1.bf16.msra.mxu0 %v2800
        %2810 = vmatprep.subr.bf16.mxu0 0
        %2811 = vmatpush1.bf16.msra.mxu0 %v2801
        %2812 = vmatprep.subr.bf16.mxu0 0
        %2813 = vmatpush1.bf16.msra.mxu0 %v2802
        %2814 = vmatprep.subr.bf16.mxu0 0
        %2815 = vmatpush1.bf16.msra.mxu0 %v2803
        %2816 = vmatprep.subr.bf16.mxu0 0
        %2817 = vmatpush1.bf16.msra.mxu0 0
        %2818 = vmatprep.subr.bf16.mxu0 0
        %2819 = vmatpush1.bf16.msra.mxu0 0
        %2820 = vmatprep.subr.bf16.mxu0 0
        %2821 = vmatpush1.bf16.msra.mxu0 0
        %2822 = vmatprep.subr.bf16.mxu0 0
        %2823 = vmatpush1.bf16.msra.mxu0 0
        %2824 = vmatprep.subr.bf16.mxu0 0
        %2825 = vmatpush1.bf16.msra.mxu0 0
        %2826 = vmatprep.subr.bf16.mxu0 0
        %2827 = vmatpush1.bf16.msra.mxu0 0
        %2828 = vmatprep.subr.bf16.mxu0 0
        %2829 = vmatpush1.bf16.msra.mxu0 0
        %2830 = vmatprep.subr.bf16.mxu0 0
        %2831 = vmatpush1.bf16.msra.mxu0 0
        %2832 = vmatprep.subr.bf16.mxu0 0
        %2833 = vmatpush1.bf16.msra.mxu0 0
        %2834 = vmatprep.subr.bf16.mxu0 0
        %2835 = vmatpush1.bf16.msra.mxu0 0
        %2836 = vmatprep.subr.bf16.mxu0 0
        %2837 = vmatpush1.bf16.msra.mxu0 0
        %2838 = vmatprep.subr.bf16.mxu0 0
        %2839 = vmatpush1.bf16.msra.mxu0 0
        %2840 = vmatprep.mubr.bf16.mxu0 0
        %2841 = vmatmul.mubr.bf16.gmra.mrb[0].mxu0 %v992
        %v2842 = vpop.f32.mrb[0].mxu0
        %v2843 = vadd.f32 0.0, %v2842
        %v2844 = vpop.f32.mrb[0].mxu0
        %v2845 = vpop.f32.mrb[0].mxu0
        %v2846 = vadd.f32 0.0, %v2845
        %v2847 = vpop.f32.mrb[0].mxu0
        %2848 = vmatprep.mubr.bf16.mxu0 0
        %2849 = vmatmul.mubr.bf16.gmra.mrb[0].mxu0 %v995
        %v2850 = vpop.f32.mrb[0].mxu0
        %v2851 = vadd.f32 0.0, %v2850
        %v2852 = vpop.f32.mrb[0].mxu0
        %v2853 = vpop.f32.mrb[0].mxu0
        %v2854 = vadd.f32 0.0, %v2853
        %v2855 = vpop.f32.mrb[0].mxu0
        %2856 = vmatprep.mubr.bf16.mxu0 0
        %2857 = vmatmul.mubr.bf16.gmra.mrb[0].mxu0 %v998
        %v2858 = vpop.f32.mrb[0].mxu0
        %v2859 = vadd.f32 0.0, %v2858
        %v2860 = vpop.f32.mrb[0].mxu0
        %v2861 = vpop.f32.mrb[0].mxu0
        %v2862 = vpop.f32.mrb[0].mxu0
        %2863 = vdwg.mxu0
        %v2872 = vunpack.c.l.b16 %v857
        %v2873 = vunpack.c.l.b16 %v858
        %v2874 = vunpack.c.l.b16 %v859
        %v2875 = vunpack.c.l.b16 %v860
        %v2876 = vunpack.c.l.b16 %v861
        %v2877 = vunpack.c.l.b16 %v862
        %v2878 = vunpack.c.l.b16 %v863
        %v2879 = vunpack.c.l.b16 %v864
        %v2880 = vpack.c.b16 %v2873, %v2872
        %v2881 = vpack.c.b16 %v2875, %v2874
        %v2882 = vpack.c.b16 %v2877, %v2876
        %v2883 = vpack.c.b16 %v2879, %v2878
        %2888 = vmatprep.subr.bf16.mxu0 0
        %2889 = vmatpush1.bf16.msra.mxu0 %v2880
        %2890 = vmatprep.subr.bf16.mxu0 0
        %2891 = vmatpush1.bf16.msra.mxu0 %v2881
        %2892 = vmatprep.subr.bf16.mxu0 0
        %2893 = vmatpush1.bf16.msra.mxu0 %v2882
        %2894 = vmatprep.subr.bf16.mxu0 0
        %2895 = vmatpush1.bf16.msra.mxu0 %v2883
        %2896 = vmatprep.subr.bf16.mxu0 0
        %2897 = vmatpush1.bf16.msra.mxu0 0
        %2898 = vmatprep.subr.bf16.mxu0 0
        %2899 = vmatpush1.bf16.msra.mxu0 0
        %2900 = vmatprep.subr.bf16.mxu0 0
        %2901 = vmatpush1.bf16.msra.mxu0 0
        %2902 = vmatprep.subr.bf16.mxu0 0
        %2903 = vmatpush1.bf16.msra.mxu0 0
        %2904 = vmatprep.subr.bf16.mxu0 0
        %2905 = vmatpush1.bf16.msra.mxu0 0
        %2906 = vmatprep.subr.bf16.mxu0 0
        %2907 = vmatpush1.bf16.msra.mxu0 0
        %2908 = vmatprep.subr.bf16.mxu0 0
        %2909 = vmatpush1.bf16.msra.mxu0 0
        %2910 = vmatprep.subr.bf16.mxu0 0
        %2911 = vmatpush1.bf16.msra.mxu0 0
        %2912 = vmatprep.subr.bf16.mxu0 0
        %2913 = vmatpush1.bf16.msra.mxu0 0
        %2914 = vmatprep.subr.bf16.mxu0 0
        %2915 = vmatpush1.bf16.msra.mxu0 0
        %2916 = vmatprep.subr.bf16.mxu0 0
        %2917 = vmatpush1.bf16.msra.mxu0 0
        %2918 = vmatprep.subr.bf16.mxu0 0
        %2919 = vmatpush1.bf16.msra.mxu0 0
        %2920 = vmatprep.mubr.bf16.mxu0 0
        %2921 = vmatmul.mubr.bf16.gmra.mrb[0].mxu0 %v992
        %v2922 = vpop.f32.mrb[0].mxu0
        %v2923 = vadd.f32 0.0, %v2922
        %v2924 = vpop.f32.mrb[0].mxu0
        %v2925 = vpop.f32.mrb[0].mxu0
        %v2926 = vadd.f32 0.0, %v2925
        %v2927 = vpop.f32.mrb[0].mxu0
        %2928 = vmatprep.mubr.bf16.mxu0 0
        %2929 = vmatmul.mubr.bf16.gmra.mrb[0].mxu0 %v995
        %v2930 = vpop.f32.mrb[0].mxu0
        %v2931 = vadd.f32 0.0, %v2930
        %v2932 = vpop.f32.mrb[0].mxu0
        %v2933 = vpop.f32.mrb[0].mxu0
        %v2934 = vadd.f32 0.0, %v2933
        %v2935 = vpop.f32.mrb[0].mxu0
        %2936 = vmatprep.mubr.bf16.mxu0 0
        %2937 = vmatmul.mubr.bf16.gmra.mrb[0].mxu0 %v998
        %v2938 = vpop.f32.mrb[0].mxu0
        %v2939 = vadd.f32 0.0, %v2938
        %v2940 = vpop.f32.mrb[0].mxu0
        %v2941 = vpop.f32.mrb[0].mxu0
        %v2942 = vpop.f32.mrb[0].mxu0
        %2943 = vdwg.mxu0
        %v2944 = vpack.c.bf16 %v2366, %v2363
        %v2945 = vpack.c.bf16 %v2374, %v2371
        %v2946 = vpack.c.bf16 %v2379, %v2379
        %v2947 = vpack.c.bf16 %v2446, %v2443
        %v2948 = vpack.c.bf16 %v2454, %v2451
        %v2949 = vpack.c.bf16 %v2459, %v2459
        %v2950 = vpack.c.bf16 %v2526, %v2523
        %v2951 = vpack.c.bf16 %v2534, %v2531
        %v2952 = vpack.c.bf16 %v2539, %v2539
        %v2953 = vpack.c.bf16 %v2606, %v2603
        %v2954 = vpack.c.bf16 %v2614, %v2611
        %v2955 = vpack.c.bf16 %v2619, %v2619
        %v2956 = vpack.c.bf16 %v2686, %v2683
        %v2957 = vpack.c.bf16 %v2694, %v2691
        %v2958 = vpack.c.bf16 %v2699, %v2699
        %v2959 = vpack.c.bf16 %v2766, %v2763
        %v2960 = vpack.c.bf16 %v2774, %v2771
        %v2961 = vpack.c.bf16 %v2779, %v2779
        %v2962 = vpack.c.bf16 %v2846, %v2843
        %v2963 = vpack.c.bf16 %v2854, %v2851
        %v2964 = vpack.c.bf16 %v2859, %v2859
        %v2965 = vpack.c.bf16 %v2926, %v2923
        %v2966 = vpack.c.bf16 %v2934, %v2931
        %v2967 = vpack.c.bf16 %v2939, %v2939
        %vm2968 = vcmask 64512
        %v2970 = vsel %vm2968, %v1616, 0
        %v2973 = vsel %vm2968, %v1617, 0
        %v2976 = vsel %vm2968, %v2280, 0
        %v2979 = vsel %vm2968, %v2281, 0
        %2981 = vmatprep.subr.bf16.mxu0 0
        %2982 = vmatpush1.bf16.xpose.msra.mxu0 %v2976
        %2983 = vmatprep.subr.bf16.mxu0 0
        %2984 = vmatpush1.bf16.xpose.msra.mxu0 %v2979
        %2985 = vmatprep.subr.bf16.mxu0 0
        %2986 = vmatpush1.bf16.xpose.msra.mxu0 0
        %2987 = vmatprep.subr.bf16.mxu0 0
        %2988 = vmatpush1.bf16.xpose.msra.mxu0 0
        %2989 = vmatprep.subr.bf16.mxu0 0
        %2990 = vmatpush1.bf16.xpose.msra.mxu0 0
        %2991 = vmatprep.subr.bf16.mxu0 0
        %2992 = vmatpush1.bf16.xpose.msra.mxu0 0
        %2993 = vmatprep.subr.bf16.mxu0 0
        %2994 = vmatpush1.bf16.xpose.msra.mxu0 0
        %2995 = vmatprep.subr.bf16.mxu0 0
        %2996 = vmatpush1.bf16.xpose.msra.mxu0 0
        %2997 = vmatprep.subr.bf16.mxu0 0
        %2998 = vmatpush1.bf16.xpose.msra.mxu0 0
        %2999 = vmatprep.subr.bf16.mxu0 0
        %3000 = vmatpush1.bf16.xpose.msra.mxu0 0
        %3001 = vmatprep.subr.bf16.mxu0 0
        %3002 = vmatpush1.bf16.xpose.msra.mxu0 0
        %3003 = vmatprep.subr.bf16.mxu0 0
        %3004 = vmatpush1.bf16.xpose.msra.mxu0 0
        %3005 = vmatprep.subr.bf16.mxu0 0
        %3006 = vmatpush1.bf16.xpose.msra.mxu0 0
        %3007 = vmatprep.subr.bf16.mxu0 0
        %3008 = vmatpush1.bf16.xpose.msra.mxu0 0
        %3009 = vmatprep.subr.bf16.mxu0 0
        %3010 = vmatpush1.bf16.xpose.msra.mxu0 0
        %3011 = vmatprep.subr.bf16.mxu0 0
        %3012 = vmatpush1.bf16.xpose.msra.mxu0 0
        %3013 = vmatprep.mubr.bf16.mxu0 0
        %3014 = vmatmul.mubr.bf16.gmra.mrb[0].mxu0 %v2970
        %v3015 = vpop.f32.mrb[0].mxu0
        %v3016 = vadd.f32 0.0, %v3015
        %v3017 = vpop.f32.mrb[0].mxu0
        %v3018 = vpop.f32.mrb[0].mxu0
        %v3019 = vadd.f32 0.0, %v3018
        %v3020 = vpop.f32.mrb[0].mxu0
        %3021 = vmatprep.mubr.bf16.mxu0 0
        %3022 = vmatmul.mubr.bf16.gmra.mrb[0].mxu0 %v2973
        %v3023 = vpop.f32.mrb[0].mxu0
        %v3024 = vadd.f32 0.0, %v3023
        %v3025 = vpop.f32.mrb[0].mxu0
        %v3026 = vpop.f32.mrb[0].mxu0
        %v3027 = vpop.f32.mrb[0].mxu0
        %3028 = vdwg.mxu0
        %v3030 = vsel %vm2968, %v1619, 0
        %v3033 = vsel %vm2968, %v1620, 0
        %v3036 = vsel %vm2968, %v2283, 0
        %v3039 = vsel %vm2968, %v2284, 0
        %3041 = vmatprep.subr.bf16.mxu0 0
        %3042 = vmatpush1.bf16.xpose.msra.mxu0 %v3036
        %3043 = vmatprep.subr.bf16.mxu0 0
        %3044 = vmatpush1.bf16.xpose.msra.mxu0 %v3039
        %3045 = vmatprep.subr.bf16.mxu0 0
        %3046 = vmatpush1.bf16.xpose.msra.mxu0 0
        %3047 = vmatprep.subr.bf16.mxu0 0
        %3048 = vmatpush1.bf16.xpose.msra.mxu0 0
        %3049 = vmatprep.subr.bf16.mxu0 0
        %3050 = vmatpush1.bf16.xpose.msra.mxu0 0
        %3051 = vmatprep.subr.bf16.mxu0 0
        %3052 = vmatpush1.bf16.xpose.msra.mxu0 0
        %3053 = vmatprep.subr.bf16.mxu0 0
        %3054 = vmatpush1.bf16.xpose.msra.mxu0 0
        %3055 = vmatprep.subr.bf16.mxu0 0
        %3056 = vmatpush1.bf16.xpose.msra.mxu0 0
        %3057 = vmatprep.subr.bf16.mxu0 0
        %3058 = vmatpush1.bf16.xpose.msra.mxu0 0
        %3059 = vmatprep.subr.bf16.mxu0 0
        %3060 = vmatpush1.bf16.xpose.msra.mxu0 0
        %3061 = vmatprep.subr.bf16.mxu0 0
        %3062 = vmatpush1.bf16.xpose.msra.mxu0 0
        %3063 = vmatprep.subr.bf16.mxu0 0
        %3064 = vmatpush1.bf16.xpose.msra.mxu0 0
        %3065 = vmatprep.subr.bf16.mxu0 0
        %3066 = vmatpush1.bf16.xpose.msra.mxu0 0
        %3067 = vmatprep.subr.bf16.mxu0 0
        %3068 = vmatpush1.bf16.xpose.msra.mxu0 0
        %3069 = vmatprep.subr.bf16.mxu0 0
        %3070 = vmatpush1.bf16.xpose.msra.mxu0 0
        %3071 = vmatprep.subr.bf16.mxu0 0
        %3072 = vmatpush1.bf16.xpose.msra.mxu0 0
        %3073 = vmatprep.mubr.bf16.mxu0 0
        %3074 = vmatmul.mubr.bf16.gmra.mrb[0].mxu0 %v3030
        %v3075 = vpop.f32.mrb[0].mxu0
        %v3076 = vadd.f32 0.0, %v3075
        %v3077 = vpop.f32.mrb[0].mxu0
        %v3078 = vpop.f32.mrb[0].mxu0
        %v3079 = vadd.f32 0.0, %v3078
        %v3080 = vpop.f32.mrb[0].mxu0
        %3081 = vmatprep.mubr.bf16.mxu0 0
        %3082 = vmatmul.mubr.bf16.gmra.mrb[0].mxu0 %v3033
        %v3083 = vpop.f32.mrb[0].mxu0
        %v3084 = vadd.f32 0.0, %v3083
        %v3085 = vpop.f32.mrb[0].mxu0
        %v3086 = vpop.f32.mrb[0].mxu0
        %v3087 = vpop.f32.mrb[0].mxu0
        %3088 = vdwg.mxu0
        %v3090 = vsel %vm2968, %v1622, 0
        %v3093 = vsel %vm2968, %v1623, 0
        %v3096 = vsel %vm2968, %v2286, 0
        %v3099 = vsel %vm2968, %v2287, 0
        %3101 = vmatprep.subr.bf16.mxu0 0
        %3102 = vmatpush1.bf16.xpose.msra.mxu0 %v3096
        %3103 = vmatprep.subr.bf16.mxu0 0
        %3104 = vmatpush1.bf16.xpose.msra.mxu0 %v3099
        %3105 = vmatprep.subr.bf16.mxu0 0
        %3106 = vmatpush1.bf16.xpose.msra.mxu0 0
        %3107 = vmatprep.subr.bf16.mxu0 0
        %3108 = vmatpush1.bf16.xpose.msra.mxu0 0
        %3109 = vmatprep.subr.bf16.mxu0 0
        %3110 = vmatpush1.bf16.xpose.msra.mxu0 0
        %3111 = vmatprep.subr.bf16.mxu0 0
        %3112 = vmatpush1.bf16.xpose.msra.mxu0 0
        %3113 = vmatprep.subr.bf16.mxu0 0
        %3114 = vmatpush1.bf16.xpose.msra.mxu0 0
        %3115 = vmatprep.subr.bf16.mxu0 0
        %3116 = vmatpush1.bf16.xpose.msra.mxu0 0
        %3117 = vmatprep.subr.bf16.mxu0 0
        %3118 = vmatpush1.bf16.xpose.msra.mxu0 0
        %3119 = vmatprep.subr.bf16.mxu0 0
        %3120 = vmatpush1.bf16.xpose.msra.mxu0 0
        %3121 = vmatprep.subr.bf16.mxu0 0
        %3122 = vmatpush1.bf16.xpose.msra.mxu0 0
        %3123 = vmatprep.subr.bf16.mxu0 0
        %3124 = vmatpush1.bf16.xpose.msra.mxu0 0
        %3125 = vmatprep.subr.bf16.mxu0 0
        %3126 = vmatpush1.bf16.xpose.msra.mxu0 0
        %3127 = vmatprep.subr.bf16.mxu0 0
        %3128 = vmatpush1.bf16.xpose.msra.mxu0 0
        %3129 = vmatprep.subr.bf16.mxu0 0
        %3130 = vmatpush1.bf16.xpose.msra.mxu0 0
        %3131 = vmatprep.subr.bf16.mxu0 0
        %3132 = vmatpush1.bf16.xpose.msra.mxu0 0
        %3133 = vmatprep.mubr.bf16.mxu0 0
        %3134 = vmatmul.mubr.bf16.gmra.mrb[0].mxu0 %v3090
        %v3135 = vpop.f32.mrb[0].mxu0
        %v3136 = vadd.f32 0.0, %v3135
        %v3137 = vpop.f32.mrb[0].mxu0
        %v3138 = vpop.f32.mrb[0].mxu0
        %v3139 = vadd.f32 0.0, %v3138
        %v3140 = vpop.f32.mrb[0].mxu0
        %3141 = vmatprep.mubr.bf16.mxu0 0
        %3142 = vmatmul.mubr.bf16.gmra.mrb[0].mxu0 %v3093
        %v3143 = vpop.f32.mrb[0].mxu0
        %v3144 = vadd.f32 0.0, %v3143
        %v3145 = vpop.f32.mrb[0].mxu0
        %v3146 = vpop.f32.mrb[0].mxu0
        %v3147 = vpop.f32.mrb[0].mxu0
        %3148 = vdwg.mxu0
        %v3150 = vsel %vm2968, %v1625, 0
        %v3153 = vsel %vm2968, %v1626, 0
        %v3156 = vsel %vm2968, %v2289, 0
        %v3159 = vsel %vm2968, %v2290, 0
        %3161 = vmatprep.subr.bf16.mxu0 0
        %3162 = vmatpush1.bf16.xpose.msra.mxu0 %v3156
        %3163 = vmatprep.subr.bf16.mxu0 0
        %3164 = vmatpush1.bf16.xpose.msra.mxu0 %v3159
        %3165 = vmatprep.subr.bf16.mxu0 0
        %3166 = vmatpush1.bf16.xpose.msra.mxu0 0
        %3167 = vmatprep.subr.bf16.mxu0 0
        %3168 = vmatpush1.bf16.xpose.msra.mxu0 0
        %3169 = vmatprep.subr.bf16.mxu0 0
        %3170 = vmatpush1.bf16.xpose.msra.mxu0 0
        %3171 = vmatprep.subr.bf16.mxu0 0
        %3172 = vmatpush1.bf16.xpose.msra.mxu0 0
        %3173 = vmatprep.subr.bf16.mxu0 0
        %3174 = vmatpush1.bf16.xpose.msra.mxu0 0
        %3175 = vmatprep.subr.bf16.mxu0 0
        %3176 = vmatpush1.bf16.xpose.msra.mxu0 0
        %3177 = vmatprep.subr.bf16.mxu0 0
        %3178 = vmatpush1.bf16.xpose.msra.mxu0 0
        %3179 = vmatprep.subr.bf16.mxu0 0
        %3180 = vmatpush1.bf16.xpose.msra.mxu0 0
        %3181 = vmatprep.subr.bf16.mxu0 0
        %3182 = vmatpush1.bf16.xpose.msra.mxu0 0
        %3183 = vmatprep.subr.bf16.mxu0 0
        %3184 = vmatpush1.bf16.xpose.msra.mxu0 0
        %3185 = vmatprep.subr.bf16.mxu0 0
        %3186 = vmatpush1.bf16.xpose.msra.mxu0 0
        %3187 = vmatprep.subr.bf16.mxu0 0
        %3188 = vmatpush1.bf16.xpose.msra.mxu0 0
        %3189 = vmatprep.subr.bf16.mxu0 0
        %3190 = vmatpush1.bf16.xpose.msra.mxu0 0
        %3191 = vmatprep.subr.bf16.mxu0 0
        %3192 = vmatpush1.bf16.xpose.msra.mxu0 0
        %3193 = vmatprep.mubr.bf16.mxu0 0
        %3194 = vmatmul.mubr.bf16.gmra.mrb[0].mxu0 %v3150
        %v3195 = vpop.f32.mrb[0].mxu0
        %v3196 = vadd.f32 0.0, %v3195
        %v3197 = vpop.f32.mrb[0].mxu0
        %v3198 = vpop.f32.mrb[0].mxu0
        %v3199 = vadd.f32 0.0, %v3198
        %v3200 = vpop.f32.mrb[0].mxu0
        %3201 = vmatprep.mubr.bf16.mxu0 0
        %3202 = vmatmul.mubr.bf16.gmra.mrb[0].mxu0 %v3153
        %v3203 = vpop.f32.mrb[0].mxu0
        %v3204 = vadd.f32 0.0, %v3203
        %v3205 = vpop.f32.mrb[0].mxu0
        %v3206 = vpop.f32.mrb[0].mxu0
        %v3207 = vpop.f32.mrb[0].mxu0
        %3208 = vdwg.mxu0
        %v3210 = vsel %vm2968, %v1628, 0
        %v3213 = vsel %vm2968, %v1629, 0
        %v3216 = vsel %vm2968, %v2292, 0
        %v3219 = vsel %vm2968, %v2293, 0
        %3221 = vmatprep.subr.bf16.mxu0 0
        %3222 = vmatpush1.bf16.xpose.msra.mxu0 %v3216
        %3223 = vmatprep.subr.bf16.mxu0 0
        %3224 = vmatpush1.bf16.xpose.msra.mxu0 %v3219
        %3225 = vmatprep.subr.bf16.mxu0 0
        %3226 = vmatpush1.bf16.xpose.msra.mxu0 0
        %3227 = vmatprep.subr.bf16.mxu0 0
        %3228 = vmatpush1.bf16.xpose.msra.mxu0 0
        %3229 = vmatprep.subr.bf16.mxu0 0
        %3230 = vmatpush1.bf16.xpose.msra.mxu0 0
        %3231 = vmatprep.subr.bf16.mxu0 0
        %3232 = vmatpush1.bf16.xpose.msra.mxu0 0
        %3233 = vmatprep.subr.bf16.mxu0 0
        %3234 = vmatpush1.bf16.xpose.msra.mxu0 0
        %3235 = vmatprep.subr.bf16.mxu0 0
        %3236 = vmatpush1.bf16.xpose.msra.mxu0 0
        %3237 = vmatprep.subr.bf16.mxu0 0
        %3238 = vmatpush1.bf16.xpose.msra.mxu0 0
        %3239 = vmatprep.subr.bf16.mxu0 0
        %3240 = vmatpush1.bf16.xpose.msra.mxu0 0
        %3241 = vmatprep.subr.bf16.mxu0 0
        %3242 = vmatpush1.bf16.xpose.msra.mxu0 0
        %3243 = vmatprep.subr.bf16.mxu0 0
        %3244 = vmatpush1.bf16.xpose.msra.mxu0 0
        %3245 = vmatprep.subr.bf16.mxu0 0
        %3246 = vmatpush1.bf16.xpose.msra.mxu0 0
        %3247 = vmatprep.subr.bf16.mxu0 0
        %3248 = vmatpush1.bf16.xpose.msra.mxu0 0
        %3249 = vmatprep.subr.bf16.mxu0 0
        %3250 = vmatpush1.bf16.xpose.msra.mxu0 0
        %3251 = vmatprep.subr.bf16.mxu0 0
        %3252 = vmatpush1.bf16.xpose.msra.mxu0 0
        %3253 = vmatprep.mubr.bf16.mxu0 0
        %3254 = vmatmul.mubr.bf16.gmra.mrb[0].mxu0 %v3210
        %v3255 = vpop.f32.mrb[0].mxu0
        %v3256 = vadd.f32 0.0, %v3255
        %v3257 = vpop.f32.mrb[0].mxu0
        %v3258 = vpop.f32.mrb[0].mxu0
        %v3259 = vadd.f32 0.0, %v3258
        %v3260 = vpop.f32.mrb[0].mxu0
        %3261 = vmatprep.mubr.bf16.mxu0 0
        %3262 = vmatmul.mubr.bf16.gmra.mrb[0].mxu0 %v3213
        %v3263 = vpop.f32.mrb[0].mxu0
        %v3264 = vadd.f32 0.0, %v3263
        %v3265 = vpop.f32.mrb[0].mxu0
        %v3266 = vpop.f32.mrb[0].mxu0
        %v3267 = vpop.f32.mrb[0].mxu0
        %3268 = vdwg.mxu0
        %v3270 = vsel %vm2968, %v1631, 0
        %v3273 = vsel %vm2968, %v1632, 0
        %v3276 = vsel %vm2968, %v2295, 0
        %v3279 = vsel %vm2968, %v2296, 0
        %3281 = vmatprep.subr.bf16.mxu0 0
        %3282 = vmatpush1.bf16.xpose.msra.mxu0 %v3276
        %3283 = vmatprep.subr.bf16.mxu0 0
        %3284 = vmatpush1.bf16.xpose.msra.mxu0 %v3279
        %3285 = vmatprep.subr.bf16.mxu0 0
        %3286 = vmatpush1.bf16.xpose.msra.mxu0 0
        %3287 = vmatprep.subr.bf16.mxu0 0
        %3288 = vmatpush1.bf16.xpose.msra.mxu0 0
        %3289 = vmatprep.subr.bf16.mxu0 0
        %3290 = vmatpush1.bf16.xpose.msra.mxu0 0
        %3291 = vmatprep.subr.bf16.mxu0 0
        %3292 = vmatpush1.bf16.xpose.msra.mxu0 0
        %3293 = vmatprep.subr.bf16.mxu0 0
        %3294 = vmatpush1.bf16.xpose.msra.mxu0 0
        %3295 = vmatprep.subr.bf16.mxu0 0
        %3296 = vmatpush1.bf16.xpose.msra.mxu0 0
        %3297 = vmatprep.subr.bf16.mxu0 0
        %3298 = vmatpush1.bf16.xpose.msra.mxu0 0
        %3299 = vmatprep.subr.bf16.mxu0 0
        %3300 = vmatpush1.bf16.xpose.msra.mxu0 0
        %3301 = vmatprep.subr.bf16.mxu0 0
        %3302 = vmatpush1.bf16.xpose.msra.mxu0 0
        %3303 = vmatprep.subr.bf16.mxu0 0
        %3304 = vmatpush1.bf16.xpose.msra.mxu0 0
        %3305 = vmatprep.subr.bf16.mxu0 0
        %3306 = vmatpush1.bf16.xpose.msra.mxu0 0
        %3307 = vmatprep.subr.bf16.mxu0 0
        %3308 = vmatpush1.bf16.xpose.msra.mxu0 0
        %3309 = vmatprep.subr.bf16.mxu0 0
        %3310 = vmatpush1.bf16.xpose.msra.mxu0 0
        %3311 = vmatprep.subr.bf16.mxu0 0
        %3312 = vmatpush1.bf16.xpose.msra.mxu0 0
        %3313 = vmatprep.mubr.bf16.mxu0 0
        %3314 = vmatmul.mubr.bf16.gmra.mrb[0].mxu0 %v3270
        %v3315 = vpop.f32.mrb[0].mxu0
        %v3316 = vadd.f32 0.0, %v3315
        %v3317 = vpop.f32.mrb[0].mxu0
        %v3318 = vpop.f32.mrb[0].mxu0
        %v3319 = vadd.f32 0.0, %v3318
        %v3320 = vpop.f32.mrb[0].mxu0
        %3321 = vmatprep.mubr.bf16.mxu0 0
        %3322 = vmatmul.mubr.bf16.gmra.mrb[0].mxu0 %v3273
        %v3323 = vpop.f32.mrb[0].mxu0
        %v3324 = vadd.f32 0.0, %v3323
        %v3325 = vpop.f32.mrb[0].mxu0
        %v3326 = vpop.f32.mrb[0].mxu0
        %v3327 = vpop.f32.mrb[0].mxu0
        %3328 = vdwg.mxu0
        %v3330 = vsel %vm2968, %v1634, 0
        %v3333 = vsel %vm2968, %v1635, 0
        %v3336 = vsel %vm2968, %v2298, 0
        %v3339 = vsel %vm2968, %v2299, 0
        %3341 = vmatprep.subr.bf16.mxu0 0
        %3342 = vmatpush1.bf16.xpose.msra.mxu0 %v3336
        %3343 = vmatprep.subr.bf16.mxu0 0
        %3344 = vmatpush1.bf16.xpose.msra.mxu0 %v3339
        %3345 = vmatprep.subr.bf16.mxu0 0
        %3346 = vmatpush1.bf16.xpose.msra.mxu0 0
        %3347 = vmatprep.subr.bf16.mxu0 0
        %3348 = vmatpush1.bf16.xpose.msra.mxu0 0
        %3349 = vmatprep.subr.bf16.mxu0 0
        %3350 = vmatpush1.bf16.xpose.msra.mxu0 0
        %3351 = vmatprep.subr.bf16.mxu0 0
        %3352 = vmatpush1.bf16.xpose.msra.mxu0 0
        %3353 = vmatprep.subr.bf16.mxu0 0
        %3354 = vmatpush1.bf16.xpose.msra.mxu0 0
        %3355 = vmatprep.subr.bf16.mxu0 0
        %3356 = vmatpush1.bf16.xpose.msra.mxu0 0
        %3357 = vmatprep.subr.bf16.mxu0 0
        %3358 = vmatpush1.bf16.xpose.msra.mxu0 0
        %3359 = vmatprep.subr.bf16.mxu0 0
        %3360 = vmatpush1.bf16.xpose.msra.mxu0 0
        %3361 = vmatprep.subr.bf16.mxu0 0
        %3362 = vmatpush1.bf16.xpose.msra.mxu0 0
        %3363 = vmatprep.subr.bf16.mxu0 0
        %3364 = vmatpush1.bf16.xpose.msra.mxu0 0
        %3365 = vmatprep.subr.bf16.mxu0 0
        %3366 = vmatpush1.bf16.xpose.msra.mxu0 0
        %3367 = vmatprep.subr.bf16.mxu0 0
        %3368 = vmatpush1.bf16.xpose.msra.mxu0 0
        %3369 = vmatprep.subr.bf16.mxu0 0
        %3370 = vmatpush1.bf16.xpose.msra.mxu0 0
        %3371 = vmatprep.subr.bf16.mxu0 0
        %3372 = vmatpush1.bf16.xpose.msra.mxu0 0
        %3373 = vmatprep.mubr.bf16.mxu0 0
        %3374 = vmatmul.mubr.bf16.gmra.mrb[0].mxu0 %v3330
        %v3375 = vpop.f32.mrb[0].mxu0
        %v3376 = vadd.f32 0.0, %v3375
        %v3377 = vpop.f32.mrb[0].mxu0
        %v3378 = vpop.f32.mrb[0].mxu0
        %v3379 = vadd.f32 0.0, %v3378
        %v3380 = vpop.f32.mrb[0].mxu0
        %3381 = vmatprep.mubr.bf16.mxu0 0
        %3382 = vmatmul.mubr.bf16.gmra.mrb[0].mxu0 %v3333
        %v3383 = vpop.f32.mrb[0].mxu0
        %v3384 = vadd.f32 0.0, %v3383
        %v3385 = vpop.f32.mrb[0].mxu0
        %v3386 = vpop.f32.mrb[0].mxu0
        %v3387 = vpop.f32.mrb[0].mxu0
        %3388 = vdwg.mxu0
        %v3390 = vsel %vm2968, %v1637, 0
        %v3393 = vsel %vm2968, %v1638, 0
        %v3396 = vsel %vm2968, %v2301, 0
        %v3399 = vsel %vm2968, %v2302, 0
        %3401 = vmatprep.subr.bf16.mxu0 0
        %3402 = vmatpush1.bf16.xpose.msra.mxu0 %v3396
        %3403 = vmatprep.subr.bf16.mxu0 0
        %3404 = vmatpush1.bf16.xpose.msra.mxu0 %v3399
        %3405 = vmatprep.subr.bf16.mxu0 0
        %3406 = vmatpush1.bf16.xpose.msra.mxu0 0
        %3407 = vmatprep.subr.bf16.mxu0 0
        %3408 = vmatpush1.bf16.xpose.msra.mxu0 0
        %3409 = vmatprep.subr.bf16.mxu0 0
        %3410 = vmatpush1.bf16.xpose.msra.mxu0 0
        %3411 = vmatprep.subr.bf16.mxu0 0
        %3412 = vmatpush1.bf16.xpose.msra.mxu0 0
        %3413 = vmatprep.subr.bf16.mxu0 0
        %3414 = vmatpush1.bf16.xpose.msra.mxu0 0
        %3415 = vmatprep.subr.bf16.mxu0 0
        %3416 = vmatpush1.bf16.xpose.msra.mxu0 0
        %3417 = vmatprep.subr.bf16.mxu0 0
        %3418 = vmatpush1.bf16.xpose.msra.mxu0 0
        %3419 = vmatprep.subr.bf16.mxu0 0
        %3420 = vmatpush1.bf16.xpose.msra.mxu0 0
        %3421 = vmatprep.subr.bf16.mxu0 0
        %3422 = vmatpush1.bf16.xpose.msra.mxu0 0
        %3423 = vmatprep.subr.bf16.mxu0 0
        %3424 = vmatpush1.bf16.xpose.msra.mxu0 0
        %3425 = vmatprep.subr.bf16.mxu0 0
        %3426 = vmatpush1.bf16.xpose.msra.mxu0 0
        %3427 = vmatprep.subr.bf16.mxu0 0
        %3428 = vmatpush1.bf16.xpose.msra.mxu0 0
        %3429 = vmatprep.subr.bf16.mxu0 0
        %3430 = vmatpush1.bf16.xpose.msra.mxu0 0
        %3431 = vmatprep.subr.bf16.mxu0 0
        %3432 = vmatpush1.bf16.xpose.msra.mxu0 0
        %3433 = vmatprep.mubr.bf16.mxu0 0
        %3434 = vmatmul.mubr.bf16.gmra.mrb[0].mxu0 %v3390
        %v3435 = vpop.f32.mrb[0].mxu0
        %v3436 = vadd.f32 0.0, %v3435
        %v3437 = vpop.f32.mrb[0].mxu0
        %v3438 = vpop.f32.mrb[0].mxu0
        %v3439 = vadd.f32 0.0, %v3438
        %v3440 = vpop.f32.mrb[0].mxu0
        %3441 = vmatprep.mubr.bf16.mxu0 0
        %3442 = vmatmul.mubr.bf16.gmra.mrb[0].mxu0 %v3393
        %v3443 = vpop.f32.mrb[0].mxu0
        %v3444 = vadd.f32 0.0, %v3443
        %v3445 = vpop.f32.mrb[0].mxu0
        %v3446 = vpop.f32.mrb[0].mxu0
        %v3447 = vpop.f32.mrb[0].mxu0
        %3448 = vdwg.mxu0
        %v3449 = vmul.f32 %v3016, 0.35355338
        %v3450 = vmul.f32 %v3019, 0.35355338
        %v3451 = vmul.f32 %v3024, 0.35355338
        %v3452 = vmul.f32 %v3076, 0.35355338
        %v3453 = vmul.f32 %v3079, 0.35355338
        %v3454 = vmul.f32 %v3084, 0.35355338
        %v3455 = vmul.f32 %v3136, 0.35355338
        %v3456 = vmul.f32 %v3139, 0.35355338
        %v3457 = vmul.f32 %v3144, 0.35355338
        %v3458 = vmul.f32 %v3196, 0.35355338
        %v3459 = vmul.f32 %v3199, 0.35355338
        %v3460 = vmul.f32 %v3204, 0.35355338
        %v3461 = vmul.f32 %v3256, 0.35355338
        %v3462 = vmul.f32 %v3259, 0.35355338
        %v3463 = vmul.f32 %v3264, 0.35355338
        %v3464 = vmul.f32 %v3316, 0.35355338
        %v3465 = vmul.f32 %v3319, 0.35355338
        %v3466 = vmul.f32 %v3324, 0.35355338
        %v3467 = vmul.f32 %v3376, 0.35355338
        %v3468 = vmul.f32 %v3379, 0.35355338
        %v3469 = vmul.f32 %v3384, 0.35355338
        %v3470 = vmul.f32 %v3436, 0.35355338
        %v3471 = vmul.f32 %v3439, 0.35355338
        %v3472 = vmul.f32 %v3444, 0.35355338
        %vm3473 = vcmask 162816
        %v3474 = vsel %vm3473, %v3449, -inf
        %3475 = vmax.xlane.f32.xlu0 %v3474
        %v3476 = vpop.xlane.xlu0 %3475
        %v3477 = vsel %vm3473, %v3450, -inf
        %3478 = vmax.xlane.f32.xlu0 %v3477
        %v3479 = vpop.xlane.xlu0 %3478
        %vm3480 = vcmask 158720
        %v3481 = vsel %vm3480, %v3451, -inf
        %3482 = vmax.xlane.f32.xlu0 %v3481
        %v3483 = vpop.xlane.xlu0 %3482
        %v3484 = vsel %vm3473, %v3452, -inf
        %3485 = vmax.xlane.f32.xlu0 %v3484
        %v3486 = vpop.xlane.xlu0 %3485
        %v3487 = vsel %vm3473, %v3453, -inf
        %3488 = vmax.xlane.f32.xlu0 %v3487
        %v3489 = vpop.xlane.xlu0 %3488
        %v3490 = vsel %vm3480, %v3454, -inf
        %3491 = vmax.xlane.f32.xlu0 %v3490
        %v3492 = vpop.xlane.xlu0 %3491
        %v3493 = vsel %vm3473, %v3455, -inf
        %3494 = vmax.xlane.f32.xlu0 %v3493
        %v3495 = vpop.xlane.xlu0 %3494
        %v3496 = vsel %vm3473, %v3456, -inf
        %3497 = vmax.xlane.f32.xlu0 %v3496
        %v3498 = vpop.xlane.xlu0 %3497
        %v3499 = vsel %vm3480, %v3457, -inf
        %3500 = vmax.xlane.f32.xlu0 %v3499
        %v3501 = vpop.xlane.xlu0 %3500
        %v3502 = vsel %vm3473, %v3458, -inf
        %3503 = vmax.xlane.f32.xlu0 %v3502
        %v3504 = vpop.xlane.xlu0 %3503
        %v3505 = vsel %vm3473, %v3459, -inf
        %3506 = vmax.xlane.f32.xlu0 %v3505
        %v3507 = vpop.xlane.xlu0 %3506
        %v3508 = vsel %vm3480, %v3460, -inf
        %3509 = vmax.xlane.f32.xlu0 %v3508
        %v3510 = vpop.xlane.xlu0 %3509
        %v3511 = vsel %vm3473, %v3461, -inf
        %3512 = vmax.xlane.f32.xlu0 %v3511
        %v3513 = vpop.xlane.xlu0 %3512
        %v3514 = vsel %vm3473, %v3462, -inf
        %3515 = vmax.xlane.f32.xlu0 %v3514
        %v3516 = vpop.xlane.xlu0 %3515
        %v3517 = vsel %vm3480, %v3463, -inf
        %3518 = vmax.xlane.f32.xlu0 %v3517
        %v3519 = vpop.xlane.xlu0 %3518
        %v3520 = vsel %vm3473, %v3464, -inf
        %3521 = vmax.xlane.f32.xlu0 %v3520
        %v3522 = vpop.xlane.xlu0 %3521
        %v3523 = vsel %vm3473, %v3465, -inf
        %3524 = vmax.xlane.f32.xlu0 %v3523
        %v3525 = vpop.xlane.xlu0 %3524
        %v3526 = vsel %vm3480, %v3466, -inf
        %3527 = vmax.xlane.f32.xlu0 %v3526
        %v3528 = vpop.xlane.xlu0 %3527
        %v3529 = vsel %vm3473, %v3467, -inf
        %3530 = vmax.xlane.f32.xlu0 %v3529
        %v3531 = vpop.xlane.xlu0 %3530
        %v3532 = vsel %vm3473, %v3468, -inf
        %3533 = vmax.xlane.f32.xlu0 %v3532
        %v3534 = vpop.xlane.xlu0 %3533
        %v3535 = vsel %vm3480, %v3469, -inf
        %3536 = vmax.xlane.f32.xlu0 %v3535
        %v3537 = vpop.xlane.xlu0 %3536
        %v3538 = vsel %vm3473, %v3470, -inf
        %3539 = vmax.xlane.f32.xlu0 %v3538
        %v3540 = vpop.xlane.xlu0 %3539
        %v3541 = vsel %vm3473, %v3471, -inf
        %3542 = vmax.xlane.f32.xlu0 %v3541
        %v3543 = vpop.xlane.xlu0 %3542
        %v3544 = vsel %vm3480, %v3472, -inf
        %3545 = vmax.xlane.f32.xlu0 %v3544
        %v3546 = vpop.xlane.xlu0 %3545
        %v3547 = vsub.f32 %v3449, %v3476
        %v3548 = vsub.f32 %v3450, %v3479
        %v3549 = vsub.f32 %v3451, %v3483
        %v3550 = vsub.f32 %v3452, %v3486
        %v3551 = vsub.f32 %v3453, %v3489
        %v3552 = vsub.f32 %v3454, %v3492
        %v3553 = vsub.f32 %v3455, %v3495
        %v3554 = vsub.f32 %v3456, %v3498
        %v3555 = vsub.f32 %v3457, %v3501
        %v3556 = vsub.f32 %v3458, %v3504
        %v3557 = vsub.f32 %v3459, %v3507
        %v3558 = vsub.f32 %v3460, %v3510
        %v3559 = vsub.f32 %v3461, %v3513
        %v3560 = vsub.f32 %v3462, %v3516
        %v3561 = vsub.f32 %v3463, %v3519
        %v3562 = vsub.f32 %v3464, %v3522
        %v3563 = vsub.f32 %v3465, %v3525
        %v3564 = vsub.f32 %v3466, %v3528
        %v3565 = vsub.f32 %v3467, %v3531
        %v3566 = vsub.f32 %v3468, %v3534
        %v3567 = vsub.f32 %v3469, %v3537
        %v3568 = vsub.f32 %v3470, %v3540
        %v3569 = vsub.f32 %v3471, %v3543
        %v3570 = vsub.f32 %v3472, %v3546
        %v3571 = vmul.f32 %v3547, 1.442695
        %v3572 = vpow.pop %v3571
        %v3573 = vmul.f32 %v3548, 1.442695
        %v3574 = vpow.pop %v3573
        %v3575 = vmul.f32 %v3549, 1.442695
        %v3576 = vpow.pop %v3575
        %v3577 = vmul.f32 %v3550, 1.442695
        %v3578 = vpow.pop %v3577
        %v3579 = vmul.f32 %v3551, 1.442695
        %v3580 = vpow.pop %v3579
        %v3581 = vmul.f32 %v3552, 1.442695
        %v3582 = vpow.pop %v3581
        %v3583 = vmul.f32 %v3553, 1.442695
        %v3584 = vpow.pop %v3583
        %v3585 = vmul.f32 %v3554, 1.442695
        %v3586 = vpow.pop %v3585
        %v3587 = vmul.f32 %v3555, 1.442695
        %v3588 = vpow.pop %v3587
        %v3589 = vmul.f32 %v3556, 1.442695
        %v3590 = vpow.pop %v3589
        %v3591 = vmul.f32 %v3557, 1.442695
        %v3592 = vpow.pop %v3591
        %v3593 = vmul.f32 %v3558, 1.442695
        %v3594 = vpow.pop %v3593
        %v3595 = vmul.f32 %v3559, 1.442695
        %v3596 = vpow.pop %v3595
        %v3597 = vmul.f32 %v3560, 1.442695
        %v3598 = vpow.pop %v3597
        %v3599 = vmul.f32 %v3561, 1.442695
        %v3600 = vpow.pop %v3599
        %v3601 = vmul.f32 %v3562, 1.442695
        %v3602 = vpow.pop %v3601
        %v3603 = vmul.f32 %v3563, 1.442695
        %v3604 = vpow.pop %v3603
        %v3605 = vmul.f32 %v3564, 1.442695
        %v3606 = vpow.pop %v3605
        %v3607 = vmul.f32 %v3565, 1.442695
        %v3608 = vpow.pop %v3607
        %v3609 = vmul.f32 %v3566, 1.442695
        %v3610 = vpow.pop %v3609
        %v3611 = vmul.f32 %v3567, 1.442695
        %v3612 = vpow.pop %v3611
        %v3613 = vmul.f32 %v3568, 1.442695
        %v3614 = vpow.pop %v3613
        %v3615 = vmul.f32 %v3569, 1.442695
        %v3616 = vpow.pop %v3615
        %v3617 = vmul.f32 %v3570, 1.442695
        %v3618 = vpow.pop %v3617
        %v3619 = vsel %vm3473, %v3572, 0.0
        %3620 = vadd.xlane.f32.xlu0 %v3619
        %v3621 = vpop.xlane.xlu0 %3620
        %v3622 = vsel %vm3473, %v3574, 0.0
        %3623 = vadd.xlane.f32.xlu0 %v3622
        %v3624 = vpop.xlane.xlu0 %3623
        %v3625 = vsel %vm3480, %v3576, 0.0
        %3626 = vadd.xlane.f32.xlu0 %v3625
        %v3627 = vpop.xlane.xlu0 %3626
        %v3628 = vsel %vm3473, %v3578, 0.0
        %3629 = vadd.xlane.f32.xlu0 %v3628
        %v3630 = vpop.xlane.xlu0 %3629
        %v3631 = vsel %vm3473, %v3580, 0.0
        %3632 = vadd.xlane.f32.xlu0 %v3631
        %v3633 = vpop.xlane.xlu0 %3632
        %v3634 = vsel %vm3480, %v3582, 0.0
        %3635 = vadd.xlane.f32.xlu0 %v3634
        %v3636 = vpop.xlane.xlu0 %3635
        %v3637 = vsel %vm3473, %v3584, 0.0
        %3638 = vadd.xlane.f32.xlu0 %v3637
        %v3639 = vpop.xlane.xlu0 %3638
        %v3640 = vsel %vm3473, %v3586, 0.0
        %3641 = vadd.xlane.f32.xlu0 %v3640
        %v3642 = vpop.xlane.xlu0 %3641
        %v3643 = vsel %vm3480, %v3588, 0.0
        %3644 = vadd.xlane.f32.xlu0 %v3643
        %v3645 = vpop.xlane.xlu0 %3644
        %v3646 = vsel %vm3473, %v3590, 0.0
        %3647 = vadd.xlane.f32.xlu0 %v3646
        %v3648 = vpop.xlane.xlu0 %3647
        %v3649 = vsel %vm3473, %v3592, 0.0
        %3650 = vadd.xlane.f32.xlu0 %v3649
        %v3651 = vpop.xlane.xlu0 %3650
        %v3652 = vsel %vm3480, %v3594, 0.0
        %3653 = vadd.xlane.f32.xlu0 %v3652
        %v3654 = vpop.xlane.xlu0 %3653
        %v3655 = vsel %vm3473, %v3596, 0.0
        %3656 = vadd.xlane.f32.xlu0 %v3655
        %v3657 = vpop.xlane.xlu0 %3656
        %v3658 = vsel %vm3473, %v3598, 0.0
        %3659 = vadd.xlane.f32.xlu0 %v3658
        %v3660 = vpop.xlane.xlu0 %3659
        %v3661 = vsel %vm3480, %v3600, 0.0
        %3662 = vadd.xlane.f32.xlu0 %v3661
        %v3663 = vpop.xlane.xlu0 %3662
        %v3664 = vsel %vm3473, %v3602, 0.0
        %3665 = vadd.xlane.f32.xlu0 %v3664
        %v3666 = vpop.xlane.xlu0 %3665
        %v3667 = vsel %vm3473, %v3604, 0.0
        %3668 = vadd.xlane.f32.xlu0 %v3667
        %v3669 = vpop.xlane.xlu0 %3668
        %v3670 = vsel %vm3480, %v3606, 0.0
        %3671 = vadd.xlane.f32.xlu0 %v3670
        %v3672 = vpop.xlane.xlu0 %3671
        %v3673 = vsel %vm3473, %v3608, 0.0
        %3674 = vadd.xlane.f32.xlu0 %v3673
        %v3675 = vpop.xlane.xlu0 %3674
        %v3676 = vsel %vm3473, %v3610, 0.0
        %3677 = vadd.xlane.f32.xlu0 %v3676
        %v3678 = vpop.xlane.xlu0 %3677
        %v3679 = vsel %vm3480, %v3612, 0.0
        %3680 = vadd.xlane.f32.xlu0 %v3679
        %v3681 = vpop.xlane.xlu0 %3680
        %v3682 = vsel %vm3473, %v3614, 0.0
        %3683 = vadd.xlane.f32.xlu0 %v3682
        %v3684 = vpop.xlane.xlu0 %3683
        %v3685 = vsel %vm3473, %v3616, 0.0
        %3686 = vadd.xlane.f32.xlu0 %v3685
        %v3687 = vpop.xlane.xlu0 %3686
        %v3688 = vsel %vm3480, %v3618, 0.0
        %3689 = vadd.xlane.f32.xlu0 %v3688
        %v3690 = vpop.xlane.xlu0 %3689
        %v3691 = vrcp.pop %v3621
        %v3692 = vrcp.pop %v3624
        %v3693 = vrcp.pop %v3627
        %v3694 = vrcp.pop %v3630
        %v3695 = vrcp.pop %v3633
        %v3696 = vrcp.pop %v3636
        %v3697 = vrcp.pop %v3639
        %v3698 = vrcp.pop %v3642
        %v3699 = vrcp.pop %v3645
        %v3700 = vrcp.pop %v3648
        %v3701 = vrcp.pop %v3651
        %v3702 = vrcp.pop %v3654
        %v3703 = vrcp.pop %v3657
        %v3704 = vrcp.pop %v3660
        %v3705 = vrcp.pop %v3663
        %v3706 = vrcp.pop %v3666
        %v3707 = vrcp.pop %v3669
        %v3708 = vrcp.pop %v3672
        %v3709 = vrcp.pop %v3675
        %v3710 = vrcp.pop %v3678
        %v3711 = vrcp.pop %v3681
        %v3712 = vrcp.pop %v3684
        %v3713 = vrcp.pop %v3687
        %v3714 = vrcp.pop %v3690
        %v3715 = vmul.f32 %v3572, %v3691
        %v3716 = vmul.f32 %v3574, %v3692
        %v3717 = vmul.f32 %v3576, %v3693
        %v3718 = vmul.f32 %v3578, %v3694
        %v3719 = vmul.f32 %v3580, %v3695
        %v3720 = vmul.f32 %v3582, %v3696
        %v3721 = vmul.f32 %v3584, %v3697
        %v3722 = vmul.f32 %v3586, %v3698
        %v3723 = vmul.f32 %v3588, %v3699
        %v3724 = vmul.f32 %v3590, %v3700
        %v3725 = vmul.f32 %v3592, %v3701
        %v3726 = vmul.f32 %v3594, %v3702
        %v3727 = vmul.f32 %v3596, %v3703
        %v3728 = vmul.f32 %v3598, %v3704
        %v3729 = vmul.f32 %v3600, %v3705
        %v3730 = vmul.f32 %v3602, %v3706
        %v3731 = vmul.f32 %v3604, %v3707
        %v3732 = vmul.f32 %v3606, %v3708
        %v3733 = vmul.f32 %v3608, %v3709
        %v3734 = vmul.f32 %v3610, %v3710
        %v3735 = vmul.f32 %v3612, %v3711
        %v3736 = vmul.f32 %v3614, %v3712
        %v3737 = vmul.f32 %v3616, %v3713
        %v3738 = vmul.f32 %v3618, %v3714
        %v3739 = vpack.c.bf16 %v3716, %v3715
        %v3740 = vpack.c.bf16 %v3717, %v3717
        %v3741 = vpack.c.bf16 %v3719, %v3718
        %v3742 = vpack.c.bf16 %v3720, %v3720
        %v3743 = vpack.c.bf16 %v3722, %v3721
        %v3744 = vpack.c.bf16 %v3723, %v3723
        %v3745 = vpack.c.bf16 %v3725, %v3724
        %v3746 = vpack.c.bf16 %v3726, %v3726
        %v3747 = vpack.c.bf16 %v3728, %v3727
        %v3748 = vpack.c.bf16 %v3729, %v3729
        %v3749 = vpack.c.bf16 %v3731, %v3730
        %v3750 = vpack.c.bf16 %v3732, %v3732
        %v3751 = vpack.c.bf16 %v3734, %v3733
        %v3752 = vpack.c.bf16 %v3735, %v3735
        %v3753 = vpack.c.bf16 %v3737, %v3736
        %v3754 = vpack.c.bf16 %v3738, %v3738
        %v3756 = vsel %vm3473, %v3739, 0
        %v3759 = vsel %vm3473, %v3740, 0
        %vm3761 = vcmask 1041408
        %v3763 = vsel %vm3761, %v2945, 0
        %3765 = vmatprep.subr.bf16.mxu0 0
        %3766 = vmatpush1.bf16.msra.mxu0 %v2944
        %3767 = vmatprep.subr.bf16.mxu0 0
        %3768 = vmatpush1.bf16.msra.mxu0 %v3763
        %3769 = vmatprep.subr.bf16.mxu0 0
        %3770 = vmatpush1.bf16.msra.mxu0 0
        %3771 = vmatprep.subr.bf16.mxu0 0
        %3772 = vmatpush1.bf16.msra.mxu0 0
        %3773 = vmatprep.subr.bf16.mxu0 0
        %3774 = vmatpush1.bf16.msra.mxu0 0
        %3775 = vmatprep.subr.bf16.mxu0 0
        %3776 = vmatpush1.bf16.msra.mxu0 0
        %3777 = vmatprep.subr.bf16.mxu0 0
        %3778 = vmatpush1.bf16.msra.mxu0 0
        %3779 = vmatprep.subr.bf16.mxu0 0
        %3780 = vmatpush1.bf16.msra.mxu0 0
        %3781 = vmatprep.subr.bf16.mxu0 0
        %3782 = vmatpush1.bf16.msra.mxu0 0
        %3783 = vmatprep.subr.bf16.mxu0 0
        %3784 = vmatpush1.bf16.msra.mxu0 0
        %3785 = vmatprep.subr.bf16.mxu0 0
        %3786 = vmatpush1.bf16.msra.mxu0 0
        %3787 = vmatprep.subr.bf16.mxu0 0
        %3788 = vmatpush1.bf16.msra.mxu0 0
        %3789 = vmatprep.subr.bf16.mxu0 0
        %3790 = vmatpush1.bf16.msra.mxu0 0
        %3791 = vmatprep.subr.bf16.mxu0 0
        %3792 = vmatpush1.bf16.msra.mxu0 0
        %3793 = vmatprep.subr.bf16.mxu0 0
        %3794 = vmatpush1.bf16.msra.mxu0 0
        %3795 = vmatprep.subr.bf16.mxu0 0
        %3796 = vmatpush1.bf16.msra.mxu0 0
        %3797 = vmatprep.mubr.bf16.mxu0 0
        %3798 = vmatmul.mubr.bf16.gmra.mrb[0].mxu0 %v3756
        %v3799 = vpop.f32.mrb[0].mxu0
        %v3800 = vadd.f32 0.0, %v3799
        %v3801 = vpop.f32.mrb[0].mxu0
        %v3802 = vpop.f32.mrb[0].mxu0
        %v3803 = vadd.f32 0.0, %v3802
        %v3804 = vpop.f32.mrb[0].mxu0
        %3805 = vmatprep.mubr.bf16.mxu0 0
        %3806 = vmatmul.mubr.bf16.gmra.mrb[0].mxu0 %v3759
        %v3807 = vpop.f32.mrb[0].mxu0
        %v3808 = vadd.f32 0.0, %v3807
        %v3809 = vpop.f32.mrb[0].mxu0
        %v3810 = vpop.f32.mrb[0].mxu0
        %v3811 = vpop.f32.mrb[0].mxu0
        %3812 = vdwg.mxu0
        %v3814 = vsel %vm3473, %v3741, 0
        %v3817 = vsel %vm3473, %v3742, 0
        %v3820 = vsel %vm3761, %v2948, 0
        %3822 = vmatprep.subr.bf16.mxu0 0
        %3823 = vmatpush1.bf16.msra.mxu0 %v2947
        %3824 = vmatprep.subr.bf16.mxu0 0
        %3825 = vmatpush1.bf16.msra.mxu0 %v3820
        %3826 = vmatprep.subr.bf16.mxu0 0
        %3827 = vmatpush1.bf16.msra.mxu0 0
        %3828 = vmatprep.subr.bf16.mxu0 0
        %3829 = vmatpush1.bf16.msra.mxu0 0
        %3830 = vmatprep.subr.bf16.mxu0 0
        %3831 = vmatpush1.bf16.msra.mxu0 0
        %3832 = vmatprep.subr.bf16.mxu0 0
        %3833 = vmatpush1.bf16.msra.mxu0 0
        %3834 = vmatprep.subr.bf16.mxu0 0
        %3835 = vmatpush1.bf16.msra.mxu0 0
        %3836 = vmatprep.subr.bf16.mxu0 0
        %3837 = vmatpush1.bf16.msra.mxu0 0
        %3838 = vmatprep.subr.bf16.mxu0 0
        %3839 = vmatpush1.bf16.msra.mxu0 0
        %3840 = vmatprep.subr.bf16.mxu0 0
        %3841 = vmatpush1.bf16.msra.mxu0 0
        %3842 = vmatprep.subr.bf16.mxu0 0
        %3843 = vmatpush1.bf16.msra.mxu0 0
        %3844 = vmatprep.subr.bf16.mxu0 0
        %3845 = vmatpush1.bf16.msra.mxu0 0
        %3846 = vmatprep.subr.bf16.mxu0 0
        %3847 = vmatpush1.bf16.msra.mxu0 0
        %3848 = vmatprep.subr.bf16.mxu0 0
        %3849 = vmatpush1.bf16.msra.mxu0 0
        %3850 = vmatprep.subr.bf16.mxu0 0
        %3851 = vmatpush1.bf16.msra.mxu0 0
        %3852 = vmatprep.subr.bf16.mxu0 0
        %3853 = vmatpush1.bf16.msra.mxu0 0
        %3854 = vmatprep.mubr.bf16.mxu0 0
        %3855 = vmatmul.mubr.bf16.gmra.mrb[0].mxu0 %v3814
        %v3856 = vpop.f32.mrb[0].mxu0
        %v3857 = vadd.f32 0.0, %v3856
        %v3858 = vpop.f32.mrb[0].mxu0
        %v3859 = vpop.f32.mrb[0].mxu0
        %v3860 = vadd.f32 0.0, %v3859
        %v3861 = vpop.f32.mrb[0].mxu0
        %3862 = vmatprep.mubr.bf16.mxu0 0
        %3863 = vmatmul.mubr.bf16.gmra.mrb[0].mxu0 %v3817
        %v3864 = vpop.f32.mrb[0].mxu0
        %v3865 = vadd.f32 0.0, %v3864
        %v3866 = vpop.f32.mrb[0].mxu0
        %v3867 = vpop.f32.mrb[0].mxu0
        %v3868 = vpop.f32.mrb[0].mxu0
        %3869 = vdwg.mxu0
        %v3871 = vsel %vm3473, %v3743, 0
        %v3874 = vsel %vm3473, %v3744, 0
        %v3877 = vsel %vm3761, %v2951, 0
        %3879 = vmatprep.subr.bf16.mxu0 0
        %3880 = vmatpush1.bf16.msra.mxu0 %v2950
        %3881 = vmatprep.subr.bf16.mxu0 0
        %3882 = vmatpush1.bf16.msra.mxu0 %v3877
        %3883 = vmatprep.subr.bf16.mxu0 0
        %3884 = vmatpush1.bf16.msra.mxu0 0
        %3885 = vmatprep.subr.bf16.mxu0 0
        %3886 = vmatpush1.bf16.msra.mxu0 0
        %3887 = vmatprep.subr.bf16.mxu0 0
        %3888 = vmatpush1.bf16.msra.mxu0 0
        %3889 = vmatprep.subr.bf16.mxu0 0
        %3890 = vmatpush1.bf16.msra.mxu0 0
        %3891 = vmatprep.subr.bf16.mxu0 0
        %3892 = vmatpush1.bf16.msra.mxu0 0
        %3893 = vmatprep.subr.bf16.mxu0 0
        %3894 = vmatpush1.bf16.msra.mxu0 0
        %3895 = vmatprep.subr.bf16.mxu0 0
        %3896 = vmatpush1.bf16.msra.mxu0 0
        %3897 = vmatprep.subr.bf16.mxu0 0
        %3898 = vmatpush1.bf16.msra.mxu0 0
        %3899 = vmatprep.subr.bf16.mxu0 0
        %3900 = vmatpush1.bf16.msra.mxu0 0
        %3901 = vmatprep.subr.bf16.mxu0 0
        %3902 = vmatpush1.bf16.msra.mxu0 0
        %3903 = vmatprep.subr.bf16.mxu0 0
        %3904 = vmatpush1.bf16.msra.mxu0 0
        %3905 = vmatprep.subr.bf16.mxu0 0
        %3906 = vmatpush1.bf16.msra.mxu0 0
        %3907 = vmatprep.subr.bf16.mxu0 0
        %3908 = vmatpush1.bf16.msra.mxu0 0
        %3909 = vmatprep.subr.bf16.mxu0 0
        %3910 = vmatpush1.bf16.msra.mxu0 0
        %3911 = vmatprep.mubr.bf16.mxu0 0
        %3912 = vmatmul.mubr.bf16.gmra.mrb[0].mxu0 %v3871
        %v3913 = vpop.f32.mrb[0].mxu0
        %v3914 = vadd.f32 0.0, %v3913
        %v3915 = vpop.f32.mrb[0].mxu0
        %v3916 = vpop.f32.mrb[0].mxu0
        %v3917 = vadd.f32 0.0, %v3916
        %v3918 = vpop.f32.mrb[0].mxu0
        %3919 = vmatprep.mubr.bf16.mxu0 0
        %3920 = vmatmul.mubr.bf16.gmra.mrb[0].mxu0 %v3874
        %v3921 = vpop.f32.mrb[0].mxu0
        %v3922 = vadd.f32 0.0, %v3921
        %v3923 = vpop.f32.mrb[0].mxu0
        %v3924 = vpop.f32.mrb[0].mxu0
        %v3925 = vpop.f32.mrb[0].mxu0
        %3926 = vdwg.mxu0
        %v3928 = vsel %vm3473, %v3745, 0
        %v3931 = vsel %vm3473, %v3746, 0
        %v3934 = vsel %vm3761, %v2954, 0
        %3936 = vmatprep.subr.bf16.mxu0 0
        %3937 = vmatpush1.bf16.msra.mxu0 %v2953
        %3938 = vmatprep.subr.bf16.mxu0 0
        %3939 = vmatpush1.bf16.msra.mxu0 %v3934
        %3940 = vmatprep.subr.bf16.mxu0 0
        %3941 = vmatpush1.bf16.msra.mxu0 0
        %3942 = vmatprep.subr.bf16.mxu0 0
        %3943 = vmatpush1.bf16.msra.mxu0 0
        %3944 = vmatprep.subr.bf16.mxu0 0
        %3945 = vmatpush1.bf16.msra.mxu0 0
        %3946 = vmatprep.subr.bf16.mxu0 0
        %3947 = vmatpush1.bf16.msra.mxu0 0
        %3948 = vmatprep.subr.bf16.mxu0 0
        %3949 = vmatpush1.bf16.msra.mxu0 0
        %3950 = vmatprep.subr.bf16.mxu0 0
        %3951 = vmatpush1.bf16.msra.mxu0 0
        %3952 = vmatprep.subr.bf16.mxu0 0
        %3953 = vmatpush1.bf16.msra.mxu0 0
        %3954 = vmatprep.subr.bf16.mxu0 0
        %3955 = vmatpush1.bf16.msra.mxu0 0
        %3956 = vmatprep.subr.bf16.mxu0 0
        %3957 = vmatpush1.bf16.msra.mxu0 0
        %3958 = vmatprep.subr.bf16.mxu0 0
        %3959 = vmatpush1.bf16.msra.mxu0 0
        %3960 = vmatprep.subr.bf16.mxu0 0
        %3961 = vmatpush1.bf16.msra.mxu0 0
        %3962 = vmatprep.subr.bf16.mxu0 0
        %3963 = vmatpush1.bf16.msra.mxu0 0
        %3964 = vmatprep.subr.bf16.mxu0 0
        %3965 = vmatpush1.bf16.msra.mxu0 0
        %3966 = vmatprep.subr.bf16.mxu0 0
        %3967 = vmatpush1.bf16.msra.mxu0 0
        %3968 = vmatprep.mubr.bf16.mxu0 0
        %3969 = vmatmul.mubr.bf16.gmra.mrb[0].mxu0 %v3928
        %v3970 = vpop.f32.mrb[0].mxu0
        %v3971 = vadd.f32 0.0, %v3970
        %v3972 = vpop.f32.mrb[0].mxu0
        %v3973 = vpop.f32.mrb[0].mxu0
        %v3974 = vadd.f32 0.0, %v3973
        %v3975 = vpop.f32.mrb[0].mxu0
        %3976 = vmatprep.mubr.bf16.mxu0 0
        %3977 = vmatmul.mubr.bf16.gmra.mrb[0].mxu0 %v3931
        %v3978 = vpop.f32.mrb[0].mxu0
        %v3979 = vadd.f32 0.0, %v3978
        %v3980 = vpop.f32.mrb[0].mxu0
        %v3981 = vpop.f32.mrb[0].mxu0
        %v3982 = vpop.f32.mrb[0].mxu0
        %3983 = vdwg.mxu0
        %v3985 = vsel %vm3473, %v3747, 0
        %v3988 = vsel %vm3473, %v3748, 0
        %v3991 = vsel %vm3761, %v2957, 0
        %3993 = vmatprep.subr.bf16.mxu0 0
        %3994 = vmatpush1.bf16.msra.mxu0 %v2956
        %3995 = vmatprep.subr.bf16.mxu0 0
        %3996 = vmatpush1.bf16.msra.mxu0 %v3991
        %3997 = vmatprep.subr.bf16.mxu0 0
        %3998 = vmatpush1.bf16.msra.mxu0 0
        %3999 = vmatprep.subr.bf16.mxu0 0
        %4000 = vmatpush1.bf16.msra.mxu0 0
        %4001 = vmatprep.subr.bf16.mxu0 0
        %4002 = vmatpush1.bf16.msra.mxu0 0
        %4003 = vmatprep.subr.bf16.mxu0 0
        %4004 = vmatpush1.bf16.msra.mxu0 0
        %4005 = vmatprep.subr.bf16.mxu0 0
        %4006 = vmatpush1.bf16.msra.mxu0 0
        %4007 = vmatprep.subr.bf16.mxu0 0
        %4008 = vmatpush1.bf16.msra.mxu0 0
        %4009 = vmatprep.subr.bf16.mxu0 0
        %4010 = vmatpush1.bf16.msra.mxu0 0
        %4011 = vmatprep.subr.bf16.mxu0 0
        %4012 = vmatpush1.bf16.msra.mxu0 0
        %4013 = vmatprep.subr.bf16.mxu0 0
        %4014 = vmatpush1.bf16.msra.mxu0 0
        %4015 = vmatprep.subr.bf16.mxu0 0
        %4016 = vmatpush1.bf16.msra.mxu0 0
        %4017 = vmatprep.subr.bf16.mxu0 0
        %4018 = vmatpush1.bf16.msra.mxu0 0
        %4019 = vmatprep.subr.bf16.mxu0 0
        %4020 = vmatpush1.bf16.msra.mxu0 0
        %4021 = vmatprep.subr.bf16.mxu0 0
        %4022 = vmatpush1.bf16.msra.mxu0 0
        %4023 = vmatprep.subr.bf16.mxu0 0
        %4024 = vmatpush1.bf16.msra.mxu0 0
        %4025 = vmatprep.mubr.bf16.mxu0 0
        %4026 = vmatmul.mubr.bf16.gmra.mrb[0].mxu0 %v3985
        %v4027 = vpop.f32.mrb[0].mxu0
        %v4028 = vadd.f32 0.0, %v4027
        %v4029 = vpop.f32.mrb[0].mxu0
        %v4030 = vpop.f32.mrb[0].mxu0
        %v4031 = vadd.f32 0.0, %v4030
        %v4032 = vpop.f32.mrb[0].mxu0
        %4033 = vmatprep.mubr.bf16.mxu0 0
        %4034 = vmatmul.mubr.bf16.gmra.mrb[0].mxu0 %v3988
        %v4035 = vpop.f32.mrb[0].mxu0
        %v4036 = vadd.f32 0.0, %v4035
        %v4037 = vpop.f32.mrb[0].mxu0
        %v4038 = vpop.f32.mrb[0].mxu0
        %v4039 = vpop.f32.mrb[0].mxu0
        %4040 = vdwg.mxu0
        %v4042 = vsel %vm3473, %v3749, 0
        %v4045 = vsel %vm3473, %v3750, 0
        %v4048 = vsel %vm3761, %v2960, 0
        %4050 = vmatprep.subr.bf16.mxu0 0
        %4051 = vmatpush1.bf16.msra.mxu0 %v2959
        %4052 = vmatprep.subr.bf16.mxu0 0
        %4053 = vmatpush1.bf16.msra.mxu0 %v4048
        %4054 = vmatprep.subr.bf16.mxu0 0
        %4055 = vmatpush1.bf16.msra.mxu0 0
        %4056 = vmatprep.subr.bf16.mxu0 0
        %4057 = vmatpush1.bf16.msra.mxu0 0
        %4058 = vmatprep.subr.bf16.mxu0 0
        %4059 = vmatpush1.bf16.msra.mxu0 0
        %4060 = vmatprep.subr.bf16.mxu0 0
        %4061 = vmatpush1.bf16.msra.mxu0 0
        %4062 = vmatprep.subr.bf16.mxu0 0
        %4063 = vmatpush1.bf16.msra.mxu0 0
        %4064 = vmatprep.subr.bf16.mxu0 0
        %4065 = vmatpush1.bf16.msra.mxu0 0
        %4066 = vmatprep.subr.bf16.mxu0 0
        %4067 = vmatpush1.bf16.msra.mxu0 0
        %4068 = vmatprep.subr.bf16.mxu0 0
        %4069 = vmatpush1.bf16.msra.mxu0 0
        %4070 = vmatprep.subr.bf16.mxu0 0
        %4071 = vmatpush1.bf16.msra.mxu0 0
        %4072 = vmatprep.subr.bf16.mxu0 0
        %4073 = vmatpush1.bf16.msra.mxu0 0
        %4074 = vmatprep.subr.bf16.mxu0 0
        %4075 = vmatpush1.bf16.msra.mxu0 0
        %4076 = vmatprep.subr.bf16.mxu0 0
        %4077 = vmatpush1.bf16.msra.mxu0 0
        %4078 = vmatprep.subr.bf16.mxu0 0
        %4079 = vmatpush1.bf16.msra.mxu0 0
        %4080 = vmatprep.subr.bf16.mxu0 0
        %4081 = vmatpush1.bf16.msra.mxu0 0
        %4082 = vmatprep.mubr.bf16.mxu0 0
        %4083 = vmatmul.mubr.bf16.gmra.mrb[0].mxu0 %v4042
        %v4084 = vpop.f32.mrb[0].mxu0
        %v4085 = vadd.f32 0.0, %v4084
        %v4086 = vpop.f32.mrb[0].mxu0
        %v4087 = vpop.f32.mrb[0].mxu0
        %v4088 = vadd.f32 0.0, %v4087
        %v4089 = vpop.f32.mrb[0].mxu0
        %4090 = vmatprep.mubr.bf16.mxu0 0
        %4091 = vmatmul.mubr.bf16.gmra.mrb[0].mxu0 %v4045
        %v4092 = vpop.f32.mrb[0].mxu0
        %v4093 = vadd.f32 0.0, %v4092
        %v4094 = vpop.f32.mrb[0].mxu0
        %v4095 = vpop.f32.mrb[0].mxu0
        %v4096 = vpop.f32.mrb[0].mxu0
        %4097 = vdwg.mxu0
        %v4099 = vsel %vm3473, %v3751, 0
        %v4102 = vsel %vm3473, %v3752, 0
        %v4105 = vsel %vm3761, %v2963, 0
        %4107 = vmatprep.subr.bf16.mxu0 0
        %4108 = vmatpush1.bf16.msra.mxu0 %v2962
        %4109 = vmatprep.subr.bf16.mxu0 0
        %4110 = vmatpush1.bf16.msra.mxu0 %v4105
        %4111 = vmatprep.subr.bf16.mxu0 0
        %4112 = vmatpush1.bf16.msra.mxu0 0
        %4113 = vmatprep.subr.bf16.mxu0 0
        %4114 = vmatpush1.bf16.msra.mxu0 0
        %4115 = vmatprep.subr.bf16.mxu0 0
        %4116 = vmatpush1.bf16.msra.mxu0 0
        %4117 = vmatprep.subr.bf16.mxu0 0
        %4118 = vmatpush1.bf16.msra.mxu0 0
        %4119 = vmatprep.subr.bf16.mxu0 0
        %4120 = vmatpush1.bf16.msra.mxu0 0
        %4121 = vmatprep.subr.bf16.mxu0 0
        %4122 = vmatpush1.bf16.msra.mxu0 0
        %4123 = vmatprep.subr.bf16.mxu0 0
        %4124 = vmatpush1.bf16.msra.mxu0 0
        %4125 = vmatprep.subr.bf16.mxu0 0
        %4126 = vmatpush1.bf16.msra.mxu0 0
        %4127 = vmatprep.subr.bf16.mxu0 0
        %4128 = vmatpush1.bf16.msra.mxu0 0
        %4129 = vmatprep.subr.bf16.mxu0 0
        %4130 = vmatpush1.bf16.msra.mxu0 0
        %4131 = vmatprep.subr.bf16.mxu0 0
        %4132 = vmatpush1.bf16.msra.mxu0 0
        %4133 = vmatprep.subr.bf16.mxu0 0
        %4134 = vmatpush1.bf16.msra.mxu0 0
        %4135 = vmatprep.subr.bf16.mxu0 0
        %4136 = vmatpush1.bf16.msra.mxu0 0
        %4137 = vmatprep.subr.bf16.mxu0 0
        %4138 = vmatpush1.bf16.msra.mxu0 0
        %4139 = vmatprep.mubr.bf16.mxu0 0
        %4140 = vmatmul.mubr.bf16.gmra.mrb[0].mxu0 %v4099
        %v4141 = vpop.f32.mrb[0].mxu0
        %v4142 = vadd.f32 0.0, %v4141
        %v4143 = vpop.f32.mrb[0].mxu0
        %v4144 = vpop.f32.mrb[0].mxu0
        %v4145 = vadd.f32 0.0, %v4144
        %v4146 = vpop.f32.mrb[0].mxu0
        %4147 = vmatprep.mubr.bf16.mxu0 0
        %4148 = vmatmul.mubr.bf16.gmra.mrb[0].mxu0 %v4102
        %v4149 = vpop.f32.mrb[0].mxu0
        %v4150 = vadd.f32 0.0, %v4149
        %v4151 = vpop.f32.mrb[0].mxu0
        %v4152 = vpop.f32.mrb[0].mxu0
        %v4153 = vpop.f32.mrb[0].mxu0
        %4154 = vdwg.mxu0
        %v4156 = vsel %vm3473, %v3753, 0
        %v4159 = vsel %vm3473, %v3754, 0
        %v4162 = vsel %vm3761, %v2966, 0
        %4164 = vmatprep.subr.bf16.mxu0 0
        %4165 = vmatpush1.bf16.msra.mxu0 %v2965
        %4166 = vmatprep.subr.bf16.mxu0 0
        %4167 = vmatpush1.bf16.msra.mxu0 %v4162
        %4168 = vmatprep.subr.bf16.mxu0 0
        %4169 = vmatpush1.bf16.msra.mxu0 0
        %4170 = vmatprep.subr.bf16.mxu0 0
        %4171 = vmatpush1.bf16.msra.mxu0 0
        %4172 = vmatprep.subr.bf16.mxu0 0
        %4173 = vmatpush1.bf16.msra.mxu0 0
        %4174 = vmatprep.subr.bf16.mxu0 0
        %4175 = vmatpush1.bf16.msra.mxu0 0
        %4176 = vmatprep.subr.bf16.mxu0 0
        %4177 = vmatpush1.bf16.msra.mxu0 0
        %4178 = vmatprep.subr.bf16.mxu0 0
        %4179 = vmatpush1.bf16.msra.mxu0 0
        %4180 = vmatprep.subr.bf16.mxu0 0
        %4181 = vmatpush1.bf16.msra.mxu0 0
        %4182 = vmatprep.subr.bf16.mxu0 0
        %4183 = vmatpush1.bf16.msra.mxu0 0
        %4184 = vmatprep.subr.bf16.mxu0 0
        %4185 = vmatpush1.bf16.msra.mxu0 0
        %4186 = vmatprep.subr.bf16.mxu0 0
        %4187 = vmatpush1.bf16.msra.mxu0 0
        %4188 = vmatprep.subr.bf16.mxu0 0
        %4189 = vmatpush1.bf16.msra.mxu0 0
        %4190 = vmatprep.subr.bf16.mxu0 0
        %4191 = vmatpush1.bf16.msra.mxu0 0
        %4192 = vmatprep.subr.bf16.mxu0 0
        %4193 = vmatpush1.bf16.msra.mxu0 0
        %4194 = vmatprep.subr.bf16.mxu0 0
        %4195 = vmatpush1.bf16.msra.mxu0 0
        %4196 = vmatprep.mubr.bf16.mxu0 0
        %4197 = vmatmul.mubr.bf16.gmra.mrb[0].mxu0 %v4156
        %v4198 = vpop.f32.mrb[0].mxu0
        %v4199 = vadd.f32 0.0, %v4198
        %v4200 = vpop.f32.mrb[0].mxu0
        %v4201 = vpop.f32.mrb[0].mxu0
        %v4202 = vadd.f32 0.0, %v4201
        %v4203 = vpop.f32.mrb[0].mxu0
        %4204 = vmatprep.mubr.bf16.mxu0 0
        %4205 = vmatmul.mubr.bf16.gmra.mrb[0].mxu0 %v4159
        %v4206 = vpop.f32.mrb[0].mxu0
        %v4207 = vadd.f32 0.0, %v4206
        %v4208 = vpop.f32.mrb[0].mxu0
        %v4209 = vpop.f32.mrb[0].mxu0
        %v4210 = vpop.f32.mrb[0].mxu0
        %4211 = vdwg.mxu0
        %v4212 = vpack.c.bf16 %v3803, %v3800
        %v4213 = vpack.c.bf16 %v3808, %v3808
        %v4214 = vpack.c.bf16 %v3860, %v3857
        %v4215 = vpack.c.bf16 %v3865, %v3865
        %v4216 = vpack.c.bf16 %v3917, %v3914
        %v4217 = vpack.c.bf16 %v3922, %v3922
        %v4218 = vpack.c.bf16 %v3974, %v3971
        %v4219 = vpack.c.bf16 %v3979, %v3979
        %v4220 = vpack.c.bf16 %v4031, %v4028
        %v4221 = vpack.c.bf16 %v4036, %v4036
        %v4222 = vpack.c.bf16 %v4088, %v4085
        %v4223 = vpack.c.bf16 %v4093, %v4093
        %v4224 = vpack.c.bf16 %v4145, %v4142
        %v4225 = vpack.c.bf16 %v4150, %v4150
        %v4226 = vpack.c.bf16 %v4202, %v4199
        %v4227 = vpack.c.bf16 %v4207, %v4207
        %v4229 = vsel %vm2968, %v4212, 0
        %v4232 = vsel %vm2968, %v4213, 0
        %vm4234 = vcmask 1043456
        %v4236 = vsel %vm4234, %v865, 0
        %4238 = vmatprep.subr.bf16.mxu0 0
        %4239 = vmatpush1.bf16.msra.mxu0 %v4236
        %4240 = vmatprep.subr.bf16.mxu0 0
        %4241 = vmatpush1.bf16.msra.mxu0 0
        %4242 = vmatprep.subr.bf16.mxu0 0
        %4243 = vmatpush1.bf16.msra.mxu0 0
        %4244 = vmatprep.subr.bf16.mxu0 0
        %4245 = vmatpush1.bf16.msra.mxu0 0
        %4246 = vmatprep.subr.bf16.mxu0 0
        %4247 = vmatpush1.bf16.msra.mxu0 0
        %4248 = vmatprep.subr.bf16.mxu0 0
        %4249 = vmatpush1.bf16.msra.mxu0 0
        %4250 = vmatprep.subr.bf16.mxu0 0
        %4251 = vmatpush1.bf16.msra.mxu0 0
        %4252 = vmatprep.subr.bf16.mxu0 0
        %4253 = vmatpush1.bf16.msra.mxu0 0
        %4254 = vmatprep.subr.bf16.mxu0 0
        %4255 = vmatpush1.bf16.msra.mxu0 0
        %4256 = vmatprep.subr.bf16.mxu0 0
        %4257 = vmatpush1.bf16.msra.mxu0 0
        %4258 = vmatprep.subr.bf16.mxu0 0
        %4259 = vmatpush1.bf16.msra.mxu0 0
        %4260 = vmatprep.subr.bf16.mxu0 0
        %4261 = vmatpush1.bf16.msra.mxu0 0
        %4262 = vmatprep.subr.bf16.mxu0 0
        %4263 = vmatpush1.bf16.msra.mxu0 0
        %4264 = vmatprep.subr.bf16.mxu0 0
        %4265 = vmatpush1.bf16.msra.mxu0 0
        %4266 = vmatprep.subr.bf16.mxu0 0
        %4267 = vmatpush1.bf16.msra.mxu0 0
        %4268 = vmatprep.subr.bf16.mxu0 0
        %4269 = vmatpush1.bf16.msra.mxu0 0
        %4270 = vmatprep.mubr.bf16.mxu0 0
        %4271 = vmatmul.mubr.bf16.gmra.mrb[0].mxu0 %v4229
        %v4272 = vpop.f32.mrb[0].mxu0
        %v4273 = vadd.f32 0.0, %v4272
        %v4274 = vpop.f32.mrb[0].mxu0
        %v4275 = vpop.f32.mrb[0].mxu0
        %v4276 = vadd.f32 0.0, %v4275
        %v4277 = vpop.f32.mrb[0].mxu0
        %4278 = vmatprep.mubr.bf16.mxu0 0
        %4279 = vmatmul.mubr.bf16.gmra.mrb[0].mxu0 %v4232
        %v4280 = vpop.f32.mrb[0].mxu0
        %v4281 = vadd.f32 0.0, %v4280
        %v4282 = vpop.f32.mrb[0].mxu0
        %v4283 = vpop.f32.mrb[0].mxu0
        %v4284 = vpop.f32.mrb[0].mxu0
        %4285 = vdwg.mxu0
        %v4287 = vsel %vm2968, %v4214, 0
        %v4290 = vsel %vm2968, %v4215, 0
        %v4293 = vsel %vm4234, %v866, 0
        %4295 = vmatprep.subr.bf16.mxu0 0
        %4296 = vmatpush1.bf16.msra.mxu0 %v4293
        %4297 = vmatprep.subr.bf16.mxu0 0
        %4298 = vmatpush1.bf16.msra.mxu0 0
        %4299 = vmatprep.subr.bf16.mxu0 0
        %4300 = vmatpush1.bf16.msra.mxu0 0
        %4301 = vmatprep.subr.bf16.mxu0 0
        %4302 = vmatpush1.bf16.msra.mxu0 0
        %4303 = vmatprep.subr.bf16.mxu0 0
        %4304 = vmatpush1.bf16.msra.mxu0 0
        %4305 = vmatprep.subr.bf16.mxu0 0
        %4306 = vmatpush1.bf16.msra.mxu0 0
        %4307 = vmatprep.subr.bf16.mxu0 0
        %4308 = vmatpush1.bf16.msra.mxu0 0
        %4309 = vmatprep.subr.bf16.mxu0 0
        %4310 = vmatpush1.bf16.msra.mxu0 0
        %4311 = vmatprep.subr.bf16.mxu0 0
        %4312 = vmatpush1.bf16.msra.mxu0 0
        %4313 = vmatprep.subr.bf16.mxu0 0
        %4314 = vmatpush1.bf16.msra.mxu0 0
        %4315 = vmatprep.subr.bf16.mxu0 0
        %4316 = vmatpush1.bf16.msra.mxu0 0
        %4317 = vmatprep.subr.bf16.mxu0 0
        %4318 = vmatpush1.bf16.msra.mxu0 0
        %4319 = vmatprep.subr.bf16.mxu0 0
        %4320 = vmatpush1.bf16.msra.mxu0 0
        %4321 = vmatprep.subr.bf16.mxu0 0
        %4322 = vmatpush1.bf16.msra.mxu0 0
        %4323 = vmatprep.subr.bf16.mxu0 0
        %4324 = vmatpush1.bf16.msra.mxu0 0
        %4325 = vmatprep.subr.bf16.mxu0 0
        %4326 = vmatpush1.bf16.msra.mxu0 0
        %4327 = vmatprep.mubr.bf16.mxu0 0
        %4328 = vmatmul.mubr.bf16.gmra.mrb[0].mxu0 %v4287
        %v4329 = vpop.f32.mrb[0].mxu0
        %v4330 = vadd.f32 0.0, %v4329
        %v4331 = vpop.f32.mrb[0].mxu0
        %v4332 = vpop.f32.mrb[0].mxu0
        %v4333 = vadd.f32 0.0, %v4332
        %v4334 = vpop.f32.mrb[0].mxu0
        %4335 = vmatprep.mubr.bf16.mxu0 0
        %4336 = vmatmul.mubr.bf16.gmra.mrb[0].mxu0 %v4290
        %v4337 = vpop.f32.mrb[0].mxu0
        %v4338 = vadd.f32 0.0, %v4337
        %v4339 = vpop.f32.mrb[0].mxu0
        %v4340 = vpop.f32.mrb[0].mxu0
        %v4341 = vpop.f32.mrb[0].mxu0
        %4342 = vdwg.mxu0
        %v4344 = vsel %vm2968, %v4216, 0
        %v4347 = vsel %vm2968, %v4217, 0
        %v4350 = vsel %vm4234, %v867, 0
        %4352 = vmatprep.subr.bf16.mxu0 0
        %4353 = vmatpush1.bf16.msra.mxu0 %v4350
        %4354 = vmatprep.subr.bf16.mxu0 0
        %4355 = vmatpush1.bf16.msra.mxu0 0
        %4356 = vmatprep.subr.bf16.mxu0 0
        %4357 = vmatpush1.bf16.msra.mxu0 0
        %4358 = vmatprep.subr.bf16.mxu0 0
        %4359 = vmatpush1.bf16.msra.mxu0 0
        %4360 = vmatprep.subr.bf16.mxu0 0
        %4361 = vmatpush1.bf16.msra.mxu0 0
        %4362 = vmatprep.subr.bf16.mxu0 0
        %4363 = vmatpush1.bf16.msra.mxu0 0
        %4364 = vmatprep.subr.bf16.mxu0 0
        %4365 = vmatpush1.bf16.msra.mxu0 0
        %4366 = vmatprep.subr.bf16.mxu0 0
        %4367 = vmatpush1.bf16.msra.mxu0 0
        %4368 = vmatprep.subr.bf16.mxu0 0
        %4369 = vmatpush1.bf16.msra.mxu0 0
        %4370 = vmatprep.subr.bf16.mxu0 0
        %4371 = vmatpush1.bf16.msra.mxu0 0
        %4372 = vmatprep.subr.bf16.mxu0 0
        %4373 = vmatpush1.bf16.msra.mxu0 0
        %4374 = vmatprep.subr.bf16.mxu0 0
        %4375 = vmatpush1.bf16.msra.mxu0 0
        %4376 = vmatprep.subr.bf16.mxu0 0
        %4377 = vmatpush1.bf16.msra.mxu0 0
        %4378 = vmatprep.subr.bf16.mxu0 0
        %4379 = vmatpush1.bf16.msra.mxu0 0
        %4380 = vmatprep.subr.bf16.mxu0 0
        %4381 = vmatpush1.bf16.msra.mxu0 0
        %4382 = vmatprep.subr.bf16.mxu0 0
        %4383 = vmatpush1.bf16.msra.mxu0 0
        %4384 = vmatprep.mubr.bf16.mxu0 0
        %4385 = vmatmul.mubr.bf16.gmra.mrb[0].mxu0 %v4344
        %v4386 = vpop.f32.mrb[0].mxu0
        %v4387 = vadd.f32 0.0, %v4386
        %v4388 = vpop.f32.mrb[0].mxu0
        %v4389 = vpop.f32.mrb[0].mxu0
        %v4390 = vadd.f32 0.0, %v4389
        %v4391 = vpop.f32.mrb[0].mxu0
        %4392 = vmatprep.mubr.bf16.mxu0 0
        %4393 = vmatmul.mubr.bf16.gmra.mrb[0].mxu0 %v4347
        %v4394 = vpop.f32.mrb[0].mxu0
        %v4395 = vadd.f32 0.0, %v4394
        %v4396 = vpop.f32.mrb[0].mxu0
        %v4397 = vpop.f32.mrb[0].mxu0
        %v4398 = vpop.f32.mrb[0].mxu0
        %4399 = vdwg.mxu0
        %v4401 = vsel %vm2968, %v4218, 0
        %v4404 = vsel %vm2968, %v4219, 0
        %v4407 = vsel %vm4234, %v868, 0
        %4409 = vmatprep.subr.bf16.mxu0 0
        %4410 = vmatpush1.bf16.msra.mxu0 %v4407
        %4411 = vmatprep.subr.bf16.mxu0 0
        %4412 = vmatpush1.bf16.msra.mxu0 0
        %4413 = vmatprep.subr.bf16.mxu0 0
        %4414 = vmatpush1.bf16.msra.mxu0 0
        %4415 = vmatprep.subr.bf16.mxu0 0
        %4416 = vmatpush1.bf16.msra.mxu0 0
        %4417 = vmatprep.subr.bf16.mxu0 0
        %4418 = vmatpush1.bf16.msra.mxu0 0
        %4419 = vmatprep.subr.bf16.mxu0 0
        %4420 = vmatpush1.bf16.msra.mxu0 0
        %4421 = vmatprep.subr.bf16.mxu0 0
        %4422 = vmatpush1.bf16.msra.mxu0 0
        %4423 = vmatprep.subr.bf16.mxu0 0
        %4424 = vmatpush1.bf16.msra.mxu0 0
        %4425 = vmatprep.subr.bf16.mxu0 0
        %4426 = vmatpush1.bf16.msra.mxu0 0
        %4427 = vmatprep.subr.bf16.mxu0 0
        %4428 = vmatpush1.bf16.msra.mxu0 0
        %4429 = vmatprep.subr.bf16.mxu0 0
        %4430 = vmatpush1.bf16.msra.mxu0 0
        %4431 = vmatprep.subr.bf16.mxu0 0
        %4432 = vmatpush1.bf16.msra.mxu0 0
        %4433 = vmatprep.subr.bf16.mxu0 0
        %4434 = vmatpush1.bf16.msra.mxu0 0
        %4435 = vmatprep.subr.bf16.mxu0 0
        %4436 = vmatpush1.bf16.msra.mxu0 0
        %4437 = vmatprep.subr.bf16.mxu0 0
        %4438 = vmatpush1.bf16.msra.mxu0 0
        %4439 = vmatprep.subr.bf16.mxu0 0
        %4440 = vmatpush1.bf16.msra.mxu0 0
        %4441 = vmatprep.mubr.bf16.mxu0 0
        %4442 = vmatmul.mubr.bf16.gmra.mrb[0].mxu0 %v4401
        %v4443 = vpop.f32.mrb[0].mxu0
        %v4444 = vadd.f32 0.0, %v4443
        %v4445 = vpop.f32.mrb[0].mxu0
        %v4446 = vpop.f32.mrb[0].mxu0
        %v4447 = vadd.f32 0.0, %v4446
        %v4448 = vpop.f32.mrb[0].mxu0
        %4449 = vmatprep.mubr.bf16.mxu0 0
        %4450 = vmatmul.mubr.bf16.gmra.mrb[0].mxu0 %v4404
        %v4451 = vpop.f32.mrb[0].mxu0
        %v4452 = vadd.f32 0.0, %v4451
        %v4453 = vpop.f32.mrb[0].mxu0
        %v4454 = vpop.f32.mrb[0].mxu0
        %v4455 = vpop.f32.mrb[0].mxu0
        %4456 = vdwg.mxu0
        %v4458 = vsel %vm2968, %v4220, 0
        %v4461 = vsel %vm2968, %v4221, 0
        %v4464 = vsel %vm4234, %v869, 0
        %4466 = vmatprep.subr.bf16.mxu0 0
        %4467 = vmatpush1.bf16.msra.mxu0 %v4464
        %4468 = vmatprep.subr.bf16.mxu0 0
        %4469 = vmatpush1.bf16.msra.mxu0 0
        %4470 = vmatprep.subr.bf16.mxu0 0
        %4471 = vmatpush1.bf16.msra.mxu0 0
        %4472 = vmatprep.subr.bf16.mxu0 0
        %4473 = vmatpush1.bf16.msra.mxu0 0
        %4474 = vmatprep.subr.bf16.mxu0 0
        %4475 = vmatpush1.bf16.msra.mxu0 0
        %4476 = vmatprep.subr.bf16.mxu0 0
        %4477 = vmatpush1.bf16.msra.mxu0 0
        %4478 = vmatprep.subr.bf16.mxu0 0
        %4479 = vmatpush1.bf16.msra.mxu0 0
        %4480 = vmatprep.subr.bf16.mxu0 0
        %4481 = vmatpush1.bf16.msra.mxu0 0
        %4482 = vmatprep.subr.bf16.mxu0 0
        %4483 = vmatpush1.bf16.msra.mxu0 0
        %4484 = vmatprep.subr.bf16.mxu0 0
        %4485 = vmatpush1.bf16.msra.mxu0 0
        %4486 = vmatprep.subr.bf16.mxu0 0
        %4487 = vmatpush1.bf16.msra.mxu0 0
        %4488 = vmatprep.subr.bf16.mxu0 0
        %4489 = vmatpush1.bf16.msra.mxu0 0
        %4490 = vmatprep.subr.bf16.mxu0 0
        %4491 = vmatpush1.bf16.msra.mxu0 0
        %4492 = vmatprep.subr.bf16.mxu0 0
        %4493 = vmatpush1.bf16.msra.mxu0 0
        %4494 = vmatprep.subr.bf16.mxu0 0
        %4495 = vmatpush1.bf16.msra.mxu0 0
        %4496 = vmatprep.subr.bf16.mxu0 0
        %4497 = vmatpush1.bf16.msra.mxu0 0
        %4498 = vmatprep.mubr.bf16.mxu0 0
        %4499 = vmatmul.mubr.bf16.gmra.mrb[0].mxu0 %v4458
        %v4500 = vpop.f32.mrb[0].mxu0
        %v4501 = vadd.f32 0.0, %v4500
        %v4502 = vpop.f32.mrb[0].mxu0
        %v4503 = vpop.f32.mrb[0].mxu0
        %v4504 = vadd.f32 0.0, %v4503
        %v4505 = vpop.f32.mrb[0].mxu0
        %4506 = vmatprep.mubr.bf16.mxu0 0
        %4507 = vmatmul.mubr.bf16.gmra.mrb[0].mxu0 %v4461
        %v4508 = vpop.f32.mrb[0].mxu0
        %v4509 = vadd.f32 0.0, %v4508
        %v4510 = vpop.f32.mrb[0].mxu0
        %v4511 = vpop.f32.mrb[0].mxu0
        %v4512 = vpop.f32.mrb[0].mxu0
        %4513 = vdwg.mxu0
        %v4515 = vsel %vm2968, %v4222, 0
        %v4518 = vsel %vm2968, %v4223, 0
        %v4521 = vsel %vm4234, %v870, 0
        %4523 = vmatprep.subr.bf16.mxu0 0
        %4524 = vmatpush1.bf16.msra.mxu0 %v4521
        %4525 = vmatprep.subr.bf16.mxu0 0
        %4526 = vmatpush1.bf16.msra.mxu0 0
        %4527 = vmatprep.subr.bf16.mxu0 0
        %4528 = vmatpush1.bf16.msra.mxu0 0
        %4529 = vmatprep.subr.bf16.mxu0 0
        %4530 = vmatpush1.bf16.msra.mxu0 0
        %4531 = vmatprep.subr.bf16.mxu0 0
        %4532 = vmatpush1.bf16.msra.mxu0 0
        %4533 = vmatprep.subr.bf16.mxu0 0
        %4534 = vmatpush1.bf16.msra.mxu0 0
        %4535 = vmatprep.subr.bf16.mxu0 0
        %4536 = vmatpush1.bf16.msra.mxu0 0
        %4537 = vmatprep.subr.bf16.mxu0 0
        %4538 = vmatpush1.bf16.msra.mxu0 0
        %4539 = vmatprep.subr.bf16.mxu0 0
        %4540 = vmatpush1.bf16.msra.mxu0 0
        %4541 = vmatprep.subr.bf16.mxu0 0
        %4542 = vmatpush1.bf16.msra.mxu0 0
        %4543 = vmatprep.subr.bf16.mxu0 0
        %4544 = vmatpush1.bf16.msra.mxu0 0
        %4545 = vmatprep.subr.bf16.mxu0 0
        %4546 = vmatpush1.bf16.msra.mxu0 0
        %4547 = vmatprep.subr.bf16.mxu0 0
        %4548 = vmatpush1.bf16.msra.mxu0 0
        %4549 = vmatprep.subr.bf16.mxu0 0
        %4550 = vmatpush1.bf16.msra.mxu0 0
        %4551 = vmatprep.subr.bf16.mxu0 0
        %4552 = vmatpush1.bf16.msra.mxu0 0
        %4553 = vmatprep.subr.bf16.mxu0 0
        %4554 = vmatpush1.bf16.msra.mxu0 0
        %4555 = vmatprep.mubr.bf16.mxu0 0
        %4556 = vmatmul.mubr.bf16.gmra.mrb[0].mxu0 %v4515
        %v4557 = vpop.f32.mrb[0].mxu0
        %v4558 = vadd.f32 0.0, %v4557
        %v4559 = vpop.f32.mrb[0].mxu0
        %v4560 = vpop.f32.mrb[0].mxu0
        %v4561 = vadd.f32 0.0, %v4560
        %v4562 = vpop.f32.mrb[0].mxu0
        %4563 = vmatprep.mubr.bf16.mxu0 0
        %4564 = vmatmul.mubr.bf16.gmra.mrb[0].mxu0 %v4518
        %v4565 = vpop.f32.mrb[0].mxu0
        %v4566 = vadd.f32 0.0, %v4565
        %v4567 = vpop.f32.mrb[0].mxu0
        %v4568 = vpop.f32.mrb[0].mxu0
        %v4569 = vpop.f32.mrb[0].mxu0
        %4570 = vdwg.mxu0
        %v4572 = vsel %vm2968, %v4224, 0
        %v4575 = vsel %vm2968, %v4225, 0
        %v4578 = vsel %vm4234, %v871, 0
        %4580 = vmatprep.subr.bf16.mxu0 0
        %4581 = vmatpush1.bf16.msra.mxu0 %v4578
        %4582 = vmatprep.subr.bf16.mxu0 0
        %4583 = vmatpush1.bf16.msra.mxu0 0
        %4584 = vmatprep.subr.bf16.mxu0 0
        %4585 = vmatpush1.bf16.msra.mxu0 0
        %4586 = vmatprep.subr.bf16.mxu0 0
        %4587 = vmatpush1.bf16.msra.mxu0 0
        %4588 = vmatprep.subr.bf16.mxu0 0
        %4589 = vmatpush1.bf16.msra.mxu0 0
        %4590 = vmatprep.subr.bf16.mxu0 0
        %4591 = vmatpush1.bf16.msra.mxu0 0
        %4592 = vmatprep.subr.bf16.mxu0 0
        %4593 = vmatpush1.bf16.msra.mxu0 0
        %4594 = vmatprep.subr.bf16.mxu0 0
        %4595 = vmatpush1.bf16.msra.mxu0 0
        %4596 = vmatprep.subr.bf16.mxu0 0
        %4597 = vmatpush1.bf16.msra.mxu0 0
        %4598 = vmatprep.subr.bf16.mxu0 0
        %4599 = vmatpush1.bf16.msra.mxu0 0
        %4600 = vmatprep.subr.bf16.mxu0 0
        %4601 = vmatpush1.bf16.msra.mxu0 0
        %4602 = vmatprep.subr.bf16.mxu0 0
        %4603 = vmatpush1.bf16.msra.mxu0 0
        %4604 = vmatprep.subr.bf16.mxu0 0
        %4605 = vmatpush1.bf16.msra.mxu0 0
        %4606 = vmatprep.subr.bf16.mxu0 0
        %4607 = vmatpush1.bf16.msra.mxu0 0
        %4608 = vmatprep.subr.bf16.mxu0 0
        %4609 = vmatpush1.bf16.msra.mxu0 0
        %4610 = vmatprep.subr.bf16.mxu0 0
        %4611 = vmatpush1.bf16.msra.mxu0 0
        %4612 = vmatprep.mubr.bf16.mxu0 0
        %4613 = vmatmul.mubr.bf16.gmra.mrb[0].mxu0 %v4572
        %v4614 = vpop.f32.mrb[0].mxu0
        %v4615 = vadd.f32 0.0, %v4614
        %v4616 = vpop.f32.mrb[0].mxu0
        %v4617 = vpop.f32.mrb[0].mxu0
        %v4618 = vadd.f32 0.0, %v4617
        %v4619 = vpop.f32.mrb[0].mxu0
        %4620 = vmatprep.mubr.bf16.mxu0 0
        %4621 = vmatmul.mubr.bf16.gmra.mrb[0].mxu0 %v4575
        %v4622 = vpop.f32.mrb[0].mxu0
        %v4623 = vadd.f32 0.0, %v4622
        %v4624 = vpop.f32.mrb[0].mxu0
        %v4625 = vpop.f32.mrb[0].mxu0
        %v4626 = vpop.f32.mrb[0].mxu0
        %4627 = vdwg.mxu0
        %v4629 = vsel %vm2968, %v4226, 0
        %v4632 = vsel %vm2968, %v4227, 0
        %v4635 = vsel %vm4234, %v872, 0
        %4637 = vmatprep.subr.bf16.mxu0 0
        %4638 = vmatpush1.bf16.msra.mxu0 %v4635
        %4639 = vmatprep.subr.bf16.mxu0 0
        %4640 = vmatpush1.bf16.msra.mxu0 0
        %4641 = vmatprep.subr.bf16.mxu0 0
        %4642 = vmatpush1.bf16.msra.mxu0 0
        %4643 = vmatprep.subr.bf16.mxu0 0
        %4644 = vmatpush1.bf16.msra.mxu0 0
        %4645 = vmatprep.subr.bf16.mxu0 0
        %4646 = vmatpush1.bf16.msra.mxu0 0
        %4647 = vmatprep.subr.bf16.mxu0 0
        %4648 = vmatpush1.bf16.msra.mxu0 0
        %4649 = vmatprep.subr.bf16.mxu0 0
        %4650 = vmatpush1.bf16.msra.mxu0 0
        %4651 = vmatprep.subr.bf16.mxu0 0
        %4652 = vmatpush1.bf16.msra.mxu0 0
        %4653 = vmatprep.subr.bf16.mxu0 0
        %4654 = vmatpush1.bf16.msra.mxu0 0
        %4655 = vmatprep.subr.bf16.mxu0 0
        %4656 = vmatpush1.bf16.msra.mxu0 0
        %4657 = vmatprep.subr.bf16.mxu0 0
        %4658 = vmatpush1.bf16.msra.mxu0 0
        %4659 = vmatprep.subr.bf16.mxu0 0
        %4660 = vmatpush1.bf16.msra.mxu0 0
        %4661 = vmatprep.subr.bf16.mxu0 0
        %4662 = vmatpush1.bf16.msra.mxu0 0
        %4663 = vmatprep.subr.bf16.mxu0 0
        %4664 = vmatpush1.bf16.msra.mxu0 0
        %4665 = vmatprep.subr.bf16.mxu0 0
        %4666 = vmatpush1.bf16.msra.mxu0 0
        %4667 = vmatprep.subr.bf16.mxu0 0
        %4668 = vmatpush1.bf16.msra.mxu0 0
        %4669 = vmatprep.mubr.bf16.mxu0 0
        %4670 = vmatmul.mubr.bf16.gmra.mrb[0].mxu0 %v4629
        %v4671 = vpop.f32.mrb[0].mxu0
        %v4672 = vadd.f32 0.0, %v4671
        %v4673 = vpop.f32.mrb[0].mxu0
        %v4674 = vpop.f32.mrb[0].mxu0
        %v4675 = vadd.f32 0.0, %v4674
        %v4676 = vpop.f32.mrb[0].mxu0
        %4677 = vmatprep.mubr.bf16.mxu0 0
        %4678 = vmatmul.mubr.bf16.gmra.mrb[0].mxu0 %v4632
        %v4679 = vpop.f32.mrb[0].mxu0
        %v4680 = vadd.f32 0.0, %v4679
        %v4681 = vpop.f32.mrb[0].mxu0
        %v4682 = vpop.f32.mrb[0].mxu0
        %v4683 = vpop.f32.mrb[0].mxu0
        %4684 = vdwg.mxu0
        %v4685 = vsel %vm875, %v4273, 0.0
        %v4686 = vsel %vm875, %v4330, 0.0
        %v4687 = vadd.f32 %v4685, %v4686
        %v4688 = vsel %vm875, %v4387, 0.0
        %v4689 = vadd.f32 %v4687, %v4688
        %v4690 = vsel %vm875, %v4444, 0.0
        %v4691 = vadd.f32 %v4689, %v4690
        %v4692 = vsel %vm875, %v4501, 0.0
        %v4693 = vadd.f32 %v4691, %v4692
        %v4694 = vsel %vm875, %v4558, 0.0
        %v4695 = vadd.f32 %v4693, %v4694
        %v4696 = vsel %vm875, %v4615, 0.0
        %v4697 = vadd.f32 %v4695, %v4696
        %v4698 = vsel %vm875, %v4672, 0.0
        %v4699 = vadd.f32 %v4697, %v4698
        %v4700 = vsel %vm875, %v4276, 0.0
        %v4701 = vsel %vm875, %v4333, 0.0
        %v4702 = vadd.f32 %v4700, %v4701
        %v4703 = vsel %vm875, %v4390, 0.0
        %v4704 = vadd.f32 %v4702, %v4703
        %v4705 = vsel %vm875, %v4447, 0.0
        %v4706 = vadd.f32 %v4704, %v4705
        %v4707 = vsel %vm875, %v4504, 0.0
        %v4708 = vadd.f32 %v4706, %v4707
        %v4709 = vsel %vm875, %v4561, 0.0
        %v4710 = vadd.f32 %v4708, %v4709
        %v4711 = vsel %vm875, %v4618, 0.0
        %v4712 = vadd.f32 %v4710, %v4711
        %v4713 = vsel %vm875, %v4675, 0.0
        %v4714 = vadd.f32 %v4712, %v4713
        %vm4715 = vcmask 519168
        %v4716 = vsel %vm4715, %v4281, 0.0
        %v4717 = vsel %vm4715, %v4338, 0.0
        %v4718 = vadd.f32 %v4716, %v4717
        %v4719 = vsel %vm4715, %v4395, 0.0
        %v4720 = vadd.f32 %v4718, %v4719
        %v4721 = vsel %vm4715, %v4452, 0.0
        %v4722 = vadd.f32 %v4720, %v4721
        %v4723 = vsel %vm4715, %v4509, 0.0
        %v4724 = vadd.f32 %v4722, %v4723
        %v4725 = vsel %vm4715, %v4566, 0.0
        %v4726 = vadd.f32 %v4724, %v4725
        %v4727 = vsel %vm4715, %v4623, 0.0
        %v4728 = vadd.f32 %v4726, %v4727
        %v4729 = vsel %vm4715, %v4680, 0.0
        %v4730 = vadd.f32 %v4728, %v4729
        %vm4733 = vcmask 1045504
        %v4734 = vrot.slane %v1617, 2
        %v4735 = vrot.slane %v1618, 2
        %v4736 = vsel %vm4733, %v4734, %v4735
        %v4739 = vrot.slane %v2281, 2
        %v4740 = vrot.slane %v2282, 2
        %v4741 = vsel %vm4733, %v4739, %v4740
        %v4743 = vsel %vm2968, %v4736, 0
        %v4746 = vsel %vm2968, %v4735, 0
        %v4749 = vsel %vm2968, %v4741, 0
        %v4752 = vsel %vm2968, %v4740, 0
        %4754 = vmatprep.subr.bf16.mxu0 0
        %4755 = vmatpush1.bf16.xpose.msra.mxu0 %v4749
        %4756 = vmatprep.subr.bf16.mxu0 0
        %4757 = vmatpush1.bf16.xpose.msra.mxu0 %v4752
        %4758 = vmatprep.subr.bf16.mxu0 0
        %4759 = vmatpush1.bf16.xpose.msra.mxu0 0
        %4760 = vmatprep.subr.bf16.mxu0 0
        %4761 = vmatpush1.bf16.xpose.msra.mxu0 0
        %4762 = vmatprep.subr.bf16.mxu0 0
        %4763 = vmatpush1.bf16.xpose.msra.mxu0 0
        %4764 = vmatprep.subr.bf16.mxu0 0
        %4765 = vmatpush1.bf16.xpose.msra.mxu0 0
        %4766 = vmatprep.subr.bf16.mxu0 0
        %4767 = vmatpush1.bf16.xpose.msra.mxu0 0
        %4768 = vmatprep.subr.bf16.mxu0 0
        %4769 = vmatpush1.bf16.xpose.msra.mxu0 0
        %4770 = vmatprep.subr.bf16.mxu0 0
        %4771 = vmatpush1.bf16.xpose.msra.mxu0 0
        %4772 = vmatprep.subr.bf16.mxu0 0
        %4773 = vmatpush1.bf16.xpose.msra.mxu0 0
        %4774 = vmatprep.subr.bf16.mxu0 0
        %4775 = vmatpush1.bf16.xpose.msra.mxu0 0
        %4776 = vmatprep.subr.bf16.mxu0 0
        %4777 = vmatpush1.bf16.xpose.msra.mxu0 0
        %4778 = vmatprep.subr.bf16.mxu0 0
        %4779 = vmatpush1.bf16.xpose.msra.mxu0 0
        %4780 = vmatprep.subr.bf16.mxu0 0
        %4781 = vmatpush1.bf16.xpose.msra.mxu0 0
        %4782 = vmatprep.subr.bf16.mxu0 0
        %4783 = vmatpush1.bf16.xpose.msra.mxu0 0
        %4784 = vmatprep.subr.bf16.mxu0 0
        %4785 = vmatpush1.bf16.xpose.msra.mxu0 0
        %4786 = vmatprep.mubr.bf16.mxu0 0
        %4787 = vmatmul.mubr.bf16.gmra.mrb[0].mxu0 %v4743
        %v4788 = vpop.f32.mrb[0].mxu0
        %v4789 = vadd.f32 0.0, %v4788
        %v4790 = vpop.f32.mrb[0].mxu0
        %v4791 = vpop.f32.mrb[0].mxu0
        %v4792 = vadd.f32 0.0, %v4791
        %v4793 = vpop.f32.mrb[0].mxu0
        %4794 = vmatprep.mubr.bf16.mxu0 0
        %4795 = vmatmul.mubr.bf16.gmra.mrb[0].mxu0 %v4746
        %v4796 = vpop.f32.mrb[0].mxu0
        %v4797 = vadd.f32 0.0, %v4796
        %v4798 = vpop.f32.mrb[0].mxu0
        %v4799 = vpop.f32.mrb[0].mxu0
        %v4800 = vpop.f32.mrb[0].mxu0
        %4801 = vdwg.mxu0
        %v4804 = vrot.slane %v1620, 2
        %v4805 = vrot.slane %v1621, 2
        %v4806 = vsel %vm4733, %v4804, %v4805
        %v4809 = vrot.slane %v2284, 2
        %v4810 = vrot.slane %v2285, 2
        %v4811 = vsel %vm4733, %v4809, %v4810
        %v4813 = vsel %vm2968, %v4806, 0
        %v4816 = vsel %vm2968, %v4805, 0
        %v4819 = vsel %vm2968, %v4811, 0
        %v4822 = vsel %vm2968, %v4810, 0
        %4824 = vmatprep.subr.bf16.mxu0 0
        %4825 = vmatpush1.bf16.xpose.msra.mxu0 %v4819
        %4826 = vmatprep.subr.bf16.mxu0 0
        %4827 = vmatpush1.bf16.xpose.msra.mxu0 %v4822
        %4828 = vmatprep.subr.bf16.mxu0 0
        %4829 = vmatpush1.bf16.xpose.msra.mxu0 0
        %4830 = vmatprep.subr.bf16.mxu0 0
        %4831 = vmatpush1.bf16.xpose.msra.mxu0 0
        %4832 = vmatprep.subr.bf16.mxu0 0
        %4833 = vmatpush1.bf16.xpose.msra.mxu0 0
        %4834 = vmatprep.subr.bf16.mxu0 0
        %4835 = vmatpush1.bf16.xpose.msra.mxu0 0
        %4836 = vmatprep.subr.bf16.mxu0 0
        %4837 = vmatpush1.bf16.xpose.msra.mxu0 0
        %4838 = vmatprep.subr.bf16.mxu0 0
        %4839 = vmatpush1.bf16.xpose.msra.mxu0 0
        %4840 = vmatprep.subr.bf16.mxu0 0
        %4841 = vmatpush1.bf16.xpose.msra.mxu0 0
        %4842 = vmatprep.subr.bf16.mxu0 0
        %4843 = vmatpush1.bf16.xpose.msra.mxu0 0
        %4844 = vmatprep.subr.bf16.mxu0 0
        %4845 = vmatpush1.bf16.xpose.msra.mxu0 0
        %4846 = vmatprep.subr.bf16.mxu0 0
        %4847 = vmatpush1.bf16.xpose.msra.mxu0 0
        %4848 = vmatprep.subr.bf16.mxu0 0
        %4849 = vmatpush1.bf16.xpose.msra.mxu0 0
        %4850 = vmatprep.subr.bf16.mxu0 0
        %4851 = vmatpush1.bf16.xpose.msra.mxu0 0
        %4852 = vmatprep.subr.bf16.mxu0 0
        %4853 = vmatpush1.bf16.xpose.msra.mxu0 0
        %4854 = vmatprep.subr.bf16.mxu0 0
        %4855 = vmatpush1.bf16.xpose.msra.mxu0 0
        %4856 = vmatprep.mubr.bf16.mxu0 0
        %4857 = vmatmul.mubr.bf16.gmra.mrb[0].mxu0 %v4813
        %v4858 = vpop.f32.mrb[0].mxu0
        %v4859 = vadd.f32 0.0, %v4858
        %v4860 = vpop.f32.mrb[0].mxu0
        %v4861 = vpop.f32.mrb[0].mxu0
        %v4862 = vadd.f32 0.0, %v4861
        %v4863 = vpop.f32.mrb[0].mxu0
        %4864 = vmatprep.mubr.bf16.mxu0 0
        %4865 = vmatmul.mubr.bf16.gmra.mrb[0].mxu0 %v4816
        %v4866 = vpop.f32.mrb[0].mxu0
        %v4867 = vadd.f32 0.0, %v4866
        %v4868 = vpop.f32.mrb[0].mxu0
        %v4869 = vpop.f32.mrb[0].mxu0
        %v4870 = vpop.f32.mrb[0].mxu0
        %4871 = vdwg.mxu0
        %v4874 = vrot.slane %v1623, 2
        %v4875 = vrot.slane %v1624, 2
        %v4876 = vsel %vm4733, %v4874, %v4875
        %v4879 = vrot.slane %v2287, 2
        %v4880 = vrot.slane %v2288, 2
        %v4881 = vsel %vm4733, %v4879, %v4880
        %v4883 = vsel %vm2968, %v4876, 0
        %v4886 = vsel %vm2968, %v4875, 0
        %v4889 = vsel %vm2968, %v4881, 0
        %v4892 = vsel %vm2968, %v4880, 0
        %4894 = vmatprep.subr.bf16.mxu0 0
        %4895 = vmatpush1.bf16.xpose.msra.mxu0 %v4889
        %4896 = vmatprep.subr.bf16.mxu0 0
        %4897 = vmatpush1.bf16.xpose.msra.mxu0 %v4892
        %4898 = vmatprep.subr.bf16.mxu0 0
        %4899 = vmatpush1.bf16.xpose.msra.mxu0 0
        %4900 = vmatprep.subr.bf16.mxu0 0
        %4901 = vmatpush1.bf16.xpose.msra.mxu0 0
        %4902 = vmatprep.subr.bf16.mxu0 0
        %4903 = vmatpush1.bf16.xpose.msra.mxu0 0
        %4904 = vmatprep.subr.bf16.mxu0 0
        %4905 = vmatpush1.bf16.xpose.msra.mxu0 0
        %4906 = vmatprep.subr.bf16.mxu0 0
        %4907 = vmatpush1.bf16.xpose.msra.mxu0 0
        %4908 = vmatprep.subr.bf16.mxu0 0
        %4909 = vmatpush1.bf16.xpose.msra.mxu0 0
        %4910 = vmatprep.subr.bf16.mxu0 0
        %4911 = vmatpush1.bf16.xpose.msra.mxu0 0
        %4912 = vmatprep.subr.bf16.mxu0 0
        %4913 = vmatpush1.bf16.xpose.msra.mxu0 0
        %4914 = vmatprep.subr.bf16.mxu0 0
        %4915 = vmatpush1.bf16.xpose.msra.mxu0 0
        %4916 = vmatprep.subr.bf16.mxu0 0
        %4917 = vmatpush1.bf16.xpose.msra.mxu0 0
        %4918 = vmatprep.subr.bf16.mxu0 0
        %4919 = vmatpush1.bf16.xpose.msra.mxu0 0
        %4920 = vmatprep.subr.bf16.mxu0 0
        %4921 = vmatpush1.bf16.xpose.msra.mxu0 0
        %4922 = vmatprep.subr.bf16.mxu0 0
        %4923 = vmatpush1.bf16.xpose.msra.mxu0 0
        %4924 = vmatprep.subr.bf16.mxu0 0
        %4925 = vmatpush1.bf16.xpose.msra.mxu0 0
        %4926 = vmatprep.mubr.bf16.mxu0 0
        %4927 = vmatmul.mubr.bf16.gmra.mrb[0].mxu0 %v4883
        %v4928 = vpop.f32.mrb[0].mxu0
        %v4929 = vadd.f32 0.0, %v4928
        %v4930 = vpop.f32.mrb[0].mxu0
        %v4931 = vpop.f32.mrb[0].mxu0
        %v4932 = vadd.f32 0.0, %v4931
        %v4933 = vpop.f32.mrb[0].mxu0
        %4934 = vmatprep.mubr.bf16.mxu0 0
        %4935 = vmatmul.mubr.bf16.gmra.mrb[0].mxu0 %v4886
        %v4936 = vpop.f32.mrb[0].mxu0
        %v4937 = vadd.f32 0.0, %v4936
        %v4938 = vpop.f32.mrb[0].mxu0
        %v4939 = vpop.f32.mrb[0].mxu0
        %v4940 = vpop.f32.mrb[0].mxu0
        %4941 = vdwg.mxu0
        %v4944 = vrot.slane %v1626, 2
        %v4945 = vrot.slane %v1627, 2
        %v4946 = vsel %vm4733, %v4944, %v4945
        %v4949 = vrot.slane %v2290, 2
        %v4950 = vrot.slane %v2291, 2
        %v4951 = vsel %vm4733, %v4949, %v4950
        %v4953 = vsel %vm2968, %v4946, 0
        %v4956 = vsel %vm2968, %v4945, 0
        %v4959 = vsel %vm2968, %v4951, 0
        %v4962 = vsel %vm2968, %v4950, 0
        %4964 = vmatprep.subr.bf16.mxu0 0
        %4965 = vmatpush1.bf16.xpose.msra.mxu0 %v4959
        %4966 = vmatprep.subr.bf16.mxu0 0
        %4967 = vmatpush1.bf16.xpose.msra.mxu0 %v4962
        %4968 = vmatprep.subr.bf16.mxu0 0
        %4969 = vmatpush1.bf16.xpose.msra.mxu0 0
        %4970 = vmatprep.subr.bf16.mxu0 0
        %4971 = vmatpush1.bf16.xpose.msra.mxu0 0
        %4972 = vmatprep.subr.bf16.mxu0 0
        %4973 = vmatpush1.bf16.xpose.msra.mxu0 0
        %4974 = vmatprep.subr.bf16.mxu0 0
        %4975 = vmatpush1.bf16.xpose.msra.mxu0 0
        %4976 = vmatprep.subr.bf16.mxu0 0
        %4977 = vmatpush1.bf16.xpose.msra.mxu0 0
        %4978 = vmatprep.subr.bf16.mxu0 0
        %4979 = vmatpush1.bf16.xpose.msra.mxu0 0
        %4980 = vmatprep.subr.bf16.mxu0 0
        %4981 = vmatpush1.bf16.xpose.msra.mxu0 0
        %4982 = vmatprep.subr.bf16.mxu0 0
        %4983 = vmatpush1.bf16.xpose.msra.mxu0 0
        %4984 = vmatprep.subr.bf16.mxu0 0
        %4985 = vmatpush1.bf16.xpose.msra.mxu0 0
        %4986 = vmatprep.subr.bf16.mxu0 0
        %4987 = vmatpush1.bf16.xpose.msra.mxu0 0
        %4988 = vmatprep.subr.bf16.mxu0 0
        %4989 = vmatpush1.bf16.xpose.msra.mxu0 0
        %4990 = vmatprep.subr.bf16.mxu0 0
        %4991 = vmatpush1.bf16.xpose.msra.mxu0 0
        %4992 = vmatprep.subr.bf16.mxu0 0
        %4993 = vmatpush1.bf16.xpose.msra.mxu0 0
        %4994 = vmatprep.subr.bf16.mxu0 0
        %4995 = vmatpush1.bf16.xpose.msra.mxu0 0
        %4996 = vmatprep.mubr.bf16.mxu0 0
        %4997 = vmatmul.mubr.bf16.gmra.mrb[0].mxu0 %v4953
        %v4998 = vpop.f32.mrb[0].mxu0
        %v4999 = vadd.f32 0.0, %v4998
        %v5000 = vpop.f32.mrb[0].mxu0
        %v5001 = vpop.f32.mrb[0].mxu0
        %v5002 = vadd.f32 0.0, %v5001
        %v5003 = vpop.f32.mrb[0].mxu0
        %5004 = vmatprep.mubr.bf16.mxu0 0
        %5005 = vmatmul.mubr.bf16.gmra.mrb[0].mxu0 %v4956
        %v5006 = vpop.f32.mrb[0].mxu0
        %v5007 = vadd.f32 0.0, %v5006
        %v5008 = vpop.f32.mrb[0].mxu0
        %v5009 = vpop.f32.mrb[0].mxu0
        %v5010 = vpop.f32.mrb[0].mxu0
        %5011 = vdwg.mxu0
        %v5014 = vrot.slane %v1629, 2
        %v5015 = vrot.slane %v1630, 2
        %v5016 = vsel %vm4733, %v5014, %v5015
        %v5019 = vrot.slane %v2293, 2
        %v5020 = vrot.slane %v2294, 2
        %v5021 = vsel %vm4733, %v5019, %v5020
        %v5023 = vsel %vm2968, %v5016, 0
        %v5026 = vsel %vm2968, %v5015, 0
        %v5029 = vsel %vm2968, %v5021, 0
        %v5032 = vsel %vm2968, %v5020, 0
        %5034 = vmatprep.subr.bf16.mxu0 0
        %5035 = vmatpush1.bf16.xpose.msra.mxu0 %v5029
        %5036 = vmatprep.subr.bf16.mxu0 0
        %5037 = vmatpush1.bf16.xpose.msra.mxu0 %v5032
        %5038 = vmatprep.subr.bf16.mxu0 0
        %5039 = vmatpush1.bf16.xpose.msra.mxu0 0
        %5040 = vmatprep.subr.bf16.mxu0 0
        %5041 = vmatpush1.bf16.xpose.msra.mxu0 0
        %5042 = vmatprep.subr.bf16.mxu0 0
        %5043 = vmatpush1.bf16.xpose.msra.mxu0 0
        %5044 = vmatprep.subr.bf16.mxu0 0
        %5045 = vmatpush1.bf16.xpose.msra.mxu0 0
        %5046 = vmatprep.subr.bf16.mxu0 0
        %5047 = vmatpush1.bf16.xpose.msra.mxu0 0
        %5048 = vmatprep.subr.bf16.mxu0 0
        %5049 = vmatpush1.bf16.xpose.msra.mxu0 0
        %5050 = vmatprep.subr.bf16.mxu0 0
        %5051 = vmatpush1.bf16.xpose.msra.mxu0 0
        %5052 = vmatprep.subr.bf16.mxu0 0
        %5053 = vmatpush1.bf16.xpose.msra.mxu0 0
        %5054 = vmatprep.subr.bf16.mxu0 0
        %5055 = vmatpush1.bf16.xpose.msra.mxu0 0
        %5056 = vmatprep.subr.bf16.mxu0 0
        %5057 = vmatpush1.bf16.xpose.msra.mxu0 0
        %5058 = vmatprep.subr.bf16.mxu0 0
        %5059 = vmatpush1.bf16.xpose.msra.mxu0 0
        %5060 = vmatprep.subr.bf16.mxu0 0
        %5061 = vmatpush1.bf16.xpose.msra.mxu0 0
        %5062 = vmatprep.subr.bf16.mxu0 0
        %5063 = vmatpush1.bf16.xpose.msra.mxu0 0
        %5064 = vmatprep.subr.bf16.mxu0 0
        %5065 = vmatpush1.bf16.xpose.msra.mxu0 0
        %5066 = vmatprep.mubr.bf16.mxu0 0
        %5067 = vmatmul.mubr.bf16.gmra.mrb[0].mxu0 %v5023
        %v5068 = vpop.f32.mrb[0].mxu0
        %v5069 = vadd.f32 0.0, %v5068
        %v5070 = vpop.f32.mrb[0].mxu0
        %v5071 = vpop.f32.mrb[0].mxu0
        %v5072 = vadd.f32 0.0, %v5071
        %v5073 = vpop.f32.mrb[0].mxu0
        %5074 = vmatprep.mubr.bf16.mxu0 0
        %5075 = vmatmul.mubr.bf16.gmra.mrb[0].mxu0 %v5026
        %v5076 = vpop.f32.mrb[0].mxu0
        %v5077 = vadd.f32 0.0, %v5076
        %v5078 = vpop.f32.mrb[0].mxu0
        %v5079 = vpop.f32.mrb[0].mxu0
        %v5080 = vpop.f32.mrb[0].mxu0
        %5081 = vdwg.mxu0
        %v5084 = vrot.slane %v1632, 2
        %v5085 = vrot.slane %v1633, 2
        %v5086 = vsel %vm4733, %v5084, %v5085
        %v5089 = vrot.slane %v2296, 2
        %v5090 = vrot.slane %v2297, 2
        %v5091 = vsel %vm4733, %v5089, %v5090
        %v5093 = vsel %vm2968, %v5086, 0
        %v5096 = vsel %vm2968, %v5085, 0
        %v5099 = vsel %vm2968, %v5091, 0
        %v5102 = vsel %vm2968, %v5090, 0
        %5104 = vmatprep.subr.bf16.mxu0 0
        %5105 = vmatpush1.bf16.xpose.msra.mxu0 %v5099
        %5106 = vmatprep.subr.bf16.mxu0 0
        %5107 = vmatpush1.bf16.xpose.msra.mxu0 %v5102
        %5108 = vmatprep.subr.bf16.mxu0 0
        %5109 = vmatpush1.bf16.xpose.msra.mxu0 0
        %5110 = vmatprep.subr.bf16.mxu0 0
        %5111 = vmatpush1.bf16.xpose.msra.mxu0 0
        %5112 = vmatprep.subr.bf16.mxu0 0
        %5113 = vmatpush1.bf16.xpose.msra.mxu0 0
        %5114 = vmatprep.subr.bf16.mxu0 0
        %5115 = vmatpush1.bf16.xpose.msra.mxu0 0
        %5116 = vmatprep.subr.bf16.mxu0 0
        %5117 = vmatpush1.bf16.xpose.msra.mxu0 0
        %5118 = vmatprep.subr.bf16.mxu0 0
        %5119 = vmatpush1.bf16.xpose.msra.mxu0 0
        %5120 = vmatprep.subr.bf16.mxu0 0
        %5121 = vmatpush1.bf16.xpose.msra.mxu0 0
        %5122 = vmatprep.subr.bf16.mxu0 0
        %5123 = vmatpush1.bf16.xpose.msra.mxu0 0
        %5124 = vmatprep.subr.bf16.mxu0 0
        %5125 = vmatpush1.bf16.xpose.msra.mxu0 0
        %5126 = vmatprep.subr.bf16.mxu0 0
        %5127 = vmatpush1.bf16.xpose.msra.mxu0 0
        %5128 = vmatprep.subr.bf16.mxu0 0
        %5129 = vmatpush1.bf16.xpose.msra.mxu0 0
        %5130 = vmatprep.subr.bf16.mxu0 0
        %5131 = vmatpush1.bf16.xpose.msra.mxu0 0
        %5132 = vmatprep.subr.bf16.mxu0 0
        %5133 = vmatpush1.bf16.xpose.msra.mxu0 0
        %5134 = vmatprep.subr.bf16.mxu0 0
        %5135 = vmatpush1.bf16.xpose.msra.mxu0 0
        %5136 = vmatprep.mubr.bf16.mxu0 0
        %5137 = vmatmul.mubr.bf16.gmra.mrb[0].mxu0 %v5093
        %v5138 = vpop.f32.mrb[0].mxu0
        %v5139 = vadd.f32 0.0, %v5138
        %v5140 = vpop.f32.mrb[0].mxu0
        %v5141 = vpop.f32.mrb[0].mxu0
        %v5142 = vadd.f32 0.0, %v5141
        %v5143 = vpop.f32.mrb[0].mxu0
        %5144 = vmatprep.mubr.bf16.mxu0 0
        %5145 = vmatmul.mubr.bf16.gmra.mrb[0].mxu0 %v5096
        %v5146 = vpop.f32.mrb[0].mxu0
        %v5147 = vadd.f32 0.0, %v5146
        %v5148 = vpop.f32.mrb[0].mxu0
        %v5149 = vpop.f32.mrb[0].mxu0
        %v5150 = vpop.f32.mrb[0].mxu0
        %5151 = vdwg.mxu0
        %v5154 = vrot.slane %v1635, 2
        %v5155 = vrot.slane %v1636, 2
        %v5156 = vsel %vm4733, %v5154, %v5155
        %v5159 = vrot.slane %v2299, 2
        %v5160 = vrot.slane %v2300, 2
        %v5161 = vsel %vm4733, %v5159, %v5160
        %v5163 = vsel %vm2968, %v5156, 0
        %v5166 = vsel %vm2968, %v5155, 0
        %v5169 = vsel %vm2968, %v5161, 0
        %v5172 = vsel %vm2968, %v5160, 0
        %5174 = vmatprep.subr.bf16.mxu0 0
        %5175 = vmatpush1.bf16.xpose.msra.mxu0 %v5169
        %5176 = vmatprep.subr.bf16.mxu0 0
        %5177 = vmatpush1.bf16.xpose.msra.mxu0 %v5172
        %5178 = vmatprep.subr.bf16.mxu0 0
        %5179 = vmatpush1.bf16.xpose.msra.mxu0 0
        %5180 = vmatprep.subr.bf16.mxu0 0
        %5181 = vmatpush1.bf16.xpose.msra.mxu0 0
        %5182 = vmatprep.subr.bf16.mxu0 0
        %5183 = vmatpush1.bf16.xpose.msra.mxu0 0
        %5184 = vmatprep.subr.bf16.mxu0 0
        %5185 = vmatpush1.bf16.xpose.msra.mxu0 0
        %5186 = vmatprep.subr.bf16.mxu0 0
        %5187 = vmatpush1.bf16.xpose.msra.mxu0 0
        %5188 = vmatprep.subr.bf16.mxu0 0
        %5189 = vmatpush1.bf16.xpose.msra.mxu0 0
        %5190 = vmatprep.subr.bf16.mxu0 0
        %5191 = vmatpush1.bf16.xpose.msra.mxu0 0
        %5192 = vmatprep.subr.bf16.mxu0 0
        %5193 = vmatpush1.bf16.xpose.msra.mxu0 0
        %5194 = vmatprep.subr.bf16.mxu0 0
        %5195 = vmatpush1.bf16.xpose.msra.mxu0 0
        %5196 = vmatprep.subr.bf16.mxu0 0
        %5197 = vmatpush1.bf16.xpose.msra.mxu0 0
        %5198 = vmatprep.subr.bf16.mxu0 0
        %5199 = vmatpush1.bf16.xpose.msra.mxu0 0
        %5200 = vmatprep.subr.bf16.mxu0 0
        %5201 = vmatpush1.bf16.xpose.msra.mxu0 0
        %5202 = vmatprep.subr.bf16.mxu0 0
        %5203 = vmatpush1.bf16.xpose.msra.mxu0 0
        %5204 = vmatprep.subr.bf16.mxu0 0
        %5205 = vmatpush1.bf16.xpose.msra.mxu0 0
        %5206 = vmatprep.mubr.bf16.mxu0 0
        %5207 = vmatmul.mubr.bf16.gmra.mrb[0].mxu0 %v5163
        %v5208 = vpop.f32.mrb[0].mxu0
        %v5209 = vadd.f32 0.0, %v5208
        %v5210 = vpop.f32.mrb[0].mxu0
        %v5211 = vpop.f32.mrb[0].mxu0
        %v5212 = vadd.f32 0.0, %v5211
        %v5213 = vpop.f32.mrb[0].mxu0
        %5214 = vmatprep.mubr.bf16.mxu0 0
        %5215 = vmatmul.mubr.bf16.gmra.mrb[0].mxu0 %v5166
        %v5216 = vpop.f32.mrb[0].mxu0
        %v5217 = vadd.f32 0.0, %v5216
        %v5218 = vpop.f32.mrb[0].mxu0
        %v5219 = vpop.f32.mrb[0].mxu0
        %v5220 = vpop.f32.mrb[0].mxu0
        %5221 = vdwg.mxu0
        %v5224 = vrot.slane %v1638, 2
        %v5225 = vrot.slane %v1639, 2
        %v5226 = vsel %vm4733, %v5224, %v5225
        %v5229 = vrot.slane %v2302, 2
        %v5230 = vrot.slane %v2303, 2
        %v5231 = vsel %vm4733, %v5229, %v5230
        %v5233 = vsel %vm2968, %v5226, 0
        %v5236 = vsel %vm2968, %v5225, 0
        %v5239 = vsel %vm2968, %v5231, 0
        %v5242 = vsel %vm2968, %v5230, 0
        %5244 = vmatprep.subr.bf16.mxu0 0
        %5245 = vmatpush1.bf16.xpose.msra.mxu0 %v5239
        %5246 = vmatprep.subr.bf16.mxu0 0
        %5247 = vmatpush1.bf16.xpose.msra.mxu0 %v5242
        %5248 = vmatprep.subr.bf16.mxu0 0
        %5249 = vmatpush1.bf16.xpose.msra.mxu0 0
        %5250 = vmatprep.subr.bf16.mxu0 0
        %5251 = vmatpush1.bf16.xpose.msra.mxu0 0
        %5252 = vmatprep.subr.bf16.mxu0 0
        %5253 = vmatpush1.bf16.xpose.msra.mxu0 0
        %5254 = vmatprep.subr.bf16.mxu0 0
        %5255 = vmatpush1.bf16.xpose.msra.mxu0 0
        %5256 = vmatprep.subr.bf16.mxu0 0
        %5257 = vmatpush1.bf16.xpose.msra.mxu0 0
        %5258 = vmatprep.subr.bf16.mxu0 0
        %5259 = vmatpush1.bf16.xpose.msra.mxu0 0
        %5260 = vmatprep.subr.bf16.mxu0 0
        %5261 = vmatpush1.bf16.xpose.msra.mxu0 0
        %5262 = vmatprep.subr.bf16.mxu0 0
        %5263 = vmatpush1.bf16.xpose.msra.mxu0 0
        %5264 = vmatprep.subr.bf16.mxu0 0
        %5265 = vmatpush1.bf16.xpose.msra.mxu0 0
        %5266 = vmatprep.subr.bf16.mxu0 0
        %5267 = vmatpush1.bf16.xpose.msra.mxu0 0
        %5268 = vmatprep.subr.bf16.mxu0 0
        %5269 = vmatpush1.bf16.xpose.msra.mxu0 0
        %5270 = vmatprep.subr.bf16.mxu0 0
        %5271 = vmatpush1.bf16.xpose.msra.mxu0 0
        %5272 = vmatprep.subr.bf16.mxu0 0
        %5273 = vmatpush1.bf16.xpose.msra.mxu0 0
        %5274 = vmatprep.subr.bf16.mxu0 0
        %5275 = vmatpush1.bf16.xpose.msra.mxu0 0
        %5276 = vmatprep.mubr.bf16.mxu0 0
        %5277 = vmatmul.mubr.bf16.gmra.mrb[0].mxu0 %v5233
        %v5278 = vpop.f32.mrb[0].mxu0
        %v5279 = vadd.f32 0.0, %v5278
        %v5280 = vpop.f32.mrb[0].mxu0
        %v5281 = vpop.f32.mrb[0].mxu0
        %v5282 = vadd.f32 0.0, %v5281
        %v5283 = vpop.f32.mrb[0].mxu0
        %5284 = vmatprep.mubr.bf16.mxu0 0
        %5285 = vmatmul.mubr.bf16.gmra.mrb[0].mxu0 %v5236
        %v5286 = vpop.f32.mrb[0].mxu0
        %v5287 = vadd.f32 0.0, %v5286
        %v5288 = vpop.f32.mrb[0].mxu0
        %v5289 = vpop.f32.mrb[0].mxu0
        %v5290 = vpop.f32.mrb[0].mxu0
        %5291 = vdwg.mxu0
        %v5292 = vmul.f32 %v4789, 0.35355338
        %v5293 = vmul.f32 %v4792, 0.35355338
        %v5294 = vmul.f32 %v4797, 0.35355338
        %v5295 = vmul.f32 %v4859, 0.35355338
        %v5296 = vmul.f32 %v4862, 0.35355338
        %v5297 = vmul.f32 %v4867, 0.35355338
        %v5298 = vmul.f32 %v4929, 0.35355338
        %v5299 = vmul.f32 %v4932, 0.35355338
        %v5300 = vmul.f32 %v4937, 0.35355338
        %v5301 = vmul.f32 %v4999, 0.35355338
        %v5302 = vmul.f32 %v5002, 0.35355338
        %v5303 = vmul.f32 %v5007, 0.35355338
        %v5304 = vmul.f32 %v5069, 0.35355338
        %v5305 = vmul.f32 %v5072, 0.35355338
        %v5306 = vmul.f32 %v5077, 0.35355338
        %v5307 = vmul.f32 %v5139, 0.35355338
        %v5308 = vmul.f32 %v5142, 0.35355338
        %v5309 = vmul.f32 %v5147, 0.35355338
        %v5310 = vmul.f32 %v5209, 0.35355338
        %v5311 = vmul.f32 %v5212, 0.35355338
        %v5312 = vmul.f32 %v5217, 0.35355338
        %v5313 = vmul.f32 %v5279, 0.35355338
        %v5314 = vmul.f32 %v5282, 0.35355338
        %v5315 = vmul.f32 %v5287, 0.35355338
        %v5316 = vsel %vm3473, %v5292, -inf
        %5317 = vmax.xlane.f32.xlu0 %v5316
        %v5318 = vpop.xlane.xlu0 %5317
        %v5319 = vsel %vm3473, %v5293, -inf
        %5320 = vmax.xlane.f32.xlu0 %v5319
        %v5321 = vpop.xlane.xlu0 %5320
        %v5322 = vsel %vm3480, %v5294, -inf
        %5323 = vmax.xlane.f32.xlu0 %v5322
        %v5324 = vpop.xlane.xlu0 %5323
        %v5325 = vsel %vm3473, %v5295, -inf
        %5326 = vmax.xlane.f32.xlu0 %v5325
        %v5327 = vpop.xlane.xlu0 %5326
        %v5328 = vsel %vm3473, %v5296, -inf
        %5329 = vmax.xlane.f32.xlu0 %v5328
        %v5330 = vpop.xlane.xlu0 %5329
        %v5331 = vsel %vm3480, %v5297, -inf
        %5332 = vmax.xlane.f32.xlu0 %v5331
        %v5333 = vpop.xlane.xlu0 %5332
        %v5334 = vsel %vm3473, %v5298, -inf
        %5335 = vmax.xlane.f32.xlu0 %v5334
        %v5336 = vpop.xlane.xlu0 %5335
        %v5337 = vsel %vm3473, %v5299, -inf
        %5338 = vmax.xlane.f32.xlu0 %v5337
        %v5339 = vpop.xlane.xlu0 %5338
        %v5340 = vsel %vm3480, %v5300, -inf
        %5341 = vmax.xlane.f32.xlu0 %v5340
        %v5342 = vpop.xlane.xlu0 %5341
        %v5343 = vsel %vm3473, %v5301, -inf
        %5344 = vmax.xlane.f32.xlu0 %v5343
        %v5345 = vpop.xlane.xlu0 %5344
        %v5346 = vsel %vm3473, %v5302, -inf
        %5347 = vmax.xlane.f32.xlu0 %v5346
        %v5348 = vpop.xlane.xlu0 %5347
        %v5349 = vsel %vm3480, %v5303, -inf
        %5350 = vmax.xlane.f32.xlu0 %v5349
        %v5351 = vpop.xlane.xlu0 %5350
        %v5352 = vsel %vm3473, %v5304, -inf
        %5353 = vmax.xlane.f32.xlu0 %v5352
        %v5354 = vpop.xlane.xlu0 %5353
        %v5355 = vsel %vm3473, %v5305, -inf
        %5356 = vmax.xlane.f32.xlu0 %v5355
        %v5357 = vpop.xlane.xlu0 %5356
        %v5358 = vsel %vm3480, %v5306, -inf
        %5359 = vmax.xlane.f32.xlu0 %v5358
        %v5360 = vpop.xlane.xlu0 %5359
        %v5361 = vsel %vm3473, %v5307, -inf
        %5362 = vmax.xlane.f32.xlu0 %v5361
        %v5363 = vpop.xlane.xlu0 %5362
        %v5364 = vsel %vm3473, %v5308, -inf
        %5365 = vmax.xlane.f32.xlu0 %v5364
        %v5366 = vpop.xlane.xlu0 %5365
        %v5367 = vsel %vm3480, %v5309, -inf
        %5368 = vmax.xlane.f32.xlu0 %v5367
        %v5369 = vpop.xlane.xlu0 %5368
        %v5370 = vsel %vm3473, %v5310, -inf
        %5371 = vmax.xlane.f32.xlu0 %v5370
        %v5372 = vpop.xlane.xlu0 %5371
        %v5373 = vsel %vm3473, %v5311, -inf
        %5374 = vmax.xlane.f32.xlu0 %v5373
        %v5375 = vpop.xlane.xlu0 %5374
        %v5376 = vsel %vm3480, %v5312, -inf
        %5377 = vmax.xlane.f32.xlu0 %v5376
        %v5378 = vpop.xlane.xlu0 %5377
        %v5379 = vsel %vm3473, %v5313, -inf
        %5380 = vmax.xlane.f32.xlu0 %v5379
        %v5381 = vpop.xlane.xlu0 %5380
        %v5382 = vsel %vm3473, %v5314, -inf
        %5383 = vmax.xlane.f32.xlu0 %v5382
        %v5384 = vpop.xlane.xlu0 %5383
        %v5385 = vsel %vm3480, %v5315, -inf
        %5386 = vmax.xlane.f32.xlu0 %v5385
        %v5387 = vpop.xlane.xlu0 %5386
        %v5388 = vsub.f32 %v5292, %v5318
        %v5389 = vsub.f32 %v5293, %v5321
        %v5390 = vsub.f32 %v5294, %v5324
        %v5391 = vsub.f32 %v5295, %v5327
        %v5392 = vsub.f32 %v5296, %v5330
        %v5393 = vsub.f32 %v5297, %v5333
        %v5394 = vsub.f32 %v5298, %v5336
        %v5395 = vsub.f32 %v5299, %v5339
        %v5396 = vsub.f32 %v5300, %v5342
        %v5397 = vsub.f32 %v5301, %v5345
        %v5398 = vsub.f32 %v5302, %v5348
        %v5399 = vsub.f32 %v5303, %v5351
        %v5400 = vsub.f32 %v5304, %v5354
        %v5401 = vsub.f32 %v5305, %v5357
        %v5402 = vsub.f32 %v5306, %v5360
        %v5403 = vsub.f32 %v5307, %v5363
        %v5404 = vsub.f32 %v5308, %v5366
        %v5405 = vsub.f32 %v5309, %v5369
        %v5406 = vsub.f32 %v5310, %v5372
        %v5407 = vsub.f32 %v5311, %v5375
        %v5408 = vsub.f32 %v5312, %v5378
        %v5409 = vsub.f32 %v5313, %v5381
        %v5410 = vsub.f32 %v5314, %v5384
        %v5411 = vsub.f32 %v5315, %v5387
        %v5412 = vmul.f32 %v5388, 1.442695
        %v5413 = vpow.pop %v5412
        %v5414 = vmul.f32 %v5389, 1.442695
        %v5415 = vpow.pop %v5414
        %v5416 = vmul.f32 %v5390, 1.442695
        %v5417 = vpow.pop %v5416
        %v5418 = vmul.f32 %v5391, 1.442695
        %v5419 = vpow.pop %v5418
        %v5420 = vmul.f32 %v5392, 1.442695
        %v5421 = vpow.pop %v5420
        %v5422 = vmul.f32 %v5393, 1.442695
        %v5423 = vpow.pop %v5422
        %v5424 = vmul.f32 %v5394, 1.442695
        %v5425 = vpow.pop %v5424
        %v5426 = vmul.f32 %v5395, 1.442695
        %v5427 = vpow.pop %v5426
        %v5428 = vmul.f32 %v5396, 1.442695
        %v5429 = vpow.pop %v5428
        %v5430 = vmul.f32 %v5397, 1.442695
        %v5431 = vpow.pop %v5430
        %v5432 = vmul.f32 %v5398, 1.442695
        %v5433 = vpow.pop %v5432
        %v5434 = vmul.f32 %v5399, 1.442695
        %v5435 = vpow.pop %v5434
        %v5436 = vmul.f32 %v5400, 1.442695
        %v5437 = vpow.pop %v5436
        %v5438 = vmul.f32 %v5401, 1.442695
        %v5439 = vpow.pop %v5438
        %v5440 = vmul.f32 %v5402, 1.442695
        %v5441 = vpow.pop %v5440
        %v5442 = vmul.f32 %v5403, 1.442695
        %v5443 = vpow.pop %v5442
        %v5444 = vmul.f32 %v5404, 1.442695
        %v5445 = vpow.pop %v5444
        %v5446 = vmul.f32 %v5405, 1.442695
        %v5447 = vpow.pop %v5446
        %v5448 = vmul.f32 %v5406, 1.442695
        %v5449 = vpow.pop %v5448
        %v5450 = vmul.f32 %v5407, 1.442695
        %v5451 = vpow.pop %v5450
        %v5452 = vmul.f32 %v5408, 1.442695
        %v5453 = vpow.pop %v5452
        %v5454 = vmul.f32 %v5409, 1.442695
        %v5455 = vpow.pop %v5454
        %v5456 = vmul.f32 %v5410, 1.442695
        %v5457 = vpow.pop %v5456
        %v5458 = vmul.f32 %v5411, 1.442695
        %v5459 = vpow.pop %v5458
        %v5460 = vsel %vm3473, %v5413, 0.0
        %5461 = vadd.xlane.f32.xlu0 %v5460
        %v5462 = vpop.xlane.xlu0 %5461
        %v5463 = vsel %vm3473, %v5415, 0.0
        %5464 = vadd.xlane.f32.xlu0 %v5463
        %v5465 = vpop.xlane.xlu0 %5464
        %v5466 = vsel %vm3480, %v5417, 0.0
        %5467 = vadd.xlane.f32.xlu0 %v5466
        %v5468 = vpop.xlane.xlu0 %5467
        %v5469 = vsel %vm3473, %v5419, 0.0
        %5470 = vadd.xlane.f32.xlu0 %v5469
        %v5471 = vpop.xlane.xlu0 %5470
        %v5472 = vsel %vm3473, %v5421, 0.0
        %5473 = vadd.xlane.f32.xlu0 %v5472
        %v5474 = vpop.xlane.xlu0 %5473
        %v5475 = vsel %vm3480, %v5423, 0.0
        %5476 = vadd.xlane.f32.xlu0 %v5475
        %v5477 = vpop.xlane.xlu0 %5476
        %v5478 = vsel %vm3473, %v5425, 0.0
        %5479 = vadd.xlane.f32.xlu0 %v5478
        %v5480 = vpop.xlane.xlu0 %5479
        %v5481 = vsel %vm3473, %v5427, 0.0
        %5482 = vadd.xlane.f32.xlu0 %v5481
        %v5483 = vpop.xlane.xlu0 %5482
        %v5484 = vsel %vm3480, %v5429, 0.0
        %5485 = vadd.xlane.f32.xlu0 %v5484
        %v5486 = vpop.xlane.xlu0 %5485
        %v5487 = vsel %vm3473, %v5431, 0.0
        %5488 = vadd.xlane.f32.xlu0 %v5487
        %v5489 = vpop.xlane.xlu0 %5488
        %v5490 = vsel %vm3473, %v5433, 0.0
        %5491 = vadd.xlane.f32.xlu0 %v5490
        %v5492 = vpop.xlane.xlu0 %5491
        %v5493 = vsel %vm3480, %v5435, 0.0
        %5494 = vadd.xlane.f32.xlu0 %v5493
        %v5495 = vpop.xlane.xlu0 %5494
        %v5496 = vsel %vm3473, %v5437, 0.0
        %5497 = vadd.xlane.f32.xlu0 %v5496
        %v5498 = vpop.xlane.xlu0 %5497
        %v5499 = vsel %vm3473, %v5439, 0.0
        %5500 = vadd.xlane.f32.xlu0 %v5499
        %v5501 = vpop.xlane.xlu0 %5500
        %v5502 = vsel %vm3480, %v5441, 0.0
        %5503 = vadd.xlane.f32.xlu0 %v5502
        %v5504 = vpop.xlane.xlu0 %5503
        %v5505 = vsel %vm3473, %v5443, 0.0
        %5506 = vadd.xlane.f32.xlu0 %v5505
        %v5507 = vpop.xlane.xlu0 %5506
        %v5508 = vsel %vm3473, %v5445, 0.0
        %5509 = vadd.xlane.f32.xlu0 %v5508
        %v5510 = vpop.xlane.xlu0 %5509
        %v5511 = vsel %vm3480, %v5447, 0.0
        %5512 = vadd.xlane.f32.xlu0 %v5511
        %v5513 = vpop.xlane.xlu0 %5512
        %v5514 = vsel %vm3473, %v5449, 0.0
        %5515 = vadd.xlane.f32.xlu0 %v5514
        %v5516 = vpop.xlane.xlu0 %5515
        %v5517 = vsel %vm3473, %v5451, 0.0
        %5518 = vadd.xlane.f32.xlu0 %v5517
        %v5519 = vpop.xlane.xlu0 %5518
        %v5520 = vsel %vm3480, %v5453, 0.0
        %5521 = vadd.xlane.f32.xlu0 %v5520
        %v5522 = vpop.xlane.xlu0 %5521
        %v5523 = vsel %vm3473, %v5455, 0.0
        %5524 = vadd.xlane.f32.xlu0 %v5523
        %v5525 = vpop.xlane.xlu0 %5524
        %v5526 = vsel %vm3473, %v5457, 0.0
        %5527 = vadd.xlane.f32.xlu0 %v5526
        %v5528 = vpop.xlane.xlu0 %5527
        %v5529 = vsel %vm3480, %v5459, 0.0
        %5530 = vadd.xlane.f32.xlu0 %v5529
        %v5531 = vpop.xlane.xlu0 %5530
        %v5532 = vrcp.pop %v5462
        %v5533 = vrcp.pop %v5465
        %v5534 = vrcp.pop %v5468
        %v5535 = vrcp.pop %v5471
        %v5536 = vrcp.pop %v5474
        %v5537 = vrcp.pop %v5477
        %v5538 = vrcp.pop %v5480
        %v5539 = vrcp.pop %v5483
        %v5540 = vrcp.pop %v5486
        %v5541 = vrcp.pop %v5489
        %v5542 = vrcp.pop %v5492
        %v5543 = vrcp.pop %v5495
        %v5544 = vrcp.pop %v5498
        %v5545 = vrcp.pop %v5501
        %v5546 = vrcp.pop %v5504
        %v5547 = vrcp.pop %v5507
        %v5548 = vrcp.pop %v5510
        %v5549 = vrcp.pop %v5513
        %v5550 = vrcp.pop %v5516
        %v5551 = vrcp.pop %v5519
        %v5552 = vrcp.pop %v5522
        %v5553 = vrcp.pop %v5525
        %v5554 = vrcp.pop %v5528
        %v5555 = vrcp.pop %v5531
        %v5556 = vmul.f32 %v5413, %v5532
        %v5557 = vmul.f32 %v5415, %v5533
        %v5558 = vmul.f32 %v5417, %v5534
        %v5559 = vmul.f32 %v5419, %v5535
        %v5560 = vmul.f32 %v5421, %v5536
        %v5561 = vmul.f32 %v5423, %v5537
        %v5562 = vmul.f32 %v5425, %v5538
        %v5563 = vmul.f32 %v5427, %v5539
        %v5564 = vmul.f32 %v5429, %v5540
        %v5565 = vmul.f32 %v5431, %v5541
        %v5566 = vmul.f32 %v5433, %v5542
        %v5567 = vmul.f32 %v5435, %v5543
        %v5568 = vmul.f32 %v5437, %v5544
        %v5569 = vmul.f32 %v5439, %v5545
        %v5570 = vmul.f32 %v5441, %v5546
        %v5571 = vmul.f32 %v5443, %v5547
        %v5572 = vmul.f32 %v5445, %v5548
        %v5573 = vmul.f32 %v5447, %v5549
        %v5574 = vmul.f32 %v5449, %v5550
        %v5575 = vmul.f32 %v5451, %v5551
        %v5576 = vmul.f32 %v5453, %v5552
        %v5577 = vmul.f32 %v5455, %v5553
        %v5578 = vmul.f32 %v5457, %v5554
        %v5579 = vmul.f32 %v5459, %v5555
        %v5580 = vpack.c.bf16 %v5557, %v5556
        %v5581 = vpack.c.bf16 %v5558, %v5558
        %v5582 = vpack.c.bf16 %v5560, %v5559
        %v5583 = vpack.c.bf16 %v5561, %v5561
        %v5584 = vpack.c.bf16 %v5563, %v5562
        %v5585 = vpack.c.bf16 %v5564, %v5564
        %v5586 = vpack.c.bf16 %v5566, %v5565
        %v5587 = vpack.c.bf16 %v5567, %v5567
        %v5588 = vpack.c.bf16 %v5569, %v5568
        %v5589 = vpack.c.bf16 %v5570, %v5570
        %v5590 = vpack.c.bf16 %v5572, %v5571
        %v5591 = vpack.c.bf16 %v5573, %v5573
        %v5592 = vpack.c.bf16 %v5575, %v5574
        %v5593 = vpack.c.bf16 %v5576, %v5576
        %v5594 = vpack.c.bf16 %v5578, %v5577
        %v5595 = vpack.c.bf16 %v5579, %v5579
        %v5598 = vrot.slane %v2945, 2
        %v5599 = vrot.slane %v2946, 2
        %v5600 = vsel %vm4733, %v5598, %v5599
        %v5603 = vsel %vm3473, %v5580, 0
        %v5606 = vsel %vm3473, %v5581, 0
        %v5609 = vsel %vm3761, %v5599, 0
        %5611 = vmatprep.subr.bf16.mxu0 0
        %5612 = vmatpush1.bf16.msra.mxu0 %v5600
        %5613 = vmatprep.subr.bf16.mxu0 0
        %5614 = vmatpush1.bf16.msra.mxu0 %v5609
        %5615 = vmatprep.subr.bf16.mxu0 0
        %5616 = vmatpush1.bf16.msra.mxu0 0
        %5617 = vmatprep.subr.bf16.mxu0 0
        %5618 = vmatpush1.bf16.msra.mxu0 0
        %5619 = vmatprep.subr.bf16.mxu0 0
        %5620 = vmatpush1.bf16.msra.mxu0 0
        %5621 = vmatprep.subr.bf16.mxu0 0
        %5622 = vmatpush1.bf16.msra.mxu0 0
        %5623 = vmatprep.subr.bf16.mxu0 0
        %5624 = vmatpush1.bf16.msra.mxu0 0
        %5625 = vmatprep.subr.bf16.mxu0 0
        %5626 = vmatpush1.bf16.msra.mxu0 0
        %5627 = vmatprep.subr.bf16.mxu0 0
        %5628 = vmatpush1.bf16.msra.mxu0 0
        %5629 = vmatprep.subr.bf16.mxu0 0
        %5630 = vmatpush1.bf16.msra.mxu0 0
        %5631 = vmatprep.subr.bf16.mxu0 0
        %5632 = vmatpush1.bf16.msra.mxu0 0
        %5633 = vmatprep.subr.bf16.mxu0 0
        %5634 = vmatpush1.bf16.msra.mxu0 0
        %5635 = vmatprep.subr.bf16.mxu0 0
        %5636 = vmatpush1.bf16.msra.mxu0 0
        %5637 = vmatprep.subr.bf16.mxu0 0
        %5638 = vmatpush1.bf16.msra.mxu0 0
        %5639 = vmatprep.subr.bf16.mxu0 0
        %5640 = vmatpush1.bf16.msra.mxu0 0
        %5641 = vmatprep.subr.bf16.mxu0 0
        %5642 = vmatpush1.bf16.msra.mxu0 0
        %5643 = vmatprep.mubr.bf16.mxu0 0
        %5644 = vmatmul.mubr.bf16.gmra.mrb[0].mxu0 %v5603
        %v5645 = vpop.f32.mrb[0].mxu0
        %v5646 = vadd.f32 0.0, %v5645
        %v5647 = vpop.f32.mrb[0].mxu0
        %v5648 = vpop.f32.mrb[0].mxu0
        %v5649 = vadd.f32 0.0, %v5648
        %v5650 = vpop.f32.mrb[0].mxu0
        %5651 = vmatprep.mubr.bf16.mxu0 0
        %5652 = vmatmul.mubr.bf16.gmra.mrb[0].mxu0 %v5606
        %v5653 = vpop.f32.mrb[0].mxu0
        %v5654 = vadd.f32 0.0, %v5653
        %v5655 = vpop.f32.mrb[0].mxu0
        %v5656 = vpop.f32.mrb[0].mxu0
        %v5657 = vpop.f32.mrb[0].mxu0
        %5658 = vdwg.mxu0
        %v5661 = vrot.slane %v2948, 2
        %v5662 = vrot.slane %v2949, 2
        %v5663 = vsel %vm4733, %v5661, %v5662
        %v5666 = vsel %vm3473, %v5582, 0
        %v5669 = vsel %vm3473, %v5583, 0
        %v5672 = vsel %vm3761, %v5662, 0
        %5674 = vmatprep.subr.bf16.mxu0 0
        %5675 = vmatpush1.bf16.msra.mxu0 %v5663
        %5676 = vmatprep.subr.bf16.mxu0 0
        %5677 = vmatpush1.bf16.msra.mxu0 %v5672
        %5678 = vmatprep.subr.bf16.mxu0 0
        %5679 = vmatpush1.bf16.msra.mxu0 0
        %5680 = vmatprep.subr.bf16.mxu0 0
        %5681 = vmatpush1.bf16.msra.mxu0 0
        %5682 = vmatprep.subr.bf16.mxu0 0
        %5683 = vmatpush1.bf16.msra.mxu0 0
        %5684 = vmatprep.subr.bf16.mxu0 0
        %5685 = vmatpush1.bf16.msra.mxu0 0
        %5686 = vmatprep.subr.bf16.mxu0 0
        %5687 = vmatpush1.bf16.msra.mxu0 0
        %5688 = vmatprep.subr.bf16.mxu0 0
        %5689 = vmatpush1.bf16.msra.mxu0 0
        %5690 = vmatprep.subr.bf16.mxu0 0
        %5691 = vmatpush1.bf16.msra.mxu0 0
        %5692 = vmatprep.subr.bf16.mxu0 0
        %5693 = vmatpush1.bf16.msra.mxu0 0
        %5694 = vmatprep.subr.bf16.mxu0 0
        %5695 = vmatpush1.bf16.msra.mxu0 0
        %5696 = vmatprep.subr.bf16.mxu0 0
        %5697 = vmatpush1.bf16.msra.mxu0 0
        %5698 = vmatprep.subr.bf16.mxu0 0
        %5699 = vmatpush1.bf16.msra.mxu0 0
        %5700 = vmatprep.subr.bf16.mxu0 0
        %5701 = vmatpush1.bf16.msra.mxu0 0
        %5702 = vmatprep.subr.bf16.mxu0 0
        %5703 = vmatpush1.bf16.msra.mxu0 0
        %5704 = vmatprep.subr.bf16.mxu0 0
        %5705 = vmatpush1.bf16.msra.mxu0 0
        %5706 = vmatprep.mubr.bf16.mxu0 0
        %5707 = vmatmul.mubr.bf16.gmra.mrb[0].mxu0 %v5666
        %v5708 = vpop.f32.mrb[0].mxu0
        %v5709 = vadd.f32 0.0, %v5708
        %v5710 = vpop.f32.mrb[0].mxu0
        %v5711 = vpop.f32.mrb[0].mxu0
        %v5712 = vadd.f32 0.0, %v5711
        %v5713 = vpop.f32.mrb[0].mxu0
        %5714 = vmatprep.mubr.bf16.mxu0 0
        %5715 = vmatmul.mubr.bf16.gmra.mrb[0].mxu0 %v5669
        %v5716 = vpop.f32.mrb[0].mxu0
        %v5717 = vadd.f32 0.0, %v5716
        %v5718 = vpop.f32.mrb[0].mxu0
        %v5719 = vpop.f32.mrb[0].mxu0
        %v5720 = vpop.f32.mrb[0].mxu0
        %5721 = vdwg.mxu0
        %v5724 = vrot.slane %v2951, 2
        %v5725 = vrot.slane %v2952, 2
        %v5726 = vsel %vm4733, %v5724, %v5725
        %v5729 = vsel %vm3473, %v5584, 0
        %v5732 = vsel %vm3473, %v5585, 0
        %v5735 = vsel %vm3761, %v5725, 0
        %5737 = vmatprep.subr.bf16.mxu0 0
        %5738 = vmatpush1.bf16.msra.mxu0 %v5726
        %5739 = vmatprep.subr.bf16.mxu0 0
        %5740 = vmatpush1.bf16.msra.mxu0 %v5735
        %5741 = vmatprep.subr.bf16.mxu0 0
        %5742 = vmatpush1.bf16.msra.mxu0 0
        %5743 = vmatprep.subr.bf16.mxu0 0
        %5744 = vmatpush1.bf16.msra.mxu0 0
        %5745 = vmatprep.subr.bf16.mxu0 0
        %5746 = vmatpush1.bf16.msra.mxu0 0
        %5747 = vmatprep.subr.bf16.mxu0 0
        %5748 = vmatpush1.bf16.msra.mxu0 0
        %5749 = vmatprep.subr.bf16.mxu0 0
        %5750 = vmatpush1.bf16.msra.mxu0 0
        %5751 = vmatprep.subr.bf16.mxu0 0
        %5752 = vmatpush1.bf16.msra.mxu0 0
        %5753 = vmatprep.subr.bf16.mxu0 0
        %5754 = vmatpush1.bf16.msra.mxu0 0
        %5755 = vmatprep.subr.bf16.mxu0 0
        %5756 = vmatpush1.bf16.msra.mxu0 0
        %5757 = vmatprep.subr.bf16.mxu0 0
        %5758 = vmatpush1.bf16.msra.mxu0 0
        %5759 = vmatprep.subr.bf16.mxu0 0
        %5760 = vmatpush1.bf16.msra.mxu0 0
        %5761 = vmatprep.subr.bf16.mxu0 0
        %5762 = vmatpush1.bf16.msra.mxu0 0
        %5763 = vmatprep.subr.bf16.mxu0 0
        %5764 = vmatpush1.bf16.msra.mxu0 0
        %5765 = vmatprep.subr.bf16.mxu0 0
        %5766 = vmatpush1.bf16.msra.mxu0 0
        %5767 = vmatprep.subr.bf16.mxu0 0
        %5768 = vmatpush1.bf16.msra.mxu0 0
        %5769 = vmatprep.mubr.bf16.mxu0 0
        %5770 = vmatmul.mubr.bf16.gmra.mrb[0].mxu0 %v5729
        %v5771 = vpop.f32.mrb[0].mxu0
        %v5772 = vadd.f32 0.0, %v5771
        %v5773 = vpop.f32.mrb[0].mxu0
        %v5774 = vpop.f32.mrb[0].mxu0
        %v5775 = vadd.f32 0.0, %v5774
        %v5776 = vpop.f32.mrb[0].mxu0
        %5777 = vmatprep.mubr.bf16.mxu0 0
        %5778 = vmatmul.mubr.bf16.gmra.mrb[0].mxu0 %v5732
        %v5779 = vpop.f32.mrb[0].mxu0
        %v5780 = vadd.f32 0.0, %v5779
        %v5781 = vpop.f32.mrb[0].mxu0
        %v5782 = vpop.f32.mrb[0].mxu0
        %v5783 = vpop.f32.mrb[0].mxu0
        %5784 = vdwg.mxu0
        %v5787 = vrot.slane %v2954, 2
        %v5788 = vrot.slane %v2955, 2
        %v5789 = vsel %vm4733, %v5787, %v5788
        %v5792 = vsel %vm3473, %v5586, 0
        %v5795 = vsel %vm3473, %v5587, 0
        %v5798 = vsel %vm3761, %v5788, 0
        %5800 = vmatprep.subr.bf16.mxu0 0
        %5801 = vmatpush1.bf16.msra.mxu0 %v5789
        %5802 = vmatprep.subr.bf16.mxu0 0
        %5803 = vmatpush1.bf16.msra.mxu0 %v5798
        %5804 = vmatprep.subr.bf16.mxu0 0
        %5805 = vmatpush1.bf16.msra.mxu0 0
        %5806 = vmatprep.subr.bf16.mxu0 0
        %5807 = vmatpush1.bf16.msra.mxu0 0
        %5808 = vmatprep.subr.bf16.mxu0 0
        %5809 = vmatpush1.bf16.msra.mxu0 0
        %5810 = vmatprep.subr.bf16.mxu0 0
        %5811 = vmatpush1.bf16.msra.mxu0 0
        %5812 = vmatprep.subr.bf16.mxu0 0
        %5813 = vmatpush1.bf16.msra.mxu0 0
        %5814 = vmatprep.subr.bf16.mxu0 0
        %5815 = vmatpush1.bf16.msra.mxu0 0
        %5816 = vmatprep.subr.bf16.mxu0 0
        %5817 = vmatpush1.bf16.msra.mxu0 0
        %5818 = vmatprep.subr.bf16.mxu0 0
        %5819 = vmatpush1.bf16.msra.mxu0 0
        %5820 = vmatprep.subr.bf16.mxu0 0
        %5821 = vmatpush1.bf16.msra.mxu0 0
        %5822 = vmatprep.subr.bf16.mxu0 0
        %5823 = vmatpush1.bf16.msra.mxu0 0
        %5824 = vmatprep.subr.bf16.mxu0 0
        %5825 = vmatpush1.bf16.msra.mxu0 0
        %5826 = vmatprep.subr.bf16.mxu0 0
        %5827 = vmatpush1.bf16.msra.mxu0 0
        %5828 = vmatprep.subr.bf16.mxu0 0
        %5829 = vmatpush1.bf16.msra.mxu0 0
        %5830 = vmatprep.subr.bf16.mxu0 0
        %5831 = vmatpush1.bf16.msra.mxu0 0
        %5832 = vmatprep.mubr.bf16.mxu0 0
        %5833 = vmatmul.mubr.bf16.gmra.mrb[0].mxu0 %v5792
        %v5834 = vpop.f32.mrb[0].mxu0
        %v5835 = vadd.f32 0.0, %v5834
        %v5836 = vpop.f32.mrb[0].mxu0
        %v5837 = vpop.f32.mrb[0].mxu0
        %v5838 = vadd.f32 0.0, %v5837
        %v5839 = vpop.f32.mrb[0].mxu0
        %5840 = vmatprep.mubr.bf16.mxu0 0
        %5841 = vmatmul.mubr.bf16.gmra.mrb[0].mxu0 %v5795
        %v5842 = vpop.f32.mrb[0].mxu0
        %v5843 = vadd.f32 0.0, %v5842
        %v5844 = vpop.f32.mrb[0].mxu0
        %v5845 = vpop.f32.mrb[0].mxu0
        %v5846 = vpop.f32.mrb[0].mxu0
        %5847 = vdwg.mxu0
        %v5850 = vrot.slane %v2957, 2
        %v5851 = vrot.slane %v2958, 2
        %v5852 = vsel %vm4733, %v5850, %v5851
        %v5855 = vsel %vm3473, %v5588, 0
        %v5858 = vsel %vm3473, %v5589, 0
        %v5861 = vsel %vm3761, %v5851, 0
        %5863 = vmatprep.subr.bf16.mxu0 0
        %5864 = vmatpush1.bf16.msra.mxu0 %v5852
        %5865 = vmatprep.subr.bf16.mxu0 0
        %5866 = vmatpush1.bf16.msra.mxu0 %v5861
        %5867 = vmatprep.subr.bf16.mxu0 0
        %5868 = vmatpush1.bf16.msra.mxu0 0
        %5869 = vmatprep.subr.bf16.mxu0 0
        %5870 = vmatpush1.bf16.msra.mxu0 0
        %5871 = vmatprep.subr.bf16.mxu0 0
        %5872 = vmatpush1.bf16.msra.mxu0 0
        %5873 = vmatprep.subr.bf16.mxu0 0
        %5874 = vmatpush1.bf16.msra.mxu0 0
        %5875 = vmatprep.subr.bf16.mxu0 0
        %5876 = vmatpush1.bf16.msra.mxu0 0
        %5877 = vmatprep.subr.bf16.mxu0 0
        %5878 = vmatpush1.bf16.msra.mxu0 0
        %5879 = vmatprep.subr.bf16.mxu0 0
        %5880 = vmatpush1.bf16.msra.mxu0 0
        %5881 = vmatprep.subr.bf16.mxu0 0
        %5882 = vmatpush1.bf16.msra.mxu0 0
        %5883 = vmatprep.subr.bf16.mxu0 0
        %5884 = vmatpush1.bf16.msra.mxu0 0
        %5885 = vmatprep.subr.bf16.mxu0 0
        %5886 = vmatpush1.bf16.msra.mxu0 0
        %5887 = vmatprep.subr.bf16.mxu0 0
        %5888 = vmatpush1.bf16.msra.mxu0 0
        %5889 = vmatprep.subr.bf16.mxu0 0
        %5890 = vmatpush1.bf16.msra.mxu0 0
        %5891 = vmatprep.subr.bf16.mxu0 0
        %5892 = vmatpush1.bf16.msra.mxu0 0
        %5893 = vmatprep.subr.bf16.mxu0 0
        %5894 = vmatpush1.bf16.msra.mxu0 0
        %5895 = vmatprep.mubr.bf16.mxu0 0
        %5896 = vmatmul.mubr.bf16.gmra.mrb[0].mxu0 %v5855
        %v5897 = vpop.f32.mrb[0].mxu0
        %v5898 = vadd.f32 0.0, %v5897
        %v5899 = vpop.f32.mrb[0].mxu0
        %v5900 = vpop.f32.mrb[0].mxu0
        %v5901 = vadd.f32 0.0, %v5900
        %v5902 = vpop.f32.mrb[0].mxu0
        %5903 = vmatprep.mubr.bf16.mxu0 0
        %5904 = vmatmul.mubr.bf16.gmra.mrb[0].mxu0 %v5858
        %v5905 = vpop.f32.mrb[0].mxu0
        %v5906 = vadd.f32 0.0, %v5905
        %v5907 = vpop.f32.mrb[0].mxu0
        %v5908 = vpop.f32.mrb[0].mxu0
        %v5909 = vpop.f32.mrb[0].mxu0
        %5910 = vdwg.mxu0
        %v5913 = vrot.slane %v2960, 2
        %v5914 = vrot.slane %v2961, 2
        %v5915 = vsel %vm4733, %v5913, %v5914
        %v5918 = vsel %vm3473, %v5590, 0
        %v5921 = vsel %vm3473, %v5591, 0
        %v5924 = vsel %vm3761, %v5914, 0
        %5926 = vmatprep.subr.bf16.mxu0 0
        %5927 = vmatpush1.bf16.msra.mxu0 %v5915
        %5928 = vmatprep.subr.bf16.mxu0 0
        %5929 = vmatpush1.bf16.msra.mxu0 %v5924
        %5930 = vmatprep.subr.bf16.mxu0 0
        %5931 = vmatpush1.bf16.msra.mxu0 0
        %5932 = vmatprep.subr.bf16.mxu0 0
        %5933 = vmatpush1.bf16.msra.mxu0 0
        %5934 = vmatprep.subr.bf16.mxu0 0
        %5935 = vmatpush1.bf16.msra.mxu0 0
        %5936 = vmatprep.subr.bf16.mxu0 0
        %5937 = vmatpush1.bf16.msra.mxu0 0
        %5938 = vmatprep.subr.bf16.mxu0 0
        %5939 = vmatpush1.bf16.msra.mxu0 0
        %5940 = vmatprep.subr.bf16.mxu0 0
        %5941 = vmatpush1.bf16.msra.mxu0 0
        %5942 = vmatprep.subr.bf16.mxu0 0
        %5943 = vmatpush1.bf16.msra.mxu0 0
        %5944 = vmatprep.subr.bf16.mxu0 0
        %5945 = vmatpush1.bf16.msra.mxu0 0
        %5946 = vmatprep.subr.bf16.mxu0 0
        %5947 = vmatpush1.bf16.msra.mxu0 0
        %5948 = vmatprep.subr.bf16.mxu0 0
        %5949 = vmatpush1.bf16.msra.mxu0 0
        %5950 = vmatprep.subr.bf16.mxu0 0
        %5951 = vmatpush1.bf16.msra.mxu0 0
        %5952 = vmatprep.subr.bf16.mxu0 0
        %5953 = vmatpush1.bf16.msra.mxu0 0
        %5954 = vmatprep.subr.bf16.mxu0 0
        %5955 = vmatpush1.bf16.msra.mxu0 0
        %5956 = vmatprep.subr.bf16.mxu0 0
        %5957 = vmatpush1.bf16.msra.mxu0 0
        %5958 = vmatprep.mubr.bf16.mxu0 0
        %5959 = vmatmul.mubr.bf16.gmra.mrb[0].mxu0 %v5918
        %v5960 = vpop.f32.mrb[0].mxu0
        %v5961 = vadd.f32 0.0, %v5960
        %v5962 = vpop.f32.mrb[0].mxu0
        %v5963 = vpop.f32.mrb[0].mxu0
        %v5964 = vadd.f32 0.0, %v5963
        %v5965 = vpop.f32.mrb[0].mxu0
        %5966 = vmatprep.mubr.bf16.mxu0 0
        %5967 = vmatmul.mubr.bf16.gmra.mrb[0].mxu0 %v5921
        %v5968 = vpop.f32.mrb[0].mxu0
        %v5969 = vadd.f32 0.0, %v5968
        %v5970 = vpop.f32.mrb[0].mxu0
        %v5971 = vpop.f32.mrb[0].mxu0
        %v5972 = vpop.f32.mrb[0].mxu0
        %5973 = vdwg.mxu0
        %v5976 = vrot.slane %v2963, 2
        %v5977 = vrot.slane %v2964, 2
        %v5978 = vsel %vm4733, %v5976, %v5977
        %v5981 = vsel %vm3473, %v5592, 0
        %v5984 = vsel %vm3473, %v5593, 0
        %v5987 = vsel %vm3761, %v5977, 0
        %5989 = vmatprep.subr.bf16.mxu0 0
        %5990 = vmatpush1.bf16.msra.mxu0 %v5978
        %5991 = vmatprep.subr.bf16.mxu0 0
        %5992 = vmatpush1.bf16.msra.mxu0 %v5987
        %5993 = vmatprep.subr.bf16.mxu0 0
        %5994 = vmatpush1.bf16.msra.mxu0 0
        %5995 = vmatprep.subr.bf16.mxu0 0
        %5996 = vmatpush1.bf16.msra.mxu0 0
        %5997 = vmatprep.subr.bf16.mxu0 0
        %5998 = vmatpush1.bf16.msra.mxu0 0
        %5999 = vmatprep.subr.bf16.mxu0 0
        %6000 = vmatpush1.bf16.msra.mxu0 0
        %6001 = vmatprep.subr.bf16.mxu0 0
        %6002 = vmatpush1.bf16.msra.mxu0 0
        %6003 = vmatprep.subr.bf16.mxu0 0
        %6004 = vmatpush1.bf16.msra.mxu0 0
        %6005 = vmatprep.subr.bf16.mxu0 0
        %6006 = vmatpush1.bf16.msra.mxu0 0
        %6007 = vmatprep.subr.bf16.mxu0 0
        %6008 = vmatpush1.bf16.msra.mxu0 0
        %6009 = vmatprep.subr.bf16.mxu0 0
        %6010 = vmatpush1.bf16.msra.mxu0 0
        %6011 = vmatprep.subr.bf16.mxu0 0
        %6012 = vmatpush1.bf16.msra.mxu0 0
        %6013 = vmatprep.subr.bf16.mxu0 0
        %6014 = vmatpush1.bf16.msra.mxu0 0
        %6015 = vmatprep.subr.bf16.mxu0 0
        %6016 = vmatpush1.bf16.msra.mxu0 0
        %6017 = vmatprep.subr.bf16.mxu0 0
        %6018 = vmatpush1.bf16.msra.mxu0 0
        %6019 = vmatprep.subr.bf16.mxu0 0
        %6020 = vmatpush1.bf16.msra.mxu0 0
        %6021 = vmatprep.mubr.bf16.mxu0 0
        %6022 = vmatmul.mubr.bf16.gmra.mrb[0].mxu0 %v5981
        %v6023 = vpop.f32.mrb[0].mxu0
        %v6024 = vadd.f32 0.0, %v6023
        %v6025 = vpop.f32.mrb[0].mxu0
        %v6026 = vpop.f32.mrb[0].mxu0
        %v6027 = vadd.f32 0.0, %v6026
        %v6028 = vpop.f32.mrb[0].mxu0
        %6029 = vmatprep.mubr.bf16.mxu0 0
        %6030 = vmatmul.mubr.bf16.gmra.mrb[0].mxu0 %v5984
        %v6031 = vpop.f32.mrb[0].mxu0
        %v6032 = vadd.f32 0.0, %v6031
        %v6033 = vpop.f32.mrb[0].mxu0
        %v6034 = vpop.f32.mrb[0].mxu0
        %v6035 = vpop.f32.mrb[0].mxu0
        %6036 = vdwg.mxu0
        %v6039 = vrot.slane %v2966, 2
        %v6040 = vrot.slane %v2967, 2
        %v6041 = vsel %vm4733, %v6039, %v6040
        %v6044 = vsel %vm3473, %v5594, 0
        %v6047 = vsel %vm3473, %v5595, 0
        %v6050 = vsel %vm3761, %v6040, 0
        %6052 = vmatprep.subr.bf16.mxu0 0
        %6053 = vmatpush1.bf16.msra.mxu0 %v6041
        %6054 = vmatprep.subr.bf16.mxu0 0
        %6055 = vmatpush1.bf16.msra.mxu0 %v6050
        %6056 = vmatprep.subr.bf16.mxu0 0
        %6057 = vmatpush1.bf16.msra.mxu0 0
        %6058 = vmatprep.subr.bf16.mxu0 0
        %6059 = vmatpush1.bf16.msra.mxu0 0
        %6060 = vmatprep.subr.bf16.mxu0 0
        %6061 = vmatpush1.bf16.msra.mxu0 0
        %6062 = vmatprep.subr.bf16.mxu0 0
        %6063 = vmatpush1.bf16.msra.mxu0 0
        %6064 = vmatprep.subr.bf16.mxu0 0
        %6065 = vmatpush1.bf16.msra.mxu0 0
        %6066 = vmatprep.subr.bf16.mxu0 0
        %6067 = vmatpush1.bf16.msra.mxu0 0
        %6068 = vmatprep.subr.bf16.mxu0 0
        %6069 = vmatpush1.bf16.msra.mxu0 0
        %6070 = vmatprep.subr.bf16.mxu0 0
        %6071 = vmatpush1.bf16.msra.mxu0 0
        %6072 = vmatprep.subr.bf16.mxu0 0
        %6073 = vmatpush1.bf16.msra.mxu0 0
        %6074 = vmatprep.subr.bf16.mxu0 0
        %6075 = vmatpush1.bf16.msra.mxu0 0
        %6076 = vmatprep.subr.bf16.mxu0 0
        %6077 = vmatpush1.bf16.msra.mxu0 0
        %6078 = vmatprep.subr.bf16.mxu0 0
        %6079 = vmatpush1.bf16.msra.mxu0 0
        %6080 = vmatprep.subr.bf16.mxu0 0
        %6081 = vmatpush1.bf16.msra.mxu0 0
        %6082 = vmatprep.subr.bf16.mxu0 0
        %6083 = vmatpush1.bf16.msra.mxu0 0
        %6084 = vmatprep.mubr.bf16.mxu0 0
        %6085 = vmatmul.mubr.bf16.gmra.mrb[0].mxu0 %v6044
        %v6086 = vpop.f32.mrb[0].mxu0
        %v6087 = vadd.f32 0.0, %v6086
        %v6088 = vpop.f32.mrb[0].mxu0
        %v6089 = vpop.f32.mrb[0].mxu0
        %v6090 = vadd.f32 0.0, %v6089
        %v6091 = vpop.f32.mrb[0].mxu0
        %6092 = vmatprep.mubr.bf16.mxu0 0
        %6093 = vmatmul.mubr.bf16.gmra.mrb[0].mxu0 %v6047
        %v6094 = vpop.f32.mrb[0].mxu0
        %v6095 = vadd.f32 0.0, %v6094
        %v6096 = vpop.f32.mrb[0].mxu0
        %v6097 = vpop.f32.mrb[0].mxu0
        %v6098 = vpop.f32.mrb[0].mxu0
        %6099 = vdwg.mxu0
        %v6100 = vpack.c.bf16 %v5649, %v5646
        %v6101 = vpack.c.bf16 %v5654, %v5654
        %v6102 = vpack.c.bf16 %v5712, %v5709
        %v6103 = vpack.c.bf16 %v5717, %v5717
        %v6104 = vpack.c.bf16 %v5775, %v5772
        %v6105 = vpack.c.bf16 %v5780, %v5780
        %v6106 = vpack.c.bf16 %v5838, %v5835
        %v6107 = vpack.c.bf16 %v5843, %v5843
        %v6108 = vpack.c.bf16 %v5901, %v5898
        %v6109 = vpack.c.bf16 %v5906, %v5906
        %v6110 = vpack.c.bf16 %v5964, %v5961
        %v6111 = vpack.c.bf16 %v5969, %v5969
        %v6112 = vpack.c.bf16 %v6027, %v6024
        %v6113 = vpack.c.bf16 %v6032, %v6032
        %v6114 = vpack.c.bf16 %v6090, %v6087
        %v6115 = vpack.c.bf16 %v6095, %v6095
        %v6117 = vsel %vm2968, %v6100, 0
        %v6120 = vsel %vm2968, %v6101, 0
        %6122 = vmatprep.subr.bf16.mxu0 0
        %6123 = vmatpush1.bf16.msra.mxu0 %v4236
        %6124 = vmatprep.subr.bf16.mxu0 0
        %6125 = vmatpush1.bf16.msra.mxu0 0
        %6126 = vmatprep.subr.bf16.mxu0 0
        %6127 = vmatpush1.bf16.msra.mxu0 0
        %6128 = vmatprep.subr.bf16.mxu0 0
        %6129 = vmatpush1.bf16.msra.mxu0 0
        %6130 = vmatprep.subr.bf16.mxu0 0
        %6131 = vmatpush1.bf16.msra.mxu0 0
        %6132 = vmatprep.subr.bf16.mxu0 0
        %6133 = vmatpush1.bf16.msra.mxu0 0
        %6134 = vmatprep.subr.bf16.mxu0 0
        %6135 = vmatpush1.bf16.msra.mxu0 0
        %6136 = vmatprep.subr.bf16.mxu0 0
        %6137 = vmatpush1.bf16.msra.mxu0 0
        %6138 = vmatprep.subr.bf16.mxu0 0
        %6139 = vmatpush1.bf16.msra.mxu0 0
        %6140 = vmatprep.subr.bf16.mxu0 0
        %6141 = vmatpush1.bf16.msra.mxu0 0
        %6142 = vmatprep.subr.bf16.mxu0 0
        %6143 = vmatpush1.bf16.msra.mxu0 0
        %6144 = vmatprep.subr.bf16.mxu0 0
        %6145 = vmatpush1.bf16.msra.mxu0 0
        %6146 = vmatprep.subr.bf16.mxu0 0
        %6147 = vmatpush1.bf16.msra.mxu0 0
        %6148 = vmatprep.subr.bf16.mxu0 0
        %6149 = vmatpush1.bf16.msra.mxu0 0
        %6150 = vmatprep.subr.bf16.mxu0 0
        %6151 = vmatpush1.bf16.msra.mxu0 0
        %6152 = vmatprep.subr.bf16.mxu0 0
        %6153 = vmatpush1.bf16.msra.mxu0 0
        %6154 = vmatprep.mubr.bf16.mxu0 0
        %6155 = vmatmul.mubr.bf16.gmra.mrb[0].mxu0 %v6117
        %v6156 = vpop.f32.mrb[0].mxu0
        %v6157 = vadd.f32 0.0, %v6156
        %v6158 = vpop.f32.mrb[0].mxu0
        %v6159 = vpop.f32.mrb[0].mxu0
        %v6160 = vadd.f32 0.0, %v6159
        %v6161 = vpop.f32.mrb[0].mxu0
        %6162 = vmatprep.mubr.bf16.mxu0 0
        %6163 = vmatmul.mubr.bf16.gmra.mrb[0].mxu0 %v6120
        %v6164 = vpop.f32.mrb[0].mxu0
        %v6165 = vadd.f32 0.0, %v6164
        %v6166 = vpop.f32.mrb[0].mxu0
        %v6167 = vpop.f32.mrb[0].mxu0
        %v6168 = vpop.f32.mrb[0].mxu0
        %6169 = vdwg.mxu0
        %v6171 = vsel %vm2968, %v6102, 0
        %v6174 = vsel %vm2968, %v6103, 0
        %6176 = vmatprep.subr.bf16.mxu0 0
        %6177 = vmatpush1.bf16.msra.mxu0 %v4293
        %6178 = vmatprep.subr.bf16.mxu0 0
        %6179 = vmatpush1.bf16.msra.mxu0 0
        %6180 = vmatprep.subr.bf16.mxu0 0
        %6181 = vmatpush1.bf16.msra.mxu0 0
        %6182 = vmatprep.subr.bf16.mxu0 0
        %6183 = vmatpush1.bf16.msra.mxu0 0
        %6184 = vmatprep.subr.bf16.mxu0 0
        %6185 = vmatpush1.bf16.msra.mxu0 0
        %6186 = vmatprep.subr.bf16.mxu0 0
        %6187 = vmatpush1.bf16.msra.mxu0 0
        %6188 = vmatprep.subr.bf16.mxu0 0
        %6189 = vmatpush1.bf16.msra.mxu0 0
        %6190 = vmatprep.subr.bf16.mxu0 0
        %6191 = vmatpush1.bf16.msra.mxu0 0
        %6192 = vmatprep.subr.bf16.mxu0 0
        %6193 = vmatpush1.bf16.msra.mxu0 0
        %6194 = vmatprep.subr.bf16.mxu0 0
        %6195 = vmatpush1.bf16.msra.mxu0 0
        %6196 = vmatprep.subr.bf16.mxu0 0
        %6197 = vmatpush1.bf16.msra.mxu0 0
        %6198 = vmatprep.subr.bf16.mxu0 0
        %6199 = vmatpush1.bf16.msra.mxu0 0
        %6200 = vmatprep.subr.bf16.mxu0 0
        %6201 = vmatpush1.bf16.msra.mxu0 0
        %6202 = vmatprep.subr.bf16.mxu0 0
        %6203 = vmatpush1.bf16.msra.mxu0 0
        %6204 = vmatprep.subr.bf16.mxu0 0
        %6205 = vmatpush1.bf16.msra.mxu0 0
        %6206 = vmatprep.subr.bf16.mxu0 0
        %6207 = vmatpush1.bf16.msra.mxu0 0
        %6208 = vmatprep.mubr.bf16.mxu0 0
        %6209 = vmatmul.mubr.bf16.gmra.mrb[0].mxu0 %v6171
        %v6210 = vpop.f32.mrb[0].mxu0
        %v6211 = vadd.f32 0.0, %v6210
        %v6212 = vpop.f32.mrb[0].mxu0
        %v6213 = vpop.f32.mrb[0].mxu0
        %v6214 = vadd.f32 0.0, %v6213
        %v6215 = vpop.f32.mrb[0].mxu0
        %6216 = vmatprep.mubr.bf16.mxu0 0
        %6217 = vmatmul.mubr.bf16.gmra.mrb[0].mxu0 %v6174
        %v6218 = vpop.f32.mrb[0].mxu0
        %v6219 = vadd.f32 0.0, %v6218
        %v6220 = vpop.f32.mrb[0].mxu0
        %v6221 = vpop.f32.mrb[0].mxu0
        %v6222 = vpop.f32.mrb[0].mxu0
        %6223 = vdwg.mxu0
        %v6225 = vsel %vm2968, %v6104, 0
        %v6228 = vsel %vm2968, %v6105, 0
        %6230 = vmatprep.subr.bf16.mxu0 0
        %6231 = vmatpush1.bf16.msra.mxu0 %v4350
        %6232 = vmatprep.subr.bf16.mxu0 0
        %6233 = vmatpush1.bf16.msra.mxu0 0
        %6234 = vmatprep.subr.bf16.mxu0 0
        %6235 = vmatpush1.bf16.msra.mxu0 0
        %6236 = vmatprep.subr.bf16.mxu0 0
        %6237 = vmatpush1.bf16.msra.mxu0 0
        %6238 = vmatprep.subr.bf16.mxu0 0
        %6239 = vmatpush1.bf16.msra.mxu0 0
        %6240 = vmatprep.subr.bf16.mxu0 0
        %6241 = vmatpush1.bf16.msra.mxu0 0
        %6242 = vmatprep.subr.bf16.mxu0 0
        %6243 = vmatpush1.bf16.msra.mxu0 0
        %6244 = vmatprep.subr.bf16.mxu0 0
        %6245 = vmatpush1.bf16.msra.mxu0 0
        %6246 = vmatprep.subr.bf16.mxu0 0
        %6247 = vmatpush1.bf16.msra.mxu0 0
        %6248 = vmatprep.subr.bf16.mxu0 0
        %6249 = vmatpush1.bf16.msra.mxu0 0
        %6250 = vmatprep.subr.bf16.mxu0 0
        %6251 = vmatpush1.bf16.msra.mxu0 0
        %6252 = vmatprep.subr.bf16.mxu0 0
        %6253 = vmatpush1.bf16.msra.mxu0 0
        %6254 = vmatprep.subr.bf16.mxu0 0
        %6255 = vmatpush1.bf16.msra.mxu0 0
        %6256 = vmatprep.subr.bf16.mxu0 0
        %6257 = vmatpush1.bf16.msra.mxu0 0
        %6258 = vmatprep.subr.bf16.mxu0 0
        %6259 = vmatpush1.bf16.msra.mxu0 0
        %6260 = vmatprep.subr.bf16.mxu0 0
        %6261 = vmatpush1.bf16.msra.mxu0 0
        %6262 = vmatprep.mubr.bf16.mxu0 0
        %6263 = vmatmul.mubr.bf16.gmra.mrb[0].mxu0 %v6225
        %v6264 = vpop.f32.mrb[0].mxu0
        %v6265 = vadd.f32 0.0, %v6264
        %v6266 = vpop.f32.mrb[0].mxu0
        %v6267 = vpop.f32.mrb[0].mxu0
        %v6268 = vadd.f32 0.0, %v6267
        %v6269 = vpop.f32.mrb[0].mxu0
        %6270 = vmatprep.mubr.bf16.mxu0 0
        %6271 = vmatmul.mubr.bf16.gmra.mrb[0].mxu0 %v6228
        %v6272 = vpop.f32.mrb[0].mxu0
        %v6273 = vadd.f32 0.0, %v6272
        %v6274 = vpop.f32.mrb[0].mxu0
        %v6275 = vpop.f32.mrb[0].mxu0
        %v6276 = vpop.f32.mrb[0].mxu0
        %6277 = vdwg.mxu0
        %v6279 = vsel %vm2968, %v6106, 0
        %v6282 = vsel %vm2968, %v6107, 0
        %6284 = vmatprep.subr.bf16.mxu0 0
        %6285 = vmatpush1.bf16.msra.mxu0 %v4407
        %6286 = vmatprep.subr.bf16.mxu0 0
        %6287 = vmatpush1.bf16.msra.mxu0 0
        %6288 = vmatprep.subr.bf16.mxu0 0
        %6289 = vmatpush1.bf16.msra.mxu0 0
        %6290 = vmatprep.subr.bf16.mxu0 0
        %6291 = vmatpush1.bf16.msra.mxu0 0
        %6292 = vmatprep.subr.bf16.mxu0 0
        %6293 = vmatpush1.bf16.msra.mxu0 0
        %6294 = vmatprep.subr.bf16.mxu0 0
        %6295 = vmatpush1.bf16.msra.mxu0 0
        %6296 = vmatprep.subr.bf16.mxu0 0
        %6297 = vmatpush1.bf16.msra.mxu0 0
        %6298 = vmatprep.subr.bf16.mxu0 0
        %6299 = vmatpush1.bf16.msra.mxu0 0
        %6300 = vmatprep.subr.bf16.mxu0 0
        %6301 = vmatpush1.bf16.msra.mxu0 0
        %6302 = vmatprep.subr.bf16.mxu0 0
        %6303 = vmatpush1.bf16.msra.mxu0 0
        %6304 = vmatprep.subr.bf16.mxu0 0
        %6305 = vmatpush1.bf16.msra.mxu0 0
        %6306 = vmatprep.subr.bf16.mxu0 0
        %6307 = vmatpush1.bf16.msra.mxu0 0
        %6308 = vmatprep.subr.bf16.mxu0 0
        %6309 = vmatpush1.bf16.msra.mxu0 0
        %6310 = vmatprep.subr.bf16.mxu0 0
        %6311 = vmatpush1.bf16.msra.mxu0 0
        %6312 = vmatprep.subr.bf16.mxu0 0
        %6313 = vmatpush1.bf16.msra.mxu0 0
        %6314 = vmatprep.subr.bf16.mxu0 0
        %6315 = vmatpush1.bf16.msra.mxu0 0
        %6316 = vmatprep.mubr.bf16.mxu0 0
        %6317 = vmatmul.mubr.bf16.gmra.mrb[0].mxu0 %v6279
        %v6318 = vpop.f32.mrb[0].mxu0
        %v6319 = vadd.f32 0.0, %v6318
        %v6320 = vpop.f32.mrb[0].mxu0
        %v6321 = vpop.f32.mrb[0].mxu0
        %v6322 = vadd.f32 0.0, %v6321
        %v6323 = vpop.f32.mrb[0].mxu0
        %6324 = vmatprep.mubr.bf16.mxu0 0
        %6325 = vmatmul.mubr.bf16.gmra.mrb[0].mxu0 %v6282
        %v6326 = vpop.f32.mrb[0].mxu0
        %v6327 = vadd.f32 0.0, %v6326
        %v6328 = vpop.f32.mrb[0].mxu0
        %v6329 = vpop.f32.mrb[0].mxu0
        %v6330 = vpop.f32.mrb[0].mxu0
        %6331 = vdwg.mxu0
        %v6333 = vsel %vm2968, %v6108, 0
        %v6336 = vsel %vm2968, %v6109, 0
        %6338 = vmatprep.subr.bf16.mxu0 0
        %6339 = vmatpush1.bf16.msra.mxu0 %v4464
        %6340 = vmatprep.subr.bf16.mxu0 0
        %6341 = vmatpush1.bf16.msra.mxu0 0
        %6342 = vmatprep.subr.bf16.mxu0 0
        %6343 = vmatpush1.bf16.msra.mxu0 0
        %6344 = vmatprep.subr.bf16.mxu0 0
        %6345 = vmatpush1.bf16.msra.mxu0 0
        %6346 = vmatprep.subr.bf16.mxu0 0
        %6347 = vmatpush1.bf16.msra.mxu0 0
        %6348 = vmatprep.subr.bf16.mxu0 0
        %6349 = vmatpush1.bf16.msra.mxu0 0
        %6350 = vmatprep.subr.bf16.mxu0 0
        %6351 = vmatpush1.bf16.msra.mxu0 0
        %6352 = vmatprep.subr.bf16.mxu0 0
        %6353 = vmatpush1.bf16.msra.mxu0 0
        %6354 = vmatprep.subr.bf16.mxu0 0
        %6355 = vmatpush1.bf16.msra.mxu0 0
        %6356 = vmatprep.subr.bf16.mxu0 0
        %6357 = vmatpush1.bf16.msra.mxu0 0
        %6358 = vmatprep.subr.bf16.mxu0 0
        %6359 = vmatpush1.bf16.msra.mxu0 0
        %6360 = vmatprep.subr.bf16.mxu0 0
        %6361 = vmatpush1.bf16.msra.mxu0 0
        %6362 = vmatprep.subr.bf16.mxu0 0
        %6363 = vmatpush1.bf16.msra.mxu0 0
        %6364 = vmatprep.subr.bf16.mxu0 0
        %6365 = vmatpush1.bf16.msra.mxu0 0
        %6366 = vmatprep.subr.bf16.mxu0 0
        %6367 = vmatpush1.bf16.msra.mxu0 0
        %6368 = vmatprep.subr.bf16.mxu0 0
        %6369 = vmatpush1.bf16.msra.mxu0 0
        %6370 = vmatprep.mubr.bf16.mxu0 0
        %6371 = vmatmul.mubr.bf16.gmra.mrb[0].mxu0 %v6333
        %v6372 = vpop.f32.mrb[0].mxu0
        %v6373 = vadd.f32 0.0, %v6372
        %v6374 = vpop.f32.mrb[0].mxu0
        %v6375 = vpop.f32.mrb[0].mxu0
        %v6376 = vadd.f32 0.0, %v6375
        %v6377 = vpop.f32.mrb[0].mxu0
        %6378 = vmatprep.mubr.bf16.mxu0 0
        %6379 = vmatmul.mubr.bf16.gmra.mrb[0].mxu0 %v6336
        %v6380 = vpop.f32.mrb[0].mxu0
        %v6381 = vadd.f32 0.0, %v6380
        %v6382 = vpop.f32.mrb[0].mxu0
        %v6383 = vpop.f32.mrb[0].mxu0
        %v6384 = vpop.f32.mrb[0].mxu0
        %6385 = vdwg.mxu0
        %v6387 = vsel %vm2968, %v6110, 0
        %v6390 = vsel %vm2968, %v6111, 0
        %6392 = vmatprep.subr.bf16.mxu0 0
        %6393 = vmatpush1.bf16.msra.mxu0 %v4521
        %6394 = vmatprep.subr.bf16.mxu0 0
        %6395 = vmatpush1.bf16.msra.mxu0 0
        %6396 = vmatprep.subr.bf16.mxu0 0
        %6397 = vmatpush1.bf16.msra.mxu0 0
        %6398 = vmatprep.subr.bf16.mxu0 0
        %6399 = vmatpush1.bf16.msra.mxu0 0
        %6400 = vmatprep.subr.bf16.mxu0 0
        %6401 = vmatpush1.bf16.msra.mxu0 0
        %6402 = vmatprep.subr.bf16.mxu0 0
        %6403 = vmatpush1.bf16.msra.mxu0 0
        %6404 = vmatprep.subr.bf16.mxu0 0
        %6405 = vmatpush1.bf16.msra.mxu0 0
        %6406 = vmatprep.subr.bf16.mxu0 0
        %6407 = vmatpush1.bf16.msra.mxu0 0
        %6408 = vmatprep.subr.bf16.mxu0 0
        %6409 = vmatpush1.bf16.msra.mxu0 0
        %6410 = vmatprep.subr.bf16.mxu0 0
        %6411 = vmatpush1.bf16.msra.mxu0 0
        %6412 = vmatprep.subr.bf16.mxu0 0
        %6413 = vmatpush1.bf16.msra.mxu0 0
        %6414 = vmatprep.subr.bf16.mxu0 0
        %6415 = vmatpush1.bf16.msra.mxu0 0
        %6416 = vmatprep.subr.bf16.mxu0 0
        %6417 = vmatpush1.bf16.msra.mxu0 0
        %6418 = vmatprep.subr.bf16.mxu0 0
        %6419 = vmatpush1.bf16.msra.mxu0 0
        %6420 = vmatprep.subr.bf16.mxu0 0
        %6421 = vmatpush1.bf16.msra.mxu0 0
        %6422 = vmatprep.subr.bf16.mxu0 0
        %6423 = vmatpush1.bf16.msra.mxu0 0
        %6424 = vmatprep.mubr.bf16.mxu0 0
        %6425 = vmatmul.mubr.bf16.gmra.mrb[0].mxu0 %v6387
        %v6426 = vpop.f32.mrb[0].mxu0
        %v6427 = vadd.f32 0.0, %v6426
        %v6428 = vpop.f32.mrb[0].mxu0
        %v6429 = vpop.f32.mrb[0].mxu0
        %v6430 = vadd.f32 0.0, %v6429
        %v6431 = vpop.f32.mrb[0].mxu0
        %6432 = vmatprep.mubr.bf16.mxu0 0
        %6433 = vmatmul.mubr.bf16.gmra.mrb[0].mxu0 %v6390
        %v6434 = vpop.f32.mrb[0].mxu0
        %v6435 = vadd.f32 0.0, %v6434
        %v6436 = vpop.f32.mrb[0].mxu0
        %v6437 = vpop.f32.mrb[0].mxu0
        %v6438 = vpop.f32.mrb[0].mxu0
        %6439 = vdwg.mxu0
        %v6441 = vsel %vm2968, %v6112, 0
        %v6444 = vsel %vm2968, %v6113, 0
        %6446 = vmatprep.subr.bf16.mxu0 0
        %6447 = vmatpush1.bf16.msra.mxu0 %v4578
        %6448 = vmatprep.subr.bf16.mxu0 0
        %6449 = vmatpush1.bf16.msra.mxu0 0
        %6450 = vmatprep.subr.bf16.mxu0 0
        %6451 = vmatpush1.bf16.msra.mxu0 0
        %6452 = vmatprep.subr.bf16.mxu0 0
        %6453 = vmatpush1.bf16.msra.mxu0 0
        %6454 = vmatprep.subr.bf16.mxu0 0
        %6455 = vmatpush1.bf16.msra.mxu0 0
        %6456 = vmatprep.subr.bf16.mxu0 0
        %6457 = vmatpush1.bf16.msra.mxu0 0
        %6458 = vmatprep.subr.bf16.mxu0 0
        %6459 = vmatpush1.bf16.msra.mxu0 0
        %6460 = vmatprep.subr.bf16.mxu0 0
        %6461 = vmatpush1.bf16.msra.mxu0 0
        %6462 = vmatprep.subr.bf16.mxu0 0
        %6463 = vmatpush1.bf16.msra.mxu0 0
        %6464 = vmatprep.subr.bf16.mxu0 0
        %6465 = vmatpush1.bf16.msra.mxu0 0
        %6466 = vmatprep.subr.bf16.mxu0 0
        %6467 = vmatpush1.bf16.msra.mxu0 0
        %6468 = vmatprep.subr.bf16.mxu0 0
        %6469 = vmatpush1.bf16.msra.mxu0 0
        %6470 = vmatprep.subr.bf16.mxu0 0
        %6471 = vmatpush1.bf16.msra.mxu0 0
        %6472 = vmatprep.subr.bf16.mxu0 0
        %6473 = vmatpush1.bf16.msra.mxu0 0
        %6474 = vmatprep.subr.bf16.mxu0 0
        %6475 = vmatpush1.bf16.msra.mxu0 0
        %6476 = vmatprep.subr.bf16.mxu0 0
        %6477 = vmatpush1.bf16.msra.mxu0 0
        %6478 = vmatprep.mubr.bf16.mxu0 0
        %6479 = vmatmul.mubr.bf16.gmra.mrb[0].mxu0 %v6441
        %v6480 = vpop.f32.mrb[0].mxu0
        %v6481 = vadd.f32 0.0, %v6480
        %v6482 = vpop.f32.mrb[0].mxu0
        %v6483 = vpop.f32.mrb[0].mxu0
        %v6484 = vadd.f32 0.0, %v6483
        %v6485 = vpop.f32.mrb[0].mxu0
        %6486 = vmatprep.mubr.bf16.mxu0 0
        %6487 = vmatmul.mubr.bf16.gmra.mrb[0].mxu0 %v6444
        %v6488 = vpop.f32.mrb[0].mxu0
        %v6489 = vadd.f32 0.0, %v6488
        %v6490 = vpop.f32.mrb[0].mxu0
        %v6491 = vpop.f32.mrb[0].mxu0
        %v6492 = vpop.f32.mrb[0].mxu0
        %6493 = vdwg.mxu0
        %v6495 = vsel %vm2968, %v6114, 0
        %v6498 = vsel %vm2968, %v6115, 0
        %6500 = vmatprep.subr.bf16.mxu0 0
        %6501 = vmatpush1.bf16.msra.mxu0 %v4635
        %6502 = vmatprep.subr.bf16.mxu0 0
        %6503 = vmatpush1.bf16.msra.mxu0 0
        %6504 = vmatprep.subr.bf16.mxu0 0
        %6505 = vmatpush1.bf16.msra.mxu0 0
        %6506 = vmatprep.subr.bf16.mxu0 0
        %6507 = vmatpush1.bf16.msra.mxu0 0
        %6508 = vmatprep.subr.bf16.mxu0 0
        %6509 = vmatpush1.bf16.msra.mxu0 0
        %6510 = vmatprep.subr.bf16.mxu0 0
        %6511 = vmatpush1.bf16.msra.mxu0 0
        %6512 = vmatprep.subr.bf16.mxu0 0
        %6513 = vmatpush1.bf16.msra.mxu0 0
        %6514 = vmatprep.subr.bf16.mxu0 0
        %6515 = vmatpush1.bf16.msra.mxu0 0
        %6516 = vmatprep.subr.bf16.mxu0 0
        %6517 = vmatpush1.bf16.msra.mxu0 0
        %6518 = vmatprep.subr.bf16.mxu0 0
        %6519 = vmatpush1.bf16.msra.mxu0 0
        %6520 = vmatprep.subr.bf16.mxu0 0
        %6521 = vmatpush1.bf16.msra.mxu0 0
        %6522 = vmatprep.subr.bf16.mxu0 0
        %6523 = vmatpush1.bf16.msra.mxu0 0
        %6524 = vmatprep.subr.bf16.mxu0 0
        %6525 = vmatpush1.bf16.msra.mxu0 0
        %6526 = vmatprep.subr.bf16.mxu0 0
        %6527 = vmatpush1.bf16.msra.mxu0 0
        %6528 = vmatprep.subr.bf16.mxu0 0
        %6529 = vmatpush1.bf16.msra.mxu0 0
        %6530 = vmatprep.subr.bf16.mxu0 0
        %6531 = vmatpush1.bf16.msra.mxu0 0
        %6532 = vmatprep.mubr.bf16.mxu0 0
        %6533 = vmatmul.mubr.bf16.gmra.mrb[0].mxu0 %v6495
        %v6534 = vpop.f32.mrb[0].mxu0
        %v6535 = vadd.f32 0.0, %v6534
        %v6536 = vpop.f32.mrb[0].mxu0
        %v6537 = vpop.f32.mrb[0].mxu0
        %v6538 = vadd.f32 0.0, %v6537
        %v6539 = vpop.f32.mrb[0].mxu0
        %6540 = vmatprep.mubr.bf16.mxu0 0
        %6541 = vmatmul.mubr.bf16.gmra.mrb[0].mxu0 %v6498
        %v6542 = vpop.f32.mrb[0].mxu0
        %v6543 = vadd.f32 0.0, %v6542
        %v6544 = vpop.f32.mrb[0].mxu0
        %v6545 = vpop.f32.mrb[0].mxu0
        %v6546 = vpop.f32.mrb[0].mxu0
        %6547 = vdwg.mxu0
        %v6548 = vsel %vm875, %v6157, 0.0
        %v6549 = vsel %vm875, %v6211, 0.0
        %v6550 = vadd.f32 %v6548, %v6549
        %v6551 = vsel %vm875, %v6265, 0.0
        %v6552 = vadd.f32 %v6550, %v6551
        %v6553 = vsel %vm875, %v6319, 0.0
        %v6554 = vadd.f32 %v6552, %v6553
        %v6555 = vsel %vm875, %v6373, 0.0
        %v6556 = vadd.f32 %v6554, %v6555
        %v6557 = vsel %vm875, %v6427, 0.0
        %v6558 = vadd.f32 %v6556, %v6557
        %v6559 = vsel %vm875, %v6481, 0.0
        %v6560 = vadd.f32 %v6558, %v6559
        %v6561 = vsel %vm875, %v6535, 0.0
        %v6562 = vadd.f32 %v6560, %v6561
        %v6563 = vsel %vm875, %v6160, 0.0
        %v6564 = vsel %vm875, %v6214, 0.0
        %v6565 = vadd.f32 %v6563, %v6564
        %v6566 = vsel %vm875, %v6268, 0.0
        %v6567 = vadd.f32 %v6565, %v6566
        %v6568 = vsel %vm875, %v6322, 0.0
        %v6569 = vadd.f32 %v6567, %v6568
        %v6570 = vsel %vm875, %v6376, 0.0
        %v6571 = vadd.f32 %v6569, %v6570
        %v6572 = vsel %vm875, %v6430, 0.0
        %v6573 = vadd.f32 %v6571, %v6572
        %v6574 = vsel %vm875, %v6484, 0.0
        %v6575 = vadd.f32 %v6573, %v6574
        %v6576 = vsel %vm875, %v6538, 0.0
        %v6577 = vadd.f32 %v6575, %v6576
        %v6578 = vsel %vm4715, %v6165, 0.0
        %v6579 = vsel %vm4715, %v6219, 0.0
        %v6580 = vadd.f32 %v6578, %v6579
        %v6581 = vsel %vm4715, %v6273, 0.0
        %v6582 = vadd.f32 %v6580, %v6581
        %v6583 = vsel %vm4715, %v6327, 0.0
        %v6584 = vadd.f32 %v6582, %v6583
        %v6585 = vsel %vm4715, %v6381, 0.0
        %v6586 = vadd.f32 %v6584, %v6585
        %v6587 = vsel %vm4715, %v6435, 0.0
        %v6588 = vadd.f32 %v6586, %v6587
        %v6589 = vsel %vm4715, %v6489, 0.0
        %v6590 = vadd.f32 %v6588, %v6589
        %v6591 = vsel %vm4715, %v6543, 0.0
        %v6592 = vadd.f32 %v6590, %v6591
        %v6596 = vrot.slane %v6562, 4
        %v6597 = vrot.slane %v6577, 4
        %v6598 = vsel %vm4234, %v6596, %v6597
        %v6599 = vrot.slane %v6592, 4
        %v6600 = vsel %vm4234, %v6597, %v6599
        %v6604 = vsel %vm4234, %v4730, %v6596
        %v6605 = vld [vmem:[%s629] sm:$0x1]
        %v6607 = vlaneseq
        %v6608 = vshrl.u32 %v6607, 7
        %v6609 = vsub.s32 0, %v6608
        %v6610 = vrot.slane %v6605, %v6609
        %v6612 = vadd.f32 %v4699, %v6610
        %v6613 = vadd.f32 %v4714, %v6610
        %v6614 = vadd.f32 %v6604, %v6610
        %v6615 = vadd.f32 %v6598, %v6610
        %v6616 = vadd.f32 %v6600, %v6610
        %v6617 = vadd.f32 %v668, %v6612
        %v6618 = vadd.f32 %v669, %v6613
        %v6619 = vadd.f32 %v670, %v6614
        %v6620 = vadd.f32 %v671, %v6615
        %v6621 = vadd.f32 %v672, %v6616
        %v6622 = vld [vmem:[%s632] sm:$0x1]
        %v6623 = vld [vmem:[%s635] sm:$0x1]
        %v6624 = vsel %vm875, %v6617, 0.0
        %6625 = vadd.xlane.f32.xlu0 %v6624
        %v6626 = vpop.xlane.xlu0 %6625
        %v6627 = vsel %vm875, %v6618, 0.0
        %6628 = vadd.xlane.f32.xlu0 %v6627
        %v6629 = vpop.xlane.xlu0 %6628
        %v6630 = vsel %vm875, %v6619, 0.0
        %6631 = vadd.xlane.f32.xlu0 %v6630
        %v6632 = vpop.xlane.xlu0 %6631
        %v6633 = vsel %vm875, %v6620, 0.0
        %6634 = vadd.xlane.f32.xlu0 %v6633
        %v6635 = vpop.xlane.xlu0 %6634
        %v6636 = vsel %vm875, %v6621, 0.0
        %6637 = vadd.xlane.f32.xlu0 %v6636
        %v6638 = vpop.xlane.xlu0 %6637
        %v6639 = vmul.f32 %v6626, %v891
        %v6640 = vmul.f32 %v6629, %v891
        %v6641 = vmul.f32 %v6632, %v891
        %v6642 = vmul.f32 %v6635, %v891
        %v6643 = vmul.f32 %v6638, %v891
        %v6644 = vsub.f32 %v6617, %v6639
        %v6645 = vsub.f32 %v6618, %v6640
        %v6646 = vsub.f32 %v6619, %v6641
        %v6647 = vsub.f32 %v6620, %v6642
        %v6648 = vsub.f32 %v6621, %v6643
        %v6649 = vmul.f32 %v6644, %v6644
        %v6650 = vmul.f32 %v6645, %v6645
        %v6651 = vmul.f32 %v6646, %v6646
        %v6652 = vmul.f32 %v6647, %v6647
        %v6653 = vmul.f32 %v6648, %v6648
        %v6654 = vsel %vm875, %v6649, 0.0
        %6655 = vadd.xlane.f32.xlu0 %v6654
        %v6656 = vpop.xlane.xlu0 %6655
        %v6657 = vsel %vm875, %v6650, 0.0
        %6658 = vadd.xlane.f32.xlu0 %v6657
        %v6659 = vpop.xlane.xlu0 %6658
        %v6660 = vsel %vm875, %v6651, 0.0
        %6661 = vadd.xlane.f32.xlu0 %v6660
        %v6662 = vpop.xlane.xlu0 %6661
        %v6663 = vsel %vm875, %v6652, 0.0
        %6664 = vadd.xlane.f32.xlu0 %v6663
        %v6665 = vpop.xlane.xlu0 %6664
        %v6666 = vsel %vm875, %v6653, 0.0
        %6667 = vadd.xlane.f32.xlu0 %v6666
        %v6668 = vpop.xlane.xlu0 %6667
        %v6669 = vmul.f32 %v6656, %v891
        %v6670 = vmul.f32 %v6659, %v891
        %v6671 = vmul.f32 %v6662, %v891
        %v6672 = vmul.f32 %v6665, %v891
        %v6673 = vmul.f32 %v6668, %v891
        %v6674 = vadd.f32 %v6669, 1e-05
        %v6675 = vadd.f32 %v6670, 1e-05
        %v6676 = vadd.f32 %v6671, 1e-05
        %v6677 = vadd.f32 %v6672, 1e-05
        %v6678 = vadd.f32 %v6673, 1e-05
        %v6679 = vrsqrt.pop %v6674
        %v6680 = vrsqrt.pop %v6675
        %v6681 = vrsqrt.pop %v6676
        %v6682 = vrsqrt.pop %v6677
        %v6683 = vrsqrt.pop %v6678
        %v6684 = vmul.f32 %v6644, %v6679
        %v6685 = vmul.f32 %v6645, %v6680
        %v6686 = vmul.f32 %v6646, %v6681
        %v6687 = vmul.f32 %v6647, %v6682
        %v6688 = vmul.f32 %v6648, %v6683
        %v6690 = vlaneseq
        %v6691 = vshrl.u32 %v6690, 7
        %v6692 = vsub.s32 0, %v6691
        %v6693 = vrot.slane %v6622, %v6692
        %v6695 = vmul.f32 %v6684, %v6693
        %v6696 = vmul.f32 %v6685, %v6693
        %v6697 = vmul.f32 %v6686, %v6693
        %v6698 = vmul.f32 %v6687, %v6693
        %v6699 = vmul.f32 %v6688, %v6693
        %v6701 = vlaneseq
        %v6702 = vshrl.u32 %v6701, 7
        %v6703 = vsub.s32 0, %v6702
        %v6704 = vrot.slane %v6623, %v6703
        %v6706 = vadd.f32 %v6695, %v6704
        %v6707 = vadd.f32 %v6696, %v6704
        %v6708 = vadd.f32 %v6697, %v6704
        %v6709 = vadd.f32 %v6698, %v6704
        %v6710 = vadd.f32 %v6699, %v6704
        %v6711 = vpack.c.bf16 %v6707, %v6706
        %v6712 = vpack.c.bf16 %v6709, %v6708
        %v6713 = vpack.c.bf16 %v6710, %v6710
        %v6714 = vld [vmem:[%s640] sm:$0xf]
        %v6715 = vld [vmem:[%s640 + $0x4] sm:$0xf]
        %v6716 = vld [vmem:[%s640 + $0x8] sm:$0xf]
        %v6717 = vld [vmem:[%s640 + $0xc] sm:$0xf]
        %v6718 = vld [vmem:[%s640 + $0x10] sm:$0xf]
        %v6719 = vld [vmem:[%s640 + $0x14] sm:$0xf]
        %v6720 = vld [vmem:[%s640 + $0x18] sm:$0xf]
        %v6721 = vld [vmem:[%s640 + $0x1c] sm:$0xf]
        %v6722 = vld [vmem:[%s643] sm:$0x1]
        %v6724 = vlaneseq
        %v6725 = vshrl.u32 %v6724, 7
        %v6726 = vsub.s32 0, %v6725
        %v6727 = vrot.slane %v6722, %v6726
        %v6737 = vunpack.c.l.b16 %v6714
        %v6738 = vunpack.c.l.b16 %v6715
        %v6739 = vunpack.c.l.b16 %v6716
        %v6740 = vunpack.c.l.b16 %v6717
        %v6741 = vunpack.c.l.b16 %v6718
        %v6742 = vunpack.c.l.b16 %v6719
        %v6743 = vunpack.c.l.b16 %v6720
        %v6744 = vunpack.c.l.b16 %v6721
        %v6745 = vpack.c.b16 %v6738, %v6737
        %v6746 = vpack.c.b16 %v6740, %v6739
        %v6747 = vpack.c.b16 %v6742, %v6741
        %v6748 = vpack.c.b16 %v6744, %v6743
        %v6754 = vsel %vm875, %v6711, 0
        %v6757 = vsel %vm875, %v6712, 0
        %v6760 = vsel %vm875, %v6713, 0
        %6762 = vmatprep.subr.bf16.mxu0 0
        %6763 = vmatpush1.bf16.msra.mxu0 %v6745
        %6764 = vmatprep.subr.bf16.mxu0 0
        %6765 = vmatpush1.bf16.msra.mxu0 %v6746
        %6766 = vmatprep.subr.bf16.mxu0 0
        %6767 = vmatpush1.bf16.msra.mxu0 %v6747
        %6768 = vmatprep.subr.bf16.mxu0 0
        %6769 = vmatpush1.bf16.msra.mxu0 %v6748
        %6770 = vmatprep.subr.bf16.mxu0 0
        %6771 = vmatpush1.bf16.msra.mxu0 0
        %6772 = vmatprep.subr.bf16.mxu0 0
        %6773 = vmatpush1.bf16.msra.mxu0 0
        %6774 = vmatprep.subr.bf16.mxu0 0
        %6775 = vmatpush1.bf16.msra.mxu0 0
        %6776 = vmatprep.subr.bf16.mxu0 0
        %6777 = vmatpush1.bf16.msra.mxu0 0
        %6778 = vmatprep.subr.bf16.mxu0 0
        %6779 = vmatpush1.bf16.msra.mxu0 0
        %6780 = vmatprep.subr.bf16.mxu0 0
        %6781 = vmatpush1.bf16.msra.mxu0 0
        %6782 = vmatprep.subr.bf16.mxu0 0
        %6783 = vmatpush1.bf16.msra.mxu0 0
        %6784 = vmatprep.subr.bf16.mxu0 0
        %6785 = vmatpush1.bf16.msra.mxu0 0
        %6786 = vmatprep.subr.bf16.mxu0 0
        %6787 = vmatpush1.bf16.msra.mxu0 0
        %6788 = vmatprep.subr.bf16.mxu0 0
        %6789 = vmatpush1.bf16.msra.mxu0 0
        %6790 = vmatprep.subr.bf16.mxu0 0
        %6791 = vmatpush1.bf16.msra.mxu0 0
        %6792 = vmatprep.subr.bf16.mxu0 0
        %6793 = vmatpush1.bf16.msra.mxu0 0
        %6794 = vmatprep.mubr.bf16.mxu0 0
        %6795 = vmatmul.mubr.bf16.gmra.mrb[0].mxu0 %v6754
        %v6796 = vpop.f32.mrb[0].mxu0
        %v6797 = vadd.f32 %v6727, %v6796
        %v6798 = vpop.f32.mrb[0].mxu0
        %v6799 = vpop.f32.mrb[0].mxu0
        %v6800 = vadd.f32 %v6727, %v6799
        %v6801 = vpop.f32.mrb[0].mxu0
        %6802 = vmatprep.mubr.bf16.mxu0 0
        %6803 = vmatmul.mubr.bf16.gmra.mrb[0].mxu0 %v6757
        %v6804 = vpop.f32.mrb[0].mxu0
        %v6805 = vadd.f32 %v6727, %v6804
        %v6806 = vpop.f32.mrb[0].mxu0
        %v6807 = vpop.f32.mrb[0].mxu0
        %v6808 = vadd.f32 %v6727, %v6807
        %v6809 = vpop.f32.mrb[0].mxu0
        %6810 = vmatprep.mubr.bf16.mxu0 0
        %6811 = vmatmul.mubr.bf16.gmra.mrb[0].mxu0 %v6760
        %v6812 = vpop.f32.mrb[0].mxu0
        %v6813 = vadd.f32 %v6727, %v6812
        %v6814 = vpop.f32.mrb[0].mxu0
        %v6815 = vpop.f32.mrb[0].mxu0
        %v6816 = vpop.f32.mrb[0].mxu0
        %6817 = vdwg.mxu0
        %v6818 = vmax.f32 %v6797, 0.0
        %v6819 = vmax.f32 %v6800, 0.0
        %v6820 = vmax.f32 %v6805, 0.0
        %v6821 = vmax.f32 %v6808, 0.0
        %v6822 = vmax.f32 %v6813, 0.0
        %v6823 = vpack.c.bf16 %v6819, %v6818
        %v6824 = vpack.c.bf16 %v6821, %v6820
        %v6825 = vpack.c.bf16 %v6822, %v6822
        %v6826 = vld [vmem:[%s648] sm:$0xf]
        %v6827 = vld [vmem:[%s648 + $0x4] sm:$0xf]
        %v6828 = vld [vmem:[%s648 + $0x8] sm:$0xf]
        %v6829 = vld [vmem:[%s648 + $0xc] sm:$0xf]
        %v6830 = vld [vmem:[%s648 + $0x10] sm:$0xf]
        %v6831 = vld [vmem:[%s648 + $0x14] sm:$0xf]
        %v6832 = vld [vmem:[%s648 + $0x18] sm:$0xf]
        %v6833 = vld [vmem:[%s648 + $0x1c] sm:$0xf]
        %v6834 = vld [vmem:[%s648 + $0x20] sm:$0xf]
        %v6835 = vld [vmem:[%s648 + $0x24] sm:$0xf]
        %v6836 = vld [vmem:[%s648 + $0x28] sm:$0xf]
        %v6837 = vld [vmem:[%s648 + $0x2c] sm:$0xf]
        %v6838 = vld [vmem:[%s648 + $0x30] sm:$0xf]
        %v6839 = vld [vmem:[%s648 + $0x34] sm:$0xf]
        %v6840 = vld [vmem:[%s648 + $0x38] sm:$0xf]
        %v6841 = vld [vmem:[%s648 + $0x3c] sm:$0xf]
        %v6842 = vld [vmem:[%s651] sm:$0x1]
        %v6844 = vlaneseq
        %v6845 = vshrl.u32 %v6844, 7
        %v6846 = vsub.s32 0, %v6845
        %v6847 = vrot.slane %v6842, %v6846
        %v6865 = vunpack.c.l.b16 %v6826
        %v6866 = vunpack.c.l.b16 %v6827
        %v6867 = vunpack.c.l.b16 %v6828
        %v6868 = vunpack.c.l.b16 %v6829
        %v6869 = vunpack.c.l.b16 %v6830
        %v6870 = vunpack.c.l.b16 %v6831
        %v6871 = vunpack.c.l.b16 %v6832
        %v6872 = vunpack.c.l.b16 %v6833
        %v6873 = vunpack.c.l.b16 %v6834
        %v6874 = vunpack.c.l.b16 %v6835
        %v6875 = vunpack.c.l.b16 %v6836
        %v6876 = vunpack.c.l.b16 %v6837
        %v6877 = vunpack.c.l.b16 %v6838
        %v6878 = vunpack.c.l.b16 %v6839
        %v6879 = vunpack.c.l.b16 %v6840
        %v6880 = vunpack.c.l.b16 %v6841
        %v6881 = vpack.c.b16 %v6866, %v6865
        %v6882 = vpack.c.b16 %v6868, %v6867
        %v6883 = vpack.c.b16 %v6870, %v6869
        %v6884 = vpack.c.b16 %v6872, %v6871
        %v6885 = vpack.c.b16 %v6874, %v6873
        %v6886 = vpack.c.b16 %v6876, %v6875
        %v6887 = vpack.c.b16 %v6878, %v6877
        %v6888 = vpack.c.b16 %v6880, %v6879
        %6897 = vmatprep.subr.bf16.mxu0 0
        %6898 = vmatpush1.bf16.msra.mxu0 %v6881
        %6899 = vmatprep.subr.bf16.mxu0 0
        %6900 = vmatpush1.bf16.msra.mxu0 %v6882
        %6901 = vmatprep.subr.bf16.mxu0 0
        %6902 = vmatpush1.bf16.msra.mxu0 %v6883
        %6903 = vmatprep.subr.bf16.mxu0 0
        %6904 = vmatpush1.bf16.msra.mxu0 %v6884
        %6905 = vmatprep.subr.bf16.mxu0 0
        %6906 = vmatpush1.bf16.msra.mxu0 %v6885
        %6907 = vmatprep.subr.bf16.mxu0 0
        %6908 = vmatpush1.bf16.msra.mxu0 %v6886
        %6909 = vmatprep.subr.bf16.mxu0 0
        %6910 = vmatpush1.bf16.msra.mxu0 %v6887
        %6911 = vmatprep.subr.bf16.mxu0 0
        %6912 = vmatpush1.bf16.msra.mxu0 %v6888
        %6913 = vmatprep.subr.bf16.mxu0 0
        %6914 = vmatpush1.bf16.msra.mxu0 0
        %6915 = vmatprep.subr.bf16.mxu0 0
        %6916 = vmatpush1.bf16.msra.mxu0 0
        %6917 = vmatprep.subr.bf16.mxu0 0
        %6918 = vmatpush1.bf16.msra.mxu0 0
        %6919 = vmatprep.subr.bf16.mxu0 0
        %6920 = vmatpush1.bf16.msra.mxu0 0
        %6921 = vmatprep.subr.bf16.mxu0 0
        %6922 = vmatpush1.bf16.msra.mxu0 0
        %6923 = vmatprep.subr.bf16.mxu0 0
        %6924 = vmatpush1.bf16.msra.mxu0 0
        %6925 = vmatprep.subr.bf16.mxu0 0
        %6926 = vmatpush1.bf16.msra.mxu0 0
        %6927 = vmatprep.subr.bf16.mxu0 0
        %6928 = vmatpush1.bf16.msra.mxu0 0
        %6929 = vmatprep.mubr.bf16.mxu0 0
        %6930 = vmatmul.mubr.bf16.gmra.mrb[0].mxu0 %v6823
        %v6931 = vpop.f32.mrb[0].mxu0
        %v6932 = vadd.f32 %v6847, %v6931
        %v6933 = vpop.f32.mrb[0].mxu0
        %v6934 = vpop.f32.mrb[0].mxu0
        %v6935 = vadd.f32 %v6847, %v6934
        %v6936 = vpop.f32.mrb[0].mxu0
        %6937 = vmatprep.mubr.bf16.mxu0 0
        %6938 = vmatmul.mubr.bf16.gmra.mrb[0].mxu0 %v6824
        %v6939 = vpop.f32.mrb[0].mxu0
        %v6940 = vadd.f32 %v6847, %v6939
        %v6941 = vpop.f32.mrb[0].mxu0
        %v6942 = vpop.f32.mrb[0].mxu0
        %v6943 = vadd.f32 %v6847, %v6942
        %v6944 = vpop.f32.mrb[0].mxu0
        %6945 = vmatprep.mubr.bf16.mxu0 0
        %6946 = vmatmul.mubr.bf16.gmra.mrb[0].mxu0 %v6825
        %v6947 = vpop.f32.mrb[0].mxu0
        %v6948 = vadd.f32 %v6847, %v6947
        %v6949 = vpop.f32.mrb[0].mxu0
        %v6950 = vpop.f32.mrb[0].mxu0
        %v6951 = vpop.f32.mrb[0].mxu0
        %6952 = vdwg.mxu0
        %v6953 = vadd.f32 %v6617, %v6932
        %v6954 = vadd.f32 %v6618, %v6935
        %v6955 = vadd.f32 %v6619, %v6940
        %v6956 = vadd.f32 %v6620, %v6943
        %v6957 = vadd.f32 %v6621, %v6948
        %6958 = vst.msk [vmem:[#allocation2] sm:$0xff] %vm875, %v6953
        %6959 = vst.msk [vmem:[#allocation2 + $0x8] sm:$0xff] %vm875, %v6954
        %6960 = vst.msk [vmem:[#allocation2 + $0x10] sm:$0xff] %vm875, %v6955
        %6961 = vst.msk [vmem:[#allocation2 + $0x18] sm:$0xff] %vm875, %v6956
        %6962 = vst.msk [vmem:[#allocation2 + $0x20] sm:$0xff] %vm875, %v6957
        // Predicated region
        $region81: #{tpu_custom_call.1} parent=75 // pred_check
          %p6963 = pneg %p398
        $region82: #{tpu_custom_call.1} parent=75 // pred_check_branch
          %6965 = sbr.rel (%p6963) target = $region84
        $region83: #{tpu_custom_call.1} parent=75 // pred_region
          %s6967 = ssub.s32 640, 640
          %6968 = vsyncadd [#allocation3], %s6967
          %s6969 = sshll.u32 [#allocation2], 4
          %s6970 = int_to_ptr.vmem [resolvable:$true] %s6969
          %6975 = dma.vmem_to_hbm [thread:$0]  %s6970, 640, %s14, [#allocation3], 128, 128, 8
        $region84: #{tpu_custom_call.1} parent=75 // pred_fallthru
          _
        // Predicated region
        $region85: #{tpu_custom_call.1} parent=75 // pred_check
          %p6976 = pneg %p398
        $region86: #{tpu_custom_call.1} parent=75 // pred_check_branch
          %6978 = sbr.rel (%p6976) target = $region88
        $region87: #{tpu_custom_call.1} parent=75 // pred_region
          %6979 = dma.done [#allocation3], 640
        $region88: #{tpu_custom_call.1} parent=75 // pred_fallthru
          _
      $region76: #{tpu_custom_call.1} parent=5 // pred_fallthru
        _
      %p6980 = scmp.le.s32.totalorder 2, %s21
      // Predicated region
      $region89: #{tpu_custom_call.1} parent=5 // pred_check
        %p6981 = pneg %p6980
      $region90: #{tpu_custom_call.1} parent=5 // pred_check_branch
        %6983 = sbr.rel (%p6981) target = $region92
      $region91: #{tpu_custom_call.1} parent=5 // pred_region
        %s6984 = ssub.s32 %s21, 2
      $region92: #{tpu_custom_call.1} parent=5 // pred_fallthru
        _
    $region6: #{tpu_custom_call.1} parent=1 // loop_footer
      %s25 = sadd.s32 1, %s21
    $region7: #{tpu_custom_call.1} parent=1 // loop_footer_branch
      %20 = sbr.rel target = $region3
    $region8: #{tpu_custom_call.1} parent=1 // loop_exit
      _
    %6985 = vsyncpa [#allocation3], 1
    %s6986 = scalar_lea.sflag [#allocation3], 1
    %6987 = vsyncpa %s6986, 1

</llo_original>
